<compile_context>
chip_gen: v6e
topology: v6e:2x2x1
jax: 0.10.0
libtpu: 0.0.40
codegen_flags: <defaults>
</compile_context>

<pallas_src>
import math

import jax
import jax.numpy as jnp
from jax.experimental import pallas as pl
from jax.experimental.pallas import tpu as pltpu


# For output parity p (0 or 1), the 3x3 taps collapse onto two original-resolution
# offsets: {offset: which 3x3 kernel indices land there}.
_PHASE_TAPS = {
    0: ((-1, (0,)), (0, (1, 2))),   # even outputs: rows a-1 (k=0) and a (k=1,2)
    1: ((0, (0, 1)), (1, (2,))),    # odd  outputs: rows a (k=0,1) and a+1 (k=2)
}


def _upsample_conv2d_kernel(x_ref, w_ref, b_ref, o_ref, xpad_ref):
    # x_ref   : (1, H, W, Cin)        channels-last input tile (one batch element)
    # w_ref   : (3, 3, Cin, Cout)     conv weights
    # b_ref   : (1, Cout)             bias
    # o_ref   : (4, H, W, Cout)       four output phases (pi*2+pj) for this batch elem
    # xpad_ref: (H+2, W+2, Cin) VMEM  zero-padded input scratch
    H, W, Cin = x_ref.shape[1], x_ref.shape[2], x_ref.shape[3]
    Cout = o_ref.shape[-1]

    # Zero every step (cheap, and safe if the "parallel" grid axis is split
    # across TensorCores, where each core owns its own scratch copy).
    xpad_ref[...] = jnp.zeros_like(xpad_ref)
    xpad_ref[1:H + 1, 1:W + 1, :] = x_ref[0].astype(jnp.float32)

    bias = b_ref[...].astype(jnp.float32)                       # (1, Cout)

    for pi in range(2):
        for pj in range(2):
            acc = None                                          # (H*W, Cout) f32
            for (roff, kis) in _PHASE_TAPS[pi]:
                for (coff, kjs) in _PHASE_TAPS[pj]:
                    # Per-phase effective weight: sum of the 3x3 taps that hit
                    # the same original-resolution pixel.
                    w_eff = None
                    for ki in kis:
                        for kj in kjs:
                            t = w_ref[ki, kj].astype(jnp.float32)   # (Cin, Cout)
                            w_eff = t if w_eff is None else w_eff + t
                    patch = xpad_ref[1 + roff:1 + roff + H,
                                     1 + coff:1 + coff + W, :]      # (H, W, Cin)
                    contrib = jnp.dot(patch.reshape(H * W, Cin), w_eff,
                                      preferred_element_type=jnp.float32)
                    acc = contrib if acc is None else acc + contrib
            res = (acc + bias).astype(o_ref.dtype).reshape(H, W, Cout)
            o_ref[2 * pi + pj] = res


def upsample_forward(x, weight, bias):
    """Fused nearest-2x upsample + Conv2d(k=3, s=1, p=1).

    x: (B, Cin, H, W), weight: (Cout, Cin, 3, 3), bias: (Cout,)
    returns: (B, Cout, 2H, 2W)   (matches the PyTorch module's forward)
    """
    B, Cin, H, W = x.shape
    Cout = weight.shape[0]
    assert weight.shape == (Cout, Cin, 3, 3)
    out_dtype = x.dtype

    x_nhwc = jnp.transpose(x, (0, 2, 3, 1))            # (B, H, W, Cin)  channels on lanes
    w_k = jnp.transpose(weight, (2, 3, 1, 0))          # (3, 3, Cin, Cout)
    b2 = jnp.reshape(bias, (1, Cout))

    out = pl.pallas_call(
        _upsample_conv2d_kernel,
        out_shape=jax.ShapeDtypeStruct((4 * B, H, W, Cout), out_dtype),
        grid_spec=pltpu.PrefetchScalarGridSpec(
            num_scalar_prefetch=0,
            grid=(B,),
            in_specs=[
                pl.BlockSpec((1, H, W, Cin), lambda bi: (bi, 0, 0, 0)),
                pl.BlockSpec((3, 3, Cin, Cout), lambda bi: (0, 0, 0, 0)),
                pl.BlockSpec((1, Cout), lambda bi: (0, 0)),
            ],
            out_specs=pl.BlockSpec((4, H, W, Cout), lambda bi: (bi, 0, 0, 0)),
            scratch_shapes=[pltpu.VMEM((H + 2, W + 2, Cin), jnp.float32)],
        ),
        compiler_params=pltpu.CompilerParams(
            dimension_semantics=("parallel",)),
    )(x_nhwc, w_k, b2)

    # Interleave the 4 phases back to full resolution (pure layout, done by XLA):
    # (4B, H, W, Co) -> (B, pi, pj, H, W, Co) -> (B, H, pi, W, pj, Co) -> (B, 2H, 2W, Co)
    out = out.reshape(B, 2, 2, H, W, Cout)
    out = jnp.transpose(out, (0, 3, 1, 4, 2, 5))
    out = out.reshape(B, 2 * H, 2 * W, Cout)
    return jnp.transpose(out, (0, 3, 1, 2))            # (B, Cout, 2H, 2W)


class Upsample:
    """Pallas port of models/model_util.Upsample (2-D, plain-conv branch).

    # TODO(synk): use_transpose_conv=True (ConvTranspose) branch not implemented.
    # TODO(synk): convolution_type in (1, 3) (Conv1d / Conv3d) variants not implemented.
    """

    def __init__(self, channels, use_transpose_conv=False, convolution_type=2,
                 out_channels=None, kernel_size=3, stride=1, padding=1, *, key):
        assert not use_transpose_conv, "transpose-conv branch not implemented"
        assert convolution_type == 2, "only the 2-D variant is implemented"
        assert kernel_size == 3 and stride == 1 and padding == 1
        self.channels = channels
        self.out_channels = out_channels or channels
        kw, kb = jax.random.split(key)
        bound = 1.0 / math.sqrt(channels * kernel_size * kernel_size)
        self.weight = jax.random.uniform(
            kw, (self.out_channels, channels, 3, 3),
            minval=-bound, maxval=bound, dtype=jnp.float32)
        self.bias = jax.random.uniform(
            kb, (self.out_channels,), minval=-bound, maxval=bound, dtype=jnp.float32)

    def __call__(self, x):
        assert x.shape[1] == self.channels
        return upsample_forward(x, self.weight, self.bias)


if __name__ == "__main__":
    key = jax.random.PRNGKey(0)
    kx, km = jax.random.split(key)

    B, Cin, H, W = 2, 4, 16, 16
    Cout = 8
    x = jax.random.normal(kx, (B, Cin, H, W), dtype=jnp.float32)

    module = Upsample(Cin, use_transpose_conv=False, convolution_type=2,
                      out_channels=Cout, key=km)

    y = module(x)
    y = jax.block_until_ready(y)
    assert y.shape == (B, Cout, 2 * H, 2 * W), y.shape

    # Pure-JAX reference: F.interpolate(scale=2, 'nearest') + Conv2d(k=3, pad=1).
    xu = jnp.repeat(jnp.repeat(x, 2, axis=2), 2, axis=3)
    y_ref = jax.lax.conv_general_dilated(
        xu, module.weight, window_strides=(1, 1), padding=((1, 1), (1, 1)),
        dimension_numbers=("NCHW", "OIHW", "NCHW"))
    y_ref = y_ref + module.bias[None, :, None, None]

    max_err = float(jnp.max(jnp.abs(y - y_ref)))
    assert jnp.allclose(y, y_ref, atol=1e-4, rtol=1e-4), max_err

    print("KERNEL_OK")
</pallas_src>

<mosaic_0001>
module attributes {stable_mosaic.version = 11 : i64} {
  func.func @_upsample_conv2d_kernel(%arg0: i32, %arg1: memref<1x16x16x4xf32, #tpu.memory_space<vmem>>, %arg2: memref<3x3x4x8xf32, #tpu.memory_space<vmem>>, %arg3: memref<1x8xf32, #tpu.memory_space<vmem>>, %arg4: memref<4x16x16x8xf32, #tpu.memory_space<vmem>>, %arg5: memref<18x18x4xf32, #tpu.memory_space<vmem>>) attributes {dimension_semantics = [#tpu.dimension_semantics<parallel>], iteration_bounds = array<i64: 2>, scalar_prefetch = 0 : i64, scratch_operands = 1 : i64, tpu.core_type = #tpu.core_type<tc>, window_params = [{transform_indices = @transform_0, window_bounds = array<i64: 1, 16, 16, 4>}, {pipeline_mode = #tpu.pipeline_mode<synchronous>, transform_indices = @transform_1, window_bounds = array<i64: 3, 3, 4, 8>}, {pipeline_mode = #tpu.pipeline_mode<synchronous>, transform_indices = @transform_2, window_bounds = array<i64: 1, 8>}, {transform_indices = @transform_3, window_bounds = array<i64: 4, 16, 16, 8>}]} {
    %cst = arith.constant 0.000000e+00 : f32
    %0 = vector.broadcast %cst : f32 to vector<18x18x4xf32>
    %c0 = arith.constant 0 : index
    %c0_0 = arith.constant 0 : index
    %c0_1 = arith.constant 0 : index
    %1 = vector.load %arg5[%c0, %c0_0, %c0_1] : memref<18x18x4xf32, #tpu.memory_space<vmem>>, vector<18x18x4xf32>
    tpu.vector_store %arg5[%c0, %c0_0, %c0_1], %0 {strides = array<i32>} : memref<18x18x4xf32, #tpu.memory_space<vmem>>, vector<18x18x4xf32>,
    %c0_2 = arith.constant 0 : index
    %c0_3 = arith.constant 0 : index
    %c0_4 = arith.constant 0 : index
    %c0_5 = arith.constant 0 : index
    %2 = vector.load %arg1[%c0_2, %c0_3, %c0_4, %c0_5] : memref<1x16x16x4xf32, #tpu.memory_space<vmem>>, vector<1x16x16x4xf32>
    %3 = vector.shape_cast %2 : vector<1x16x16x4xf32> to vector<16x16x4xf32>
    %c1 = arith.constant 1 : index
    %c1_6 = arith.constant 1 : index
    %c0_7 = arith.constant 0 : index
    %4 = vector.load %arg5[%c1, %c1_6, %c0_7] : memref<18x18x4xf32, #tpu.memory_space<vmem>>, vector<16x16x4xf32>
    tpu.vector_store %arg5[%c1, %c1_6, %c0_7], %3 {strides = array<i32>} : memref<18x18x4xf32, #tpu.memory_space<vmem>>, vector<16x16x4xf32>,
    %c0_8 = arith.constant 0 : index
    %c0_9 = arith.constant 0 : index
    %5 = vector.load %arg3[%c0_8, %c0_9] : memref<1x8xf32, #tpu.memory_space<vmem>>, vector<1x8xf32>
    %c0_10 = arith.constant 0 : index
    %c0_11 = arith.constant 0 : index
    %c0_12 = arith.constant 0 : index
    %c0_13 = arith.constant 0 : index
    %6 = vector.load %arg2[%c0_10, %c0_11, %c0_12, %c0_13] : memref<3x3x4x8xf32, #tpu.memory_space<vmem>>, vector<1x1x4x8xf32>
    %7 = vector.shape_cast %6 : vector<1x1x4x8xf32> to vector<4x8xf32>
    %c0_14 = arith.constant 0 : index
    %c0_15 = arith.constant 0 : index
    %c0_16 = arith.constant 0 : index
    %8 = vector.load %arg5[%c0_14, %c0_15, %c0_16] : memref<18x18x4xf32, #tpu.memory_space<vmem>>, vector<16x16x4xf32>
    %9 = vector.shape_cast %8 : vector<16x16x4xf32> to vector<256x4xf32>
    %cst_17 = arith.constant dense<0.000000e+00> : vector<256x8xf32>
    %10 = tpu.matmul %9, %7, %cst_17 {dimension_numbers = #tpu.dot_dimension_numbers<[1], [0], [0], [1], [0, 0, 1, 1], [], []>} : vector<256x4xf32>, vector<4x8xf32>, vector<256x8xf32> -> vector<256x8xf32>
    %c0_18 = arith.constant 0 : index
    %c1_19 = arith.constant 1 : index
    %c0_20 = arith.constant 0 : index
    %c0_21 = arith.constant 0 : index
    %11 = vector.load %arg2[%c0_18, %c1_19, %c0_20, %c0_21] : memref<3x3x4x8xf32, #tpu.memory_space<vmem>>, vector<1x1x4x8xf32>
    %12 = vector.shape_cast %11 : vector<1x1x4x8xf32> to vector<4x8xf32>
    %c0_22 = arith.constant 0 : index
    %c2 = arith.constant 2 : index
    %c0_23 = arith.constant 0 : index
    %c0_24 = arith.constant 0 : index
    %13 = vector.load %arg2[%c0_22, %c2, %c0_23, %c0_24] : memref<3x3x4x8xf32, #tpu.memory_space<vmem>>, vector<1x1x4x8xf32>
    %14 = vector.shape_cast %13 : vector<1x1x4x8xf32> to vector<4x8xf32>
    %15 = arith.addf %12, %14 : vector<4x8xf32>
    %c0_25 = arith.constant 0 : index
    %c1_26 = arith.constant 1 : index
    %c0_27 = arith.constant 0 : index
    %16 = vector.load %arg5[%c0_25, %c1_26, %c0_27] : memref<18x18x4xf32, #tpu.memory_space<vmem>>, vector<16x16x4xf32>
    %17 = vector.shape_cast %16 : vector<16x16x4xf32> to vector<256x4xf32>
    %cst_28 = arith.constant dense<0.000000e+00> : vector<256x8xf32>
    %18 = tpu.matmul %17, %15, %cst_28 {dimension_numbers = #tpu.dot_dimension_numbers<[1], [0], [0], [1], [0, 0, 1, 1], [], []>} : vector<256x4xf32>, vector<4x8xf32>, vector<256x8xf32> -> vector<256x8xf32>
    %19 = arith.addf %10, %18 : vector<256x8xf32>
    %c1_29 = arith.constant 1 : index
    %c0_30 = arith.constant 0 : index
    %c0_31 = arith.constant 0 : index
    %c0_32 = arith.constant 0 : index
    %20 = vector.load %arg2[%c1_29, %c0_30, %c0_31, %c0_32] : memref<3x3x4x8xf32, #tpu.memory_space<vmem>>, vector<1x1x4x8xf32>
    %21 = vector.shape_cast %20 : vector<1x1x4x8xf32> to vector<4x8xf32>
    %c2_33 = arith.constant 2 : index
    %c0_34 = arith.constant 0 : index
    %c0_35 = arith.constant 0 : index
    %c0_36 = arith.constant 0 : index
    %22 = vector.load %arg2[%c2_33, %c0_34, %c0_35, %c0_36] : memref<3x3x4x8xf32, #tpu.memory_space<vmem>>, vector<1x1x4x8xf32>
    %23 = vector.shape_cast %22 : vector<1x1x4x8xf32> to vector<4x8xf32>
    %24 = arith.addf %21, %23 : vector<4x8xf32>
    %c1_37 = arith.constant 1 : index
    %c0_38 = arith.constant 0 : index
    %c0_39 = arith.constant 0 : index
    %25 = vector.load %arg5[%c1_37, %c0_38, %c0_39] : memref<18x18x4xf32, #tpu.memory_space<vmem>>, vector<16x16x4xf32>
    %26 = vector.shape_cast %25 : vector<16x16x4xf32> to vector<256x4xf32>
    %cst_40 = arith.constant dense<0.000000e+00> : vector<256x8xf32>
    %27 = tpu.matmul %26, %24, %cst_40 {dimension_numbers = #tpu.dot_dimension_numbers<[1], [0], [0], [1], [0, 0, 1, 1], [], []>} : vector<256x4xf32>, vector<4x8xf32>, vector<256x8xf32> -> vector<256x8xf32>
    %28 = arith.addf %19, %27 : vector<256x8xf32>
    %c1_41 = arith.constant 1 : index
    %c1_42 = arith.constant 1 : index
    %c0_43 = arith.constant 0 : index
    %c0_44 = arith.constant 0 : index
    %29 = vector.load %arg2[%c1_41, %c1_42, %c0_43, %c0_44] : memref<3x3x4x8xf32, #tpu.memory_space<vmem>>, vector<1x1x4x8xf32>
    %30 = vector.shape_cast %29 : vector<1x1x4x8xf32> to vector<4x8xf32>
    %c1_45 = arith.constant 1 : index
    %c2_46 = arith.constant 2 : index
    %c0_47 = arith.constant 0 : index
    %c0_48 = arith.constant 0 : index
    %31 = vector.load %arg2[%c1_45, %c2_46, %c0_47, %c0_48] : memref<3x3x4x8xf32, #tpu.memory_space<vmem>>, vector<1x1x4x8xf32>
    %32 = vector.shape_cast %31 : vector<1x1x4x8xf32> to vector<4x8xf32>
    %33 = arith.addf %30, %32 : vector<4x8xf32>
    %c2_49 = arith.constant 2 : index
    %c1_50 = arith.constant 1 : index
    %c0_51 = arith.constant 0 : index
    %c0_52 = arith.constant 0 : index
    %34 = vector.load %arg2[%c2_49, %c1_50, %c0_51, %c0_52] : memref<3x3x4x8xf32, #tpu.memory_space<vmem>>, vector<1x1x4x8xf32>
    %35 = vector.shape_cast %34 : vector<1x1x4x8xf32> to vector<4x8xf32>
    %36 = arith.addf %33, %35 : vector<4x8xf32>
    %c2_53 = arith.constant 2 : index
    %c2_54 = arith.constant 2 : index
    %c0_55 = arith.constant 0 : index
    %c0_56 = arith.constant 0 : index
    %37 = vector.load %arg2[%c2_53, %c2_54, %c0_55, %c0_56] : memref<3x3x4x8xf32, #tpu.memory_space<vmem>>, vector<1x1x4x8xf32>
    %38 = vector.shape_cast %37 : vector<1x1x4x8xf32> to vector<4x8xf32>
    %39 = arith.addf %36, %38 : vector<4x8xf32>
    %c1_57 = arith.constant 1 : index
    %c1_58 = arith.constant 1 : index
    %c0_59 = arith.constant 0 : index
    %40 = vector.load %arg5[%c1_57, %c1_58, %c0_59] : memref<18x18x4xf32, #tpu.memory_space<vmem>>, vector<16x16x4xf32>
    %41 = vector.shape_cast %40 : vector<16x16x4xf32> to vector<256x4xf32>
    %cst_60 = arith.constant dense<0.000000e+00> : vector<256x8xf32>
    %42 = tpu.matmul %41, %39, %cst_60 {dimension_numbers = #tpu.dot_dimension_numbers<[1], [0], [0], [1], [0, 0, 1, 1], [], []>} : vector<256x4xf32>, vector<4x8xf32>, vector<256x8xf32> -> vector<256x8xf32>
    %43 = arith.addf %28, %42 : vector<256x8xf32>
    %44 = vector.broadcast %5 : vector<1x8xf32> to vector<256x8xf32>
    %45 = arith.addf %43, %44 : vector<256x8xf32>
    %46 = vector.shape_cast %45 : vector<256x8xf32> to vector<16x16x8xf32>
    %c0_61 = arith.constant 0 : index
    %c0_62 = arith.constant 0 : index
    %c0_63 = arith.constant 0 : index
    %c0_64 = arith.constant 0 : index
    %47 = vector.load %arg4[%c0_61, %c0_62, %c0_63, %c0_64] : memref<4x16x16x8xf32, #tpu.memory_space<vmem>>, vector<1x16x16x8xf32>
    %48 = vector.shape_cast %47 : vector<1x16x16x8xf32> to vector<16x16x8xf32>
    %49 = vector.shape_cast %46 : vector<16x16x8xf32> to vector<1x16x16x8xf32>
    tpu.vector_store %arg4[%c0_61, %c0_62, %c0_63, %c0_64], %49 {strides = array<i32>} : memref<4x16x16x8xf32, #tpu.memory_space<vmem>>, vector<1x16x16x8xf32>,
    %c0_65 = arith.constant 0 : index
    %c0_66 = arith.constant 0 : index
    %c0_67 = arith.constant 0 : index
    %c0_68 = arith.constant 0 : index
    %50 = vector.load %arg2[%c0_65, %c0_66, %c0_67, %c0_68] : memref<3x3x4x8xf32, #tpu.memory_space<vmem>>, vector<1x1x4x8xf32>
    %51 = vector.shape_cast %50 : vector<1x1x4x8xf32> to vector<4x8xf32>
    %c0_69 = arith.constant 0 : index
    %c1_70 = arith.constant 1 : index
    %c0_71 = arith.constant 0 : index
    %c0_72 = arith.constant 0 : index
    %52 = vector.load %arg2[%c0_69, %c1_70, %c0_71, %c0_72] : memref<3x3x4x8xf32, #tpu.memory_space<vmem>>, vector<1x1x4x8xf32>
    %53 = vector.shape_cast %52 : vector<1x1x4x8xf32> to vector<4x8xf32>
    %54 = arith.addf %51, %53 : vector<4x8xf32>
    %c0_73 = arith.constant 0 : index
    %c1_74 = arith.constant 1 : index
    %c0_75 = arith.constant 0 : index
    %55 = vector.load %arg5[%c0_73, %c1_74, %c0_75] : memref<18x18x4xf32, #tpu.memory_space<vmem>>, vector<16x16x4xf32>
    %56 = vector.shape_cast %55 : vector<16x16x4xf32> to vector<256x4xf32>
    %cst_76 = arith.constant dense<0.000000e+00> : vector<256x8xf32>
    %57 = tpu.matmul %56, %54, %cst_76 {dimension_numbers = #tpu.dot_dimension_numbers<[1], [0], [0], [1], [0, 0, 1, 1], [], []>} : vector<256x4xf32>, vector<4x8xf32>, vector<256x8xf32> -> vector<256x8xf32>
    %c0_77 = arith.constant 0 : index
    %c2_78 = arith.constant 2 : index
    %c0_79 = arith.constant 0 : index
    %c0_80 = arith.constant 0 : index
    %58 = vector.load %arg2[%c0_77, %c2_78, %c0_79, %c0_80] : memref<3x3x4x8xf32, #tpu.memory_space<vmem>>, vector<1x1x4x8xf32>
    %59 = vector.shape_cast %58 : vector<1x1x4x8xf32> to vector<4x8xf32>
    %c0_81 = arith.constant 0 : index
    %c2_82 = arith.constant 2 : index
    %c0_83 = arith.constant 0 : index
    %60 = vector.load %arg5[%c0_81, %c2_82, %c0_83] : memref<18x18x4xf32, #tpu.memory_space<vmem>>, vector<16x16x4xf32>
    %61 = vector.shape_cast %60 : vector<16x16x4xf32> to vector<256x4xf32>
    %cst_84 = arith.constant dense<0.000000e+00> : vector<256x8xf32>
    %62 = tpu.matmul %61, %59, %cst_84 {dimension_numbers = #tpu.dot_dimension_numbers<[1], [0], [0], [1], [0, 0, 1, 1], [], []>} : vector<256x4xf32>, vector<4x8xf32>, vector<256x8xf32> -> vector<256x8xf32>
    %63 = arith.addf %57, %62 : vector<256x8xf32>
    %c1_85 = arith.constant 1 : index
    %c0_86 = arith.constant 0 : index
    %c0_87 = arith.constant 0 : index
    %c0_88 = arith.constant 0 : index
    %64 = vector.load %arg2[%c1_85, %c0_86, %c0_87, %c0_88] : memref<3x3x4x8xf32, #tpu.memory_space<vmem>>, vector<1x1x4x8xf32>
    %65 = vector.shape_cast %64 : vector<1x1x4x8xf32> to vector<4x8xf32>
    %c1_89 = arith.constant 1 : index
    %c1_90 = arith.constant 1 : index
    %c0_91 = arith.constant 0 : index
    %c0_92 = arith.constant 0 : index
    %66 = vector.load %arg2[%c1_89, %c1_90, %c0_91, %c0_92] : memref<3x3x4x8xf32, #tpu.memory_space<vmem>>, vector<1x1x4x8xf32>
    %67 = vector.shape_cast %66 : vector<1x1x4x8xf32> to vector<4x8xf32>
    %68 = arith.addf %65, %67 : vector<4x8xf32>
    %c2_93 = arith.constant 2 : index
    %c0_94 = arith.constant 0 : index
    %c0_95 = arith.constant 0 : index
    %c0_96 = arith.constant 0 : index
    %69 = vector.load %arg2[%c2_93, %c0_94, %c0_95, %c0_96] : memref<3x3x4x8xf32, #tpu.memory_space<vmem>>, vector<1x1x4x8xf32>
    %70 = vector.shape_cast %69 : vector<1x1x4x8xf32> to vector<4x8xf32>
    %71 = arith.addf %68, %70 : vector<4x8xf32>
    %c2_97 = arith.constant 2 : index
    %c1_98 = arith.constant 1 : index
    %c0_99 = arith.constant 0 : index
    %c0_100 = arith.constant 0 : index
    %72 = vector.load %arg2[%c2_97, %c1_98, %c0_99, %c0_100] : memref<3x3x4x8xf32, #tpu.memory_space<vmem>>, vector<1x1x4x8xf32>
    %73 = vector.shape_cast %72 : vector<1x1x4x8xf32> to vector<4x8xf32>
    %74 = arith.addf %71, %73 : vector<4x8xf32>
    %c1_101 = arith.constant 1 : index
    %c1_102 = arith.constant 1 : index
    %c0_103 = arith.constant 0 : index
    %75 = vector.load %arg5[%c1_101, %c1_102, %c0_103] : memref<18x18x4xf32, #tpu.memory_space<vmem>>, vector<16x16x4xf32>
    %76 = vector.shape_cast %75 : vector<16x16x4xf32> to vector<256x4xf32>
    %cst_104 = arith.constant dense<0.000000e+00> : vector<256x8xf32>
    %77 = tpu.matmul %76, %74, %cst_104 {dimension_numbers = #tpu.dot_dimension_numbers<[1], [0], [0], [1], [0, 0, 1, 1], [], []>} : vector<256x4xf32>, vector<4x8xf32>, vector<256x8xf32> -> vector<256x8xf32>
    %78 = arith.addf %63, %77 : vector<256x8xf32>
    %c1_105 = arith.constant 1 : index
    %c2_106 = arith.constant 2 : index
    %c0_107 = arith.constant 0 : index
    %c0_108 = arith.constant 0 : index
    %79 = vector.load %arg2[%c1_105, %c2_106, %c0_107, %c0_108] : memref<3x3x4x8xf32, #tpu.memory_space<vmem>>, vector<1x1x4x8xf32>
    %80 = vector.shape_cast %79 : vector<1x1x4x8xf32> to vector<4x8xf32>
    %c2_109 = arith.constant 2 : index
    %c2_110 = arith.constant 2 : index
    %c0_111 = arith.constant 0 : index
    %c0_112 = arith.constant 0 : index
    %81 = vector.load %arg2[%c2_109, %c2_110, %c0_111, %c0_112] : memref<3x3x4x8xf32, #tpu.memory_space<vmem>>, vector<1x1x4x8xf32>
    %82 = vector.shape_cast %81 : vector<1x1x4x8xf32> to vector<4x8xf32>
    %83 = arith.addf %80, %82 : vector<4x8xf32>
    %c1_113 = arith.constant 1 : index
    %c2_114 = arith.constant 2 : index
    %c0_115 = arith.constant 0 : index
    %84 = vector.load %arg5[%c1_113, %c2_114, %c0_115] : memref<18x18x4xf32, #tpu.memory_space<vmem>>, vector<16x16x4xf32>
    %85 = vector.shape_cast %84 : vector<16x16x4xf32> to vector<256x4xf32>
    %cst_116 = arith.constant dense<0.000000e+00> : vector<256x8xf32>
    %86 = tpu.matmul %85, %83, %cst_116 {dimension_numbers = #tpu.dot_dimension_numbers<[1], [0], [0], [1], [0, 0, 1, 1], [], []>} : vector<256x4xf32>, vector<4x8xf32>, vector<256x8xf32> -> vector<256x8xf32>
    %87 = arith.addf %78, %86 : vector<256x8xf32>
    %88 = vector.broadcast %5 : vector<1x8xf32> to vector<256x8xf32>
    %89 = arith.addf %87, %88 : vector<256x8xf32>
    %90 = vector.shape_cast %89 : vector<256x8xf32> to vector<16x16x8xf32>
    %c1_117 = arith.constant 1 : index
    %c0_118 = arith.constant 0 : index
    %c0_119 = arith.constant 0 : index
    %c0_120 = arith.constant 0 : index
    %91 = vector.load %arg4[%c1_117, %c0_118, %c0_119, %c0_120] : memref<4x16x16x8xf32, #tpu.memory_space<vmem>>, vector<1x16x16x8xf32>
    %92 = vector.shape_cast %91 : vector<1x16x16x8xf32> to vector<16x16x8xf32>
    %93 = vector.shape_cast %90 : vector<16x16x8xf32> to vector<1x16x16x8xf32>
    tpu.vector_store %arg4[%c1_117, %c0_118, %c0_119, %c0_120], %93 {strides = array<i32>} : memref<4x16x16x8xf32, #tpu.memory_space<vmem>>, vector<1x16x16x8xf32>,
    %c0_121 = arith.constant 0 : index
    %c0_122 = arith.constant 0 : index
    %c0_123 = arith.constant 0 : index
    %c0_124 = arith.constant 0 : index
    %94 = vector.load %arg2[%c0_121, %c0_122, %c0_123, %c0_124] : memref<3x3x4x8xf32, #tpu.memory_space<vmem>>, vector<1x1x4x8xf32>
    %95 = vector.shape_cast %94 : vector<1x1x4x8xf32> to vector<4x8xf32>
    %c1_125 = arith.constant 1 : index
    %c0_126 = arith.constant 0 : index
    %c0_127 = arith.constant 0 : index
    %c0_128 = arith.constant 0 : index
    %96 = vector.load %arg2[%c1_125, %c0_126, %c0_127, %c0_128] : memref<3x3x4x8xf32, #tpu.memory_space<vmem>>, vector<1x1x4x8xf32>
    %97 = vector.shape_cast %96 : vector<1x1x4x8xf32> to vector<4x8xf32>
    %98 = arith.addf %95, %97 : vector<4x8xf32>
    %c1_129 = arith.constant 1 : index
    %c0_130 = arith.constant 0 : index
    %c0_131 = arith.constant 0 : index
    %99 = vector.load %arg5[%c1_129, %c0_130, %c0_131] : memref<18x18x4xf32, #tpu.memory_space<vmem>>, vector<16x16x4xf32>
    %100 = vector.shape_cast %99 : vector<16x16x4xf32> to vector<256x4xf32>
    %cst_132 = arith.constant dense<0.000000e+00> : vector<256x8xf32>
    %101 = tpu.matmul %100, %98, %cst_132 {dimension_numbers = #tpu.dot_dimension_numbers<[1], [0], [0], [1], [0, 0, 1, 1], [], []>} : vector<256x4xf32>, vector<4x8xf32>, vector<256x8xf32> -> vector<256x8xf32>
    %c0_133 = arith.constant 0 : index
    %c1_134 = arith.constant 1 : index
    %c0_135 = arith.constant 0 : index
    %c0_136 = arith.constant 0 : index
    %102 = vector.load %arg2[%c0_133, %c1_134, %c0_135, %c0_136] : memref<3x3x4x8xf32, #tpu.memory_space<vmem>>, vector<1x1x4x8xf32>
    %103 = vector.shape_cast %102 : vector<1x1x4x8xf32> to vector<4x8xf32>
    %c0_137 = arith.constant 0 : index
    %c2_138 = arith.constant 2 : index
    %c0_139 = arith.constant 0 : index
    %c0_140 = arith.constant 0 : index
    %104 = vector.load %arg2[%c0_137, %c2_138, %c0_139, %c0_140] : memref<3x3x4x8xf32, #tpu.memory_space<vmem>>, vector<1x1x4x8xf32>
    %105 = vector.shape_cast %104 : vector<1x1x4x8xf32> to vector<4x8xf32>
    %106 = arith.addf %103, %105 : vector<4x8xf32>
    %c1_141 = arith.constant 1 : index
    %c1_142 = arith.constant 1 : index
    %c0_143 = arith.constant 0 : index
    %c0_144 = arith.constant 0 : index
    %107 = vector.load %arg2[%c1_141, %c1_142, %c0_143, %c0_144] : memref<3x3x4x8xf32, #tpu.memory_space<vmem>>, vector<1x1x4x8xf32>
    %108 = vector.shape_cast %107 : vector<1x1x4x8xf32> to vector<4x8xf32>
    %109 = arith.addf %106, %108 : vector<4x8xf32>
    %c1_145 = arith.constant 1 : index
    %c2_146 = arith.constant 2 : index
    %c0_147 = arith.constant 0 : index
    %c0_148 = arith.constant 0 : index
    %110 = vector.load %arg2[%c1_145, %c2_146, %c0_147, %c0_148] : memref<3x3x4x8xf32, #tpu.memory_space<vmem>>, vector<1x1x4x8xf32>
    %111 = vector.shape_cast %110 : vector<1x1x4x8xf32> to vector<4x8xf32>
    %112 = arith.addf %109, %111 : vector<4x8xf32>
    %c1_149 = arith.constant 1 : index
    %c1_150 = arith.constant 1 : index
    %c0_151 = arith.constant 0 : index
    %113 = vector.load %arg5[%c1_149, %c1_150, %c0_151] : memref<18x18x4xf32, #tpu.memory_space<vmem>>, vector<16x16x4xf32>
    %114 = vector.shape_cast %113 : vector<16x16x4xf32> to vector<256x4xf32>
    %cst_152 = arith.constant dense<0.000000e+00> : vector<256x8xf32>
    %115 = tpu.matmul %114, %112, %cst_152 {dimension_numbers = #tpu.dot_dimension_numbers<[1], [0], [0], [1], [0, 0, 1, 1], [], []>} : vector<256x4xf32>, vector<4x8xf32>, vector<256x8xf32> -> vector<256x8xf32>
    %116 = arith.addf %101, %115 : vector<256x8xf32>
    %c2_153 = arith.constant 2 : index
    %c0_154 = arith.constant 0 : index
    %c0_155 = arith.constant 0 : index
    %c0_156 = arith.constant 0 : index
    %117 = vector.load %arg2[%c2_153, %c0_154, %c0_155, %c0_156] : memref<3x3x4x8xf32, #tpu.memory_space<vmem>>, vector<1x1x4x8xf32>
    %118 = vector.shape_cast %117 : vector<1x1x4x8xf32> to vector<4x8xf32>
    %c2_157 = arith.constant 2 : index
    %c0_158 = arith.constant 0 : index
    %c0_159 = arith.constant 0 : index
    %119 = vector.load %arg5[%c2_157, %c0_158, %c0_159] : memref<18x18x4xf32, #tpu.memory_space<vmem>>, vector<16x16x4xf32>
    %120 = vector.shape_cast %119 : vector<16x16x4xf32> to vector<256x4xf32>
    %cst_160 = arith.constant dense<0.000000e+00> : vector<256x8xf32>
    %121 = tpu.matmul %120, %118, %cst_160 {dimension_numbers = #tpu.dot_dimension_numbers<[1], [0], [0], [1], [0, 0, 1, 1], [], []>} : vector<256x4xf32>, vector<4x8xf32>, vector<256x8xf32> -> vector<256x8xf32>
    %122 = arith.addf %116, %121 : vector<256x8xf32>
    %c2_161 = arith.constant 2 : index
    %c1_162 = arith.constant 1 : index
    %c0_163 = arith.constant 0 : index
    %c0_164 = arith.constant 0 : index
    %123 = vector.load %arg2[%c2_161, %c1_162, %c0_163, %c0_164] : memref<3x3x4x8xf32, #tpu.memory_space<vmem>>, vector<1x1x4x8xf32>
    %124 = vector.shape_cast %123 : vector<1x1x4x8xf32> to vector<4x8xf32>
    %c2_165 = arith.constant 2 : index
    %c2_166 = arith.constant 2 : index
    %c0_167 = arith.constant 0 : index
    %c0_168 = arith.constant 0 : index
    %125 = vector.load %arg2[%c2_165, %c2_166, %c0_167, %c0_168] : memref<3x3x4x8xf32, #tpu.memory_space<vmem>>, vector<1x1x4x8xf32>
    %126 = vector.shape_cast %125 : vector<1x1x4x8xf32> to vector<4x8xf32>
    %127 = arith.addf %124, %126 : vector<4x8xf32>
    %c2_169 = arith.constant 2 : index
    %c1_170 = arith.constant 1 : index
    %c0_171 = arith.constant 0 : index
    %128 = vector.load %arg5[%c2_169, %c1_170, %c0_171] : memref<18x18x4xf32, #tpu.memory_space<vmem>>, vector<16x16x4xf32>
    %129 = vector.shape_cast %128 : vector<16x16x4xf32> to vector<256x4xf32>
    %cst_172 = arith.constant dense<0.000000e+00> : vector<256x8xf32>
    %130 = tpu.matmul %129, %127, %cst_172 {dimension_numbers = #tpu.dot_dimension_numbers<[1], [0], [0], [1], [0, 0, 1, 1], [], []>} : vector<256x4xf32>, vector<4x8xf32>, vector<256x8xf32> -> vector<256x8xf32>
    %131 = arith.addf %122, %130 : vector<256x8xf32>
    %132 = vector.broadcast %5 : vector<1x8xf32> to vector<256x8xf32>
    %133 = arith.addf %131, %132 : vector<256x8xf32>
    %134 = vector.shape_cast %133 : vector<256x8xf32> to vector<16x16x8xf32>
    %c2_173 = arith.constant 2 : index
    %c0_174 = arith.constant 0 : index
    %c0_175 = arith.constant 0 : index
    %c0_176 = arith.constant 0 : index
    %135 = vector.load %arg4[%c2_173, %c0_174, %c0_175, %c0_176] : memref<4x16x16x8xf32, #tpu.memory_space<vmem>>, vector<1x16x16x8xf32>
    %136 = vector.shape_cast %135 : vector<1x16x16x8xf32> to vector<16x16x8xf32>
    %137 = vector.shape_cast %134 : vector<16x16x8xf32> to vector<1x16x16x8xf32>
    tpu.vector_store %arg4[%c2_173, %c0_174, %c0_175, %c0_176], %137 {strides = array<i32>} : memref<4x16x16x8xf32, #tpu.memory_space<vmem>>, vector<1x16x16x8xf32>,
    %c0_177 = arith.constant 0 : index
    %c0_178 = arith.constant 0 : index
    %c0_179 = arith.constant 0 : index
    %c0_180 = arith.constant 0 : index
    %138 = vector.load %arg2[%c0_177, %c0_178, %c0_179, %c0_180] : memref<3x3x4x8xf32, #tpu.memory_space<vmem>>, vector<1x1x4x8xf32>
    %139 = vector.shape_cast %138 : vector<1x1x4x8xf32> to vector<4x8xf32>
    %c0_181 = arith.constant 0 : index
    %c1_182 = arith.constant 1 : index
    %c0_183 = arith.constant 0 : index
    %c0_184 = arith.constant 0 : index
    %140 = vector.load %arg2[%c0_181, %c1_182, %c0_183, %c0_184] : memref<3x3x4x8xf32, #tpu.memory_space<vmem>>, vector<1x1x4x8xf32>
    %141 = vector.shape_cast %140 : vector<1x1x4x8xf32> to vector<4x8xf32>
    %142 = arith.addf %139, %141 : vector<4x8xf32>
    %c1_185 = arith.constant 1 : index
    %c0_186 = arith.constant 0 : index
    %c0_187 = arith.constant 0 : index
    %c0_188 = arith.constant 0 : index
    %143 = vector.load %arg2[%c1_185, %c0_186, %c0_187, %c0_188] : memref<3x3x4x8xf32, #tpu.memory_space<vmem>>, vector<1x1x4x8xf32>
    %144 = vector.shape_cast %143 : vector<1x1x4x8xf32> to vector<4x8xf32>
    %145 = arith.addf %142, %144 : vector<4x8xf32>
    %c1_189 = arith.constant 1 : index
    %c1_190 = arith.constant 1 : index
    %c0_191 = arith.constant 0 : index
    %c0_192 = arith.constant 0 : index
    %146 = vector.load %arg2[%c1_189, %c1_190, %c0_191, %c0_192] : memref<3x3x4x8xf32, #tpu.memory_space<vmem>>, vector<1x1x4x8xf32>
    %147 = vector.shape_cast %146 : vector<1x1x4x8xf32> to vector<4x8xf32>
    %148 = arith.addf %145, %147 : vector<4x8xf32>
    %c1_193 = arith.constant 1 : index
    %c1_194 = arith.constant 1 : index
    %c0_195 = arith.constant 0 : index
    %149 = vector.load %arg5[%c1_193, %c1_194, %c0_195] : memref<18x18x4xf32, #tpu.memory_space<vmem>>, vector<16x16x4xf32>
    %150 = vector.shape_cast %149 : vector<16x16x4xf32> to vector<256x4xf32>
    %cst_196 = arith.constant dense<0.000000e+00> : vector<256x8xf32>
    %151 = tpu.matmul %150, %148, %cst_196 {dimension_numbers = #tpu.dot_dimension_numbers<[1], [0], [0], [1], [0, 0, 1, 1], [], []>} : vector<256x4xf32>, vector<4x8xf32>, vector<256x8xf32> -> vector<256x8xf32>
    %c0_197 = arith.constant 0 : index
    %c2_198 = arith.constant 2 : index
    %c0_199 = arith.constant 0 : index
    %c0_200 = arith.constant 0 : index
    %152 = vector.load %arg2[%c0_197, %c2_198, %c0_199, %c0_200] : memref<3x3x4x8xf32, #tpu.memory_space<vmem>>, vector<1x1x4x8xf32>
    %153 = vector.shape_cast %152 : vector<1x1x4x8xf32> to vector<4x8xf32>
    %c1_201 = arith.constant 1 : index
    %c2_202 = arith.constant 2 : index
    %c0_203 = arith.constant 0 : index
    %c0_204 = arith.constant 0 : index
    %154 = vector.load %arg2[%c1_201, %c2_202, %c0_203, %c0_204] : memref<3x3x4x8xf32, #tpu.memory_space<vmem>>, vector<1x1x4x8xf32>
    %155 = vector.shape_cast %154 : vector<1x1x4x8xf32> to vector<4x8xf32>
    %156 = arith.addf %153, %155 : vector<4x8xf32>
    %c1_205 = arith.constant 1 : index
    %c2_206 = arith.constant 2 : index
    %c0_207 = arith.constant 0 : index
    %157 = vector.load %arg5[%c1_205, %c2_206, %c0_207] : memref<18x18x4xf32, #tpu.memory_space<vmem>>, vector<16x16x4xf32>
    %158 = vector.shape_cast %157 : vector<16x16x4xf32> to vector<256x4xf32>
    %cst_208 = arith.constant dense<0.000000e+00> : vector<256x8xf32>
    %159 = tpu.matmul %158, %156, %cst_208 {dimension_numbers = #tpu.dot_dimension_numbers<[1], [0], [0], [1], [0, 0, 1, 1], [], []>} : vector<256x4xf32>, vector<4x8xf32>, vector<256x8xf32> -> vector<256x8xf32>
    %160 = arith.addf %151, %159 : vector<256x8xf32>
    %c2_209 = arith.constant 2 : index
    %c0_210 = arith.constant 0 : index
    %c0_211 = arith.constant 0 : index
    %c0_212 = arith.constant 0 : index
    %161 = vector.load %arg2[%c2_209, %c0_210, %c0_211, %c0_212] : memref<3x3x4x8xf32, #tpu.memory_space<vmem>>, vector<1x1x4x8xf32>
    %162 = vector.shape_cast %161 : vector<1x1x4x8xf32> to vector<4x8xf32>
    %c2_213 = arith.constant 2 : index
    %c1_214 = arith.constant 1 : index
    %c0_215 = arith.constant 0 : index
    %c0_216 = arith.constant 0 : index
    %163 = vector.load %arg2[%c2_213, %c1_214, %c0_215, %c0_216] : memref<3x3x4x8xf32, #tpu.memory_space<vmem>>, vector<1x1x4x8xf32>
    %164 = vector.shape_cast %163 : vector<1x1x4x8xf32> to vector<4x8xf32>
    %165 = arith.addf %162, %164 : vector<4x8xf32>
    %c2_217 = arith.constant 2 : index
    %c1_218 = arith.constant 1 : index
    %c0_219 = arith.constant 0 : index
    %166 = vector.load %arg5[%c2_217, %c1_218, %c0_219] : memref<18x18x4xf32, #tpu.memory_space<vmem>>, vector<16x16x4xf32>
    %167 = vector.shape_cast %166 : vector<16x16x4xf32> to vector<256x4xf32>
    %cst_220 = arith.constant dense<0.000000e+00> : vector<256x8xf32>
    %168 = tpu.matmul %167, %165, %cst_220 {dimension_numbers = #tpu.dot_dimension_numbers<[1], [0], [0], [1], [0, 0, 1, 1], [], []>} : vector<256x4xf32>, vector<4x8xf32>, vector<256x8xf32> -> vector<256x8xf32>
    %169 = arith.addf %160, %168 : vector<256x8xf32>
    %c2_221 = arith.constant 2 : index
    %c2_222 = arith.constant 2 : index
    %c0_223 = arith.constant 0 : index
    %c0_224 = arith.constant 0 : index
    %170 = vector.load %arg2[%c2_221, %c2_222, %c0_223, %c0_224] : memref<3x3x4x8xf32, #tpu.memory_space<vmem>>, vector<1x1x4x8xf32>
    %171 = vector.shape_cast %170 : vector<1x1x4x8xf32> to vector<4x8xf32>
    %c2_225 = arith.constant 2 : index
    %c2_226 = arith.constant 2 : index
    %c0_227 = arith.constant 0 : index
    %172 = vector.load %arg5[%c2_225, %c2_226, %c0_227] : memref<18x18x4xf32, #tpu.memory_space<vmem>>, vector<16x16x4xf32>
    %173 = vector.shape_cast %172 : vector<16x16x4xf32> to vector<256x4xf32>
    %cst_228 = arith.constant dense<0.000000e+00> : vector<256x8xf32>
    %174 = tpu.matmul %173, %171, %cst_228 {dimension_numbers = #tpu.dot_dimension_numbers<[1], [0], [0], [1], [0, 0, 1, 1], [], []>} : vector<256x4xf32>, vector<4x8xf32>, vector<256x8xf32> -> vector<256x8xf32>
    %175 = arith.addf %169, %174 : vector<256x8xf32>
    %176 = vector.broadcast %5 : vector<1x8xf32> to vector<256x8xf32>
    %177 = arith.addf %175, %176 : vector<256x8xf32>
    %178 = vector.shape_cast %177 : vector<256x8xf32> to vector<16x16x8xf32>
    %c3 = arith.constant 3 : index
    %c0_229 = arith.constant 0 : index
    %c0_230 = arith.constant 0 : index
    %c0_231 = arith.constant 0 : index
    %179 = vector.load %arg4[%c3, %c0_229, %c0_230, %c0_231] : memref<4x16x16x8xf32, #tpu.memory_space<vmem>>, vector<1x16x16x8xf32>
    %180 = vector.shape_cast %179 : vector<1x16x16x8xf32> to vector<16x16x8xf32>
    %181 = vector.shape_cast %178 : vector<16x16x8xf32> to vector<1x16x16x8xf32>
    tpu.vector_store %arg4[%c3, %c0_229, %c0_230, %c0_231], %181 {strides = array<i32>} : memref<4x16x16x8xf32, #tpu.memory_space<vmem>>, vector<1x16x16x8xf32>,
    return
  }
  func.func @transform_0(%arg0: i32) -> (i32, i32, i32, i32) {
    %c0_i32 = arith.constant 0 : i32
    %c0_i32_0 = arith.constant 0 : i32
    %c0_i32_1 = arith.constant 0 : i32
    %c0_i32_2 = arith.constant 0 : i32
    return %arg0, %c0_i32, %c0_i32_0, %c0_i32_1 : i32, i32, i32, i32
  }
  func.func @transform_1(%arg0: i32) -> (i32, i32, i32, i32) {
    %c0_i32 = arith.constant 0 : i32
    %c0_i32_0 = arith.constant 0 : i32
    %c0_i32_1 = arith.constant 0 : i32
    %c0_i32_2 = arith.constant 0 : i32
    %c0_i32_3 = arith.constant 0 : i32
    return %c0_i32, %c0_i32_0, %c0_i32_1, %c0_i32_2 : i32, i32, i32, i32
  }
  func.func @transform_2(%arg0: i32) -> (i32, i32) {
    %c0_i32 = arith.constant 0 : i32
    %c0_i32_0 = arith.constant 0 : i32
    %c0_i32_1 = arith.constant 0 : i32
    return %c0_i32, %c0_i32_0 : i32, i32
  }
  func.func @transform_3(%arg0: i32) -> (i32, i32, i32, i32) {
    %c0_i32 = arith.constant 0 : i32
    %c0_i32_0 = arith.constant 0 : i32
    %c0_i32_1 = arith.constant 0 : i32
    %c0_i32_2 = arith.constant 0 : i32
    return %arg0, %c0_i32, %c0_i32_0, %c0_i32_1 : i32, i32, i32, i32
  }
}

</mosaic_0001>

<llo_original>
// kernel: tpu_custom_call.1
$region0: #{tpu_custom_call.1}
  #allocation0 [shape = 'u32[]', space=smem, size = 0x4, offset = 0x4, fixed_abs, tag = 'smem constant byte address 0x4 - core index']
  #allocation1 [shape = 'u32[144,128]{1,0:T(1,128)}', space=vmem, size = 0x12000, scoped, tag = 'internal scratch']
  #allocation2 [shape = 'f32[18,18,4]{2,1,0:T(8,128)}', space=vmem, size = 0x36000, scoped, tag = 'scratch operand']
  %s0 = inlined_call_operand.vmem [shape: f32[2,16,16,4], index: 0, kind: input, shape index: {}]
  %s1 = inlined_call_operand.vmem [shape: f32[3,3,4,8], index: 1, kind: input, shape index: {}]
  %s2 = inlined_call_operand.vmem [shape: f32[1,8], index: 2, kind: input, shape index: {}]
  %s3 = inlined_call_operand.vmem [shape: f32[8,16,16,8], index: 3, kind: output, shape index: {}]
  %s4 = sld [smem:[#allocation0]]
  $region45: #{tpu_custom_call.1} parent=0
    _
  %s6 = ssub.s32 1, %s4
  %s7 = scalar_select 0, %s6, %s4
  loop: start=0, step=1, limit=4
  $region2: #{tpu_custom_call.1} parent=0 // loop_pre_header
    _
  $region3: #{tpu_custom_call.1} parent=0 // loop_header
    %s9 = sphi 0, %s13
    %p10 = scmp.ge.s32.totalorder %s9, 4
    %s19 = sphi 0, %s21
    %s22 = sphi 0, %s19
    %s23 = sphi 0, %s22
    %s39 = sphi 0, %s23
    %s43 = sphi 0, %s43
    %s45 = sphi 0, %s43
    %s46 = sphi 0, %s45
    %s60 = sphi 0, %s46
    %s64 = sphi 0, %s64
    %s66 = sphi 0, %s64
    %s67 = sphi 0, %s66
    %s81 = sphi 0, %s67
    %s87 = sphi 0, %s89
    %s90 = sphi 0, %s87
    %s91 = sphi 0, %s90
    %s107 = sphi 0, %s91
  $region4: #{tpu_custom_call.1} parent=0 // loop_header_branch
    %12 = sbr.rel (%p10) target = $region8
  $region5: #{tpu_custom_call.1} parent=0 // loop_body
    %s14 = ssub.s32 %s9, 1
    %s15 = ssub.s32 %s9, 2
    %s16 = sadd.s32 %s9, 1
    %s17 = ssub.s32 %s9, %s16
    %p18 = scmp.eq.s32.totalorder %s17, 0
    %s20 = sadd.s32 %s19, 1
    %s21 = scalar_select %p18, %s19, %s20
    %p24 = pneg %p18
    %p25 = scmp.eq.s32.totalorder %s9, 1
    %p26 = por %p24, %p25
    %p27 = scmp.ne.s32.totalorder %s19, %s22
    %p28 = scmp.eq.s32.totalorder %s9, 0
    %p29 = por %p27, %p28
    %p30 = scmp.ne.s32.totalorder %s19, %s22
    %p31 = scmp.eq.s32.totalorder %s14, 1
    %p32 = por %p30, %p31
    %p33 = scmp.ne.s32.totalorder %s22, %s23
    %p34 = scmp.eq.s32.totalorder %s14, 0
    %p35 = por %p33, %p34
    %p36 = scmp.ne.s32.totalorder %s22, %s23
    %p37 = scmp.eq.s32.totalorder %s15, 1
    %p38 = por %p36, %p37
    %p40 = scmp.ne.s32.totalorder %s23, %s39
    %p41 = scmp.eq.s32.totalorder %s15, 0
    %p42 = por %p40, %p41
    %s44 = sadd.s32 %s43, 1
    %p47 = scmp.eq.s32.totalorder %s9, 1
    %p48 = scmp.ne.s32.totalorder %s43, %s45
    %p49 = scmp.eq.s32.totalorder %s9, 0
    %p50 = por %p48, %p49
    %p51 = scmp.ne.s32.totalorder %s43, %s45
    %p52 = scmp.eq.s32.totalorder %s14, 1
    %p53 = por %p51, %p52
    %p54 = scmp.ne.s32.totalorder %s45, %s46
    %p55 = scmp.eq.s32.totalorder %s14, 0
    %p56 = por %p54, %p55
    %p57 = scmp.ne.s32.totalorder %s45, %s46
    %p58 = scmp.eq.s32.totalorder %s15, 1
    %p59 = por %p57, %p58
    %p61 = scmp.ne.s32.totalorder %s46, %s60
    %p62 = scmp.eq.s32.totalorder %s15, 0
    %p63 = por %p61, %p62
    %s65 = sadd.s32 %s64, 1
    %p68 = scmp.eq.s32.totalorder %s9, 1
    %p69 = scmp.ne.s32.totalorder %s64, %s66
    %p70 = scmp.eq.s32.totalorder %s9, 0
    %p71 = por %p69, %p70
    %p72 = scmp.ne.s32.totalorder %s64, %s66
    %p73 = scmp.eq.s32.totalorder %s14, 1
    %p74 = por %p72, %p73
    %p75 = scmp.ne.s32.totalorder %s66, %s67
    %p76 = scmp.eq.s32.totalorder %s14, 0
    %p77 = por %p75, %p76
    %p78 = scmp.ne.s32.totalorder %s66, %s67
    %p79 = scmp.eq.s32.totalorder %s15, 1
    %p80 = por %p78, %p79
    %p82 = scmp.ne.s32.totalorder %s67, %s81
    %p83 = scmp.eq.s32.totalorder %s15, 0
    %p84 = por %p82, %p83
    %s85 = ssub.s32 %s9, %s16
    %p86 = scmp.eq.s32.totalorder %s85, 0
    %s88 = sadd.s32 %s87, 1
    %s89 = scalar_select %p86, %s87, %s88
    %p92 = pneg %p86
    %p93 = scmp.eq.s32.totalorder %s9, 1
    %p94 = por %p92, %p93
    %p95 = scmp.ne.s32.totalorder %s87, %s90
    %p96 = scmp.eq.s32.totalorder %s9, 0
    %p97 = por %p95, %p96
    %p98 = scmp.ne.s32.totalorder %s87, %s90
    %p99 = scmp.eq.s32.totalorder %s14, 1
    %p100 = por %p98, %p99
    %p101 = scmp.ne.s32.totalorder %s90, %s91
    %p102 = scmp.eq.s32.totalorder %s14, 0
    %p103 = por %p101, %p102
    %p104 = scmp.ne.s32.totalorder %s90, %s91
    %p105 = scmp.eq.s32.totalorder %s15, 1
    %p106 = por %p104, %p105
    %p108 = scmp.ne.s32.totalorder %s91, %s107
    %p109 = scmp.eq.s32.totalorder %s15, 0
    %p110 = por %p108, %p109
    %p111 = scmp.le.s32.totalorder 1, %s9
    %p112 = scmp.lt.s32.totalorder %s9, 3
    %p113 = pnand %p111, %p112
    %p114 = pneg %p113
    // Predicated region
    $region9: #{tpu_custom_call.1} parent=5 // pred_check
      _
    $region10: #{tpu_custom_call.1} parent=5 // pred_check_branch
      %116 = sbr.rel (%p113) target = $region12
    $region11: #{tpu_custom_call.1} parent=5 // pred_region
      %s117 = ssub.s32 %s9, 1
      // Predicated region
      $region13: #{tpu_custom_call.1} parent=11 // pred_check
        %p118 = pneg %p56
      $region14: #{tpu_custom_call.1} parent=11 // pred_check_branch
        %120 = sbr.rel (%p118) target = $region16
      $region15: #{tpu_custom_call.1} parent=11 // pred_region
        _
      $region16: #{tpu_custom_call.1} parent=11 // pred_fallthru
        _
      // Predicated region
      $region17: #{tpu_custom_call.1} parent=11 // pred_check
        %p121 = pneg %p77
      $region18: #{tpu_custom_call.1} parent=11 // pred_check_branch
        %123 = sbr.rel (%p121) target = $region20
      $region19: #{tpu_custom_call.1} parent=11 // pred_region
        _
      $region20: #{tpu_custom_call.1} parent=11 // pred_fallthru
        _
    $region12: #{tpu_custom_call.1} parent=5 // pred_fallthru
      _
    %p124 = scmp.lt.s32.totalorder %s9, 2
    // Predicated region
    $region21: #{tpu_custom_call.1} parent=5 // pred_check
      %p125 = pneg %p124
    $region22: #{tpu_custom_call.1} parent=5 // pred_check_branch
      %127 = sbr.rel (%p125) target = $region24
    $region23: #{tpu_custom_call.1} parent=5 // pred_region
      // Predicated region
      $region25: #{tpu_custom_call.1} parent=23 // pred_check
        %p128 = pneg %p29
      $region26: #{tpu_custom_call.1} parent=23 // pred_check_branch
        %130 = sbr.rel (%p128) target = $region28
      $region27: #{tpu_custom_call.1} parent=23 // pred_region
        %p131 = scmp.lt.s32.totalorder %s9, 1
        %s132 = scalar_select %p131, %s9, 1
        %s133 = smul.addr %s132, 32
        %s134 = smul.addr %s133, 8
        %s135 = scalar_lea.vmem %s0, %s134
      $region28: #{tpu_custom_call.1} parent=23 // pred_fallthru
        _
    $region24: #{tpu_custom_call.1} parent=5 // pred_fallthru
      _
    %p136 = scmp.le.s32.totalorder 1, %s9
    %p137 = scmp.lt.s32.totalorder %s9, 3
    %p138 = pnand %p136, %p137
    %p139 = pneg %p138
    // Predicated region
    $region29: #{tpu_custom_call.1} parent=5 // pred_check
      _
    $region30: #{tpu_custom_call.1} parent=5 // pred_check_branch
      %141 = sbr.rel (%p138) target = $region32
    $region31: #{tpu_custom_call.1} parent=5 // pred_region
      %s142 = ssub.s32 %s9, 1
      %p143 = scmp.lt.s32.totalorder %s14, 1
      %s144 = scalar_select %p143, %s14, 1
      %s145 = smul.addr %s144, 32
      %s146 = smul.addr %s145, 8
      %s147 = scalar_lea.vmem %s0, %s146
      %p148 = pneg %p35
      %p149 = pneg %p32
      %p150 = pneg %p56
      %p151 = pneg %p53
      %p152 = pneg %p77
      %p153 = pneg %p74
      %p154 = pneg %p103
      %p155 = pneg %p100
      %s156 = smul.u32 4, %s14
      %p157 = scmp.lt.s32.totalorder %s156, 7
      %s158 = scalar_select %p157, %s156, 7
      %s159 = smul.addr %s158, 32
      %s160 = smul.addr %s159, 8
      %s161 = scalar_lea.vmem %s3, %s160
      %p162 = scmp.lt.s32.totalorder %s14, 1
      %s163 = scalar_select %p162, %s14, 1
      %s164 = smul.addr %s163, 32
      %s165 = smul.addr %s164, 8
      %s166 = scalar_lea.vmem %s0, %s165
      %s167 = smul.u32 4, %s14
      %p168 = scmp.lt.s32.totalorder %s167, 7
      %s169 = scalar_select %p168, %s167, 7
      %s170 = smul.addr %s169, 32
      %s171 = smul.addr %s170, 8
      %s172 = scalar_lea.vmem %s3, %s171
      %s173 = smul.u32 4, %s14
      %vm174 = vcmask 31744
      %175 = vst.msk [vmem:[#allocation2] sm:$0xff] %vm174, 0.0
      %176 = vst.msk [vmem:[#allocation2 + $0x8] sm:$0xff] %vm174, 0.0
      %vm177 = vcmask 25600
      %178 = vst.msk [vmem:[#allocation2 + $0x10] sm:$0x3] %vm177, 0.0
      %179 = vst.msk [vmem:[#allocation2 + $0x18] sm:$0xff] %vm174, 0.0
      %180 = vst.msk [vmem:[#allocation2 + $0x20] sm:$0xff] %vm174, 0.0
      %181 = vst.msk [vmem:[#allocation2 + $0x28] sm:$0x3] %vm177, 0.0
      %182 = vst.msk [vmem:[#allocation2 + $0x30] sm:$0xff] %vm174, 0.0
      %183 = vst.msk [vmem:[#allocation2 + $0x38] sm:$0xff] %vm174, 0.0
      %184 = vst.msk [vmem:[#allocation2 + $0x40] sm:$0x3] %vm177, 0.0
      %185 = vst.msk [vmem:[#allocation2 + $0x48] sm:$0xff] %vm174, 0.0
      %186 = vst.msk [vmem:[#allocation2 + $0x50] sm:$0xff] %vm174, 0.0
      %187 = vst.msk [vmem:[#allocation2 + $0x58] sm:$0x3] %vm177, 0.0
      %188 = vst.msk [vmem:[#allocation2 + $0x60] sm:$0xff] %vm174, 0.0
      %189 = vst.msk [vmem:[#allocation2 + $0x68] sm:$0xff] %vm174, 0.0
      %190 = vst.msk [vmem:[#allocation2 + $0x70] sm:$0x3] %vm177, 0.0
      %191 = vst.msk [vmem:[#allocation2 + $0x78] sm:$0xff] %vm174, 0.0
      %192 = vst.msk [vmem:[#allocation2 + $0x80] sm:$0xff] %vm174, 0.0
      %193 = vst.msk [vmem:[#allocation2 + $0x88] sm:$0x3] %vm177, 0.0
      %194 = vst.msk [vmem:[#allocation2 + $0x90] sm:$0xff] %vm174, 0.0
      %195 = vst.msk [vmem:[#allocation2 + $0x98] sm:$0xff] %vm174, 0.0
      %196 = vst.msk [vmem:[#allocation2 + $0xa0] sm:$0x3] %vm177, 0.0
      %197 = vst.msk [vmem:[#allocation2 + $0xa8] sm:$0xff] %vm174, 0.0
      %198 = vst.msk [vmem:[#allocation2 + $0xb0] sm:$0xff] %vm174, 0.0
      %199 = vst.msk [vmem:[#allocation2 + $0xb8] sm:$0x3] %vm177, 0.0
      %200 = vst.msk [vmem:[#allocation2 + $0xc0] sm:$0xff] %vm174, 0.0
      %201 = vst.msk [vmem:[#allocation2 + $0xc8] sm:$0xff] %vm174, 0.0
      %202 = vst.msk [vmem:[#allocation2 + $0xd0] sm:$0x3] %vm177, 0.0
      %203 = vst.msk [vmem:[#allocation2 + $0xd8] sm:$0xff] %vm174, 0.0
      %204 = vst.msk [vmem:[#allocation2 + $0xe0] sm:$0xff] %vm174, 0.0
      %205 = vst.msk [vmem:[#allocation2 + $0xe8] sm:$0x3] %vm177, 0.0
      %206 = vst.msk [vmem:[#allocation2 + $0xf0] sm:$0xff] %vm174, 0.0
      %207 = vst.msk [vmem:[#allocation2 + $0xf8] sm:$0xff] %vm174, 0.0
      %208 = vst.msk [vmem:[#allocation2 + $0x100] sm:$0x3] %vm177, 0.0
      %209 = vst.msk [vmem:[#allocation2 + $0x108] sm:$0xff] %vm174, 0.0
      %210 = vst.msk [vmem:[#allocation2 + $0x110] sm:$0xff] %vm174, 0.0
      %211 = vst.msk [vmem:[#allocation2 + $0x118] sm:$0x3] %vm177, 0.0
      %212 = vst.msk [vmem:[#allocation2 + $0x120] sm:$0xff] %vm174, 0.0
      %213 = vst.msk [vmem:[#allocation2 + $0x128] sm:$0xff] %vm174, 0.0
      %214 = vst.msk [vmem:[#allocation2 + $0x130] sm:$0x3] %vm177, 0.0
      %215 = vst.msk [vmem:[#allocation2 + $0x138] sm:$0xff] %vm174, 0.0
      %216 = vst.msk [vmem:[#allocation2 + $0x140] sm:$0xff] %vm174, 0.0
      %217 = vst.msk [vmem:[#allocation2 + $0x148] sm:$0x3] %vm177, 0.0
      %218 = vst.msk [vmem:[#allocation2 + $0x150] sm:$0xff] %vm174, 0.0
      %219 = vst.msk [vmem:[#allocation2 + $0x158] sm:$0xff] %vm174, 0.0
      %220 = vst.msk [vmem:[#allocation2 + $0x160] sm:$0x3] %vm177, 0.0
      %221 = vst.msk [vmem:[#allocation2 + $0x168] sm:$0xff] %vm174, 0.0
      %222 = vst.msk [vmem:[#allocation2 + $0x170] sm:$0xff] %vm174, 0.0
      %223 = vst.msk [vmem:[#allocation2 + $0x178] sm:$0x3] %vm177, 0.0
      %224 = vst.msk [vmem:[#allocation2 + $0x180] sm:$0xff] %vm174, 0.0
      %225 = vst.msk [vmem:[#allocation2 + $0x188] sm:$0xff] %vm174, 0.0
      %226 = vst.msk [vmem:[#allocation2 + $0x190] sm:$0x3] %vm177, 0.0
      %227 = vst.msk [vmem:[#allocation2 + $0x198] sm:$0xff] %vm174, 0.0
      %228 = vst.msk [vmem:[#allocation2 + $0x1a0] sm:$0xff] %vm174, 0.0
      %229 = vst.msk [vmem:[#allocation2 + $0x1a8] sm:$0x3] %vm177, 0.0
      %v230 = vld [vmem:[%s166] sm:$0xff]
      %v231 = vld [vmem:[%s166 + $0x8] sm:$0xff]
      %v232 = vld [vmem:[%s166 + $0x10] sm:$0xff]
      %v233 = vld [vmem:[%s166 + $0x18] sm:$0xff]
      %v234 = vld [vmem:[%s166 + $0x20] sm:$0xff]
      %v235 = vld [vmem:[%s166 + $0x28] sm:$0xff]
      %v236 = vld [vmem:[%s166 + $0x30] sm:$0xff]
      %v237 = vld [vmem:[%s166 + $0x38] sm:$0xff]
      %v238 = vld [vmem:[%s166 + $0x40] sm:$0xff]
      %v239 = vld [vmem:[%s166 + $0x48] sm:$0xff]
      %v240 = vld [vmem:[%s166 + $0x50] sm:$0xff]
      %v241 = vld [vmem:[%s166 + $0x58] sm:$0xff]
      %v242 = vld [vmem:[%s166 + $0x60] sm:$0xff]
      %v243 = vld [vmem:[%s166 + $0x68] sm:$0xff]
      %v244 = vld [vmem:[%s166 + $0x70] sm:$0xff]
      %v245 = vld [vmem:[%s166 + $0x78] sm:$0xff]
      %v246 = vld [vmem:[%s166 + $0x80] sm:$0xff]
      %v247 = vld [vmem:[%s166 + $0x88] sm:$0xff]
      %v248 = vld [vmem:[%s166 + $0x90] sm:$0xff]
      %v249 = vld [vmem:[%s166 + $0x98] sm:$0xff]
      %v250 = vld [vmem:[%s166 + $0xa0] sm:$0xff]
      %v251 = vld [vmem:[%s166 + $0xa8] sm:$0xff]
      %v252 = vld [vmem:[%s166 + $0xb0] sm:$0xff]
      %v253 = vld [vmem:[%s166 + $0xb8] sm:$0xff]
      %v254 = vld [vmem:[%s166 + $0xc0] sm:$0xff]
      %v255 = vld [vmem:[%s166 + $0xc8] sm:$0xff]
      %v256 = vld [vmem:[%s166 + $0xd0] sm:$0xff]
      %v257 = vld [vmem:[%s166 + $0xd8] sm:$0xff]
      %v258 = vld [vmem:[%s166 + $0xe0] sm:$0xff]
      %v259 = vld [vmem:[%s166 + $0xe8] sm:$0xff]
      %v260 = vld [vmem:[%s166 + $0xf0] sm:$0xff]
      %v261 = vld [vmem:[%s166 + $0xf8] sm:$0xff]
      %s262 = scalar_lea.vmem [#allocation2], 24
      %263 = vst.msk [vmem:[%s262 + $0x1] sm:$0xff] %vm174, %v230
      %264 = vst.msk [vmem:[%s262 + $0x9] sm:$0xff] %vm174, %v231
      %265 = vst.msk [vmem:[%s262 + $0x19] sm:$0xff] %vm174, %v232
      %266 = vst.msk [vmem:[%s262 + $0x21] sm:$0xff] %vm174, %v233
      %267 = vst.msk [vmem:[%s262 + $0x31] sm:$0xff] %vm174, %v234
      %268 = vst.msk [vmem:[%s262 + $0x39] sm:$0xff] %vm174, %v235
      %269 = vst.msk [vmem:[%s262 + $0x49] sm:$0xff] %vm174, %v236
      %270 = vst.msk [vmem:[%s262 + $0x51] sm:$0xff] %vm174, %v237
      %271 = vst.msk [vmem:[%s262 + $0x61] sm:$0xff] %vm174, %v238
      %272 = vst.msk [vmem:[%s262 + $0x69] sm:$0xff] %vm174, %v239
      %273 = vst.msk [vmem:[%s262 + $0x79] sm:$0xff] %vm174, %v240
      %274 = vst.msk [vmem:[%s262 + $0x81] sm:$0xff] %vm174, %v241
      %275 = vst.msk [vmem:[%s262 + $0x91] sm:$0xff] %vm174, %v242
      %276 = vst.msk [vmem:[%s262 + $0x99] sm:$0xff] %vm174, %v243
      %277 = vst.msk [vmem:[%s262 + $0xa9] sm:$0xff] %vm174, %v244
      %278 = vst.msk [vmem:[%s262 + $0xb1] sm:$0xff] %vm174, %v245
      %279 = vst.msk [vmem:[%s262 + $0xc1] sm:$0xff] %vm174, %v246
      %280 = vst.msk [vmem:[%s262 + $0xc9] sm:$0xff] %vm174, %v247
      %281 = vst.msk [vmem:[%s262 + $0xd9] sm:$0xff] %vm174, %v248
      %282 = vst.msk [vmem:[%s262 + $0xe1] sm:$0xff] %vm174, %v249
      %283 = vst.msk [vmem:[%s262 + $0xf1] sm:$0xff] %vm174, %v250
      %284 = vst.msk [vmem:[%s262 + $0xf9] sm:$0xff] %vm174, %v251
      %285 = vst.msk [vmem:[%s262 + $0x109] sm:$0xff] %vm174, %v252
      %286 = vst.msk [vmem:[%s262 + $0x111] sm:$0xff] %vm174, %v253
      %287 = vst.msk [vmem:[%s262 + $0x121] sm:$0xff] %vm174, %v254
      %288 = vst.msk [vmem:[%s262 + $0x129] sm:$0xff] %vm174, %v255
      %289 = vst.msk [vmem:[%s262 + $0x139] sm:$0xff] %vm174, %v256
      %290 = vst.msk [vmem:[%s262 + $0x141] sm:$0xff] %vm174, %v257
      %291 = vst.msk [vmem:[%s262 + $0x151] sm:$0xff] %vm174, %v258
      %292 = vst.msk [vmem:[%s262 + $0x159] sm:$0xff] %vm174, %v259
      %293 = vst.msk [vmem:[%s262 + $0x169] sm:$0xff] %vm174, %v260
      %294 = vst.msk [vmem:[%s262 + $0x171] sm:$0xff] %vm174, %v261
      %v295 = vld [vmem:[%s2] sm:$0x1]
      %v296 = vld [vmem:[%s1] sm:$0xf]
      %v297 = vld [vmem:[#allocation2] sm:$0xff]
      %v298 = vld [vmem:[#allocation2 + $0x8] sm:$0xff]
      %v299 = vld [vmem:[#allocation2 + $0x18] sm:$0xff]
      %v300 = vld [vmem:[#allocation2 + $0x20] sm:$0xff]
      %v301 = vld [vmem:[#allocation2 + $0x30] sm:$0xff]
      %v302 = vld [vmem:[#allocation2 + $0x38] sm:$0xff]
      %v303 = vld [vmem:[#allocation2 + $0x48] sm:$0xff]
      %v304 = vld [vmem:[#allocation2 + $0x50] sm:$0xff]
      %v305 = vld [vmem:[#allocation2 + $0x60] sm:$0xff]
      %v306 = vld [vmem:[#allocation2 + $0x68] sm:$0xff]
      %v307 = vld [vmem:[#allocation2 + $0x78] sm:$0xff]
      %v308 = vld [vmem:[#allocation2 + $0x80] sm:$0xff]
      %v309 = vld [vmem:[#allocation2 + $0x90] sm:$0xff]
      %v310 = vld [vmem:[#allocation2 + $0x98] sm:$0xff]
      %v311 = vld [vmem:[#allocation2 + $0xa8] sm:$0xff]
      %v312 = vld [vmem:[#allocation2 + $0xb0] sm:$0xff]
      %v313 = vld [vmem:[#allocation2 + $0xc0] sm:$0xff]
      %v314 = vld [vmem:[#allocation2 + $0xc8] sm:$0xff]
      %v315 = vld [vmem:[#allocation2 + $0xd8] sm:$0xff]
      %v316 = vld [vmem:[#allocation2 + $0xe0] sm:$0xff]
      %v317 = vld [vmem:[#allocation2 + $0xf0] sm:$0xff]
      %v318 = vld [vmem:[#allocation2 + $0xf8] sm:$0xff]
      %v319 = vld [vmem:[#allocation2 + $0x108] sm:$0xff]
      %v320 = vld [vmem:[#allocation2 + $0x110] sm:$0xff]
      %v321 = vld [vmem:[#allocation2 + $0x120] sm:$0xff]
      %v322 = vld [vmem:[#allocation2 + $0x128] sm:$0xff]
      %v323 = vld [vmem:[#allocation2 + $0x138] sm:$0xff]
      %v324 = vld [vmem:[#allocation2 + $0x140] sm:$0xff]
      %v325 = vld [vmem:[#allocation2 + $0x150] sm:$0xff]
      %v326 = vld [vmem:[#allocation2 + $0x158] sm:$0xff]
      %v327 = vld [vmem:[#allocation2 + $0x168] sm:$0xff]
      %v328 = vld [vmem:[#allocation2 + $0x170] sm:$0xff]
      %s329 = scalar_lea.vmem %s1, 4
      %v330 = vld [vmem:[%s329] sm:$0xf]
      %s331 = scalar_lea.vmem %s1, 8
      %v332 = vld [vmem:[%s331] sm:$0xf]
      %v333 = vadd.f32 %v330, %v332
      %v334 = vld [vmem:[#allocation2 + $0x1] sm:$0xff]
      %v335 = vld [vmem:[#allocation2 + $0x9] sm:$0xff]
      %v336 = vld [vmem:[#allocation2 + $0x19] sm:$0xff]
      %v337 = vld [vmem:[#allocation2 + $0x21] sm:$0xff]
      %v338 = vld [vmem:[#allocation2 + $0x31] sm:$0xff]
      %v339 = vld [vmem:[#allocation2 + $0x39] sm:$0xff]
      %v340 = vld [vmem:[#allocation2 + $0x49] sm:$0xff]
      %v341 = vld [vmem:[#allocation2 + $0x51] sm:$0xff]
      %v342 = vld [vmem:[#allocation2 + $0x61] sm:$0xff]
      %v343 = vld [vmem:[#allocation2 + $0x69] sm:$0xff]
      %v344 = vld [vmem:[#allocation2 + $0x79] sm:$0xff]
      %v345 = vld [vmem:[#allocation2 + $0x81] sm:$0xff]
      %v346 = vld [vmem:[#allocation2 + $0x91] sm:$0xff]
      %v347 = vld [vmem:[#allocation2 + $0x99] sm:$0xff]
      %v348 = vld [vmem:[#allocation2 + $0xa9] sm:$0xff]
      %v349 = vld [vmem:[#allocation2 + $0xb1] sm:$0xff]
      %v350 = vld [vmem:[#allocation2 + $0xc1] sm:$0xff]
      %v351 = vld [vmem:[#allocation2 + $0xc9] sm:$0xff]
      %v352 = vld [vmem:[#allocation2 + $0xd9] sm:$0xff]
      %v353 = vld [vmem:[#allocation2 + $0xe1] sm:$0xff]
      %v354 = vld [vmem:[#allocation2 + $0xf1] sm:$0xff]
      %v355 = vld [vmem:[#allocation2 + $0xf9] sm:$0xff]
      %v356 = vld [vmem:[#allocation2 + $0x109] sm:$0xff]
      %v357 = vld [vmem:[#allocation2 + $0x111] sm:$0xff]
      %v358 = vld [vmem:[#allocation2 + $0x121] sm:$0xff]
      %v359 = vld [vmem:[#allocation2 + $0x129] sm:$0xff]
      %v360 = vld [vmem:[#allocation2 + $0x139] sm:$0xff]
      %v361 = vld [vmem:[#allocation2 + $0x141] sm:$0xff]
      %v362 = vld [vmem:[#allocation2 + $0x151] sm:$0xff]
      %v363 = vld [vmem:[#allocation2 + $0x159] sm:$0xff]
      %v364 = vld [vmem:[#allocation2 + $0x169] sm:$0xff]
      %v365 = vld [vmem:[#allocation2 + $0x171] sm:$0xff]
      %v367 = vsel %vm174, %v334, 0
      %v370 = vsel %vm174, %v335, 0
      %v373 = vsel %vm174, %v336, 0
      %v376 = vsel %vm174, %v337, 0
      %v379 = vsel %vm174, %v338, 0
      %v382 = vsel %vm174, %v339, 0
      %v385 = vsel %vm174, %v340, 0
      %v388 = vsel %vm174, %v341, 0
      %v391 = vsel %vm174, %v342, 0
      %v394 = vsel %vm174, %v343, 0
      %v397 = vsel %vm174, %v344, 0
      %v400 = vsel %vm174, %v345, 0
      %v403 = vsel %vm174, %v346, 0
      %v406 = vsel %vm174, %v347, 0
      %v409 = vsel %vm174, %v348, 0
      %v412 = vsel %vm174, %v349, 0
      %v415 = vsel %vm174, %v350, 0
      %v418 = vsel %vm174, %v351, 0
      %v421 = vsel %vm174, %v352, 0
      %v424 = vsel %vm174, %v353, 0
      %v427 = vsel %vm174, %v354, 0
      %v430 = vsel %vm174, %v355, 0
      %v433 = vsel %vm174, %v356, 0
      %v436 = vsel %vm174, %v357, 0
      %v439 = vsel %vm174, %v358, 0
      %v442 = vsel %vm174, %v359, 0
      %v445 = vsel %vm174, %v360, 0
      %v448 = vsel %vm174, %v361, 0
      %v451 = vsel %vm174, %v362, 0
      %v454 = vsel %vm174, %v363, 0
      %v457 = vsel %vm174, %v364, 0
      %v460 = vsel %vm174, %v365, 0
      %vm462 = vcmask 1043456
      %v464 = vsel %vm462, %v333, 0
      %466 = vmatprep.subr.mxu0 0.0
      %467 = vmatpush1.msra.mxu0 0.0
      %468 = vmatprep.subr.mxu0 0.0
      %469 = vmatpush1.msra.mxu0 0.0
      %470 = vmatprep.subr.mxu0 0.0
      %471 = vmatpush1.msra.mxu0 0.0
      %472 = vmatprep.subr.mxu0 0.0
      %473 = vmatpush1.msra.mxu0 0.0
      %474 = vmatprep.subr.mxu0 0.0
      %475 = vmatpush1.msra.mxu0 0.0
      %476 = vmatprep.subr.mxu0 0.0
      %477 = vmatpush1.msra.mxu0 0.0
      %478 = vmatprep.subr.mxu0 0.0
      %479 = vmatpush1.msra.mxu0 0.0
      %480 = vmatprep.subr.mxu0 0.0
      %481 = vmatpush1.msra.mxu0 0.0
      %482 = vmatprep.subr.mxu0 0.0
      %483 = vmatpush1.msra.mxu0 0.0
      %484 = vmatprep.subr.mxu0 0.0
      %485 = vmatpush1.msra.mxu0 0.0
      %486 = vmatprep.subr.mxu0 0.0
      %487 = vmatpush1.msra.mxu0 0.0
      %488 = vmatprep.subr.mxu0 0.0
      %489 = vmatpush1.msra.mxu0 0.0
      %490 = vmatprep.subr.mxu0 0.0
      %491 = vmatpush1.msra.mxu0 0.0
      %492 = vmatprep.subr.mxu0 0.0
      %493 = vmatpush1.msra.mxu0 0.0
      %494 = vmatprep.subr.mxu0 0.0
      %495 = vmatpush1.msra.mxu0 0.0
      %496 = vmatprep.subr.mxu0 0.0
      %497 = vmatpush1.msra.mxu0 %v464
      %498 = vmatprep.subr.mxu0 0.0
      %499 = vmatpush2.msra.mxu0 0.0
      %500 = vmatprep.subr.mxu0 0.0
      %501 = vmatpush2.msra.mxu0 0.0
      %502 = vmatprep.subr.mxu0 0.0
      %503 = vmatpush2.msra.mxu0 0.0
      %504 = vmatprep.subr.mxu0 0.0
      %505 = vmatpush2.msra.mxu0 0.0
      %506 = vmatprep.subr.mxu0 0.0
      %507 = vmatpush2.msra.mxu0 0.0
      %508 = vmatprep.subr.mxu0 0.0
      %509 = vmatpush2.msra.mxu0 0.0
      %510 = vmatprep.subr.mxu0 0.0
      %511 = vmatpush2.msra.mxu0 0.0
      %512 = vmatprep.subr.mxu0 0.0
      %513 = vmatpush2.msra.mxu0 0.0
      %514 = vmatprep.subr.mxu0 0.0
      %515 = vmatpush2.msra.mxu0 0.0
      %516 = vmatprep.subr.mxu0 0.0
      %517 = vmatpush2.msra.mxu0 0.0
      %518 = vmatprep.subr.mxu0 0.0
      %519 = vmatpush2.msra.mxu0 0.0
      %520 = vmatprep.subr.mxu0 0.0
      %521 = vmatpush2.msra.mxu0 0.0
      %522 = vmatprep.subr.mxu0 0.0
      %523 = vmatpush2.msra.mxu0 0.0
      %524 = vmatprep.subr.mxu0 0.0
      %525 = vmatpush2.msra.mxu0 0.0
      %526 = vmatprep.subr.mxu0 0.0
      %527 = vmatpush2.msra.mxu0 0.0
      %528 = vmatprep.subr.mxu0 0.0
      %529 = vmatpush2.msra.mxu0 0.0
      %530 = vmatprep.mubr.f32.mxu0 0.0
      %531 = vmatmul.mubr.f32.gmra.mxu0 %v367
      %v532 = vpop.f32.mrf.mxu0
      %v533 = vadd.f32 0.0, %v532
      %v534 = vpop.f32.mrf.mxu0
      %535 = vmatprep.mubr.f32.mxu0 0.0
      %536 = vmatmul.mubr.f32.gmra.mxu0 %v370
      %v537 = vpop.f32.mrf.mxu0
      %v538 = vadd.f32 0.0, %v537
      %v539 = vpop.f32.mrf.mxu0
      %540 = vmatprep.mubr.f32.mxu0 0.0
      %541 = vmatmul.mubr.f32.gmra.mxu0 %v373
      %v542 = vpop.f32.mrf.mxu0
      %v543 = vadd.f32 0.0, %v542
      %v544 = vpop.f32.mrf.mxu0
      %545 = vmatprep.mubr.f32.mxu0 0.0
      %546 = vmatmul.mubr.f32.gmra.mxu0 %v376
      %v547 = vpop.f32.mrf.mxu0
      %v548 = vadd.f32 0.0, %v547
      %v549 = vpop.f32.mrf.mxu0
      %550 = vmatprep.mubr.f32.mxu0 0.0
      %551 = vmatmul.mubr.f32.gmra.mxu0 %v379
      %v552 = vpop.f32.mrf.mxu0
      %v553 = vadd.f32 0.0, %v552
      %v554 = vpop.f32.mrf.mxu0
      %555 = vmatprep.mubr.f32.mxu0 0.0
      %556 = vmatmul.mubr.f32.gmra.mxu0 %v382
      %v557 = vpop.f32.mrf.mxu0
      %v558 = vadd.f32 0.0, %v557
      %v559 = vpop.f32.mrf.mxu0
      %560 = vmatprep.mubr.f32.mxu0 0.0
      %561 = vmatmul.mubr.f32.gmra.mxu0 %v385
      %v562 = vpop.f32.mrf.mxu0
      %v563 = vadd.f32 0.0, %v562
      %v564 = vpop.f32.mrf.mxu0
      %565 = vmatprep.mubr.f32.mxu0 0.0
      %566 = vmatmul.mubr.f32.gmra.mxu0 %v388
      %v567 = vpop.f32.mrf.mxu0
      %v568 = vadd.f32 0.0, %v567
      %v569 = vpop.f32.mrf.mxu0
      %570 = vmatprep.mubr.f32.mxu0 0.0
      %571 = vmatmul.mubr.f32.gmra.mxu0 %v391
      %v572 = vpop.f32.mrf.mxu0
      %v573 = vadd.f32 0.0, %v572
      %v574 = vpop.f32.mrf.mxu0
      %575 = vmatprep.mubr.f32.mxu0 0.0
      %576 = vmatmul.mubr.f32.gmra.mxu0 %v394
      %v577 = vpop.f32.mrf.mxu0
      %v578 = vadd.f32 0.0, %v577
      %v579 = vpop.f32.mrf.mxu0
      %580 = vmatprep.mubr.f32.mxu0 0.0
      %581 = vmatmul.mubr.f32.gmra.mxu0 %v397
      %v582 = vpop.f32.mrf.mxu0
      %v583 = vadd.f32 0.0, %v582
      %v584 = vpop.f32.mrf.mxu0
      %585 = vmatprep.mubr.f32.mxu0 0.0
      %586 = vmatmul.mubr.f32.gmra.mxu0 %v400
      %v587 = vpop.f32.mrf.mxu0
      %v588 = vadd.f32 0.0, %v587
      %v589 = vpop.f32.mrf.mxu0
      %590 = vmatprep.mubr.f32.mxu0 0.0
      %591 = vmatmul.mubr.f32.gmra.mxu0 %v403
      %v592 = vpop.f32.mrf.mxu0
      %v593 = vadd.f32 0.0, %v592
      %v594 = vpop.f32.mrf.mxu0
      %595 = vmatprep.mubr.f32.mxu0 0.0
      %596 = vmatmul.mubr.f32.gmra.mxu0 %v406
      %v597 = vpop.f32.mrf.mxu0
      %v598 = vadd.f32 0.0, %v597
      %v599 = vpop.f32.mrf.mxu0
      %600 = vmatprep.mubr.f32.mxu0 0.0
      %601 = vmatmul.mubr.f32.gmra.mxu0 %v409
      %v602 = vpop.f32.mrf.mxu0
      %v603 = vadd.f32 0.0, %v602
      %v604 = vpop.f32.mrf.mxu0
      %605 = vmatprep.mubr.f32.mxu0 0.0
      %606 = vmatmul.mubr.f32.gmra.mxu0 %v412
      %v607 = vpop.f32.mrf.mxu0
      %v608 = vadd.f32 0.0, %v607
      %v609 = vpop.f32.mrf.mxu0
      %610 = vmatprep.mubr.f32.mxu0 0.0
      %611 = vmatmul.mubr.f32.gmra.mxu0 %v415
      %v612 = vpop.f32.mrf.mxu0
      %v613 = vadd.f32 0.0, %v612
      %v614 = vpop.f32.mrf.mxu0
      %615 = vmatprep.mubr.f32.mxu0 0.0
      %616 = vmatmul.mubr.f32.gmra.mxu0 %v418
      %v617 = vpop.f32.mrf.mxu0
      %v618 = vadd.f32 0.0, %v617
      %v619 = vpop.f32.mrf.mxu0
      %620 = vmatprep.mubr.f32.mxu0 0.0
      %621 = vmatmul.mubr.f32.gmra.mxu0 %v421
      %v622 = vpop.f32.mrf.mxu0
      %v623 = vadd.f32 0.0, %v622
      %v624 = vpop.f32.mrf.mxu0
      %625 = vmatprep.mubr.f32.mxu0 0.0
      %626 = vmatmul.mubr.f32.gmra.mxu0 %v424
      %v627 = vpop.f32.mrf.mxu0
      %v628 = vadd.f32 0.0, %v627
      %v629 = vpop.f32.mrf.mxu0
      %630 = vmatprep.mubr.f32.mxu0 0.0
      %631 = vmatmul.mubr.f32.gmra.mxu0 %v427
      %v632 = vpop.f32.mrf.mxu0
      %v633 = vadd.f32 0.0, %v632
      %v634 = vpop.f32.mrf.mxu0
      %635 = vmatprep.mubr.f32.mxu0 0.0
      %636 = vmatmul.mubr.f32.gmra.mxu0 %v430
      %v637 = vpop.f32.mrf.mxu0
      %v638 = vadd.f32 0.0, %v637
      %v639 = vpop.f32.mrf.mxu0
      %640 = vmatprep.mubr.f32.mxu0 0.0
      %641 = vmatmul.mubr.f32.gmra.mxu0 %v433
      %v642 = vpop.f32.mrf.mxu0
      %v643 = vadd.f32 0.0, %v642
      %v644 = vpop.f32.mrf.mxu0
      %645 = vmatprep.mubr.f32.mxu0 0.0
      %646 = vmatmul.mubr.f32.gmra.mxu0 %v436
      %v647 = vpop.f32.mrf.mxu0
      %v648 = vadd.f32 0.0, %v647
      %v649 = vpop.f32.mrf.mxu0
      %650 = vmatprep.mubr.f32.mxu0 0.0
      %651 = vmatmul.mubr.f32.gmra.mxu0 %v439
      %v652 = vpop.f32.mrf.mxu0
      %v653 = vadd.f32 0.0, %v652
      %v654 = vpop.f32.mrf.mxu0
      %655 = vmatprep.mubr.f32.mxu0 0.0
      %656 = vmatmul.mubr.f32.gmra.mxu0 %v442
      %v657 = vpop.f32.mrf.mxu0
      %v658 = vadd.f32 0.0, %v657
      %v659 = vpop.f32.mrf.mxu0
      %660 = vmatprep.mubr.f32.mxu0 0.0
      %661 = vmatmul.mubr.f32.gmra.mxu0 %v445
      %v662 = vpop.f32.mrf.mxu0
      %v663 = vadd.f32 0.0, %v662
      %v664 = vpop.f32.mrf.mxu0
      %665 = vmatprep.mubr.f32.mxu0 0.0
      %666 = vmatmul.mubr.f32.gmra.mxu0 %v448
      %v667 = vpop.f32.mrf.mxu0
      %v668 = vadd.f32 0.0, %v667
      %v669 = vpop.f32.mrf.mxu0
      %670 = vmatprep.mubr.f32.mxu0 0.0
      %671 = vmatmul.mubr.f32.gmra.mxu0 %v451
      %v672 = vpop.f32.mrf.mxu0
      %v673 = vadd.f32 0.0, %v672
      %v674 = vpop.f32.mrf.mxu0
      %675 = vmatprep.mubr.f32.mxu0 0.0
      %676 = vmatmul.mubr.f32.gmra.mxu0 %v454
      %v677 = vpop.f32.mrf.mxu0
      %v678 = vadd.f32 0.0, %v677
      %v679 = vpop.f32.mrf.mxu0
      %680 = vmatprep.mubr.f32.mxu0 0.0
      %681 = vmatmul.mubr.f32.gmra.mxu0 %v457
      %v682 = vpop.f32.mrf.mxu0
      %v683 = vadd.f32 0.0, %v682
      %v684 = vpop.f32.mrf.mxu0
      %685 = vmatprep.mubr.f32.mxu0 0.0
      %686 = vmatmul.mubr.f32.gmra.mxu0 %v460
      %v687 = vpop.f32.mrf.mxu0
      %v688 = vadd.f32 0.0, %v687
      %v689 = vpop.f32.mrf.mxu0
      %690 = vdwg.mxu0
      %v692 = vsel %vm174, %v297, 0
      %v695 = vsel %vm174, %v298, 0
      %v698 = vsel %vm174, %v299, 0
      %v701 = vsel %vm174, %v300, 0
      %v704 = vsel %vm174, %v301, 0
      %v707 = vsel %vm174, %v302, 0
      %v710 = vsel %vm174, %v303, 0
      %v713 = vsel %vm174, %v304, 0
      %v716 = vsel %vm174, %v305, 0
      %v719 = vsel %vm174, %v306, 0
      %v722 = vsel %vm174, %v307, 0
      %v725 = vsel %vm174, %v308, 0
      %v728 = vsel %vm174, %v309, 0
      %v731 = vsel %vm174, %v310, 0
      %v734 = vsel %vm174, %v311, 0
      %v737 = vsel %vm174, %v312, 0
      %v740 = vsel %vm174, %v313, 0
      %v743 = vsel %vm174, %v314, 0
      %v746 = vsel %vm174, %v315, 0
      %v749 = vsel %vm174, %v316, 0
      %v752 = vsel %vm174, %v317, 0
      %v755 = vsel %vm174, %v318, 0
      %v758 = vsel %vm174, %v319, 0
      %v761 = vsel %vm174, %v320, 0
      %v764 = vsel %vm174, %v321, 0
      %v767 = vsel %vm174, %v322, 0
      %v770 = vsel %vm174, %v323, 0
      %v773 = vsel %vm174, %v324, 0
      %v776 = vsel %vm174, %v325, 0
      %v779 = vsel %vm174, %v326, 0
      %v782 = vsel %vm174, %v327, 0
      %v785 = vsel %vm174, %v328, 0
      %v788 = vsel %vm462, %v296, 0
      %790 = vmatprep.subr.mxu0 0.0
      %791 = vmatpush1.msra.mxu0 0.0
      %792 = vmatprep.subr.mxu0 0.0
      %793 = vmatpush1.msra.mxu0 0.0
      %794 = vmatprep.subr.mxu0 0.0
      %795 = vmatpush1.msra.mxu0 0.0
      %796 = vmatprep.subr.mxu0 0.0
      %797 = vmatpush1.msra.mxu0 0.0
      %798 = vmatprep.subr.mxu0 0.0
      %799 = vmatpush1.msra.mxu0 0.0
      %800 = vmatprep.subr.mxu0 0.0
      %801 = vmatpush1.msra.mxu0 0.0
      %802 = vmatprep.subr.mxu0 0.0
      %803 = vmatpush1.msra.mxu0 0.0
      %804 = vmatprep.subr.mxu0 0.0
      %805 = vmatpush1.msra.mxu0 0.0
      %806 = vmatprep.subr.mxu0 0.0
      %807 = vmatpush1.msra.mxu0 0.0
      %808 = vmatprep.subr.mxu0 0.0
      %809 = vmatpush1.msra.mxu0 0.0
      %810 = vmatprep.subr.mxu0 0.0
      %811 = vmatpush1.msra.mxu0 0.0
      %812 = vmatprep.subr.mxu0 0.0
      %813 = vmatpush1.msra.mxu0 0.0
      %814 = vmatprep.subr.mxu0 0.0
      %815 = vmatpush1.msra.mxu0 0.0
      %816 = vmatprep.subr.mxu0 0.0
      %817 = vmatpush1.msra.mxu0 0.0
      %818 = vmatprep.subr.mxu0 0.0
      %819 = vmatpush1.msra.mxu0 0.0
      %820 = vmatprep.subr.mxu0 0.0
      %821 = vmatpush1.msra.mxu0 %v788
      %822 = vmatprep.subr.mxu0 0.0
      %823 = vmatpush2.msra.mxu0 0.0
      %824 = vmatprep.subr.mxu0 0.0
      %825 = vmatpush2.msra.mxu0 0.0
      %826 = vmatprep.subr.mxu0 0.0
      %827 = vmatpush2.msra.mxu0 0.0
      %828 = vmatprep.subr.mxu0 0.0
      %829 = vmatpush2.msra.mxu0 0.0
      %830 = vmatprep.subr.mxu0 0.0
      %831 = vmatpush2.msra.mxu0 0.0
      %832 = vmatprep.subr.mxu0 0.0
      %833 = vmatpush2.msra.mxu0 0.0
      %834 = vmatprep.subr.mxu0 0.0
      %835 = vmatpush2.msra.mxu0 0.0
      %836 = vmatprep.subr.mxu0 0.0
      %837 = vmatpush2.msra.mxu0 0.0
      %838 = vmatprep.subr.mxu0 0.0
      %839 = vmatpush2.msra.mxu0 0.0
      %840 = vmatprep.subr.mxu0 0.0
      %841 = vmatpush2.msra.mxu0 0.0
      %842 = vmatprep.subr.mxu0 0.0
      %843 = vmatpush2.msra.mxu0 0.0
      %844 = vmatprep.subr.mxu0 0.0
      %845 = vmatpush2.msra.mxu0 0.0
      %846 = vmatprep.subr.mxu0 0.0
      %847 = vmatpush2.msra.mxu0 0.0
      %848 = vmatprep.subr.mxu0 0.0
      %849 = vmatpush2.msra.mxu0 0.0
      %850 = vmatprep.subr.mxu0 0.0
      %851 = vmatpush2.msra.mxu0 0.0
      %852 = vmatprep.subr.mxu0 0.0
      %853 = vmatpush2.msra.mxu0 0.0
      %854 = vmatprep.mubr.f32.mxu0 0.0
      %855 = vmatmul.mubr.f32.gmra.mxu0 %v692
      %v856 = vpop.f32.mrf.mxu0
      %v857 = vadd.f32 %v533, %v856
      %v858 = vpop.f32.mrf.mxu0
      %859 = vmatprep.mubr.f32.mxu0 0.0
      %860 = vmatmul.mubr.f32.gmra.mxu0 %v695
      %v861 = vpop.f32.mrf.mxu0
      %v862 = vadd.f32 %v538, %v861
      %v863 = vpop.f32.mrf.mxu0
      %864 = vmatprep.mubr.f32.mxu0 0.0
      %865 = vmatmul.mubr.f32.gmra.mxu0 %v698
      %v866 = vpop.f32.mrf.mxu0
      %v867 = vadd.f32 %v543, %v866
      %v868 = vpop.f32.mrf.mxu0
      %869 = vmatprep.mubr.f32.mxu0 0.0
      %870 = vmatmul.mubr.f32.gmra.mxu0 %v701
      %v871 = vpop.f32.mrf.mxu0
      %v872 = vadd.f32 %v548, %v871
      %v873 = vpop.f32.mrf.mxu0
      %874 = vmatprep.mubr.f32.mxu0 0.0
      %875 = vmatmul.mubr.f32.gmra.mxu0 %v704
      %v876 = vpop.f32.mrf.mxu0
      %v877 = vadd.f32 %v553, %v876
      %v878 = vpop.f32.mrf.mxu0
      %879 = vmatprep.mubr.f32.mxu0 0.0
      %880 = vmatmul.mubr.f32.gmra.mxu0 %v707
      %v881 = vpop.f32.mrf.mxu0
      %v882 = vadd.f32 %v558, %v881
      %v883 = vpop.f32.mrf.mxu0
      %884 = vmatprep.mubr.f32.mxu0 0.0
      %885 = vmatmul.mubr.f32.gmra.mxu0 %v710
      %v886 = vpop.f32.mrf.mxu0
      %v887 = vadd.f32 %v563, %v886
      %v888 = vpop.f32.mrf.mxu0
      %889 = vmatprep.mubr.f32.mxu0 0.0
      %890 = vmatmul.mubr.f32.gmra.mxu0 %v713
      %v891 = vpop.f32.mrf.mxu0
      %v892 = vadd.f32 %v568, %v891
      %v893 = vpop.f32.mrf.mxu0
      %894 = vmatprep.mubr.f32.mxu0 0.0
      %895 = vmatmul.mubr.f32.gmra.mxu0 %v716
      %v896 = vpop.f32.mrf.mxu0
      %v897 = vadd.f32 %v573, %v896
      %v898 = vpop.f32.mrf.mxu0
      %899 = vmatprep.mubr.f32.mxu0 0.0
      %900 = vmatmul.mubr.f32.gmra.mxu0 %v719
      %v901 = vpop.f32.mrf.mxu0
      %v902 = vadd.f32 %v578, %v901
      %v903 = vpop.f32.mrf.mxu0
      %904 = vmatprep.mubr.f32.mxu0 0.0
      %905 = vmatmul.mubr.f32.gmra.mxu0 %v722
      %v906 = vpop.f32.mrf.mxu0
      %v907 = vadd.f32 %v583, %v906
      %v908 = vpop.f32.mrf.mxu0
      %909 = vmatprep.mubr.f32.mxu0 0.0
      %910 = vmatmul.mubr.f32.gmra.mxu0 %v725
      %v911 = vpop.f32.mrf.mxu0
      %v912 = vadd.f32 %v588, %v911
      %v913 = vpop.f32.mrf.mxu0
      %914 = vmatprep.mubr.f32.mxu0 0.0
      %915 = vmatmul.mubr.f32.gmra.mxu0 %v728
      %v916 = vpop.f32.mrf.mxu0
      %v917 = vadd.f32 %v593, %v916
      %v918 = vpop.f32.mrf.mxu0
      %919 = vmatprep.mubr.f32.mxu0 0.0
      %920 = vmatmul.mubr.f32.gmra.mxu0 %v731
      %v921 = vpop.f32.mrf.mxu0
      %v922 = vadd.f32 %v598, %v921
      %v923 = vpop.f32.mrf.mxu0
      %924 = vmatprep.mubr.f32.mxu0 0.0
      %925 = vmatmul.mubr.f32.gmra.mxu0 %v734
      %v926 = vpop.f32.mrf.mxu0
      %v927 = vadd.f32 %v603, %v926
      %v928 = vpop.f32.mrf.mxu0
      %929 = vmatprep.mubr.f32.mxu0 0.0
      %930 = vmatmul.mubr.f32.gmra.mxu0 %v737
      %v931 = vpop.f32.mrf.mxu0
      %v932 = vadd.f32 %v608, %v931
      %v933 = vpop.f32.mrf.mxu0
      %934 = vmatprep.mubr.f32.mxu0 0.0
      %935 = vmatmul.mubr.f32.gmra.mxu0 %v740
      %v936 = vpop.f32.mrf.mxu0
      %v937 = vadd.f32 %v613, %v936
      %v938 = vpop.f32.mrf.mxu0
      %939 = vmatprep.mubr.f32.mxu0 0.0
      %940 = vmatmul.mubr.f32.gmra.mxu0 %v743
      %v941 = vpop.f32.mrf.mxu0
      %v942 = vadd.f32 %v618, %v941
      %v943 = vpop.f32.mrf.mxu0
      %944 = vmatprep.mubr.f32.mxu0 0.0
      %945 = vmatmul.mubr.f32.gmra.mxu0 %v746
      %v946 = vpop.f32.mrf.mxu0
      %v947 = vadd.f32 %v623, %v946
      %v948 = vpop.f32.mrf.mxu0
      %949 = vmatprep.mubr.f32.mxu0 0.0
      %950 = vmatmul.mubr.f32.gmra.mxu0 %v749
      %v951 = vpop.f32.mrf.mxu0
      %v952 = vadd.f32 %v628, %v951
      %v953 = vpop.f32.mrf.mxu0
      %954 = vmatprep.mubr.f32.mxu0 0.0
      %955 = vmatmul.mubr.f32.gmra.mxu0 %v752
      %v956 = vpop.f32.mrf.mxu0
      %v957 = vadd.f32 %v633, %v956
      %v958 = vpop.f32.mrf.mxu0
      %959 = vmatprep.mubr.f32.mxu0 0.0
      %960 = vmatmul.mubr.f32.gmra.mxu0 %v755
      %v961 = vpop.f32.mrf.mxu0
      %v962 = vadd.f32 %v638, %v961
      %v963 = vpop.f32.mrf.mxu0
      %964 = vmatprep.mubr.f32.mxu0 0.0
      %965 = vmatmul.mubr.f32.gmra.mxu0 %v758
      %v966 = vpop.f32.mrf.mxu0
      %v967 = vadd.f32 %v643, %v966
      %v968 = vpop.f32.mrf.mxu0
      %969 = vmatprep.mubr.f32.mxu0 0.0
      %970 = vmatmul.mubr.f32.gmra.mxu0 %v761
      %v971 = vpop.f32.mrf.mxu0
      %v972 = vadd.f32 %v648, %v971
      %v973 = vpop.f32.mrf.mxu0
      %974 = vmatprep.mubr.f32.mxu0 0.0
      %975 = vmatmul.mubr.f32.gmra.mxu0 %v764
      %v976 = vpop.f32.mrf.mxu0
      %v977 = vadd.f32 %v653, %v976
      %v978 = vpop.f32.mrf.mxu0
      %979 = vmatprep.mubr.f32.mxu0 0.0
      %980 = vmatmul.mubr.f32.gmra.mxu0 %v767
      %v981 = vpop.f32.mrf.mxu0
      %v982 = vadd.f32 %v658, %v981
      %v983 = vpop.f32.mrf.mxu0
      %984 = vmatprep.mubr.f32.mxu0 0.0
      %985 = vmatmul.mubr.f32.gmra.mxu0 %v770
      %v986 = vpop.f32.mrf.mxu0
      %v987 = vadd.f32 %v663, %v986
      %v988 = vpop.f32.mrf.mxu0
      %989 = vmatprep.mubr.f32.mxu0 0.0
      %990 = vmatmul.mubr.f32.gmra.mxu0 %v773
      %v991 = vpop.f32.mrf.mxu0
      %v992 = vadd.f32 %v668, %v991
      %v993 = vpop.f32.mrf.mxu0
      %994 = vmatprep.mubr.f32.mxu0 0.0
      %995 = vmatmul.mubr.f32.gmra.mxu0 %v776
      %v996 = vpop.f32.mrf.mxu0
      %v997 = vadd.f32 %v673, %v996
      %v998 = vpop.f32.mrf.mxu0
      %999 = vmatprep.mubr.f32.mxu0 0.0
      %1000 = vmatmul.mubr.f32.gmra.mxu0 %v779
      %v1001 = vpop.f32.mrf.mxu0
      %v1002 = vadd.f32 %v678, %v1001
      %v1003 = vpop.f32.mrf.mxu0
      %1004 = vmatprep.mubr.f32.mxu0 0.0
      %1005 = vmatmul.mubr.f32.gmra.mxu0 %v782
      %v1006 = vpop.f32.mrf.mxu0
      %v1007 = vadd.f32 %v683, %v1006
      %v1008 = vpop.f32.mrf.mxu0
      %1009 = vmatprep.mubr.f32.mxu0 0.0
      %1010 = vmatmul.mubr.f32.gmra.mxu0 %v785
      %v1011 = vpop.f32.mrf.mxu0
      %v1012 = vadd.f32 %v688, %v1011
      %v1013 = vpop.f32.mrf.mxu0
      %1014 = vdwg.mxu0
      %s1015 = scalar_lea.vmem %s1, 12
      %v1016 = vld [vmem:[%s1015] sm:$0xf]
      %s1017 = scalar_lea.vmem %s1, 24
      %v1018 = vld [vmem:[%s1017] sm:$0xf]
      %v1019 = vadd.f32 %v1016, %v1018
      %v1020 = vld [vmem:[%s262] sm:$0xff]
      %v1021 = vld [vmem:[%s262 + $0x8] sm:$0xff]
      %v1022 = vld [vmem:[%s262 + $0x18] sm:$0xff]
      %v1023 = vld [vmem:[%s262 + $0x20] sm:$0xff]
      %v1024 = vld [vmem:[%s262 + $0x30] sm:$0xff]
      %v1025 = vld [vmem:[%s262 + $0x38] sm:$0xff]
      %v1026 = vld [vmem:[%s262 + $0x48] sm:$0xff]
      %v1027 = vld [vmem:[%s262 + $0x50] sm:$0xff]
      %v1028 = vld [vmem:[%s262 + $0x60] sm:$0xff]
      %v1029 = vld [vmem:[%s262 + $0x68] sm:$0xff]
      %v1030 = vld [vmem:[%s262 + $0x78] sm:$0xff]
      %v1031 = vld [vmem:[%s262 + $0x80] sm:$0xff]
      %v1032 = vld [vmem:[%s262 + $0x90] sm:$0xff]
      %v1033 = vld [vmem:[%s262 + $0x98] sm:$0xff]
      %v1034 = vld [vmem:[%s262 + $0xa8] sm:$0xff]
      %v1035 = vld [vmem:[%s262 + $0xb0] sm:$0xff]
      %v1036 = vld [vmem:[%s262 + $0xc0] sm:$0xff]
      %v1037 = vld [vmem:[%s262 + $0xc8] sm:$0xff]
      %v1038 = vld [vmem:[%s262 + $0xd8] sm:$0xff]
      %v1039 = vld [vmem:[%s262 + $0xe0] sm:$0xff]
      %v1040 = vld [vmem:[%s262 + $0xf0] sm:$0xff]
      %v1041 = vld [vmem:[%s262 + $0xf8] sm:$0xff]
      %v1042 = vld [vmem:[%s262 + $0x108] sm:$0xff]
      %v1043 = vld [vmem:[%s262 + $0x110] sm:$0xff]
      %v1044 = vld [vmem:[%s262 + $0x120] sm:$0xff]
      %v1045 = vld [vmem:[%s262 + $0x128] sm:$0xff]
      %v1046 = vld [vmem:[%s262 + $0x138] sm:$0xff]
      %v1047 = vld [vmem:[%s262 + $0x140] sm:$0xff]
      %v1048 = vld [vmem:[%s262 + $0x150] sm:$0xff]
      %v1049 = vld [vmem:[%s262 + $0x158] sm:$0xff]
      %v1050 = vld [vmem:[%s262 + $0x168] sm:$0xff]
      %v1051 = vld [vmem:[%s262 + $0x170] sm:$0xff]
      %v1053 = vsel %vm174, %v1020, 0
      %v1056 = vsel %vm174, %v1021, 0
      %v1059 = vsel %vm174, %v1022, 0
      %v1062 = vsel %vm174, %v1023, 0
      %v1065 = vsel %vm174, %v1024, 0
      %v1068 = vsel %vm174, %v1025, 0
      %v1071 = vsel %vm174, %v1026, 0
      %v1074 = vsel %vm174, %v1027, 0
      %v1077 = vsel %vm174, %v1028, 0
      %v1080 = vsel %vm174, %v1029, 0
      %v1083 = vsel %vm174, %v1030, 0
      %v1086 = vsel %vm174, %v1031, 0
      %v1089 = vsel %vm174, %v1032, 0
      %v1092 = vsel %vm174, %v1033, 0
      %v1095 = vsel %vm174, %v1034, 0
      %v1098 = vsel %vm174, %v1035, 0
      %v1101 = vsel %vm174, %v1036, 0
      %v1104 = vsel %vm174, %v1037, 0
      %v1107 = vsel %vm174, %v1038, 0
      %v1110 = vsel %vm174, %v1039, 0
      %v1113 = vsel %vm174, %v1040, 0
      %v1116 = vsel %vm174, %v1041, 0
      %v1119 = vsel %vm174, %v1042, 0
      %v1122 = vsel %vm174, %v1043, 0
      %v1125 = vsel %vm174, %v1044, 0
      %v1128 = vsel %vm174, %v1045, 0
      %v1131 = vsel %vm174, %v1046, 0
      %v1134 = vsel %vm174, %v1047, 0
      %v1137 = vsel %vm174, %v1048, 0
      %v1140 = vsel %vm174, %v1049, 0
      %v1143 = vsel %vm174, %v1050, 0
      %v1146 = vsel %vm174, %v1051, 0
      %v1149 = vsel %vm462, %v1019, 0
      %1151 = vmatprep.subr.mxu0 0.0
      %1152 = vmatpush1.msra.mxu0 0.0
      %1153 = vmatprep.subr.mxu0 0.0
      %1154 = vmatpush1.msra.mxu0 0.0
      %1155 = vmatprep.subr.mxu0 0.0
      %1156 = vmatpush1.msra.mxu0 0.0
      %1157 = vmatprep.subr.mxu0 0.0
      %1158 = vmatpush1.msra.mxu0 0.0
      %1159 = vmatprep.subr.mxu0 0.0
      %1160 = vmatpush1.msra.mxu0 0.0
      %1161 = vmatprep.subr.mxu0 0.0
      %1162 = vmatpush1.msra.mxu0 0.0
      %1163 = vmatprep.subr.mxu0 0.0
      %1164 = vmatpush1.msra.mxu0 0.0
      %1165 = vmatprep.subr.mxu0 0.0
      %1166 = vmatpush1.msra.mxu0 0.0
      %1167 = vmatprep.subr.mxu0 0.0
      %1168 = vmatpush1.msra.mxu0 0.0
      %1169 = vmatprep.subr.mxu0 0.0
      %1170 = vmatpush1.msra.mxu0 0.0
      %1171 = vmatprep.subr.mxu0 0.0
      %1172 = vmatpush1.msra.mxu0 0.0
      %1173 = vmatprep.subr.mxu0 0.0
      %1174 = vmatpush1.msra.mxu0 0.0
      %1175 = vmatprep.subr.mxu0 0.0
      %1176 = vmatpush1.msra.mxu0 0.0
      %1177 = vmatprep.subr.mxu0 0.0
      %1178 = vmatpush1.msra.mxu0 0.0
      %1179 = vmatprep.subr.mxu0 0.0
      %1180 = vmatpush1.msra.mxu0 0.0
      %1181 = vmatprep.subr.mxu0 0.0
      %1182 = vmatpush1.msra.mxu0 %v1149
      %1183 = vmatprep.subr.mxu0 0.0
      %1184 = vmatpush2.msra.mxu0 0.0
      %1185 = vmatprep.subr.mxu0 0.0
      %1186 = vmatpush2.msra.mxu0 0.0
      %1187 = vmatprep.subr.mxu0 0.0
      %1188 = vmatpush2.msra.mxu0 0.0
      %1189 = vmatprep.subr.mxu0 0.0
      %1190 = vmatpush2.msra.mxu0 0.0
      %1191 = vmatprep.subr.mxu0 0.0
      %1192 = vmatpush2.msra.mxu0 0.0
      %1193 = vmatprep.subr.mxu0 0.0
      %1194 = vmatpush2.msra.mxu0 0.0
      %1195 = vmatprep.subr.mxu0 0.0
      %1196 = vmatpush2.msra.mxu0 0.0
      %1197 = vmatprep.subr.mxu0 0.0
      %1198 = vmatpush2.msra.mxu0 0.0
      %1199 = vmatprep.subr.mxu0 0.0
      %1200 = vmatpush2.msra.mxu0 0.0
      %1201 = vmatprep.subr.mxu0 0.0
      %1202 = vmatpush2.msra.mxu0 0.0
      %1203 = vmatprep.subr.mxu0 0.0
      %1204 = vmatpush2.msra.mxu0 0.0
      %1205 = vmatprep.subr.mxu0 0.0
      %1206 = vmatpush2.msra.mxu0 0.0
      %1207 = vmatprep.subr.mxu0 0.0
      %1208 = vmatpush2.msra.mxu0 0.0
      %1209 = vmatprep.subr.mxu0 0.0
      %1210 = vmatpush2.msra.mxu0 0.0
      %1211 = vmatprep.subr.mxu0 0.0
      %1212 = vmatpush2.msra.mxu0 0.0
      %1213 = vmatprep.subr.mxu0 0.0
      %1214 = vmatpush2.msra.mxu0 0.0
      %1215 = vmatprep.mubr.f32.mxu0 0.0
      %1216 = vmatmul.mubr.f32.gmra.mxu0 %v1053
      %v1217 = vpop.f32.mrf.mxu0
      %v1218 = vadd.f32 0.0, %v1217
      %v1219 = vpop.f32.mrf.mxu0
      %1220 = vmatprep.mubr.f32.mxu0 0.0
      %1221 = vmatmul.mubr.f32.gmra.mxu0 %v1056
      %v1222 = vpop.f32.mrf.mxu0
      %v1223 = vadd.f32 0.0, %v1222
      %v1224 = vpop.f32.mrf.mxu0
      %1225 = vmatprep.mubr.f32.mxu0 0.0
      %1226 = vmatmul.mubr.f32.gmra.mxu0 %v1059
      %v1227 = vpop.f32.mrf.mxu0
      %v1228 = vadd.f32 0.0, %v1227
      %v1229 = vpop.f32.mrf.mxu0
      %1230 = vmatprep.mubr.f32.mxu0 0.0
      %1231 = vmatmul.mubr.f32.gmra.mxu0 %v1062
      %v1232 = vpop.f32.mrf.mxu0
      %v1233 = vadd.f32 0.0, %v1232
      %v1234 = vpop.f32.mrf.mxu0
      %1235 = vmatprep.mubr.f32.mxu0 0.0
      %1236 = vmatmul.mubr.f32.gmra.mxu0 %v1065
      %v1237 = vpop.f32.mrf.mxu0
      %v1238 = vadd.f32 0.0, %v1237
      %v1239 = vpop.f32.mrf.mxu0
      %1240 = vmatprep.mubr.f32.mxu0 0.0
      %1241 = vmatmul.mubr.f32.gmra.mxu0 %v1068
      %v1242 = vpop.f32.mrf.mxu0
      %v1243 = vadd.f32 0.0, %v1242
      %v1244 = vpop.f32.mrf.mxu0
      %1245 = vmatprep.mubr.f32.mxu0 0.0
      %1246 = vmatmul.mubr.f32.gmra.mxu0 %v1071
      %v1247 = vpop.f32.mrf.mxu0
      %v1248 = vadd.f32 0.0, %v1247
      %v1249 = vpop.f32.mrf.mxu0
      %1250 = vmatprep.mubr.f32.mxu0 0.0
      %1251 = vmatmul.mubr.f32.gmra.mxu0 %v1074
      %v1252 = vpop.f32.mrf.mxu0
      %v1253 = vadd.f32 0.0, %v1252
      %v1254 = vpop.f32.mrf.mxu0
      %1255 = vmatprep.mubr.f32.mxu0 0.0
      %1256 = vmatmul.mubr.f32.gmra.mxu0 %v1077
      %v1257 = vpop.f32.mrf.mxu0
      %v1258 = vadd.f32 0.0, %v1257
      %v1259 = vpop.f32.mrf.mxu0
      %1260 = vmatprep.mubr.f32.mxu0 0.0
      %1261 = vmatmul.mubr.f32.gmra.mxu0 %v1080
      %v1262 = vpop.f32.mrf.mxu0
      %v1263 = vadd.f32 0.0, %v1262
      %v1264 = vpop.f32.mrf.mxu0
      %1265 = vmatprep.mubr.f32.mxu0 0.0
      %1266 = vmatmul.mubr.f32.gmra.mxu0 %v1083
      %v1267 = vpop.f32.mrf.mxu0
      %v1268 = vadd.f32 0.0, %v1267
      %v1269 = vpop.f32.mrf.mxu0
      %1270 = vmatprep.mubr.f32.mxu0 0.0
      %1271 = vmatmul.mubr.f32.gmra.mxu0 %v1086
      %v1272 = vpop.f32.mrf.mxu0
      %v1273 = vadd.f32 0.0, %v1272
      %v1274 = vpop.f32.mrf.mxu0
      %1275 = vmatprep.mubr.f32.mxu0 0.0
      %1276 = vmatmul.mubr.f32.gmra.mxu0 %v1089
      %v1277 = vpop.f32.mrf.mxu0
      %v1278 = vadd.f32 0.0, %v1277
      %v1279 = vpop.f32.mrf.mxu0
      %1280 = vmatprep.mubr.f32.mxu0 0.0
      %1281 = vmatmul.mubr.f32.gmra.mxu0 %v1092
      %v1282 = vpop.f32.mrf.mxu0
      %v1283 = vadd.f32 0.0, %v1282
      %v1284 = vpop.f32.mrf.mxu0
      %1285 = vmatprep.mubr.f32.mxu0 0.0
      %1286 = vmatmul.mubr.f32.gmra.mxu0 %v1095
      %v1287 = vpop.f32.mrf.mxu0
      %v1288 = vadd.f32 0.0, %v1287
      %v1289 = vpop.f32.mrf.mxu0
      %1290 = vmatprep.mubr.f32.mxu0 0.0
      %1291 = vmatmul.mubr.f32.gmra.mxu0 %v1098
      %v1292 = vpop.f32.mrf.mxu0
      %v1293 = vadd.f32 0.0, %v1292
      %v1294 = vpop.f32.mrf.mxu0
      %1295 = vmatprep.mubr.f32.mxu0 0.0
      %1296 = vmatmul.mubr.f32.gmra.mxu0 %v1101
      %v1297 = vpop.f32.mrf.mxu0
      %v1298 = vadd.f32 0.0, %v1297
      %v1299 = vpop.f32.mrf.mxu0
      %1300 = vmatprep.mubr.f32.mxu0 0.0
      %1301 = vmatmul.mubr.f32.gmra.mxu0 %v1104
      %v1302 = vpop.f32.mrf.mxu0
      %v1303 = vadd.f32 0.0, %v1302
      %v1304 = vpop.f32.mrf.mxu0
      %1305 = vmatprep.mubr.f32.mxu0 0.0
      %1306 = vmatmul.mubr.f32.gmra.mxu0 %v1107
      %v1307 = vpop.f32.mrf.mxu0
      %v1308 = vadd.f32 0.0, %v1307
      %v1309 = vpop.f32.mrf.mxu0
      %1310 = vmatprep.mubr.f32.mxu0 0.0
      %1311 = vmatmul.mubr.f32.gmra.mxu0 %v1110
      %v1312 = vpop.f32.mrf.mxu0
      %v1313 = vadd.f32 0.0, %v1312
      %v1314 = vpop.f32.mrf.mxu0
      %1315 = vmatprep.mubr.f32.mxu0 0.0
      %1316 = vmatmul.mubr.f32.gmra.mxu0 %v1113
      %v1317 = vpop.f32.mrf.mxu0
      %v1318 = vadd.f32 0.0, %v1317
      %v1319 = vpop.f32.mrf.mxu0
      %1320 = vmatprep.mubr.f32.mxu0 0.0
      %1321 = vmatmul.mubr.f32.gmra.mxu0 %v1116
      %v1322 = vpop.f32.mrf.mxu0
      %v1323 = vadd.f32 0.0, %v1322
      %v1324 = vpop.f32.mrf.mxu0
      %1325 = vmatprep.mubr.f32.mxu0 0.0
      %1326 = vmatmul.mubr.f32.gmra.mxu0 %v1119
      %v1327 = vpop.f32.mrf.mxu0
      %v1328 = vadd.f32 0.0, %v1327
      %v1329 = vpop.f32.mrf.mxu0
      %1330 = vmatprep.mubr.f32.mxu0 0.0
      %1331 = vmatmul.mubr.f32.gmra.mxu0 %v1122
      %v1332 = vpop.f32.mrf.mxu0
      %v1333 = vadd.f32 0.0, %v1332
      %v1334 = vpop.f32.mrf.mxu0
      %1335 = vmatprep.mubr.f32.mxu0 0.0
      %1336 = vmatmul.mubr.f32.gmra.mxu0 %v1125
      %v1337 = vpop.f32.mrf.mxu0
      %v1338 = vadd.f32 0.0, %v1337
      %v1339 = vpop.f32.mrf.mxu0
      %1340 = vmatprep.mubr.f32.mxu0 0.0
      %1341 = vmatmul.mubr.f32.gmra.mxu0 %v1128
      %v1342 = vpop.f32.mrf.mxu0
      %v1343 = vadd.f32 0.0, %v1342
      %v1344 = vpop.f32.mrf.mxu0
      %1345 = vmatprep.mubr.f32.mxu0 0.0
      %1346 = vmatmul.mubr.f32.gmra.mxu0 %v1131
      %v1347 = vpop.f32.mrf.mxu0
      %v1348 = vadd.f32 0.0, %v1347
      %v1349 = vpop.f32.mrf.mxu0
      %1350 = vmatprep.mubr.f32.mxu0 0.0
      %1351 = vmatmul.mubr.f32.gmra.mxu0 %v1134
      %v1352 = vpop.f32.mrf.mxu0
      %v1353 = vadd.f32 0.0, %v1352
      %v1354 = vpop.f32.mrf.mxu0
      %1355 = vmatprep.mubr.f32.mxu0 0.0
      %1356 = vmatmul.mubr.f32.gmra.mxu0 %v1137
      %v1357 = vpop.f32.mrf.mxu0
      %v1358 = vadd.f32 0.0, %v1357
      %v1359 = vpop.f32.mrf.mxu0
      %1360 = vmatprep.mubr.f32.mxu0 0.0
      %1361 = vmatmul.mubr.f32.gmra.mxu0 %v1140
      %v1362 = vpop.f32.mrf.mxu0
      %v1363 = vadd.f32 0.0, %v1362
      %v1364 = vpop.f32.mrf.mxu0
      %1365 = vmatprep.mubr.f32.mxu0 0.0
      %1366 = vmatmul.mubr.f32.gmra.mxu0 %v1143
      %v1367 = vpop.f32.mrf.mxu0
      %v1368 = vadd.f32 0.0, %v1367
      %v1369 = vpop.f32.mrf.mxu0
      %1370 = vmatprep.mubr.f32.mxu0 0.0
      %1371 = vmatmul.mubr.f32.gmra.mxu0 %v1146
      %v1372 = vpop.f32.mrf.mxu0
      %v1373 = vadd.f32 0.0, %v1372
      %v1374 = vpop.f32.mrf.mxu0
      %1375 = vdwg.mxu0
      %v1376 = vadd.f32 %v857, %v1218
      %v1377 = vadd.f32 %v862, %v1223
      %v1378 = vadd.f32 %v867, %v1228
      %v1379 = vadd.f32 %v872, %v1233
      %v1380 = vadd.f32 %v877, %v1238
      %v1381 = vadd.f32 %v882, %v1243
      %v1382 = vadd.f32 %v887, %v1248
      %v1383 = vadd.f32 %v892, %v1253
      %v1384 = vadd.f32 %v897, %v1258
      %v1385 = vadd.f32 %v902, %v1263
      %v1386 = vadd.f32 %v907, %v1268
      %v1387 = vadd.f32 %v912, %v1273
      %v1388 = vadd.f32 %v917, %v1278
      %v1389 = vadd.f32 %v922, %v1283
      %v1390 = vadd.f32 %v927, %v1288
      %v1391 = vadd.f32 %v932, %v1293
      %v1392 = vadd.f32 %v937, %v1298
      %v1393 = vadd.f32 %v942, %v1303
      %v1394 = vadd.f32 %v947, %v1308
      %v1395 = vadd.f32 %v952, %v1313
      %v1396 = vadd.f32 %v957, %v1318
      %v1397 = vadd.f32 %v962, %v1323
      %v1398 = vadd.f32 %v967, %v1328
      %v1399 = vadd.f32 %v972, %v1333
      %v1400 = vadd.f32 %v977, %v1338
      %v1401 = vadd.f32 %v982, %v1343
      %v1402 = vadd.f32 %v987, %v1348
      %v1403 = vadd.f32 %v992, %v1353
      %v1404 = vadd.f32 %v997, %v1358
      %v1405 = vadd.f32 %v1002, %v1363
      %v1406 = vadd.f32 %v1007, %v1368
      %v1407 = vadd.f32 %v1012, %v1373
      %s1408 = scalar_lea.vmem %s1, 16
      %v1409 = vld [vmem:[%s1408] sm:$0xf]
      %s1410 = scalar_lea.vmem %s1, 20
      %v1411 = vld [vmem:[%s1410] sm:$0xf]
      %v1412 = vadd.f32 %v1409, %v1411
      %s1413 = scalar_lea.vmem %s1, 28
      %v1414 = vld [vmem:[%s1413] sm:$0xf]
      %v1415 = vadd.f32 %v1412, %v1414
      %s1416 = scalar_lea.vmem %s1, 32
      %v1417 = vld [vmem:[%s1416] sm:$0xf]
      %v1418 = vadd.f32 %v1415, %v1417
      %v1419 = vld [vmem:[%s262 + $0x1] sm:$0xff]
      %v1420 = vld [vmem:[%s262 + $0x9] sm:$0xff]
      %v1421 = vld [vmem:[%s262 + $0x19] sm:$0xff]
      %v1422 = vld [vmem:[%s262 + $0x21] sm:$0xff]
      %v1423 = vld [vmem:[%s262 + $0x31] sm:$0xff]
      %v1424 = vld [vmem:[%s262 + $0x39] sm:$0xff]
      %v1425 = vld [vmem:[%s262 + $0x49] sm:$0xff]
      %v1426 = vld [vmem:[%s262 + $0x51] sm:$0xff]
      %v1427 = vld [vmem:[%s262 + $0x61] sm:$0xff]
      %v1428 = vld [vmem:[%s262 + $0x69] sm:$0xff]
      %v1429 = vld [vmem:[%s262 + $0x79] sm:$0xff]
      %v1430 = vld [vmem:[%s262 + $0x81] sm:$0xff]
      %v1431 = vld [vmem:[%s262 + $0x91] sm:$0xff]
      %v1432 = vld [vmem:[%s262 + $0x99] sm:$0xff]
      %v1433 = vld [vmem:[%s262 + $0xa9] sm:$0xff]
      %v1434 = vld [vmem:[%s262 + $0xb1] sm:$0xff]
      %v1435 = vld [vmem:[%s262 + $0xc1] sm:$0xff]
      %v1436 = vld [vmem:[%s262 + $0xc9] sm:$0xff]
      %v1437 = vld [vmem:[%s262 + $0xd9] sm:$0xff]
      %v1438 = vld [vmem:[%s262 + $0xe1] sm:$0xff]
      %v1439 = vld [vmem:[%s262 + $0xf1] sm:$0xff]
      %v1440 = vld [vmem:[%s262 + $0xf9] sm:$0xff]
      %v1441 = vld [vmem:[%s262 + $0x109] sm:$0xff]
      %v1442 = vld [vmem:[%s262 + $0x111] sm:$0xff]
      %v1443 = vld [vmem:[%s262 + $0x121] sm:$0xff]
      %v1444 = vld [vmem:[%s262 + $0x129] sm:$0xff]
      %v1445 = vld [vmem:[%s262 + $0x139] sm:$0xff]
      %v1446 = vld [vmem:[%s262 + $0x141] sm:$0xff]
      %v1447 = vld [vmem:[%s262 + $0x151] sm:$0xff]
      %v1448 = vld [vmem:[%s262 + $0x159] sm:$0xff]
      %v1449 = vld [vmem:[%s262 + $0x169] sm:$0xff]
      %v1450 = vld [vmem:[%s262 + $0x171] sm:$0xff]
      %v1452 = vsel %vm174, %v1419, 0
      %v1455 = vsel %vm174, %v1420, 0
      %v1458 = vsel %vm174, %v1421, 0
      %v1461 = vsel %vm174, %v1422, 0
      %v1464 = vsel %vm174, %v1423, 0
      %v1467 = vsel %vm174, %v1424, 0
      %v1470 = vsel %vm174, %v1425, 0
      %v1473 = vsel %vm174, %v1426, 0
      %v1476 = vsel %vm174, %v1427, 0
      %v1479 = vsel %vm174, %v1428, 0
      %v1482 = vsel %vm174, %v1429, 0
      %v1485 = vsel %vm174, %v1430, 0
      %v1488 = vsel %vm174, %v1431, 0
      %v1491 = vsel %vm174, %v1432, 0
      %v1494 = vsel %vm174, %v1433, 0
      %v1497 = vsel %vm174, %v1434, 0
      %v1500 = vsel %vm174, %v1435, 0
      %v1503 = vsel %vm174, %v1436, 0
      %v1506 = vsel %vm174, %v1437, 0
      %v1509 = vsel %vm174, %v1438, 0
      %v1512 = vsel %vm174, %v1439, 0
      %v1515 = vsel %vm174, %v1440, 0
      %v1518 = vsel %vm174, %v1441, 0
      %v1521 = vsel %vm174, %v1442, 0
      %v1524 = vsel %vm174, %v1443, 0
      %v1527 = vsel %vm174, %v1444, 0
      %v1530 = vsel %vm174, %v1445, 0
      %v1533 = vsel %vm174, %v1446, 0
      %v1536 = vsel %vm174, %v1447, 0
      %v1539 = vsel %vm174, %v1448, 0
      %v1542 = vsel %vm174, %v1449, 0
      %v1545 = vsel %vm174, %v1450, 0
      %v1548 = vsel %vm462, %v1418, 0
      %1550 = vmatprep.subr.mxu0 0.0
      %1551 = vmatpush1.msra.mxu0 0.0
      %1552 = vmatprep.subr.mxu0 0.0
      %1553 = vmatpush1.msra.mxu0 0.0
      %1554 = vmatprep.subr.mxu0 0.0
      %1555 = vmatpush1.msra.mxu0 0.0
      %1556 = vmatprep.subr.mxu0 0.0
      %1557 = vmatpush1.msra.mxu0 0.0
      %1558 = vmatprep.subr.mxu0 0.0
      %1559 = vmatpush1.msra.mxu0 0.0
      %1560 = vmatprep.subr.mxu0 0.0
      %1561 = vmatpush1.msra.mxu0 0.0
      %1562 = vmatprep.subr.mxu0 0.0
      %1563 = vmatpush1.msra.mxu0 0.0
      %1564 = vmatprep.subr.mxu0 0.0
      %1565 = vmatpush1.msra.mxu0 0.0
      %1566 = vmatprep.subr.mxu0 0.0
      %1567 = vmatpush1.msra.mxu0 0.0
      %1568 = vmatprep.subr.mxu0 0.0
      %1569 = vmatpush1.msra.mxu0 0.0
      %1570 = vmatprep.subr.mxu0 0.0
      %1571 = vmatpush1.msra.mxu0 0.0
      %1572 = vmatprep.subr.mxu0 0.0
      %1573 = vmatpush1.msra.mxu0 0.0
      %1574 = vmatprep.subr.mxu0 0.0
      %1575 = vmatpush1.msra.mxu0 0.0
      %1576 = vmatprep.subr.mxu0 0.0
      %1577 = vmatpush1.msra.mxu0 0.0
      %1578 = vmatprep.subr.mxu0 0.0
      %1579 = vmatpush1.msra.mxu0 0.0
      %1580 = vmatprep.subr.mxu0 0.0
      %1581 = vmatpush1.msra.mxu0 %v1548
      %1582 = vmatprep.subr.mxu0 0.0
      %1583 = vmatpush2.msra.mxu0 0.0
      %1584 = vmatprep.subr.mxu0 0.0
      %1585 = vmatpush2.msra.mxu0 0.0
      %1586 = vmatprep.subr.mxu0 0.0
      %1587 = vmatpush2.msra.mxu0 0.0
      %1588 = vmatprep.subr.mxu0 0.0
      %1589 = vmatpush2.msra.mxu0 0.0
      %1590 = vmatprep.subr.mxu0 0.0
      %1591 = vmatpush2.msra.mxu0 0.0
      %1592 = vmatprep.subr.mxu0 0.0
      %1593 = vmatpush2.msra.mxu0 0.0
      %1594 = vmatprep.subr.mxu0 0.0
      %1595 = vmatpush2.msra.mxu0 0.0
      %1596 = vmatprep.subr.mxu0 0.0
      %1597 = vmatpush2.msra.mxu0 0.0
      %1598 = vmatprep.subr.mxu0 0.0
      %1599 = vmatpush2.msra.mxu0 0.0
      %1600 = vmatprep.subr.mxu0 0.0
      %1601 = vmatpush2.msra.mxu0 0.0
      %1602 = vmatprep.subr.mxu0 0.0
      %1603 = vmatpush2.msra.mxu0 0.0
      %1604 = vmatprep.subr.mxu0 0.0
      %1605 = vmatpush2.msra.mxu0 0.0
      %1606 = vmatprep.subr.mxu0 0.0
      %1607 = vmatpush2.msra.mxu0 0.0
      %1608 = vmatprep.subr.mxu0 0.0
      %1609 = vmatpush2.msra.mxu0 0.0
      %1610 = vmatprep.subr.mxu0 0.0
      %1611 = vmatpush2.msra.mxu0 0.0
      %1612 = vmatprep.subr.mxu0 0.0
      %1613 = vmatpush2.msra.mxu0 0.0
      %1614 = vmatprep.mubr.f32.mxu0 0.0
      %1615 = vmatmul.mubr.f32.gmra.mxu0 %v1452
      %v1616 = vpop.f32.mrf.mxu0
      %v1617 = vadd.f32 0.0, %v1616
      %v1618 = vpop.f32.mrf.mxu0
      %1619 = vmatprep.mubr.f32.mxu0 0.0
      %1620 = vmatmul.mubr.f32.gmra.mxu0 %v1455
      %v1621 = vpop.f32.mrf.mxu0
      %v1622 = vadd.f32 0.0, %v1621
      %v1623 = vpop.f32.mrf.mxu0
      %1624 = vmatprep.mubr.f32.mxu0 0.0
      %1625 = vmatmul.mubr.f32.gmra.mxu0 %v1458
      %v1626 = vpop.f32.mrf.mxu0
      %v1627 = vadd.f32 0.0, %v1626
      %v1628 = vpop.f32.mrf.mxu0
      %1629 = vmatprep.mubr.f32.mxu0 0.0
      %1630 = vmatmul.mubr.f32.gmra.mxu0 %v1461
      %v1631 = vpop.f32.mrf.mxu0
      %v1632 = vadd.f32 0.0, %v1631
      %v1633 = vpop.f32.mrf.mxu0
      %1634 = vmatprep.mubr.f32.mxu0 0.0
      %1635 = vmatmul.mubr.f32.gmra.mxu0 %v1464
      %v1636 = vpop.f32.mrf.mxu0
      %v1637 = vadd.f32 0.0, %v1636
      %v1638 = vpop.f32.mrf.mxu0
      %1639 = vmatprep.mubr.f32.mxu0 0.0
      %1640 = vmatmul.mubr.f32.gmra.mxu0 %v1467
      %v1641 = vpop.f32.mrf.mxu0
      %v1642 = vadd.f32 0.0, %v1641
      %v1643 = vpop.f32.mrf.mxu0
      %1644 = vmatprep.mubr.f32.mxu0 0.0
      %1645 = vmatmul.mubr.f32.gmra.mxu0 %v1470
      %v1646 = vpop.f32.mrf.mxu0
      %v1647 = vadd.f32 0.0, %v1646
      %v1648 = vpop.f32.mrf.mxu0
      %1649 = vmatprep.mubr.f32.mxu0 0.0
      %1650 = vmatmul.mubr.f32.gmra.mxu0 %v1473
      %v1651 = vpop.f32.mrf.mxu0
      %v1652 = vadd.f32 0.0, %v1651
      %v1653 = vpop.f32.mrf.mxu0
      %1654 = vmatprep.mubr.f32.mxu0 0.0
      %1655 = vmatmul.mubr.f32.gmra.mxu0 %v1476
      %v1656 = vpop.f32.mrf.mxu0
      %v1657 = vadd.f32 0.0, %v1656
      %v1658 = vpop.f32.mrf.mxu0
      %1659 = vmatprep.mubr.f32.mxu0 0.0
      %1660 = vmatmul.mubr.f32.gmra.mxu0 %v1479
      %v1661 = vpop.f32.mrf.mxu0
      %v1662 = vadd.f32 0.0, %v1661
      %v1663 = vpop.f32.mrf.mxu0
      %1664 = vmatprep.mubr.f32.mxu0 0.0
      %1665 = vmatmul.mubr.f32.gmra.mxu0 %v1482
      %v1666 = vpop.f32.mrf.mxu0
      %v1667 = vadd.f32 0.0, %v1666
      %v1668 = vpop.f32.mrf.mxu0
      %1669 = vmatprep.mubr.f32.mxu0 0.0
      %1670 = vmatmul.mubr.f32.gmra.mxu0 %v1485
      %v1671 = vpop.f32.mrf.mxu0
      %v1672 = vadd.f32 0.0, %v1671
      %v1673 = vpop.f32.mrf.mxu0
      %1674 = vmatprep.mubr.f32.mxu0 0.0
      %1675 = vmatmul.mubr.f32.gmra.mxu0 %v1488
      %v1676 = vpop.f32.mrf.mxu0
      %v1677 = vadd.f32 0.0, %v1676
      %v1678 = vpop.f32.mrf.mxu0
      %1679 = vmatprep.mubr.f32.mxu0 0.0
      %1680 = vmatmul.mubr.f32.gmra.mxu0 %v1491
      %v1681 = vpop.f32.mrf.mxu0
      %v1682 = vadd.f32 0.0, %v1681
      %v1683 = vpop.f32.mrf.mxu0
      %1684 = vmatprep.mubr.f32.mxu0 0.0
      %1685 = vmatmul.mubr.f32.gmra.mxu0 %v1494
      %v1686 = vpop.f32.mrf.mxu0
      %v1687 = vadd.f32 0.0, %v1686
      %v1688 = vpop.f32.mrf.mxu0
      %1689 = vmatprep.mubr.f32.mxu0 0.0
      %1690 = vmatmul.mubr.f32.gmra.mxu0 %v1497
      %v1691 = vpop.f32.mrf.mxu0
      %v1692 = vadd.f32 0.0, %v1691
      %v1693 = vpop.f32.mrf.mxu0
      %1694 = vmatprep.mubr.f32.mxu0 0.0
      %1695 = vmatmul.mubr.f32.gmra.mxu0 %v1500
      %v1696 = vpop.f32.mrf.mxu0
      %v1697 = vadd.f32 0.0, %v1696
      %v1698 = vpop.f32.mrf.mxu0
      %1699 = vmatprep.mubr.f32.mxu0 0.0
      %1700 = vmatmul.mubr.f32.gmra.mxu0 %v1503
      %v1701 = vpop.f32.mrf.mxu0
      %v1702 = vadd.f32 0.0, %v1701
      %v1703 = vpop.f32.mrf.mxu0
      %1704 = vmatprep.mubr.f32.mxu0 0.0
      %1705 = vmatmul.mubr.f32.gmra.mxu0 %v1506
      %v1706 = vpop.f32.mrf.mxu0
      %v1707 = vadd.f32 0.0, %v1706
      %v1708 = vpop.f32.mrf.mxu0
      %1709 = vmatprep.mubr.f32.mxu0 0.0
      %1710 = vmatmul.mubr.f32.gmra.mxu0 %v1509
      %v1711 = vpop.f32.mrf.mxu0
      %v1712 = vadd.f32 0.0, %v1711
      %v1713 = vpop.f32.mrf.mxu0
      %1714 = vmatprep.mubr.f32.mxu0 0.0
      %1715 = vmatmul.mubr.f32.gmra.mxu0 %v1512
      %v1716 = vpop.f32.mrf.mxu0
      %v1717 = vadd.f32 0.0, %v1716
      %v1718 = vpop.f32.mrf.mxu0
      %1719 = vmatprep.mubr.f32.mxu0 0.0
      %1720 = vmatmul.mubr.f32.gmra.mxu0 %v1515
      %v1721 = vpop.f32.mrf.mxu0
      %v1722 = vadd.f32 0.0, %v1721
      %v1723 = vpop.f32.mrf.mxu0
      %1724 = vmatprep.mubr.f32.mxu0 0.0
      %1725 = vmatmul.mubr.f32.gmra.mxu0 %v1518
      %v1726 = vpop.f32.mrf.mxu0
      %v1727 = vadd.f32 0.0, %v1726
      %v1728 = vpop.f32.mrf.mxu0
      %1729 = vmatprep.mubr.f32.mxu0 0.0
      %1730 = vmatmul.mubr.f32.gmra.mxu0 %v1521
      %v1731 = vpop.f32.mrf.mxu0
      %v1732 = vadd.f32 0.0, %v1731
      %v1733 = vpop.f32.mrf.mxu0
      %1734 = vmatprep.mubr.f32.mxu0 0.0
      %1735 = vmatmul.mubr.f32.gmra.mxu0 %v1524
      %v1736 = vpop.f32.mrf.mxu0
      %v1737 = vadd.f32 0.0, %v1736
      %v1738 = vpop.f32.mrf.mxu0
      %1739 = vmatprep.mubr.f32.mxu0 0.0
      %1740 = vmatmul.mubr.f32.gmra.mxu0 %v1527
      %v1741 = vpop.f32.mrf.mxu0
      %v1742 = vadd.f32 0.0, %v1741
      %v1743 = vpop.f32.mrf.mxu0
      %1744 = vmatprep.mubr.f32.mxu0 0.0
      %1745 = vmatmul.mubr.f32.gmra.mxu0 %v1530
      %v1746 = vpop.f32.mrf.mxu0
      %v1747 = vadd.f32 0.0, %v1746
      %v1748 = vpop.f32.mrf.mxu0
      %1749 = vmatprep.mubr.f32.mxu0 0.0
      %1750 = vmatmul.mubr.f32.gmra.mxu0 %v1533
      %v1751 = vpop.f32.mrf.mxu0
      %v1752 = vadd.f32 0.0, %v1751
      %v1753 = vpop.f32.mrf.mxu0
      %1754 = vmatprep.mubr.f32.mxu0 0.0
      %1755 = vmatmul.mubr.f32.gmra.mxu0 %v1536
      %v1756 = vpop.f32.mrf.mxu0
      %v1757 = vadd.f32 0.0, %v1756
      %v1758 = vpop.f32.mrf.mxu0
      %1759 = vmatprep.mubr.f32.mxu0 0.0
      %1760 = vmatmul.mubr.f32.gmra.mxu0 %v1539
      %v1761 = vpop.f32.mrf.mxu0
      %v1762 = vadd.f32 0.0, %v1761
      %v1763 = vpop.f32.mrf.mxu0
      %1764 = vmatprep.mubr.f32.mxu0 0.0
      %1765 = vmatmul.mubr.f32.gmra.mxu0 %v1542
      %v1766 = vpop.f32.mrf.mxu0
      %v1767 = vadd.f32 0.0, %v1766
      %v1768 = vpop.f32.mrf.mxu0
      %1769 = vmatprep.mubr.f32.mxu0 0.0
      %1770 = vmatmul.mubr.f32.gmra.mxu0 %v1545
      %v1771 = vpop.f32.mrf.mxu0
      %v1772 = vadd.f32 0.0, %v1771
      %v1773 = vpop.f32.mrf.mxu0
      %1774 = vdwg.mxu0
      %v1775 = vadd.f32 %v1376, %v1617
      %v1776 = vadd.f32 %v1377, %v1622
      %v1777 = vadd.f32 %v1378, %v1627
      %v1778 = vadd.f32 %v1379, %v1632
      %v1779 = vadd.f32 %v1380, %v1637
      %v1780 = vadd.f32 %v1381, %v1642
      %v1781 = vadd.f32 %v1382, %v1647
      %v1782 = vadd.f32 %v1383, %v1652
      %v1783 = vadd.f32 %v1384, %v1657
      %v1784 = vadd.f32 %v1385, %v1662
      %v1785 = vadd.f32 %v1386, %v1667
      %v1786 = vadd.f32 %v1387, %v1672
      %v1787 = vadd.f32 %v1388, %v1677
      %v1788 = vadd.f32 %v1389, %v1682
      %v1789 = vadd.f32 %v1390, %v1687
      %v1790 = vadd.f32 %v1391, %v1692
      %v1791 = vadd.f32 %v1392, %v1697
      %v1792 = vadd.f32 %v1393, %v1702
      %v1793 = vadd.f32 %v1394, %v1707
      %v1794 = vadd.f32 %v1395, %v1712
      %v1795 = vadd.f32 %v1396, %v1717
      %v1796 = vadd.f32 %v1397, %v1722
      %v1797 = vadd.f32 %v1398, %v1727
      %v1798 = vadd.f32 %v1399, %v1732
      %v1799 = vadd.f32 %v1400, %v1737
      %v1800 = vadd.f32 %v1401, %v1742
      %v1801 = vadd.f32 %v1402, %v1747
      %v1802 = vadd.f32 %v1403, %v1752
      %v1803 = vadd.f32 %v1404, %v1757
      %v1804 = vadd.f32 %v1405, %v1762
      %v1805 = vadd.f32 %v1406, %v1767
      %v1806 = vadd.f32 %v1407, %v1772
      %v1808 = vlaneseq
      %v1809 = vshrl.u32 %v1808, 7
      %v1810 = vsub.s32 0, %v1809
      %v1811 = vrot.slane %v295, %v1810
      %v1813 = vadd.f32 %v1775, %v1811
      %v1814 = vadd.f32 %v1776, %v1811
      %v1815 = vadd.f32 %v1777, %v1811
      %v1816 = vadd.f32 %v1778, %v1811
      %v1817 = vadd.f32 %v1779, %v1811
      %v1818 = vadd.f32 %v1780, %v1811
      %v1819 = vadd.f32 %v1781, %v1811
      %v1820 = vadd.f32 %v1782, %v1811
      %v1821 = vadd.f32 %v1783, %v1811
      %v1822 = vadd.f32 %v1784, %v1811
      %v1823 = vadd.f32 %v1785, %v1811
      %v1824 = vadd.f32 %v1786, %v1811
      %v1825 = vadd.f32 %v1787, %v1811
      %v1826 = vadd.f32 %v1788, %v1811
      %v1827 = vadd.f32 %v1789, %v1811
      %v1828 = vadd.f32 %v1790, %v1811
      %v1829 = vadd.f32 %v1791, %v1811
      %v1830 = vadd.f32 %v1792, %v1811
      %v1831 = vadd.f32 %v1793, %v1811
      %v1832 = vadd.f32 %v1794, %v1811
      %v1833 = vadd.f32 %v1795, %v1811
      %v1834 = vadd.f32 %v1796, %v1811
      %v1835 = vadd.f32 %v1797, %v1811
      %v1836 = vadd.f32 %v1798, %v1811
      %v1837 = vadd.f32 %v1799, %v1811
      %v1838 = vadd.f32 %v1800, %v1811
      %v1839 = vadd.f32 %v1801, %v1811
      %v1840 = vadd.f32 %v1802, %v1811
      %v1841 = vadd.f32 %v1803, %v1811
      %v1842 = vadd.f32 %v1804, %v1811
      %v1843 = vadd.f32 %v1805, %v1811
      %v1844 = vadd.f32 %v1806, %v1811
      %vm1845 = vcmask 64512
      %1846 = vst.msk [vmem:[%s172] sm:$0xff] %vm1845, %v1813
      %1847 = vst.msk [vmem:[%s172 + $0x8] sm:$0xff] %vm1845, %v1814
      %1848 = vst.msk [vmem:[%s172 + $0x10] sm:$0xff] %vm1845, %v1815
      %1849 = vst.msk [vmem:[%s172 + $0x18] sm:$0xff] %vm1845, %v1816
      %1850 = vst.msk [vmem:[%s172 + $0x20] sm:$0xff] %vm1845, %v1817
      %1851 = vst.msk [vmem:[%s172 + $0x28] sm:$0xff] %vm1845, %v1818
      %1852 = vst.msk [vmem:[%s172 + $0x30] sm:$0xff] %vm1845, %v1819
      %1853 = vst.msk [vmem:[%s172 + $0x38] sm:$0xff] %vm1845, %v1820
      %1854 = vst.msk [vmem:[%s172 + $0x40] sm:$0xff] %vm1845, %v1821
      %1855 = vst.msk [vmem:[%s172 + $0x48] sm:$0xff] %vm1845, %v1822
      %1856 = vst.msk [vmem:[%s172 + $0x50] sm:$0xff] %vm1845, %v1823
      %1857 = vst.msk [vmem:[%s172 + $0x58] sm:$0xff] %vm1845, %v1824
      %1858 = vst.msk [vmem:[%s172 + $0x60] sm:$0xff] %vm1845, %v1825
      %1859 = vst.msk [vmem:[%s172 + $0x68] sm:$0xff] %vm1845, %v1826
      %1860 = vst.msk [vmem:[%s172 + $0x70] sm:$0xff] %vm1845, %v1827
      %1861 = vst.msk [vmem:[%s172 + $0x78] sm:$0xff] %vm1845, %v1828
      %1862 = vst.msk [vmem:[%s172 + $0x80] sm:$0xff] %vm1845, %v1829
      %1863 = vst.msk [vmem:[%s172 + $0x88] sm:$0xff] %vm1845, %v1830
      %1864 = vst.msk [vmem:[%s172 + $0x90] sm:$0xff] %vm1845, %v1831
      %1865 = vst.msk [vmem:[%s172 + $0x98] sm:$0xff] %vm1845, %v1832
      %1866 = vst.msk [vmem:[%s172 + $0xa0] sm:$0xff] %vm1845, %v1833
      %1867 = vst.msk [vmem:[%s172 + $0xa8] sm:$0xff] %vm1845, %v1834
      %1868 = vst.msk [vmem:[%s172 + $0xb0] sm:$0xff] %vm1845, %v1835
      %1869 = vst.msk [vmem:[%s172 + $0xb8] sm:$0xff] %vm1845, %v1836
      %1870 = vst.msk [vmem:[%s172 + $0xc0] sm:$0xff] %vm1845, %v1837
      %1871 = vst.msk [vmem:[%s172 + $0xc8] sm:$0xff] %vm1845, %v1838
      %1872 = vst.msk [vmem:[%s172 + $0xd0] sm:$0xff] %vm1845, %v1839
      %1873 = vst.msk [vmem:[%s172 + $0xd8] sm:$0xff] %vm1845, %v1840
      %1874 = vst.msk [vmem:[%s172 + $0xe0] sm:$0xff] %vm1845, %v1841
      %1875 = vst.msk [vmem:[%s172 + $0xe8] sm:$0xff] %vm1845, %v1842
      %1876 = vst.msk [vmem:[%s172 + $0xf0] sm:$0xff] %vm1845, %v1843
      %1877 = vst.msk [vmem:[%s172 + $0xf8] sm:$0xff] %vm1845, %v1844
      %v1878 = vld [vmem:[%s1] sm:$0xf]
      %v1879 = vld [vmem:[%s329] sm:$0xf]
      %v1880 = vadd.f32 %v1878, %v1879
      %v1881 = vld [vmem:[#allocation2 + $0x1] sm:$0xff]
      %v1882 = vld [vmem:[#allocation2 + $0x9] sm:$0xff]
      %v1883 = vld [vmem:[#allocation2 + $0x19] sm:$0xff]
      %v1884 = vld [vmem:[#allocation2 + $0x21] sm:$0xff]
      %v1885 = vld [vmem:[#allocation2 + $0x31] sm:$0xff]
      %v1886 = vld [vmem:[#allocation2 + $0x39] sm:$0xff]
      %v1887 = vld [vmem:[#allocation2 + $0x49] sm:$0xff]
      %v1888 = vld [vmem:[#allocation2 + $0x51] sm:$0xff]
      %v1889 = vld [vmem:[#allocation2 + $0x61] sm:$0xff]
      %v1890 = vld [vmem:[#allocation2 + $0x69] sm:$0xff]
      %v1891 = vld [vmem:[#allocation2 + $0x79] sm:$0xff]
      %v1892 = vld [vmem:[#allocation2 + $0x81] sm:$0xff]
      %v1893 = vld [vmem:[#allocation2 + $0x91] sm:$0xff]
      %v1894 = vld [vmem:[#allocation2 + $0x99] sm:$0xff]
      %v1895 = vld [vmem:[#allocation2 + $0xa9] sm:$0xff]
      %v1896 = vld [vmem:[#allocation2 + $0xb1] sm:$0xff]
      %v1897 = vld [vmem:[#allocation2 + $0xc1] sm:$0xff]
      %v1898 = vld [vmem:[#allocation2 + $0xc9] sm:$0xff]
      %v1899 = vld [vmem:[#allocation2 + $0xd9] sm:$0xff]
      %v1900 = vld [vmem:[#allocation2 + $0xe1] sm:$0xff]
      %v1901 = vld [vmem:[#allocation2 + $0xf1] sm:$0xff]
      %v1902 = vld [vmem:[#allocation2 + $0xf9] sm:$0xff]
      %v1903 = vld [vmem:[#allocation2 + $0x109] sm:$0xff]
      %v1904 = vld [vmem:[#allocation2 + $0x111] sm:$0xff]
      %v1905 = vld [vmem:[#allocation2 + $0x121] sm:$0xff]
      %v1906 = vld [vmem:[#allocation2 + $0x129] sm:$0xff]
      %v1907 = vld [vmem:[#allocation2 + $0x139] sm:$0xff]
      %v1908 = vld [vmem:[#allocation2 + $0x141] sm:$0xff]
      %v1909 = vld [vmem:[#allocation2 + $0x151] sm:$0xff]
      %v1910 = vld [vmem:[#allocation2 + $0x159] sm:$0xff]
      %v1911 = vld [vmem:[#allocation2 + $0x169] sm:$0xff]
      %v1912 = vld [vmem:[#allocation2 + $0x171] sm:$0xff]
      %v1913 = vld [vmem:[%s331] sm:$0xf]
      %v1914 = vld [vmem:[#allocation2 + $0x2] sm:$0xff]
      %v1915 = vld [vmem:[#allocation2 + $0xa] sm:$0xff]
      %v1916 = vld [vmem:[#allocation2 + $0x1a] sm:$0xff]
      %v1917 = vld [vmem:[#allocation2 + $0x22] sm:$0xff]
      %v1918 = vld [vmem:[#allocation2 + $0x32] sm:$0xff]
      %v1919 = vld [vmem:[#allocation2 + $0x3a] sm:$0xff]
      %v1920 = vld [vmem:[#allocation2 + $0x4a] sm:$0xff]
      %v1921 = vld [vmem:[#allocation2 + $0x52] sm:$0xff]
      %v1922 = vld [vmem:[#allocation2 + $0x62] sm:$0xff]
      %v1923 = vld [vmem:[#allocation2 + $0x6a] sm:$0xff]
      %v1924 = vld [vmem:[#allocation2 + $0x7a] sm:$0xff]
      %v1925 = vld [vmem:[#allocation2 + $0x82] sm:$0xff]
      %v1926 = vld [vmem:[#allocation2 + $0x92] sm:$0xff]
      %v1927 = vld [vmem:[#allocation2 + $0x9a] sm:$0xff]
      %v1928 = vld [vmem:[#allocation2 + $0xaa] sm:$0xff]
      %v1929 = vld [vmem:[#allocation2 + $0xb2] sm:$0xff]
      %v1930 = vld [vmem:[#allocation2 + $0xc2] sm:$0xff]
      %v1931 = vld [vmem:[#allocation2 + $0xca] sm:$0xff]
      %v1932 = vld [vmem:[#allocation2 + $0xda] sm:$0xff]
      %v1933 = vld [vmem:[#allocation2 + $0xe2] sm:$0xff]
      %v1934 = vld [vmem:[#allocation2 + $0xf2] sm:$0xff]
      %v1935 = vld [vmem:[#allocation2 + $0xfa] sm:$0xff]
      %v1936 = vld [vmem:[#allocation2 + $0x10a] sm:$0xff]
      %v1937 = vld [vmem:[#allocation2 + $0x112] sm:$0xff]
      %v1938 = vld [vmem:[#allocation2 + $0x122] sm:$0xff]
      %v1939 = vld [vmem:[#allocation2 + $0x12a] sm:$0xff]
      %v1940 = vld [vmem:[#allocation2 + $0x13a] sm:$0xff]
      %v1941 = vld [vmem:[#allocation2 + $0x142] sm:$0xff]
      %v1942 = vld [vmem:[#allocation2 + $0x152] sm:$0xff]
      %v1943 = vld [vmem:[#allocation2 + $0x15a] sm:$0xff]
      %v1944 = vld [vmem:[#allocation2 + $0x16a] sm:$0xff]
      %v1945 = vld [vmem:[#allocation2 + $0x172] sm:$0xff]
      %v1947 = vsel %vm174, %v1914, 0
      %v1950 = vsel %vm174, %v1915, 0
      %v1953 = vsel %vm174, %v1916, 0
      %v1956 = vsel %vm174, %v1917, 0
      %v1959 = vsel %vm174, %v1918, 0
      %v1962 = vsel %vm174, %v1919, 0
      %v1965 = vsel %vm174, %v1920, 0
      %v1968 = vsel %vm174, %v1921, 0
      %v1971 = vsel %vm174, %v1922, 0
      %v1974 = vsel %vm174, %v1923, 0
      %v1977 = vsel %vm174, %v1924, 0
      %v1980 = vsel %vm174, %v1925, 0
      %v1983 = vsel %vm174, %v1926, 0
      %v1986 = vsel %vm174, %v1927, 0
      %v1989 = vsel %vm174, %v1928, 0
      %v1992 = vsel %vm174, %v1929, 0
      %v1995 = vsel %vm174, %v1930, 0
      %v1998 = vsel %vm174, %v1931, 0
      %v2001 = vsel %vm174, %v1932, 0
      %v2004 = vsel %vm174, %v1933, 0
      %v2007 = vsel %vm174, %v1934, 0
      %v2010 = vsel %vm174, %v1935, 0
      %v2013 = vsel %vm174, %v1936, 0
      %v2016 = vsel %vm174, %v1937, 0
      %v2019 = vsel %vm174, %v1938, 0
      %v2022 = vsel %vm174, %v1939, 0
      %v2025 = vsel %vm174, %v1940, 0
      %v2028 = vsel %vm174, %v1941, 0
      %v2031 = vsel %vm174, %v1942, 0
      %v2034 = vsel %vm174, %v1943, 0
      %v2037 = vsel %vm174, %v1944, 0
      %v2040 = vsel %vm174, %v1945, 0
      %v2043 = vsel %vm462, %v1913, 0
      %2045 = vmatprep.subr.mxu0 0.0
      %2046 = vmatpush1.msra.mxu0 0.0
      %2047 = vmatprep.subr.mxu0 0.0
      %2048 = vmatpush1.msra.mxu0 0.0
      %2049 = vmatprep.subr.mxu0 0.0
      %2050 = vmatpush1.msra.mxu0 0.0
      %2051 = vmatprep.subr.mxu0 0.0
      %2052 = vmatpush1.msra.mxu0 0.0
      %2053 = vmatprep.subr.mxu0 0.0
      %2054 = vmatpush1.msra.mxu0 0.0
      %2055 = vmatprep.subr.mxu0 0.0
      %2056 = vmatpush1.msra.mxu0 0.0
      %2057 = vmatprep.subr.mxu0 0.0
      %2058 = vmatpush1.msra.mxu0 0.0
      %2059 = vmatprep.subr.mxu0 0.0
      %2060 = vmatpush1.msra.mxu0 0.0
      %2061 = vmatprep.subr.mxu0 0.0
      %2062 = vmatpush1.msra.mxu0 0.0
      %2063 = vmatprep.subr.mxu0 0.0
      %2064 = vmatpush1.msra.mxu0 0.0
      %2065 = vmatprep.subr.mxu0 0.0
      %2066 = vmatpush1.msra.mxu0 0.0
      %2067 = vmatprep.subr.mxu0 0.0
      %2068 = vmatpush1.msra.mxu0 0.0
      %2069 = vmatprep.subr.mxu0 0.0
      %2070 = vmatpush1.msra.mxu0 0.0
      %2071 = vmatprep.subr.mxu0 0.0
      %2072 = vmatpush1.msra.mxu0 0.0
      %2073 = vmatprep.subr.mxu0 0.0
      %2074 = vmatpush1.msra.mxu0 0.0
      %2075 = vmatprep.subr.mxu0 0.0
      %2076 = vmatpush1.msra.mxu0 %v2043
      %2077 = vmatprep.subr.mxu0 0.0
      %2078 = vmatpush2.msra.mxu0 0.0
      %2079 = vmatprep.subr.mxu0 0.0
      %2080 = vmatpush2.msra.mxu0 0.0
      %2081 = vmatprep.subr.mxu0 0.0
      %2082 = vmatpush2.msra.mxu0 0.0
      %2083 = vmatprep.subr.mxu0 0.0
      %2084 = vmatpush2.msra.mxu0 0.0
      %2085 = vmatprep.subr.mxu0 0.0
      %2086 = vmatpush2.msra.mxu0 0.0
      %2087 = vmatprep.subr.mxu0 0.0
      %2088 = vmatpush2.msra.mxu0 0.0
      %2089 = vmatprep.subr.mxu0 0.0
      %2090 = vmatpush2.msra.mxu0 0.0
      %2091 = vmatprep.subr.mxu0 0.0
      %2092 = vmatpush2.msra.mxu0 0.0
      %2093 = vmatprep.subr.mxu0 0.0
      %2094 = vmatpush2.msra.mxu0 0.0
      %2095 = vmatprep.subr.mxu0 0.0
      %2096 = vmatpush2.msra.mxu0 0.0
      %2097 = vmatprep.subr.mxu0 0.0
      %2098 = vmatpush2.msra.mxu0 0.0
      %2099 = vmatprep.subr.mxu0 0.0
      %2100 = vmatpush2.msra.mxu0 0.0
      %2101 = vmatprep.subr.mxu0 0.0
      %2102 = vmatpush2.msra.mxu0 0.0
      %2103 = vmatprep.subr.mxu0 0.0
      %2104 = vmatpush2.msra.mxu0 0.0
      %2105 = vmatprep.subr.mxu0 0.0
      %2106 = vmatpush2.msra.mxu0 0.0
      %2107 = vmatprep.subr.mxu0 0.0
      %2108 = vmatpush2.msra.mxu0 0.0
      %2109 = vmatprep.mubr.f32.mxu0 0.0
      %2110 = vmatmul.mubr.f32.gmra.mxu0 %v1947
      %v2111 = vpop.f32.mrf.mxu0
      %v2112 = vadd.f32 0.0, %v2111
      %v2113 = vpop.f32.mrf.mxu0
      %2114 = vmatprep.mubr.f32.mxu0 0.0
      %2115 = vmatmul.mubr.f32.gmra.mxu0 %v1950
      %v2116 = vpop.f32.mrf.mxu0
      %v2117 = vadd.f32 0.0, %v2116
      %v2118 = vpop.f32.mrf.mxu0
      %2119 = vmatprep.mubr.f32.mxu0 0.0
      %2120 = vmatmul.mubr.f32.gmra.mxu0 %v1953
      %v2121 = vpop.f32.mrf.mxu0
      %v2122 = vadd.f32 0.0, %v2121
      %v2123 = vpop.f32.mrf.mxu0
      %2124 = vmatprep.mubr.f32.mxu0 0.0
      %2125 = vmatmul.mubr.f32.gmra.mxu0 %v1956
      %v2126 = vpop.f32.mrf.mxu0
      %v2127 = vadd.f32 0.0, %v2126
      %v2128 = vpop.f32.mrf.mxu0
      %2129 = vmatprep.mubr.f32.mxu0 0.0
      %2130 = vmatmul.mubr.f32.gmra.mxu0 %v1959
      %v2131 = vpop.f32.mrf.mxu0
      %v2132 = vadd.f32 0.0, %v2131
      %v2133 = vpop.f32.mrf.mxu0
      %2134 = vmatprep.mubr.f32.mxu0 0.0
      %2135 = vmatmul.mubr.f32.gmra.mxu0 %v1962
      %v2136 = vpop.f32.mrf.mxu0
      %v2137 = vadd.f32 0.0, %v2136
      %v2138 = vpop.f32.mrf.mxu0
      %2139 = vmatprep.mubr.f32.mxu0 0.0
      %2140 = vmatmul.mubr.f32.gmra.mxu0 %v1965
      %v2141 = vpop.f32.mrf.mxu0
      %v2142 = vadd.f32 0.0, %v2141
      %v2143 = vpop.f32.mrf.mxu0
      %2144 = vmatprep.mubr.f32.mxu0 0.0
      %2145 = vmatmul.mubr.f32.gmra.mxu0 %v1968
      %v2146 = vpop.f32.mrf.mxu0
      %v2147 = vadd.f32 0.0, %v2146
      %v2148 = vpop.f32.mrf.mxu0
      %2149 = vmatprep.mubr.f32.mxu0 0.0
      %2150 = vmatmul.mubr.f32.gmra.mxu0 %v1971
      %v2151 = vpop.f32.mrf.mxu0
      %v2152 = vadd.f32 0.0, %v2151
      %v2153 = vpop.f32.mrf.mxu0
      %2154 = vmatprep.mubr.f32.mxu0 0.0
      %2155 = vmatmul.mubr.f32.gmra.mxu0 %v1974
      %v2156 = vpop.f32.mrf.mxu0
      %v2157 = vadd.f32 0.0, %v2156
      %v2158 = vpop.f32.mrf.mxu0
      %2159 = vmatprep.mubr.f32.mxu0 0.0
      %2160 = vmatmul.mubr.f32.gmra.mxu0 %v1977
      %v2161 = vpop.f32.mrf.mxu0
      %v2162 = vadd.f32 0.0, %v2161
      %v2163 = vpop.f32.mrf.mxu0
      %2164 = vmatprep.mubr.f32.mxu0 0.0
      %2165 = vmatmul.mubr.f32.gmra.mxu0 %v1980
      %v2166 = vpop.f32.mrf.mxu0
      %v2167 = vadd.f32 0.0, %v2166
      %v2168 = vpop.f32.mrf.mxu0
      %2169 = vmatprep.mubr.f32.mxu0 0.0
      %2170 = vmatmul.mubr.f32.gmra.mxu0 %v1983
      %v2171 = vpop.f32.mrf.mxu0
      %v2172 = vadd.f32 0.0, %v2171
      %v2173 = vpop.f32.mrf.mxu0
      %2174 = vmatprep.mubr.f32.mxu0 0.0
      %2175 = vmatmul.mubr.f32.gmra.mxu0 %v1986
      %v2176 = vpop.f32.mrf.mxu0
      %v2177 = vadd.f32 0.0, %v2176
      %v2178 = vpop.f32.mrf.mxu0
      %2179 = vmatprep.mubr.f32.mxu0 0.0
      %2180 = vmatmul.mubr.f32.gmra.mxu0 %v1989
      %v2181 = vpop.f32.mrf.mxu0
      %v2182 = vadd.f32 0.0, %v2181
      %v2183 = vpop.f32.mrf.mxu0
      %2184 = vmatprep.mubr.f32.mxu0 0.0
      %2185 = vmatmul.mubr.f32.gmra.mxu0 %v1992
      %v2186 = vpop.f32.mrf.mxu0
      %v2187 = vadd.f32 0.0, %v2186
      %v2188 = vpop.f32.mrf.mxu0
      %2189 = vmatprep.mubr.f32.mxu0 0.0
      %2190 = vmatmul.mubr.f32.gmra.mxu0 %v1995
      %v2191 = vpop.f32.mrf.mxu0
      %v2192 = vadd.f32 0.0, %v2191
      %v2193 = vpop.f32.mrf.mxu0
      %2194 = vmatprep.mubr.f32.mxu0 0.0
      %2195 = vmatmul.mubr.f32.gmra.mxu0 %v1998
      %v2196 = vpop.f32.mrf.mxu0
      %v2197 = vadd.f32 0.0, %v2196
      %v2198 = vpop.f32.mrf.mxu0
      %2199 = vmatprep.mubr.f32.mxu0 0.0
      %2200 = vmatmul.mubr.f32.gmra.mxu0 %v2001
      %v2201 = vpop.f32.mrf.mxu0
      %v2202 = vadd.f32 0.0, %v2201
      %v2203 = vpop.f32.mrf.mxu0
      %2204 = vmatprep.mubr.f32.mxu0 0.0
      %2205 = vmatmul.mubr.f32.gmra.mxu0 %v2004
      %v2206 = vpop.f32.mrf.mxu0
      %v2207 = vadd.f32 0.0, %v2206
      %v2208 = vpop.f32.mrf.mxu0
      %2209 = vmatprep.mubr.f32.mxu0 0.0
      %2210 = vmatmul.mubr.f32.gmra.mxu0 %v2007
      %v2211 = vpop.f32.mrf.mxu0
      %v2212 = vadd.f32 0.0, %v2211
      %v2213 = vpop.f32.mrf.mxu0
      %2214 = vmatprep.mubr.f32.mxu0 0.0
      %2215 = vmatmul.mubr.f32.gmra.mxu0 %v2010
      %v2216 = vpop.f32.mrf.mxu0
      %v2217 = vadd.f32 0.0, %v2216
      %v2218 = vpop.f32.mrf.mxu0
      %2219 = vmatprep.mubr.f32.mxu0 0.0
      %2220 = vmatmul.mubr.f32.gmra.mxu0 %v2013
      %v2221 = vpop.f32.mrf.mxu0
      %v2222 = vadd.f32 0.0, %v2221
      %v2223 = vpop.f32.mrf.mxu0
      %2224 = vmatprep.mubr.f32.mxu0 0.0
      %2225 = vmatmul.mubr.f32.gmra.mxu0 %v2016
      %v2226 = vpop.f32.mrf.mxu0
      %v2227 = vadd.f32 0.0, %v2226
      %v2228 = vpop.f32.mrf.mxu0
      %2229 = vmatprep.mubr.f32.mxu0 0.0
      %2230 = vmatmul.mubr.f32.gmra.mxu0 %v2019
      %v2231 = vpop.f32.mrf.mxu0
      %v2232 = vadd.f32 0.0, %v2231
      %v2233 = vpop.f32.mrf.mxu0
      %2234 = vmatprep.mubr.f32.mxu0 0.0
      %2235 = vmatmul.mubr.f32.gmra.mxu0 %v2022
      %v2236 = vpop.f32.mrf.mxu0
      %v2237 = vadd.f32 0.0, %v2236
      %v2238 = vpop.f32.mrf.mxu0
      %2239 = vmatprep.mubr.f32.mxu0 0.0
      %2240 = vmatmul.mubr.f32.gmra.mxu0 %v2025
      %v2241 = vpop.f32.mrf.mxu0
      %v2242 = vadd.f32 0.0, %v2241
      %v2243 = vpop.f32.mrf.mxu0
      %2244 = vmatprep.mubr.f32.mxu0 0.0
      %2245 = vmatmul.mubr.f32.gmra.mxu0 %v2028
      %v2246 = vpop.f32.mrf.mxu0
      %v2247 = vadd.f32 0.0, %v2246
      %v2248 = vpop.f32.mrf.mxu0
      %2249 = vmatprep.mubr.f32.mxu0 0.0
      %2250 = vmatmul.mubr.f32.gmra.mxu0 %v2031
      %v2251 = vpop.f32.mrf.mxu0
      %v2252 = vadd.f32 0.0, %v2251
      %v2253 = vpop.f32.mrf.mxu0
      %2254 = vmatprep.mubr.f32.mxu0 0.0
      %2255 = vmatmul.mubr.f32.gmra.mxu0 %v2034
      %v2256 = vpop.f32.mrf.mxu0
      %v2257 = vadd.f32 0.0, %v2256
      %v2258 = vpop.f32.mrf.mxu0
      %2259 = vmatprep.mubr.f32.mxu0 0.0
      %2260 = vmatmul.mubr.f32.gmra.mxu0 %v2037
      %v2261 = vpop.f32.mrf.mxu0
      %v2262 = vadd.f32 0.0, %v2261
      %v2263 = vpop.f32.mrf.mxu0
      %2264 = vmatprep.mubr.f32.mxu0 0.0
      %2265 = vmatmul.mubr.f32.gmra.mxu0 %v2040
      %v2266 = vpop.f32.mrf.mxu0
      %v2267 = vadd.f32 0.0, %v2266
      %v2268 = vpop.f32.mrf.mxu0
      %2269 = vdwg.mxu0
      %v2271 = vsel %vm174, %v1881, 0
      %v2274 = vsel %vm174, %v1882, 0
      %v2277 = vsel %vm174, %v1883, 0
      %v2280 = vsel %vm174, %v1884, 0
      %v2283 = vsel %vm174, %v1885, 0
      %v2286 = vsel %vm174, %v1886, 0
      %v2289 = vsel %vm174, %v1887, 0
      %v2292 = vsel %vm174, %v1888, 0
      %v2295 = vsel %vm174, %v1889, 0
      %v2298 = vsel %vm174, %v1890, 0
      %v2301 = vsel %vm174, %v1891, 0
      %v2304 = vsel %vm174, %v1892, 0
      %v2307 = vsel %vm174, %v1893, 0
      %v2310 = vsel %vm174, %v1894, 0
      %v2313 = vsel %vm174, %v1895, 0
      %v2316 = vsel %vm174, %v1896, 0
      %v2319 = vsel %vm174, %v1897, 0
      %v2322 = vsel %vm174, %v1898, 0
      %v2325 = vsel %vm174, %v1899, 0
      %v2328 = vsel %vm174, %v1900, 0
      %v2331 = vsel %vm174, %v1901, 0
      %v2334 = vsel %vm174, %v1902, 0
      %v2337 = vsel %vm174, %v1903, 0
      %v2340 = vsel %vm174, %v1904, 0
      %v2343 = vsel %vm174, %v1905, 0
      %v2346 = vsel %vm174, %v1906, 0
      %v2349 = vsel %vm174, %v1907, 0
      %v2352 = vsel %vm174, %v1908, 0
      %v2355 = vsel %vm174, %v1909, 0
      %v2358 = vsel %vm174, %v1910, 0
      %v2361 = vsel %vm174, %v1911, 0
      %v2364 = vsel %vm174, %v1912, 0
      %v2367 = vsel %vm462, %v1880, 0
      %2369 = vmatprep.subr.mxu0 0.0
      %2370 = vmatpush1.msra.mxu0 0.0
      %2371 = vmatprep.subr.mxu0 0.0
      %2372 = vmatpush1.msra.mxu0 0.0
      %2373 = vmatprep.subr.mxu0 0.0
      %2374 = vmatpush1.msra.mxu0 0.0
      %2375 = vmatprep.subr.mxu0 0.0
      %2376 = vmatpush1.msra.mxu0 0.0
      %2377 = vmatprep.subr.mxu0 0.0
      %2378 = vmatpush1.msra.mxu0 0.0
      %2379 = vmatprep.subr.mxu0 0.0
      %2380 = vmatpush1.msra.mxu0 0.0
      %2381 = vmatprep.subr.mxu0 0.0
      %2382 = vmatpush1.msra.mxu0 0.0
      %2383 = vmatprep.subr.mxu0 0.0
      %2384 = vmatpush1.msra.mxu0 0.0
      %2385 = vmatprep.subr.mxu0 0.0
      %2386 = vmatpush1.msra.mxu0 0.0
      %2387 = vmatprep.subr.mxu0 0.0
      %2388 = vmatpush1.msra.mxu0 0.0
      %2389 = vmatprep.subr.mxu0 0.0
      %2390 = vmatpush1.msra.mxu0 0.0
      %2391 = vmatprep.subr.mxu0 0.0
      %2392 = vmatpush1.msra.mxu0 0.0
      %2393 = vmatprep.subr.mxu0 0.0
      %2394 = vmatpush1.msra.mxu0 0.0
      %2395 = vmatprep.subr.mxu0 0.0
      %2396 = vmatpush1.msra.mxu0 0.0
      %2397 = vmatprep.subr.mxu0 0.0
      %2398 = vmatpush1.msra.mxu0 0.0
      %2399 = vmatprep.subr.mxu0 0.0
      %2400 = vmatpush1.msra.mxu0 %v2367
      %2401 = vmatprep.subr.mxu0 0.0
      %2402 = vmatpush2.msra.mxu0 0.0
      %2403 = vmatprep.subr.mxu0 0.0
      %2404 = vmatpush2.msra.mxu0 0.0
      %2405 = vmatprep.subr.mxu0 0.0
      %2406 = vmatpush2.msra.mxu0 0.0
      %2407 = vmatprep.subr.mxu0 0.0
      %2408 = vmatpush2.msra.mxu0 0.0
      %2409 = vmatprep.subr.mxu0 0.0
      %2410 = vmatpush2.msra.mxu0 0.0
      %2411 = vmatprep.subr.mxu0 0.0
      %2412 = vmatpush2.msra.mxu0 0.0
      %2413 = vmatprep.subr.mxu0 0.0
      %2414 = vmatpush2.msra.mxu0 0.0
      %2415 = vmatprep.subr.mxu0 0.0
      %2416 = vmatpush2.msra.mxu0 0.0
      %2417 = vmatprep.subr.mxu0 0.0
      %2418 = vmatpush2.msra.mxu0 0.0
      %2419 = vmatprep.subr.mxu0 0.0
      %2420 = vmatpush2.msra.mxu0 0.0
      %2421 = vmatprep.subr.mxu0 0.0
      %2422 = vmatpush2.msra.mxu0 0.0
      %2423 = vmatprep.subr.mxu0 0.0
      %2424 = vmatpush2.msra.mxu0 0.0
      %2425 = vmatprep.subr.mxu0 0.0
      %2426 = vmatpush2.msra.mxu0 0.0
      %2427 = vmatprep.subr.mxu0 0.0
      %2428 = vmatpush2.msra.mxu0 0.0
      %2429 = vmatprep.subr.mxu0 0.0
      %2430 = vmatpush2.msra.mxu0 0.0
      %2431 = vmatprep.subr.mxu0 0.0
      %2432 = vmatpush2.msra.mxu0 0.0
      %2433 = vmatprep.mubr.f32.mxu0 0.0
      %2434 = vmatmul.mubr.f32.gmra.mxu0 %v2271
      %v2435 = vpop.f32.mrf.mxu0
      %v2436 = vadd.f32 %v2112, %v2435
      %v2437 = vpop.f32.mrf.mxu0
      %2438 = vmatprep.mubr.f32.mxu0 0.0
      %2439 = vmatmul.mubr.f32.gmra.mxu0 %v2274
      %v2440 = vpop.f32.mrf.mxu0
      %v2441 = vadd.f32 %v2117, %v2440
      %v2442 = vpop.f32.mrf.mxu0
      %2443 = vmatprep.mubr.f32.mxu0 0.0
      %2444 = vmatmul.mubr.f32.gmra.mxu0 %v2277
      %v2445 = vpop.f32.mrf.mxu0
      %v2446 = vadd.f32 %v2122, %v2445
      %v2447 = vpop.f32.mrf.mxu0
      %2448 = vmatprep.mubr.f32.mxu0 0.0
      %2449 = vmatmul.mubr.f32.gmra.mxu0 %v2280
      %v2450 = vpop.f32.mrf.mxu0
      %v2451 = vadd.f32 %v2127, %v2450
      %v2452 = vpop.f32.mrf.mxu0
      %2453 = vmatprep.mubr.f32.mxu0 0.0
      %2454 = vmatmul.mubr.f32.gmra.mxu0 %v2283
      %v2455 = vpop.f32.mrf.mxu0
      %v2456 = vadd.f32 %v2132, %v2455
      %v2457 = vpop.f32.mrf.mxu0
      %2458 = vmatprep.mubr.f32.mxu0 0.0
      %2459 = vmatmul.mubr.f32.gmra.mxu0 %v2286
      %v2460 = vpop.f32.mrf.mxu0
      %v2461 = vadd.f32 %v2137, %v2460
      %v2462 = vpop.f32.mrf.mxu0
      %2463 = vmatprep.mubr.f32.mxu0 0.0
      %2464 = vmatmul.mubr.f32.gmra.mxu0 %v2289
      %v2465 = vpop.f32.mrf.mxu0
      %v2466 = vadd.f32 %v2142, %v2465
      %v2467 = vpop.f32.mrf.mxu0
      %2468 = vmatprep.mubr.f32.mxu0 0.0
      %2469 = vmatmul.mubr.f32.gmra.mxu0 %v2292
      %v2470 = vpop.f32.mrf.mxu0
      %v2471 = vadd.f32 %v2147, %v2470
      %v2472 = vpop.f32.mrf.mxu0
      %2473 = vmatprep.mubr.f32.mxu0 0.0
      %2474 = vmatmul.mubr.f32.gmra.mxu0 %v2295
      %v2475 = vpop.f32.mrf.mxu0
      %v2476 = vadd.f32 %v2152, %v2475
      %v2477 = vpop.f32.mrf.mxu0
      %2478 = vmatprep.mubr.f32.mxu0 0.0
      %2479 = vmatmul.mubr.f32.gmra.mxu0 %v2298
      %v2480 = vpop.f32.mrf.mxu0
      %v2481 = vadd.f32 %v2157, %v2480
      %v2482 = vpop.f32.mrf.mxu0
      %2483 = vmatprep.mubr.f32.mxu0 0.0
      %2484 = vmatmul.mubr.f32.gmra.mxu0 %v2301
      %v2485 = vpop.f32.mrf.mxu0
      %v2486 = vadd.f32 %v2162, %v2485
      %v2487 = vpop.f32.mrf.mxu0
      %2488 = vmatprep.mubr.f32.mxu0 0.0
      %2489 = vmatmul.mubr.f32.gmra.mxu0 %v2304
      %v2490 = vpop.f32.mrf.mxu0
      %v2491 = vadd.f32 %v2167, %v2490
      %v2492 = vpop.f32.mrf.mxu0
      %2493 = vmatprep.mubr.f32.mxu0 0.0
      %2494 = vmatmul.mubr.f32.gmra.mxu0 %v2307
      %v2495 = vpop.f32.mrf.mxu0
      %v2496 = vadd.f32 %v2172, %v2495
      %v2497 = vpop.f32.mrf.mxu0
      %2498 = vmatprep.mubr.f32.mxu0 0.0
      %2499 = vmatmul.mubr.f32.gmra.mxu0 %v2310
      %v2500 = vpop.f32.mrf.mxu0
      %v2501 = vadd.f32 %v2177, %v2500
      %v2502 = vpop.f32.mrf.mxu0
      %2503 = vmatprep.mubr.f32.mxu0 0.0
      %2504 = vmatmul.mubr.f32.gmra.mxu0 %v2313
      %v2505 = vpop.f32.mrf.mxu0
      %v2506 = vadd.f32 %v2182, %v2505
      %v2507 = vpop.f32.mrf.mxu0
      %2508 = vmatprep.mubr.f32.mxu0 0.0
      %2509 = vmatmul.mubr.f32.gmra.mxu0 %v2316
      %v2510 = vpop.f32.mrf.mxu0
      %v2511 = vadd.f32 %v2187, %v2510
      %v2512 = vpop.f32.mrf.mxu0
      %2513 = vmatprep.mubr.f32.mxu0 0.0
      %2514 = vmatmul.mubr.f32.gmra.mxu0 %v2319
      %v2515 = vpop.f32.mrf.mxu0
      %v2516 = vadd.f32 %v2192, %v2515
      %v2517 = vpop.f32.mrf.mxu0
      %2518 = vmatprep.mubr.f32.mxu0 0.0
      %2519 = vmatmul.mubr.f32.gmra.mxu0 %v2322
      %v2520 = vpop.f32.mrf.mxu0
      %v2521 = vadd.f32 %v2197, %v2520
      %v2522 = vpop.f32.mrf.mxu0
      %2523 = vmatprep.mubr.f32.mxu0 0.0
      %2524 = vmatmul.mubr.f32.gmra.mxu0 %v2325
      %v2525 = vpop.f32.mrf.mxu0
      %v2526 = vadd.f32 %v2202, %v2525
      %v2527 = vpop.f32.mrf.mxu0
      %2528 = vmatprep.mubr.f32.mxu0 0.0
      %2529 = vmatmul.mubr.f32.gmra.mxu0 %v2328
      %v2530 = vpop.f32.mrf.mxu0
      %v2531 = vadd.f32 %v2207, %v2530
      %v2532 = vpop.f32.mrf.mxu0
      %2533 = vmatprep.mubr.f32.mxu0 0.0
      %2534 = vmatmul.mubr.f32.gmra.mxu0 %v2331
      %v2535 = vpop.f32.mrf.mxu0
      %v2536 = vadd.f32 %v2212, %v2535
      %v2537 = vpop.f32.mrf.mxu0
      %2538 = vmatprep.mubr.f32.mxu0 0.0
      %2539 = vmatmul.mubr.f32.gmra.mxu0 %v2334
      %v2540 = vpop.f32.mrf.mxu0
      %v2541 = vadd.f32 %v2217, %v2540
      %v2542 = vpop.f32.mrf.mxu0
      %2543 = vmatprep.mubr.f32.mxu0 0.0
      %2544 = vmatmul.mubr.f32.gmra.mxu0 %v2337
      %v2545 = vpop.f32.mrf.mxu0
      %v2546 = vadd.f32 %v2222, %v2545
      %v2547 = vpop.f32.mrf.mxu0
      %2548 = vmatprep.mubr.f32.mxu0 0.0
      %2549 = vmatmul.mubr.f32.gmra.mxu0 %v2340
      %v2550 = vpop.f32.mrf.mxu0
      %v2551 = vadd.f32 %v2227, %v2550
      %v2552 = vpop.f32.mrf.mxu0
      %2553 = vmatprep.mubr.f32.mxu0 0.0
      %2554 = vmatmul.mubr.f32.gmra.mxu0 %v2343
      %v2555 = vpop.f32.mrf.mxu0
      %v2556 = vadd.f32 %v2232, %v2555
      %v2557 = vpop.f32.mrf.mxu0
      %2558 = vmatprep.mubr.f32.mxu0 0.0
      %2559 = vmatmul.mubr.f32.gmra.mxu0 %v2346
      %v2560 = vpop.f32.mrf.mxu0
      %v2561 = vadd.f32 %v2237, %v2560
      %v2562 = vpop.f32.mrf.mxu0
      %2563 = vmatprep.mubr.f32.mxu0 0.0
      %2564 = vmatmul.mubr.f32.gmra.mxu0 %v2349
      %v2565 = vpop.f32.mrf.mxu0
      %v2566 = vadd.f32 %v2242, %v2565
      %v2567 = vpop.f32.mrf.mxu0
      %2568 = vmatprep.mubr.f32.mxu0 0.0
      %2569 = vmatmul.mubr.f32.gmra.mxu0 %v2352
      %v2570 = vpop.f32.mrf.mxu0
      %v2571 = vadd.f32 %v2247, %v2570
      %v2572 = vpop.f32.mrf.mxu0
      %2573 = vmatprep.mubr.f32.mxu0 0.0
      %2574 = vmatmul.mubr.f32.gmra.mxu0 %v2355
      %v2575 = vpop.f32.mrf.mxu0
      %v2576 = vadd.f32 %v2252, %v2575
      %v2577 = vpop.f32.mrf.mxu0
      %2578 = vmatprep.mubr.f32.mxu0 0.0
      %2579 = vmatmul.mubr.f32.gmra.mxu0 %v2358
      %v2580 = vpop.f32.mrf.mxu0
      %v2581 = vadd.f32 %v2257, %v2580
      %v2582 = vpop.f32.mrf.mxu0
      %2583 = vmatprep.mubr.f32.mxu0 0.0
      %2584 = vmatmul.mubr.f32.gmra.mxu0 %v2361
      %v2585 = vpop.f32.mrf.mxu0
      %v2586 = vadd.f32 %v2262, %v2585
      %v2587 = vpop.f32.mrf.mxu0
      %2588 = vmatprep.mubr.f32.mxu0 0.0
      %2589 = vmatmul.mubr.f32.gmra.mxu0 %v2364
      %v2590 = vpop.f32.mrf.mxu0
      %v2591 = vadd.f32 %v2267, %v2590
      %v2592 = vpop.f32.mrf.mxu0
      %2593 = vdwg.mxu0
      %v2594 = vld [vmem:[%s1015] sm:$0xf]
      %v2595 = vld [vmem:[%s1408] sm:$0xf]
      %v2596 = vadd.f32 %v2594, %v2595
      %v2597 = vld [vmem:[%s1017] sm:$0xf]
      %v2598 = vadd.f32 %v2596, %v2597
      %v2599 = vld [vmem:[%s1413] sm:$0xf]
      %v2600 = vadd.f32 %v2598, %v2599
      %v2601 = vld [vmem:[%s262 + $0x1] sm:$0xff]
      %v2602 = vld [vmem:[%s262 + $0x9] sm:$0xff]
      %v2603 = vld [vmem:[%s262 + $0x19] sm:$0xff]
      %v2604 = vld [vmem:[%s262 + $0x21] sm:$0xff]
      %v2605 = vld [vmem:[%s262 + $0x31] sm:$0xff]
      %v2606 = vld [vmem:[%s262 + $0x39] sm:$0xff]
      %v2607 = vld [vmem:[%s262 + $0x49] sm:$0xff]
      %v2608 = vld [vmem:[%s262 + $0x51] sm:$0xff]
      %v2609 = vld [vmem:[%s262 + $0x61] sm:$0xff]
      %v2610 = vld [vmem:[%s262 + $0x69] sm:$0xff]
      %v2611 = vld [vmem:[%s262 + $0x79] sm:$0xff]
      %v2612 = vld [vmem:[%s262 + $0x81] sm:$0xff]
      %v2613 = vld [vmem:[%s262 + $0x91] sm:$0xff]
      %v2614 = vld [vmem:[%s262 + $0x99] sm:$0xff]
      %v2615 = vld [vmem:[%s262 + $0xa9] sm:$0xff]
      %v2616 = vld [vmem:[%s262 + $0xb1] sm:$0xff]
      %v2617 = vld [vmem:[%s262 + $0xc1] sm:$0xff]
      %v2618 = vld [vmem:[%s262 + $0xc9] sm:$0xff]
      %v2619 = vld [vmem:[%s262 + $0xd9] sm:$0xff]
      %v2620 = vld [vmem:[%s262 + $0xe1] sm:$0xff]
      %v2621 = vld [vmem:[%s262 + $0xf1] sm:$0xff]
      %v2622 = vld [vmem:[%s262 + $0xf9] sm:$0xff]
      %v2623 = vld [vmem:[%s262 + $0x109] sm:$0xff]
      %v2624 = vld [vmem:[%s262 + $0x111] sm:$0xff]
      %v2625 = vld [vmem:[%s262 + $0x121] sm:$0xff]
      %v2626 = vld [vmem:[%s262 + $0x129] sm:$0xff]
      %v2627 = vld [vmem:[%s262 + $0x139] sm:$0xff]
      %v2628 = vld [vmem:[%s262 + $0x141] sm:$0xff]
      %v2629 = vld [vmem:[%s262 + $0x151] sm:$0xff]
      %v2630 = vld [vmem:[%s262 + $0x159] sm:$0xff]
      %v2631 = vld [vmem:[%s262 + $0x169] sm:$0xff]
      %v2632 = vld [vmem:[%s262 + $0x171] sm:$0xff]
      %v2634 = vsel %vm174, %v2601, 0
      %v2637 = vsel %vm174, %v2602, 0
      %v2640 = vsel %vm174, %v2603, 0
      %v2643 = vsel %vm174, %v2604, 0
      %v2646 = vsel %vm174, %v2605, 0
      %v2649 = vsel %vm174, %v2606, 0
      %v2652 = vsel %vm174, %v2607, 0
      %v2655 = vsel %vm174, %v2608, 0
      %v2658 = vsel %vm174, %v2609, 0
      %v2661 = vsel %vm174, %v2610, 0
      %v2664 = vsel %vm174, %v2611, 0
      %v2667 = vsel %vm174, %v2612, 0
      %v2670 = vsel %vm174, %v2613, 0
      %v2673 = vsel %vm174, %v2614, 0
      %v2676 = vsel %vm174, %v2615, 0
      %v2679 = vsel %vm174, %v2616, 0
      %v2682 = vsel %vm174, %v2617, 0
      %v2685 = vsel %vm174, %v2618, 0
      %v2688 = vsel %vm174, %v2619, 0
      %v2691 = vsel %vm174, %v2620, 0
      %v2694 = vsel %vm174, %v2621, 0
      %v2697 = vsel %vm174, %v2622, 0
      %v2700 = vsel %vm174, %v2623, 0
      %v2703 = vsel %vm174, %v2624, 0
      %v2706 = vsel %vm174, %v2625, 0
      %v2709 = vsel %vm174, %v2626, 0
      %v2712 = vsel %vm174, %v2627, 0
      %v2715 = vsel %vm174, %v2628, 0
      %v2718 = vsel %vm174, %v2629, 0
      %v2721 = vsel %vm174, %v2630, 0
      %v2724 = vsel %vm174, %v2631, 0
      %v2727 = vsel %vm174, %v2632, 0
      %v2730 = vsel %vm462, %v2600, 0
      %2732 = vmatprep.subr.mxu0 0.0
      %2733 = vmatpush1.msra.mxu0 0.0
      %2734 = vmatprep.subr.mxu0 0.0
      %2735 = vmatpush1.msra.mxu0 0.0
      %2736 = vmatprep.subr.mxu0 0.0
      %2737 = vmatpush1.msra.mxu0 0.0
      %2738 = vmatprep.subr.mxu0 0.0
      %2739 = vmatpush1.msra.mxu0 0.0
      %2740 = vmatprep.subr.mxu0 0.0
      %2741 = vmatpush1.msra.mxu0 0.0
      %2742 = vmatprep.subr.mxu0 0.0
      %2743 = vmatpush1.msra.mxu0 0.0
      %2744 = vmatprep.subr.mxu0 0.0
      %2745 = vmatpush1.msra.mxu0 0.0
      %2746 = vmatprep.subr.mxu0 0.0
      %2747 = vmatpush1.msra.mxu0 0.0
      %2748 = vmatprep.subr.mxu0 0.0
      %2749 = vmatpush1.msra.mxu0 0.0
      %2750 = vmatprep.subr.mxu0 0.0
      %2751 = vmatpush1.msra.mxu0 0.0
      %2752 = vmatprep.subr.mxu0 0.0
      %2753 = vmatpush1.msra.mxu0 0.0
      %2754 = vmatprep.subr.mxu0 0.0
      %2755 = vmatpush1.msra.mxu0 0.0
      %2756 = vmatprep.subr.mxu0 0.0
      %2757 = vmatpush1.msra.mxu0 0.0
      %2758 = vmatprep.subr.mxu0 0.0
      %2759 = vmatpush1.msra.mxu0 0.0
      %2760 = vmatprep.subr.mxu0 0.0
      %2761 = vmatpush1.msra.mxu0 0.0
      %2762 = vmatprep.subr.mxu0 0.0
      %2763 = vmatpush1.msra.mxu0 %v2730
      %2764 = vmatprep.subr.mxu0 0.0
      %2765 = vmatpush2.msra.mxu0 0.0
      %2766 = vmatprep.subr.mxu0 0.0
      %2767 = vmatpush2.msra.mxu0 0.0
      %2768 = vmatprep.subr.mxu0 0.0
      %2769 = vmatpush2.msra.mxu0 0.0
      %2770 = vmatprep.subr.mxu0 0.0
      %2771 = vmatpush2.msra.mxu0 0.0
      %2772 = vmatprep.subr.mxu0 0.0
      %2773 = vmatpush2.msra.mxu0 0.0
      %2774 = vmatprep.subr.mxu0 0.0
      %2775 = vmatpush2.msra.mxu0 0.0
      %2776 = vmatprep.subr.mxu0 0.0
      %2777 = vmatpush2.msra.mxu0 0.0
      %2778 = vmatprep.subr.mxu0 0.0
      %2779 = vmatpush2.msra.mxu0 0.0
      %2780 = vmatprep.subr.mxu0 0.0
      %2781 = vmatpush2.msra.mxu0 0.0
      %2782 = vmatprep.subr.mxu0 0.0
      %2783 = vmatpush2.msra.mxu0 0.0
      %2784 = vmatprep.subr.mxu0 0.0
      %2785 = vmatpush2.msra.mxu0 0.0
      %2786 = vmatprep.subr.mxu0 0.0
      %2787 = vmatpush2.msra.mxu0 0.0
      %2788 = vmatprep.subr.mxu0 0.0
      %2789 = vmatpush2.msra.mxu0 0.0
      %2790 = vmatprep.subr.mxu0 0.0
      %2791 = vmatpush2.msra.mxu0 0.0
      %2792 = vmatprep.subr.mxu0 0.0
      %2793 = vmatpush2.msra.mxu0 0.0
      %2794 = vmatprep.subr.mxu0 0.0
      %2795 = vmatpush2.msra.mxu0 0.0
      %2796 = vmatprep.mubr.f32.mxu0 0.0
      %2797 = vmatmul.mubr.f32.gmra.mxu0 %v2634
      %v2798 = vpop.f32.mrf.mxu0
      %v2799 = vadd.f32 0.0, %v2798
      %v2800 = vpop.f32.mrf.mxu0
      %2801 = vmatprep.mubr.f32.mxu0 0.0
      %2802 = vmatmul.mubr.f32.gmra.mxu0 %v2637
      %v2803 = vpop.f32.mrf.mxu0
      %v2804 = vadd.f32 0.0, %v2803
      %v2805 = vpop.f32.mrf.mxu0
      %2806 = vmatprep.mubr.f32.mxu0 0.0
      %2807 = vmatmul.mubr.f32.gmra.mxu0 %v2640
      %v2808 = vpop.f32.mrf.mxu0
      %v2809 = vadd.f32 0.0, %v2808
      %v2810 = vpop.f32.mrf.mxu0
      %2811 = vmatprep.mubr.f32.mxu0 0.0
      %2812 = vmatmul.mubr.f32.gmra.mxu0 %v2643
      %v2813 = vpop.f32.mrf.mxu0
      %v2814 = vadd.f32 0.0, %v2813
      %v2815 = vpop.f32.mrf.mxu0
      %2816 = vmatprep.mubr.f32.mxu0 0.0
      %2817 = vmatmul.mubr.f32.gmra.mxu0 %v2646
      %v2818 = vpop.f32.mrf.mxu0
      %v2819 = vadd.f32 0.0, %v2818
      %v2820 = vpop.f32.mrf.mxu0
      %2821 = vmatprep.mubr.f32.mxu0 0.0
      %2822 = vmatmul.mubr.f32.gmra.mxu0 %v2649
      %v2823 = vpop.f32.mrf.mxu0
      %v2824 = vadd.f32 0.0, %v2823
      %v2825 = vpop.f32.mrf.mxu0
      %2826 = vmatprep.mubr.f32.mxu0 0.0
      %2827 = vmatmul.mubr.f32.gmra.mxu0 %v2652
      %v2828 = vpop.f32.mrf.mxu0
      %v2829 = vadd.f32 0.0, %v2828
      %v2830 = vpop.f32.mrf.mxu0
      %2831 = vmatprep.mubr.f32.mxu0 0.0
      %2832 = vmatmul.mubr.f32.gmra.mxu0 %v2655
      %v2833 = vpop.f32.mrf.mxu0
      %v2834 = vadd.f32 0.0, %v2833
      %v2835 = vpop.f32.mrf.mxu0
      %2836 = vmatprep.mubr.f32.mxu0 0.0
      %2837 = vmatmul.mubr.f32.gmra.mxu0 %v2658
      %v2838 = vpop.f32.mrf.mxu0
      %v2839 = vadd.f32 0.0, %v2838
      %v2840 = vpop.f32.mrf.mxu0
      %2841 = vmatprep.mubr.f32.mxu0 0.0
      %2842 = vmatmul.mubr.f32.gmra.mxu0 %v2661
      %v2843 = vpop.f32.mrf.mxu0
      %v2844 = vadd.f32 0.0, %v2843
      %v2845 = vpop.f32.mrf.mxu0
      %2846 = vmatprep.mubr.f32.mxu0 0.0
      %2847 = vmatmul.mubr.f32.gmra.mxu0 %v2664
      %v2848 = vpop.f32.mrf.mxu0
      %v2849 = vadd.f32 0.0, %v2848
      %v2850 = vpop.f32.mrf.mxu0
      %2851 = vmatprep.mubr.f32.mxu0 0.0
      %2852 = vmatmul.mubr.f32.gmra.mxu0 %v2667
      %v2853 = vpop.f32.mrf.mxu0
      %v2854 = vadd.f32 0.0, %v2853
      %v2855 = vpop.f32.mrf.mxu0
      %2856 = vmatprep.mubr.f32.mxu0 0.0
      %2857 = vmatmul.mubr.f32.gmra.mxu0 %v2670
      %v2858 = vpop.f32.mrf.mxu0
      %v2859 = vadd.f32 0.0, %v2858
      %v2860 = vpop.f32.mrf.mxu0
      %2861 = vmatprep.mubr.f32.mxu0 0.0
      %2862 = vmatmul.mubr.f32.gmra.mxu0 %v2673
      %v2863 = vpop.f32.mrf.mxu0
      %v2864 = vadd.f32 0.0, %v2863
      %v2865 = vpop.f32.mrf.mxu0
      %2866 = vmatprep.mubr.f32.mxu0 0.0
      %2867 = vmatmul.mubr.f32.gmra.mxu0 %v2676
      %v2868 = vpop.f32.mrf.mxu0
      %v2869 = vadd.f32 0.0, %v2868
      %v2870 = vpop.f32.mrf.mxu0
      %2871 = vmatprep.mubr.f32.mxu0 0.0
      %2872 = vmatmul.mubr.f32.gmra.mxu0 %v2679
      %v2873 = vpop.f32.mrf.mxu0
      %v2874 = vadd.f32 0.0, %v2873
      %v2875 = vpop.f32.mrf.mxu0
      %2876 = vmatprep.mubr.f32.mxu0 0.0
      %2877 = vmatmul.mubr.f32.gmra.mxu0 %v2682
      %v2878 = vpop.f32.mrf.mxu0
      %v2879 = vadd.f32 0.0, %v2878
      %v2880 = vpop.f32.mrf.mxu0
      %2881 = vmatprep.mubr.f32.mxu0 0.0
      %2882 = vmatmul.mubr.f32.gmra.mxu0 %v2685
      %v2883 = vpop.f32.mrf.mxu0
      %v2884 = vadd.f32 0.0, %v2883
      %v2885 = vpop.f32.mrf.mxu0
      %2886 = vmatprep.mubr.f32.mxu0 0.0
      %2887 = vmatmul.mubr.f32.gmra.mxu0 %v2688
      %v2888 = vpop.f32.mrf.mxu0
      %v2889 = vadd.f32 0.0, %v2888
      %v2890 = vpop.f32.mrf.mxu0
      %2891 = vmatprep.mubr.f32.mxu0 0.0
      %2892 = vmatmul.mubr.f32.gmra.mxu0 %v2691
      %v2893 = vpop.f32.mrf.mxu0
      %v2894 = vadd.f32 0.0, %v2893
      %v2895 = vpop.f32.mrf.mxu0
      %2896 = vmatprep.mubr.f32.mxu0 0.0
      %2897 = vmatmul.mubr.f32.gmra.mxu0 %v2694
      %v2898 = vpop.f32.mrf.mxu0
      %v2899 = vadd.f32 0.0, %v2898
      %v2900 = vpop.f32.mrf.mxu0
      %2901 = vmatprep.mubr.f32.mxu0 0.0
      %2902 = vmatmul.mubr.f32.gmra.mxu0 %v2697
      %v2903 = vpop.f32.mrf.mxu0
      %v2904 = vadd.f32 0.0, %v2903
      %v2905 = vpop.f32.mrf.mxu0
      %2906 = vmatprep.mubr.f32.mxu0 0.0
      %2907 = vmatmul.mubr.f32.gmra.mxu0 %v2700
      %v2908 = vpop.f32.mrf.mxu0
      %v2909 = vadd.f32 0.0, %v2908
      %v2910 = vpop.f32.mrf.mxu0
      %2911 = vmatprep.mubr.f32.mxu0 0.0
      %2912 = vmatmul.mubr.f32.gmra.mxu0 %v2703
      %v2913 = vpop.f32.mrf.mxu0
      %v2914 = vadd.f32 0.0, %v2913
      %v2915 = vpop.f32.mrf.mxu0
      %2916 = vmatprep.mubr.f32.mxu0 0.0
      %2917 = vmatmul.mubr.f32.gmra.mxu0 %v2706
      %v2918 = vpop.f32.mrf.mxu0
      %v2919 = vadd.f32 0.0, %v2918
      %v2920 = vpop.f32.mrf.mxu0
      %2921 = vmatprep.mubr.f32.mxu0 0.0
      %2922 = vmatmul.mubr.f32.gmra.mxu0 %v2709
      %v2923 = vpop.f32.mrf.mxu0
      %v2924 = vadd.f32 0.0, %v2923
      %v2925 = vpop.f32.mrf.mxu0
      %2926 = vmatprep.mubr.f32.mxu0 0.0
      %2927 = vmatmul.mubr.f32.gmra.mxu0 %v2712
      %v2928 = vpop.f32.mrf.mxu0
      %v2929 = vadd.f32 0.0, %v2928
      %v2930 = vpop.f32.mrf.mxu0
      %2931 = vmatprep.mubr.f32.mxu0 0.0
      %2932 = vmatmul.mubr.f32.gmra.mxu0 %v2715
      %v2933 = vpop.f32.mrf.mxu0
      %v2934 = vadd.f32 0.0, %v2933
      %v2935 = vpop.f32.mrf.mxu0
      %2936 = vmatprep.mubr.f32.mxu0 0.0
      %2937 = vmatmul.mubr.f32.gmra.mxu0 %v2718
      %v2938 = vpop.f32.mrf.mxu0
      %v2939 = vadd.f32 0.0, %v2938
      %v2940 = vpop.f32.mrf.mxu0
      %2941 = vmatprep.mubr.f32.mxu0 0.0
      %2942 = vmatmul.mubr.f32.gmra.mxu0 %v2721
      %v2943 = vpop.f32.mrf.mxu0
      %v2944 = vadd.f32 0.0, %v2943
      %v2945 = vpop.f32.mrf.mxu0
      %2946 = vmatprep.mubr.f32.mxu0 0.0
      %2947 = vmatmul.mubr.f32.gmra.mxu0 %v2724
      %v2948 = vpop.f32.mrf.mxu0
      %v2949 = vadd.f32 0.0, %v2948
      %v2950 = vpop.f32.mrf.mxu0
      %2951 = vmatprep.mubr.f32.mxu0 0.0
      %2952 = vmatmul.mubr.f32.gmra.mxu0 %v2727
      %v2953 = vpop.f32.mrf.mxu0
      %v2954 = vadd.f32 0.0, %v2953
      %v2955 = vpop.f32.mrf.mxu0
      %2956 = vdwg.mxu0
      %v2957 = vadd.f32 %v2436, %v2799
      %v2958 = vadd.f32 %v2441, %v2804
      %v2959 = vadd.f32 %v2446, %v2809
      %v2960 = vadd.f32 %v2451, %v2814
      %v2961 = vadd.f32 %v2456, %v2819
      %v2962 = vadd.f32 %v2461, %v2824
      %v2963 = vadd.f32 %v2466, %v2829
      %v2964 = vadd.f32 %v2471, %v2834
      %v2965 = vadd.f32 %v2476, %v2839
      %v2966 = vadd.f32 %v2481, %v2844
      %v2967 = vadd.f32 %v2486, %v2849
      %v2968 = vadd.f32 %v2491, %v2854
      %v2969 = vadd.f32 %v2496, %v2859
      %v2970 = vadd.f32 %v2501, %v2864
      %v2971 = vadd.f32 %v2506, %v2869
      %v2972 = vadd.f32 %v2511, %v2874
      %v2973 = vadd.f32 %v2516, %v2879
      %v2974 = vadd.f32 %v2521, %v2884
      %v2975 = vadd.f32 %v2526, %v2889
      %v2976 = vadd.f32 %v2531, %v2894
      %v2977 = vadd.f32 %v2536, %v2899
      %v2978 = vadd.f32 %v2541, %v2904
      %v2979 = vadd.f32 %v2546, %v2909
      %v2980 = vadd.f32 %v2551, %v2914
      %v2981 = vadd.f32 %v2556, %v2919
      %v2982 = vadd.f32 %v2561, %v2924
      %v2983 = vadd.f32 %v2566, %v2929
      %v2984 = vadd.f32 %v2571, %v2934
      %v2985 = vadd.f32 %v2576, %v2939
      %v2986 = vadd.f32 %v2581, %v2944
      %v2987 = vadd.f32 %v2586, %v2949
      %v2988 = vadd.f32 %v2591, %v2954
      %v2989 = vld [vmem:[%s1410] sm:$0xf]
      %v2990 = vld [vmem:[%s1416] sm:$0xf]
      %v2991 = vadd.f32 %v2989, %v2990
      %v2992 = vld [vmem:[%s262 + $0x2] sm:$0xff]
      %v2993 = vld [vmem:[%s262 + $0xa] sm:$0xff]
      %v2994 = vld [vmem:[%s262 + $0x1a] sm:$0xff]
      %v2995 = vld [vmem:[%s262 + $0x22] sm:$0xff]
      %v2996 = vld [vmem:[%s262 + $0x32] sm:$0xff]
      %v2997 = vld [vmem:[%s262 + $0x3a] sm:$0xff]
      %v2998 = vld [vmem:[%s262 + $0x4a] sm:$0xff]
      %v2999 = vld [vmem:[%s262 + $0x52] sm:$0xff]
      %v3000 = vld [vmem:[%s262 + $0x62] sm:$0xff]
      %v3001 = vld [vmem:[%s262 + $0x6a] sm:$0xff]
      %v3002 = vld [vmem:[%s262 + $0x7a] sm:$0xff]
      %v3003 = vld [vmem:[%s262 + $0x82] sm:$0xff]
      %v3004 = vld [vmem:[%s262 + $0x92] sm:$0xff]
      %v3005 = vld [vmem:[%s262 + $0x9a] sm:$0xff]
      %v3006 = vld [vmem:[%s262 + $0xaa] sm:$0xff]
      %v3007 = vld [vmem:[%s262 + $0xb2] sm:$0xff]
      %v3008 = vld [vmem:[%s262 + $0xc2] sm:$0xff]
      %v3009 = vld [vmem:[%s262 + $0xca] sm:$0xff]
      %v3010 = vld [vmem:[%s262 + $0xda] sm:$0xff]
      %v3011 = vld [vmem:[%s262 + $0xe2] sm:$0xff]
      %v3012 = vld [vmem:[%s262 + $0xf2] sm:$0xff]
      %v3013 = vld [vmem:[%s262 + $0xfa] sm:$0xff]
      %v3014 = vld [vmem:[%s262 + $0x10a] sm:$0xff]
      %v3015 = vld [vmem:[%s262 + $0x112] sm:$0xff]
      %v3016 = vld [vmem:[%s262 + $0x122] sm:$0xff]
      %v3017 = vld [vmem:[%s262 + $0x12a] sm:$0xff]
      %v3018 = vld [vmem:[%s262 + $0x13a] sm:$0xff]
      %v3019 = vld [vmem:[%s262 + $0x142] sm:$0xff]
      %v3020 = vld [vmem:[%s262 + $0x152] sm:$0xff]
      %v3021 = vld [vmem:[%s262 + $0x15a] sm:$0xff]
      %v3022 = vld [vmem:[%s262 + $0x16a] sm:$0xff]
      %v3023 = vld [vmem:[%s262 + $0x172] sm:$0xff]
      %v3025 = vsel %vm174, %v2992, 0
      %v3028 = vsel %vm174, %v2993, 0
      %v3031 = vsel %vm174, %v2994, 0
      %v3034 = vsel %vm174, %v2995, 0
      %v3037 = vsel %vm174, %v2996, 0
      %v3040 = vsel %vm174, %v2997, 0
      %v3043 = vsel %vm174, %v2998, 0
      %v3046 = vsel %vm174, %v2999, 0
      %v3049 = vsel %vm174, %v3000, 0
      %v3052 = vsel %vm174, %v3001, 0
      %v3055 = vsel %vm174, %v3002, 0
      %v3058 = vsel %vm174, %v3003, 0
      %v3061 = vsel %vm174, %v3004, 0
      %v3064 = vsel %vm174, %v3005, 0
      %v3067 = vsel %vm174, %v3006, 0
      %v3070 = vsel %vm174, %v3007, 0
      %v3073 = vsel %vm174, %v3008, 0
      %v3076 = vsel %vm174, %v3009, 0
      %v3079 = vsel %vm174, %v3010, 0
      %v3082 = vsel %vm174, %v3011, 0
      %v3085 = vsel %vm174, %v3012, 0
      %v3088 = vsel %vm174, %v3013, 0
      %v3091 = vsel %vm174, %v3014, 0
      %v3094 = vsel %vm174, %v3015, 0
      %v3097 = vsel %vm174, %v3016, 0
      %v3100 = vsel %vm174, %v3017, 0
      %v3103 = vsel %vm174, %v3018, 0
      %v3106 = vsel %vm174, %v3019, 0
      %v3109 = vsel %vm174, %v3020, 0
      %v3112 = vsel %vm174, %v3021, 0
      %v3115 = vsel %vm174, %v3022, 0
      %v3118 = vsel %vm174, %v3023, 0
      %v3121 = vsel %vm462, %v2991, 0
      %3123 = vmatprep.subr.mxu0 0.0
      %3124 = vmatpush1.msra.mxu0 0.0
      %3125 = vmatprep.subr.mxu0 0.0
      %3126 = vmatpush1.msra.mxu0 0.0
      %3127 = vmatprep.subr.mxu0 0.0
      %3128 = vmatpush1.msra.mxu0 0.0
      %3129 = vmatprep.subr.mxu0 0.0
      %3130 = vmatpush1.msra.mxu0 0.0
      %3131 = vmatprep.subr.mxu0 0.0
      %3132 = vmatpush1.msra.mxu0 0.0
      %3133 = vmatprep.subr.mxu0 0.0
      %3134 = vmatpush1.msra.mxu0 0.0
      %3135 = vmatprep.subr.mxu0 0.0
      %3136 = vmatpush1.msra.mxu0 0.0
      %3137 = vmatprep.subr.mxu0 0.0
      %3138 = vmatpush1.msra.mxu0 0.0
      %3139 = vmatprep.subr.mxu0 0.0
      %3140 = vmatpush1.msra.mxu0 0.0
      %3141 = vmatprep.subr.mxu0 0.0
      %3142 = vmatpush1.msra.mxu0 0.0
      %3143 = vmatprep.subr.mxu0 0.0
      %3144 = vmatpush1.msra.mxu0 0.0
      %3145 = vmatprep.subr.mxu0 0.0
      %3146 = vmatpush1.msra.mxu0 0.0
      %3147 = vmatprep.subr.mxu0 0.0
      %3148 = vmatpush1.msra.mxu0 0.0
      %3149 = vmatprep.subr.mxu0 0.0
      %3150 = vmatpush1.msra.mxu0 0.0
      %3151 = vmatprep.subr.mxu0 0.0
      %3152 = vmatpush1.msra.mxu0 0.0
      %3153 = vmatprep.subr.mxu0 0.0
      %3154 = vmatpush1.msra.mxu0 %v3121
      %3155 = vmatprep.subr.mxu0 0.0
      %3156 = vmatpush2.msra.mxu0 0.0
      %3157 = vmatprep.subr.mxu0 0.0
      %3158 = vmatpush2.msra.mxu0 0.0
      %3159 = vmatprep.subr.mxu0 0.0
      %3160 = vmatpush2.msra.mxu0 0.0
      %3161 = vmatprep.subr.mxu0 0.0
      %3162 = vmatpush2.msra.mxu0 0.0
      %3163 = vmatprep.subr.mxu0 0.0
      %3164 = vmatpush2.msra.mxu0 0.0
      %3165 = vmatprep.subr.mxu0 0.0
      %3166 = vmatpush2.msra.mxu0 0.0
      %3167 = vmatprep.subr.mxu0 0.0
      %3168 = vmatpush2.msra.mxu0 0.0
      %3169 = vmatprep.subr.mxu0 0.0
      %3170 = vmatpush2.msra.mxu0 0.0
      %3171 = vmatprep.subr.mxu0 0.0
      %3172 = vmatpush2.msra.mxu0 0.0
      %3173 = vmatprep.subr.mxu0 0.0
      %3174 = vmatpush2.msra.mxu0 0.0
      %3175 = vmatprep.subr.mxu0 0.0
      %3176 = vmatpush2.msra.mxu0 0.0
      %3177 = vmatprep.subr.mxu0 0.0
      %3178 = vmatpush2.msra.mxu0 0.0
      %3179 = vmatprep.subr.mxu0 0.0
      %3180 = vmatpush2.msra.mxu0 0.0
      %3181 = vmatprep.subr.mxu0 0.0
      %3182 = vmatpush2.msra.mxu0 0.0
      %3183 = vmatprep.subr.mxu0 0.0
      %3184 = vmatpush2.msra.mxu0 0.0
      %3185 = vmatprep.subr.mxu0 0.0
      %3186 = vmatpush2.msra.mxu0 0.0
      %3187 = vmatprep.mubr.f32.mxu0 0.0
      %3188 = vmatmul.mubr.f32.gmra.mxu0 %v3025
      %v3189 = vpop.f32.mrf.mxu0
      %v3190 = vadd.f32 0.0, %v3189
      %v3191 = vpop.f32.mrf.mxu0
      %3192 = vmatprep.mubr.f32.mxu0 0.0
      %3193 = vmatmul.mubr.f32.gmra.mxu0 %v3028
      %v3194 = vpop.f32.mrf.mxu0
      %v3195 = vadd.f32 0.0, %v3194
      %v3196 = vpop.f32.mrf.mxu0
      %3197 = vmatprep.mubr.f32.mxu0 0.0
      %3198 = vmatmul.mubr.f32.gmra.mxu0 %v3031
      %v3199 = vpop.f32.mrf.mxu0
      %v3200 = vadd.f32 0.0, %v3199
      %v3201 = vpop.f32.mrf.mxu0
      %3202 = vmatprep.mubr.f32.mxu0 0.0
      %3203 = vmatmul.mubr.f32.gmra.mxu0 %v3034
      %v3204 = vpop.f32.mrf.mxu0
      %v3205 = vadd.f32 0.0, %v3204
      %v3206 = vpop.f32.mrf.mxu0
      %3207 = vmatprep.mubr.f32.mxu0 0.0
      %3208 = vmatmul.mubr.f32.gmra.mxu0 %v3037
      %v3209 = vpop.f32.mrf.mxu0
      %v3210 = vadd.f32 0.0, %v3209
      %v3211 = vpop.f32.mrf.mxu0
      %3212 = vmatprep.mubr.f32.mxu0 0.0
      %3213 = vmatmul.mubr.f32.gmra.mxu0 %v3040
      %v3214 = vpop.f32.mrf.mxu0
      %v3215 = vadd.f32 0.0, %v3214
      %v3216 = vpop.f32.mrf.mxu0
      %3217 = vmatprep.mubr.f32.mxu0 0.0
      %3218 = vmatmul.mubr.f32.gmra.mxu0 %v3043
      %v3219 = vpop.f32.mrf.mxu0
      %v3220 = vadd.f32 0.0, %v3219
      %v3221 = vpop.f32.mrf.mxu0
      %3222 = vmatprep.mubr.f32.mxu0 0.0
      %3223 = vmatmul.mubr.f32.gmra.mxu0 %v3046
      %v3224 = vpop.f32.mrf.mxu0
      %v3225 = vadd.f32 0.0, %v3224
      %v3226 = vpop.f32.mrf.mxu0
      %3227 = vmatprep.mubr.f32.mxu0 0.0
      %3228 = vmatmul.mubr.f32.gmra.mxu0 %v3049
      %v3229 = vpop.f32.mrf.mxu0
      %v3230 = vadd.f32 0.0, %v3229
      %v3231 = vpop.f32.mrf.mxu0
      %3232 = vmatprep.mubr.f32.mxu0 0.0
      %3233 = vmatmul.mubr.f32.gmra.mxu0 %v3052
      %v3234 = vpop.f32.mrf.mxu0
      %v3235 = vadd.f32 0.0, %v3234
      %v3236 = vpop.f32.mrf.mxu0
      %3237 = vmatprep.mubr.f32.mxu0 0.0
      %3238 = vmatmul.mubr.f32.gmra.mxu0 %v3055
      %v3239 = vpop.f32.mrf.mxu0
      %v3240 = vadd.f32 0.0, %v3239
      %v3241 = vpop.f32.mrf.mxu0
      %3242 = vmatprep.mubr.f32.mxu0 0.0
      %3243 = vmatmul.mubr.f32.gmra.mxu0 %v3058
      %v3244 = vpop.f32.mrf.mxu0
      %v3245 = vadd.f32 0.0, %v3244
      %v3246 = vpop.f32.mrf.mxu0
      %3247 = vmatprep.mubr.f32.mxu0 0.0
      %3248 = vmatmul.mubr.f32.gmra.mxu0 %v3061
      %v3249 = vpop.f32.mrf.mxu0
      %v3250 = vadd.f32 0.0, %v3249
      %v3251 = vpop.f32.mrf.mxu0
      %3252 = vmatprep.mubr.f32.mxu0 0.0
      %3253 = vmatmul.mubr.f32.gmra.mxu0 %v3064
      %v3254 = vpop.f32.mrf.mxu0
      %v3255 = vadd.f32 0.0, %v3254
      %v3256 = vpop.f32.mrf.mxu0
      %3257 = vmatprep.mubr.f32.mxu0 0.0
      %3258 = vmatmul.mubr.f32.gmra.mxu0 %v3067
      %v3259 = vpop.f32.mrf.mxu0
      %v3260 = vadd.f32 0.0, %v3259
      %v3261 = vpop.f32.mrf.mxu0
      %3262 = vmatprep.mubr.f32.mxu0 0.0
      %3263 = vmatmul.mubr.f32.gmra.mxu0 %v3070
      %v3264 = vpop.f32.mrf.mxu0
      %v3265 = vadd.f32 0.0, %v3264
      %v3266 = vpop.f32.mrf.mxu0
      %3267 = vmatprep.mubr.f32.mxu0 0.0
      %3268 = vmatmul.mubr.f32.gmra.mxu0 %v3073
      %v3269 = vpop.f32.mrf.mxu0
      %v3270 = vadd.f32 0.0, %v3269
      %v3271 = vpop.f32.mrf.mxu0
      %3272 = vmatprep.mubr.f32.mxu0 0.0
      %3273 = vmatmul.mubr.f32.gmra.mxu0 %v3076
      %v3274 = vpop.f32.mrf.mxu0
      %v3275 = vadd.f32 0.0, %v3274
      %v3276 = vpop.f32.mrf.mxu0
      %3277 = vmatprep.mubr.f32.mxu0 0.0
      %3278 = vmatmul.mubr.f32.gmra.mxu0 %v3079
      %v3279 = vpop.f32.mrf.mxu0
      %v3280 = vadd.f32 0.0, %v3279
      %v3281 = vpop.f32.mrf.mxu0
      %3282 = vmatprep.mubr.f32.mxu0 0.0
      %3283 = vmatmul.mubr.f32.gmra.mxu0 %v3082
      %v3284 = vpop.f32.mrf.mxu0
      %v3285 = vadd.f32 0.0, %v3284
      %v3286 = vpop.f32.mrf.mxu0
      %3287 = vmatprep.mubr.f32.mxu0 0.0
      %3288 = vmatmul.mubr.f32.gmra.mxu0 %v3085
      %v3289 = vpop.f32.mrf.mxu0
      %v3290 = vadd.f32 0.0, %v3289
      %v3291 = vpop.f32.mrf.mxu0
      %3292 = vmatprep.mubr.f32.mxu0 0.0
      %3293 = vmatmul.mubr.f32.gmra.mxu0 %v3088
      %v3294 = vpop.f32.mrf.mxu0
      %v3295 = vadd.f32 0.0, %v3294
      %v3296 = vpop.f32.mrf.mxu0
      %3297 = vmatprep.mubr.f32.mxu0 0.0
      %3298 = vmatmul.mubr.f32.gmra.mxu0 %v3091
      %v3299 = vpop.f32.mrf.mxu0
      %v3300 = vadd.f32 0.0, %v3299
      %v3301 = vpop.f32.mrf.mxu0
      %3302 = vmatprep.mubr.f32.mxu0 0.0
      %3303 = vmatmul.mubr.f32.gmra.mxu0 %v3094
      %v3304 = vpop.f32.mrf.mxu0
      %v3305 = vadd.f32 0.0, %v3304
      %v3306 = vpop.f32.mrf.mxu0
      %3307 = vmatprep.mubr.f32.mxu0 0.0
      %3308 = vmatmul.mubr.f32.gmra.mxu0 %v3097
      %v3309 = vpop.f32.mrf.mxu0
      %v3310 = vadd.f32 0.0, %v3309
      %v3311 = vpop.f32.mrf.mxu0
      %3312 = vmatprep.mubr.f32.mxu0 0.0
      %3313 = vmatmul.mubr.f32.gmra.mxu0 %v3100
      %v3314 = vpop.f32.mrf.mxu0
      %v3315 = vadd.f32 0.0, %v3314
      %v3316 = vpop.f32.mrf.mxu0
      %3317 = vmatprep.mubr.f32.mxu0 0.0
      %3318 = vmatmul.mubr.f32.gmra.mxu0 %v3103
      %v3319 = vpop.f32.mrf.mxu0
      %v3320 = vadd.f32 0.0, %v3319
      %v3321 = vpop.f32.mrf.mxu0
      %3322 = vmatprep.mubr.f32.mxu0 0.0
      %3323 = vmatmul.mubr.f32.gmra.mxu0 %v3106
      %v3324 = vpop.f32.mrf.mxu0
      %v3325 = vadd.f32 0.0, %v3324
      %v3326 = vpop.f32.mrf.mxu0
      %3327 = vmatprep.mubr.f32.mxu0 0.0
      %3328 = vmatmul.mubr.f32.gmra.mxu0 %v3109
      %v3329 = vpop.f32.mrf.mxu0
      %v3330 = vadd.f32 0.0, %v3329
      %v3331 = vpop.f32.mrf.mxu0
      %3332 = vmatprep.mubr.f32.mxu0 0.0
      %3333 = vmatmul.mubr.f32.gmra.mxu0 %v3112
      %v3334 = vpop.f32.mrf.mxu0
      %v3335 = vadd.f32 0.0, %v3334
      %v3336 = vpop.f32.mrf.mxu0
      %3337 = vmatprep.mubr.f32.mxu0 0.0
      %3338 = vmatmul.mubr.f32.gmra.mxu0 %v3115
      %v3339 = vpop.f32.mrf.mxu0
      %v3340 = vadd.f32 0.0, %v3339
      %v3341 = vpop.f32.mrf.mxu0
      %3342 = vmatprep.mubr.f32.mxu0 0.0
      %3343 = vmatmul.mubr.f32.gmra.mxu0 %v3118
      %v3344 = vpop.f32.mrf.mxu0
      %v3345 = vadd.f32 0.0, %v3344
      %v3346 = vpop.f32.mrf.mxu0
      %3347 = vdwg.mxu0
      %v3348 = vadd.f32 %v2957, %v3190
      %v3349 = vadd.f32 %v2958, %v3195
      %v3350 = vadd.f32 %v2959, %v3200
      %v3351 = vadd.f32 %v2960, %v3205
      %v3352 = vadd.f32 %v2961, %v3210
      %v3353 = vadd.f32 %v2962, %v3215
      %v3354 = vadd.f32 %v2963, %v3220
      %v3355 = vadd.f32 %v2964, %v3225
      %v3356 = vadd.f32 %v2965, %v3230
      %v3357 = vadd.f32 %v2966, %v3235
      %v3358 = vadd.f32 %v2967, %v3240
      %v3359 = vadd.f32 %v2968, %v3245
      %v3360 = vadd.f32 %v2969, %v3250
      %v3361 = vadd.f32 %v2970, %v3255
      %v3362 = vadd.f32 %v2971, %v3260
      %v3363 = vadd.f32 %v2972, %v3265
      %v3364 = vadd.f32 %v2973, %v3270
      %v3365 = vadd.f32 %v2974, %v3275
      %v3366 = vadd.f32 %v2975, %v3280
      %v3367 = vadd.f32 %v2976, %v3285
      %v3368 = vadd.f32 %v2977, %v3290
      %v3369 = vadd.f32 %v2978, %v3295
      %v3370 = vadd.f32 %v2979, %v3300
      %v3371 = vadd.f32 %v2980, %v3305
      %v3372 = vadd.f32 %v2981, %v3310
      %v3373 = vadd.f32 %v2982, %v3315
      %v3374 = vadd.f32 %v2983, %v3320
      %v3375 = vadd.f32 %v2984, %v3325
      %v3376 = vadd.f32 %v2985, %v3330
      %v3377 = vadd.f32 %v2986, %v3335
      %v3378 = vadd.f32 %v2987, %v3340
      %v3379 = vadd.f32 %v2988, %v3345
      %v3380 = vadd.f32 %v3348, %v1811
      %v3381 = vadd.f32 %v3349, %v1811
      %v3382 = vadd.f32 %v3350, %v1811
      %v3383 = vadd.f32 %v3351, %v1811
      %v3384 = vadd.f32 %v3352, %v1811
      %v3385 = vadd.f32 %v3353, %v1811
      %v3386 = vadd.f32 %v3354, %v1811
      %v3387 = vadd.f32 %v3355, %v1811
      %v3388 = vadd.f32 %v3356, %v1811
      %v3389 = vadd.f32 %v3357, %v1811
      %v3390 = vadd.f32 %v3358, %v1811
      %v3391 = vadd.f32 %v3359, %v1811
      %v3392 = vadd.f32 %v3360, %v1811
      %v3393 = vadd.f32 %v3361, %v1811
      %v3394 = vadd.f32 %v3362, %v1811
      %v3395 = vadd.f32 %v3363, %v1811
      %v3396 = vadd.f32 %v3364, %v1811
      %v3397 = vadd.f32 %v3365, %v1811
      %v3398 = vadd.f32 %v3366, %v1811
      %v3399 = vadd.f32 %v3367, %v1811
      %v3400 = vadd.f32 %v3368, %v1811
      %v3401 = vadd.f32 %v3369, %v1811
      %v3402 = vadd.f32 %v3370, %v1811
      %v3403 = vadd.f32 %v3371, %v1811
      %v3404 = vadd.f32 %v3372, %v1811
      %v3405 = vadd.f32 %v3373, %v1811
      %v3406 = vadd.f32 %v3374, %v1811
      %v3407 = vadd.f32 %v3375, %v1811
      %v3408 = vadd.f32 %v3376, %v1811
      %v3409 = vadd.f32 %v3377, %v1811
      %v3410 = vadd.f32 %v3378, %v1811
      %v3411 = vadd.f32 %v3379, %v1811
      %s3412 = scalar_lea.vmem %s172, 256
      %3413 = vst.msk [vmem:[%s3412] sm:$0xff] %vm1845, %v3380
      %3414 = vst.msk [vmem:[%s3412 + $0x8] sm:$0xff] %vm1845, %v3381
      %3415 = vst.msk [vmem:[%s3412 + $0x10] sm:$0xff] %vm1845, %v3382
      %3416 = vst.msk [vmem:[%s3412 + $0x18] sm:$0xff] %vm1845, %v3383
      %3417 = vst.msk [vmem:[%s3412 + $0x20] sm:$0xff] %vm1845, %v3384
      %3418 = vst.msk [vmem:[%s3412 + $0x28] sm:$0xff] %vm1845, %v3385
      %3419 = vst.msk [vmem:[%s3412 + $0x30] sm:$0xff] %vm1845, %v3386
      %3420 = vst.msk [vmem:[%s3412 + $0x38] sm:$0xff] %vm1845, %v3387
      %3421 = vst.msk [vmem:[%s3412 + $0x40] sm:$0xff] %vm1845, %v3388
      %3422 = vst.msk [vmem:[%s3412 + $0x48] sm:$0xff] %vm1845, %v3389
      %3423 = vst.msk [vmem:[%s3412 + $0x50] sm:$0xff] %vm1845, %v3390
      %3424 = vst.msk [vmem:[%s3412 + $0x58] sm:$0xff] %vm1845, %v3391
      %3425 = vst.msk [vmem:[%s3412 + $0x60] sm:$0xff] %vm1845, %v3392
      %3426 = vst.msk [vmem:[%s3412 + $0x68] sm:$0xff] %vm1845, %v3393
      %3427 = vst.msk [vmem:[%s3412 + $0x70] sm:$0xff] %vm1845, %v3394
      %3428 = vst.msk [vmem:[%s3412 + $0x78] sm:$0xff] %vm1845, %v3395
      %3429 = vst.msk [vmem:[%s3412 + $0x80] sm:$0xff] %vm1845, %v3396
      %3430 = vst.msk [vmem:[%s3412 + $0x88] sm:$0xff] %vm1845, %v3397
      %3431 = vst.msk [vmem:[%s3412 + $0x90] sm:$0xff] %vm1845, %v3398
      %3432 = vst.msk [vmem:[%s3412 + $0x98] sm:$0xff] %vm1845, %v3399
      %3433 = vst.msk [vmem:[%s3412 + $0xa0] sm:$0xff] %vm1845, %v3400
      %3434 = vst.msk [vmem:[%s3412 + $0xa8] sm:$0xff] %vm1845, %v3401
      %3435 = vst.msk [vmem:[%s3412 + $0xb0] sm:$0xff] %vm1845, %v3402
      %3436 = vst.msk [vmem:[%s3412 + $0xb8] sm:$0xff] %vm1845, %v3403
      %3437 = vst.msk [vmem:[%s3412 + $0xc0] sm:$0xff] %vm1845, %v3404
      %3438 = vst.msk [vmem:[%s3412 + $0xc8] sm:$0xff] %vm1845, %v3405
      %3439 = vst.msk [vmem:[%s3412 + $0xd0] sm:$0xff] %vm1845, %v3406
      %3440 = vst.msk [vmem:[%s3412 + $0xd8] sm:$0xff] %vm1845, %v3407
      %3441 = vst.msk [vmem:[%s3412 + $0xe0] sm:$0xff] %vm1845, %v3408
      %3442 = vst.msk [vmem:[%s3412 + $0xe8] sm:$0xff] %vm1845, %v3409
      %3443 = vst.msk [vmem:[%s3412 + $0xf0] sm:$0xff] %vm1845, %v3410
      %3444 = vst.msk [vmem:[%s3412 + $0xf8] sm:$0xff] %vm1845, %v3411
      %v3445 = vld [vmem:[%s1] sm:$0xf]
      %v3446 = vld [vmem:[%s1015] sm:$0xf]
      %v3447 = vadd.f32 %v3445, %v3446
      %v3448 = vld [vmem:[%s262] sm:$0xff]
      %v3449 = vld [vmem:[%s262 + $0x8] sm:$0xff]
      %v3450 = vld [vmem:[%s262 + $0x18] sm:$0xff]
      %v3451 = vld [vmem:[%s262 + $0x20] sm:$0xff]
      %v3452 = vld [vmem:[%s262 + $0x30] sm:$0xff]
      %v3453 = vld [vmem:[%s262 + $0x38] sm:$0xff]
      %v3454 = vld [vmem:[%s262 + $0x48] sm:$0xff]
      %v3455 = vld [vmem:[%s262 + $0x50] sm:$0xff]
      %v3456 = vld [vmem:[%s262 + $0x60] sm:$0xff]
      %v3457 = vld [vmem:[%s262 + $0x68] sm:$0xff]
      %v3458 = vld [vmem:[%s262 + $0x78] sm:$0xff]
      %v3459 = vld [vmem:[%s262 + $0x80] sm:$0xff]
      %v3460 = vld [vmem:[%s262 + $0x90] sm:$0xff]
      %v3461 = vld [vmem:[%s262 + $0x98] sm:$0xff]
      %v3462 = vld [vmem:[%s262 + $0xa8] sm:$0xff]
      %v3463 = vld [vmem:[%s262 + $0xb0] sm:$0xff]
      %v3464 = vld [vmem:[%s262 + $0xc0] sm:$0xff]
      %v3465 = vld [vmem:[%s262 + $0xc8] sm:$0xff]
      %v3466 = vld [vmem:[%s262 + $0xd8] sm:$0xff]
      %v3467 = vld [vmem:[%s262 + $0xe0] sm:$0xff]
      %v3468 = vld [vmem:[%s262 + $0xf0] sm:$0xff]
      %v3469 = vld [vmem:[%s262 + $0xf8] sm:$0xff]
      %v3470 = vld [vmem:[%s262 + $0x108] sm:$0xff]
      %v3471 = vld [vmem:[%s262 + $0x110] sm:$0xff]
      %v3472 = vld [vmem:[%s262 + $0x120] sm:$0xff]
      %v3473 = vld [vmem:[%s262 + $0x128] sm:$0xff]
      %v3474 = vld [vmem:[%s262 + $0x138] sm:$0xff]
      %v3475 = vld [vmem:[%s262 + $0x140] sm:$0xff]
      %v3476 = vld [vmem:[%s262 + $0x150] sm:$0xff]
      %v3477 = vld [vmem:[%s262 + $0x158] sm:$0xff]
      %v3478 = vld [vmem:[%s262 + $0x168] sm:$0xff]
      %v3479 = vld [vmem:[%s262 + $0x170] sm:$0xff]
      %v3480 = vld [vmem:[%s329] sm:$0xf]
      %v3481 = vld [vmem:[%s331] sm:$0xf]
      %v3482 = vadd.f32 %v3480, %v3481
      %v3483 = vld [vmem:[%s1408] sm:$0xf]
      %v3484 = vadd.f32 %v3482, %v3483
      %v3485 = vld [vmem:[%s1410] sm:$0xf]
      %v3486 = vadd.f32 %v3484, %v3485
      %v3487 = vld [vmem:[%s262 + $0x1] sm:$0xff]
      %v3488 = vld [vmem:[%s262 + $0x9] sm:$0xff]
      %v3489 = vld [vmem:[%s262 + $0x19] sm:$0xff]
      %v3490 = vld [vmem:[%s262 + $0x21] sm:$0xff]
      %v3491 = vld [vmem:[%s262 + $0x31] sm:$0xff]
      %v3492 = vld [vmem:[%s262 + $0x39] sm:$0xff]
      %v3493 = vld [vmem:[%s262 + $0x49] sm:$0xff]
      %v3494 = vld [vmem:[%s262 + $0x51] sm:$0xff]
      %v3495 = vld [vmem:[%s262 + $0x61] sm:$0xff]
      %v3496 = vld [vmem:[%s262 + $0x69] sm:$0xff]
      %v3497 = vld [vmem:[%s262 + $0x79] sm:$0xff]
      %v3498 = vld [vmem:[%s262 + $0x81] sm:$0xff]
      %v3499 = vld [vmem:[%s262 + $0x91] sm:$0xff]
      %v3500 = vld [vmem:[%s262 + $0x99] sm:$0xff]
      %v3501 = vld [vmem:[%s262 + $0xa9] sm:$0xff]
      %v3502 = vld [vmem:[%s262 + $0xb1] sm:$0xff]
      %v3503 = vld [vmem:[%s262 + $0xc1] sm:$0xff]
      %v3504 = vld [vmem:[%s262 + $0xc9] sm:$0xff]
      %v3505 = vld [vmem:[%s262 + $0xd9] sm:$0xff]
      %v3506 = vld [vmem:[%s262 + $0xe1] sm:$0xff]
      %v3507 = vld [vmem:[%s262 + $0xf1] sm:$0xff]
      %v3508 = vld [vmem:[%s262 + $0xf9] sm:$0xff]
      %v3509 = vld [vmem:[%s262 + $0x109] sm:$0xff]
      %v3510 = vld [vmem:[%s262 + $0x111] sm:$0xff]
      %v3511 = vld [vmem:[%s262 + $0x121] sm:$0xff]
      %v3512 = vld [vmem:[%s262 + $0x129] sm:$0xff]
      %v3513 = vld [vmem:[%s262 + $0x139] sm:$0xff]
      %v3514 = vld [vmem:[%s262 + $0x141] sm:$0xff]
      %v3515 = vld [vmem:[%s262 + $0x151] sm:$0xff]
      %v3516 = vld [vmem:[%s262 + $0x159] sm:$0xff]
      %v3517 = vld [vmem:[%s262 + $0x169] sm:$0xff]
      %v3518 = vld [vmem:[%s262 + $0x171] sm:$0xff]
      %v3520 = vsel %vm174, %v3487, 0
      %v3523 = vsel %vm174, %v3488, 0
      %v3526 = vsel %vm174, %v3489, 0
      %v3529 = vsel %vm174, %v3490, 0
      %v3532 = vsel %vm174, %v3491, 0
      %v3535 = vsel %vm174, %v3492, 0
      %v3538 = vsel %vm174, %v3493, 0
      %v3541 = vsel %vm174, %v3494, 0
      %v3544 = vsel %vm174, %v3495, 0
      %v3547 = vsel %vm174, %v3496, 0
      %v3550 = vsel %vm174, %v3497, 0
      %v3553 = vsel %vm174, %v3498, 0
      %v3556 = vsel %vm174, %v3499, 0
      %v3559 = vsel %vm174, %v3500, 0
      %v3562 = vsel %vm174, %v3501, 0
      %v3565 = vsel %vm174, %v3502, 0
      %v3568 = vsel %vm174, %v3503, 0
      %v3571 = vsel %vm174, %v3504, 0
      %v3574 = vsel %vm174, %v3505, 0
      %v3577 = vsel %vm174, %v3506, 0
      %v3580 = vsel %vm174, %v3507, 0
      %v3583 = vsel %vm174, %v3508, 0
      %v3586 = vsel %vm174, %v3509, 0
      %v3589 = vsel %vm174, %v3510, 0
      %v3592 = vsel %vm174, %v3511, 0
      %v3595 = vsel %vm174, %v3512, 0
      %v3598 = vsel %vm174, %v3513, 0
      %v3601 = vsel %vm174, %v3514, 0
      %v3604 = vsel %vm174, %v3515, 0
      %v3607 = vsel %vm174, %v3516, 0
      %v3610 = vsel %vm174, %v3517, 0
      %v3613 = vsel %vm174, %v3518, 0
      %v3616 = vsel %vm462, %v3486, 0
      %3618 = vmatprep.subr.mxu0 0.0
      %3619 = vmatpush1.msra.mxu0 0.0
      %3620 = vmatprep.subr.mxu0 0.0
      %3621 = vmatpush1.msra.mxu0 0.0
      %3622 = vmatprep.subr.mxu0 0.0
      %3623 = vmatpush1.msra.mxu0 0.0
      %3624 = vmatprep.subr.mxu0 0.0
      %3625 = vmatpush1.msra.mxu0 0.0
      %3626 = vmatprep.subr.mxu0 0.0
      %3627 = vmatpush1.msra.mxu0 0.0
      %3628 = vmatprep.subr.mxu0 0.0
      %3629 = vmatpush1.msra.mxu0 0.0
      %3630 = vmatprep.subr.mxu0 0.0
      %3631 = vmatpush1.msra.mxu0 0.0
      %3632 = vmatprep.subr.mxu0 0.0
      %3633 = vmatpush1.msra.mxu0 0.0
      %3634 = vmatprep.subr.mxu0 0.0
      %3635 = vmatpush1.msra.mxu0 0.0
      %3636 = vmatprep.subr.mxu0 0.0
      %3637 = vmatpush1.msra.mxu0 0.0
      %3638 = vmatprep.subr.mxu0 0.0
      %3639 = vmatpush1.msra.mxu0 0.0
      %3640 = vmatprep.subr.mxu0 0.0
      %3641 = vmatpush1.msra.mxu0 0.0
      %3642 = vmatprep.subr.mxu0 0.0
      %3643 = vmatpush1.msra.mxu0 0.0
      %3644 = vmatprep.subr.mxu0 0.0
      %3645 = vmatpush1.msra.mxu0 0.0
      %3646 = vmatprep.subr.mxu0 0.0
      %3647 = vmatpush1.msra.mxu0 0.0
      %3648 = vmatprep.subr.mxu0 0.0
      %3649 = vmatpush1.msra.mxu0 %v3616
      %3650 = vmatprep.subr.mxu0 0.0
      %3651 = vmatpush2.msra.mxu0 0.0
      %3652 = vmatprep.subr.mxu0 0.0
      %3653 = vmatpush2.msra.mxu0 0.0
      %3654 = vmatprep.subr.mxu0 0.0
      %3655 = vmatpush2.msra.mxu0 0.0
      %3656 = vmatprep.subr.mxu0 0.0
      %3657 = vmatpush2.msra.mxu0 0.0
      %3658 = vmatprep.subr.mxu0 0.0
      %3659 = vmatpush2.msra.mxu0 0.0
      %3660 = vmatprep.subr.mxu0 0.0
      %3661 = vmatpush2.msra.mxu0 0.0
      %3662 = vmatprep.subr.mxu0 0.0
      %3663 = vmatpush2.msra.mxu0 0.0
      %3664 = vmatprep.subr.mxu0 0.0
      %3665 = vmatpush2.msra.mxu0 0.0
      %3666 = vmatprep.subr.mxu0 0.0
      %3667 = vmatpush2.msra.mxu0 0.0
      %3668 = vmatprep.subr.mxu0 0.0
      %3669 = vmatpush2.msra.mxu0 0.0
      %3670 = vmatprep.subr.mxu0 0.0
      %3671 = vmatpush2.msra.mxu0 0.0
      %3672 = vmatprep.subr.mxu0 0.0
      %3673 = vmatpush2.msra.mxu0 0.0
      %3674 = vmatprep.subr.mxu0 0.0
      %3675 = vmatpush2.msra.mxu0 0.0
      %3676 = vmatprep.subr.mxu0 0.0
      %3677 = vmatpush2.msra.mxu0 0.0
      %3678 = vmatprep.subr.mxu0 0.0
      %3679 = vmatpush2.msra.mxu0 0.0
      %3680 = vmatprep.subr.mxu0 0.0
      %3681 = vmatpush2.msra.mxu0 0.0
      %3682 = vmatprep.mubr.f32.mxu0 0.0
      %3683 = vmatmul.mubr.f32.gmra.mxu0 %v3520
      %v3684 = vpop.f32.mrf.mxu0
      %v3685 = vadd.f32 0.0, %v3684
      %v3686 = vpop.f32.mrf.mxu0
      %3687 = vmatprep.mubr.f32.mxu0 0.0
      %3688 = vmatmul.mubr.f32.gmra.mxu0 %v3523
      %v3689 = vpop.f32.mrf.mxu0
      %v3690 = vadd.f32 0.0, %v3689
      %v3691 = vpop.f32.mrf.mxu0
      %3692 = vmatprep.mubr.f32.mxu0 0.0
      %3693 = vmatmul.mubr.f32.gmra.mxu0 %v3526
      %v3694 = vpop.f32.mrf.mxu0
      %v3695 = vadd.f32 0.0, %v3694
      %v3696 = vpop.f32.mrf.mxu0
      %3697 = vmatprep.mubr.f32.mxu0 0.0
      %3698 = vmatmul.mubr.f32.gmra.mxu0 %v3529
      %v3699 = vpop.f32.mrf.mxu0
      %v3700 = vadd.f32 0.0, %v3699
      %v3701 = vpop.f32.mrf.mxu0
      %3702 = vmatprep.mubr.f32.mxu0 0.0
      %3703 = vmatmul.mubr.f32.gmra.mxu0 %v3532
      %v3704 = vpop.f32.mrf.mxu0
      %v3705 = vadd.f32 0.0, %v3704
      %v3706 = vpop.f32.mrf.mxu0
      %3707 = vmatprep.mubr.f32.mxu0 0.0
      %3708 = vmatmul.mubr.f32.gmra.mxu0 %v3535
      %v3709 = vpop.f32.mrf.mxu0
      %v3710 = vadd.f32 0.0, %v3709
      %v3711 = vpop.f32.mrf.mxu0
      %3712 = vmatprep.mubr.f32.mxu0 0.0
      %3713 = vmatmul.mubr.f32.gmra.mxu0 %v3538
      %v3714 = vpop.f32.mrf.mxu0
      %v3715 = vadd.f32 0.0, %v3714
      %v3716 = vpop.f32.mrf.mxu0
      %3717 = vmatprep.mubr.f32.mxu0 0.0
      %3718 = vmatmul.mubr.f32.gmra.mxu0 %v3541
      %v3719 = vpop.f32.mrf.mxu0
      %v3720 = vadd.f32 0.0, %v3719
      %v3721 = vpop.f32.mrf.mxu0
      %3722 = vmatprep.mubr.f32.mxu0 0.0
      %3723 = vmatmul.mubr.f32.gmra.mxu0 %v3544
      %v3724 = vpop.f32.mrf.mxu0
      %v3725 = vadd.f32 0.0, %v3724
      %v3726 = vpop.f32.mrf.mxu0
      %3727 = vmatprep.mubr.f32.mxu0 0.0
      %3728 = vmatmul.mubr.f32.gmra.mxu0 %v3547
      %v3729 = vpop.f32.mrf.mxu0
      %v3730 = vadd.f32 0.0, %v3729
      %v3731 = vpop.f32.mrf.mxu0
      %3732 = vmatprep.mubr.f32.mxu0 0.0
      %3733 = vmatmul.mubr.f32.gmra.mxu0 %v3550
      %v3734 = vpop.f32.mrf.mxu0
      %v3735 = vadd.f32 0.0, %v3734
      %v3736 = vpop.f32.mrf.mxu0
      %3737 = vmatprep.mubr.f32.mxu0 0.0
      %3738 = vmatmul.mubr.f32.gmra.mxu0 %v3553
      %v3739 = vpop.f32.mrf.mxu0
      %v3740 = vadd.f32 0.0, %v3739
      %v3741 = vpop.f32.mrf.mxu0
      %3742 = vmatprep.mubr.f32.mxu0 0.0
      %3743 = vmatmul.mubr.f32.gmra.mxu0 %v3556
      %v3744 = vpop.f32.mrf.mxu0
      %v3745 = vadd.f32 0.0, %v3744
      %v3746 = vpop.f32.mrf.mxu0
      %3747 = vmatprep.mubr.f32.mxu0 0.0
      %3748 = vmatmul.mubr.f32.gmra.mxu0 %v3559
      %v3749 = vpop.f32.mrf.mxu0
      %v3750 = vadd.f32 0.0, %v3749
      %v3751 = vpop.f32.mrf.mxu0
      %3752 = vmatprep.mubr.f32.mxu0 0.0
      %3753 = vmatmul.mubr.f32.gmra.mxu0 %v3562
      %v3754 = vpop.f32.mrf.mxu0
      %v3755 = vadd.f32 0.0, %v3754
      %v3756 = vpop.f32.mrf.mxu0
      %3757 = vmatprep.mubr.f32.mxu0 0.0
      %3758 = vmatmul.mubr.f32.gmra.mxu0 %v3565
      %v3759 = vpop.f32.mrf.mxu0
      %v3760 = vadd.f32 0.0, %v3759
      %v3761 = vpop.f32.mrf.mxu0
      %3762 = vmatprep.mubr.f32.mxu0 0.0
      %3763 = vmatmul.mubr.f32.gmra.mxu0 %v3568
      %v3764 = vpop.f32.mrf.mxu0
      %v3765 = vadd.f32 0.0, %v3764
      %v3766 = vpop.f32.mrf.mxu0
      %3767 = vmatprep.mubr.f32.mxu0 0.0
      %3768 = vmatmul.mubr.f32.gmra.mxu0 %v3571
      %v3769 = vpop.f32.mrf.mxu0
      %v3770 = vadd.f32 0.0, %v3769
      %v3771 = vpop.f32.mrf.mxu0
      %3772 = vmatprep.mubr.f32.mxu0 0.0
      %3773 = vmatmul.mubr.f32.gmra.mxu0 %v3574
      %v3774 = vpop.f32.mrf.mxu0
      %v3775 = vadd.f32 0.0, %v3774
      %v3776 = vpop.f32.mrf.mxu0
      %3777 = vmatprep.mubr.f32.mxu0 0.0
      %3778 = vmatmul.mubr.f32.gmra.mxu0 %v3577
      %v3779 = vpop.f32.mrf.mxu0
      %v3780 = vadd.f32 0.0, %v3779
      %v3781 = vpop.f32.mrf.mxu0
      %3782 = vmatprep.mubr.f32.mxu0 0.0
      %3783 = vmatmul.mubr.f32.gmra.mxu0 %v3580
      %v3784 = vpop.f32.mrf.mxu0
      %v3785 = vadd.f32 0.0, %v3784
      %v3786 = vpop.f32.mrf.mxu0
      %3787 = vmatprep.mubr.f32.mxu0 0.0
      %3788 = vmatmul.mubr.f32.gmra.mxu0 %v3583
      %v3789 = vpop.f32.mrf.mxu0
      %v3790 = vadd.f32 0.0, %v3789
      %v3791 = vpop.f32.mrf.mxu0
      %3792 = vmatprep.mubr.f32.mxu0 0.0
      %3793 = vmatmul.mubr.f32.gmra.mxu0 %v3586
      %v3794 = vpop.f32.mrf.mxu0
      %v3795 = vadd.f32 0.0, %v3794
      %v3796 = vpop.f32.mrf.mxu0
      %3797 = vmatprep.mubr.f32.mxu0 0.0
      %3798 = vmatmul.mubr.f32.gmra.mxu0 %v3589
      %v3799 = vpop.f32.mrf.mxu0
      %v3800 = vadd.f32 0.0, %v3799
      %v3801 = vpop.f32.mrf.mxu0
      %3802 = vmatprep.mubr.f32.mxu0 0.0
      %3803 = vmatmul.mubr.f32.gmra.mxu0 %v3592
      %v3804 = vpop.f32.mrf.mxu0
      %v3805 = vadd.f32 0.0, %v3804
      %v3806 = vpop.f32.mrf.mxu0
      %3807 = vmatprep.mubr.f32.mxu0 0.0
      %3808 = vmatmul.mubr.f32.gmra.mxu0 %v3595
      %v3809 = vpop.f32.mrf.mxu0
      %v3810 = vadd.f32 0.0, %v3809
      %v3811 = vpop.f32.mrf.mxu0
      %3812 = vmatprep.mubr.f32.mxu0 0.0
      %3813 = vmatmul.mubr.f32.gmra.mxu0 %v3598
      %v3814 = vpop.f32.mrf.mxu0
      %v3815 = vadd.f32 0.0, %v3814
      %v3816 = vpop.f32.mrf.mxu0
      %3817 = vmatprep.mubr.f32.mxu0 0.0
      %3818 = vmatmul.mubr.f32.gmra.mxu0 %v3601
      %v3819 = vpop.f32.mrf.mxu0
      %v3820 = vadd.f32 0.0, %v3819
      %v3821 = vpop.f32.mrf.mxu0
      %3822 = vmatprep.mubr.f32.mxu0 0.0
      %3823 = vmatmul.mubr.f32.gmra.mxu0 %v3604
      %v3824 = vpop.f32.mrf.mxu0
      %v3825 = vadd.f32 0.0, %v3824
      %v3826 = vpop.f32.mrf.mxu0
      %3827 = vmatprep.mubr.f32.mxu0 0.0
      %3828 = vmatmul.mubr.f32.gmra.mxu0 %v3607
      %v3829 = vpop.f32.mrf.mxu0
      %v3830 = vadd.f32 0.0, %v3829
      %v3831 = vpop.f32.mrf.mxu0
      %3832 = vmatprep.mubr.f32.mxu0 0.0
      %3833 = vmatmul.mubr.f32.gmra.mxu0 %v3610
      %v3834 = vpop.f32.mrf.mxu0
      %v3835 = vadd.f32 0.0, %v3834
      %v3836 = vpop.f32.mrf.mxu0
      %3837 = vmatprep.mubr.f32.mxu0 0.0
      %3838 = vmatmul.mubr.f32.gmra.mxu0 %v3613
      %v3839 = vpop.f32.mrf.mxu0
      %v3840 = vadd.f32 0.0, %v3839
      %v3841 = vpop.f32.mrf.mxu0
      %3842 = vdwg.mxu0
      %v3844 = vsel %vm174, %v3448, 0
      %v3847 = vsel %vm174, %v3449, 0
      %v3850 = vsel %vm174, %v3450, 0
      %v3853 = vsel %vm174, %v3451, 0
      %v3856 = vsel %vm174, %v3452, 0
      %v3859 = vsel %vm174, %v3453, 0
      %v3862 = vsel %vm174, %v3454, 0
      %v3865 = vsel %vm174, %v3455, 0
      %v3868 = vsel %vm174, %v3456, 0
      %v3871 = vsel %vm174, %v3457, 0
      %v3874 = vsel %vm174, %v3458, 0
      %v3877 = vsel %vm174, %v3459, 0
      %v3880 = vsel %vm174, %v3460, 0
      %v3883 = vsel %vm174, %v3461, 0
      %v3886 = vsel %vm174, %v3462, 0
      %v3889 = vsel %vm174, %v3463, 0
      %v3892 = vsel %vm174, %v3464, 0
      %v3895 = vsel %vm174, %v3465, 0
      %v3898 = vsel %vm174, %v3466, 0
      %v3901 = vsel %vm174, %v3467, 0
      %v3904 = vsel %vm174, %v3468, 0
      %v3907 = vsel %vm174, %v3469, 0
      %v3910 = vsel %vm174, %v3470, 0
      %v3913 = vsel %vm174, %v3471, 0
      %v3916 = vsel %vm174, %v3472, 0
      %v3919 = vsel %vm174, %v3473, 0
      %v3922 = vsel %vm174, %v3474, 0
      %v3925 = vsel %vm174, %v3475, 0
      %v3928 = vsel %vm174, %v3476, 0
      %v3931 = vsel %vm174, %v3477, 0
      %v3934 = vsel %vm174, %v3478, 0
      %v3937 = vsel %vm174, %v3479, 0
      %v3940 = vsel %vm462, %v3447, 0
      %3942 = vmatprep.subr.mxu0 0.0
      %3943 = vmatpush1.msra.mxu0 0.0
      %3944 = vmatprep.subr.mxu0 0.0
      %3945 = vmatpush1.msra.mxu0 0.0
      %3946 = vmatprep.subr.mxu0 0.0
      %3947 = vmatpush1.msra.mxu0 0.0
      %3948 = vmatprep.subr.mxu0 0.0
      %3949 = vmatpush1.msra.mxu0 0.0
      %3950 = vmatprep.subr.mxu0 0.0
      %3951 = vmatpush1.msra.mxu0 0.0
      %3952 = vmatprep.subr.mxu0 0.0
      %3953 = vmatpush1.msra.mxu0 0.0
      %3954 = vmatprep.subr.mxu0 0.0
      %3955 = vmatpush1.msra.mxu0 0.0
      %3956 = vmatprep.subr.mxu0 0.0
      %3957 = vmatpush1.msra.mxu0 0.0
      %3958 = vmatprep.subr.mxu0 0.0
      %3959 = vmatpush1.msra.mxu0 0.0
      %3960 = vmatprep.subr.mxu0 0.0
      %3961 = vmatpush1.msra.mxu0 0.0
      %3962 = vmatprep.subr.mxu0 0.0
      %3963 = vmatpush1.msra.mxu0 0.0
      %3964 = vmatprep.subr.mxu0 0.0
      %3965 = vmatpush1.msra.mxu0 0.0
      %3966 = vmatprep.subr.mxu0 0.0
      %3967 = vmatpush1.msra.mxu0 0.0
      %3968 = vmatprep.subr.mxu0 0.0
      %3969 = vmatpush1.msra.mxu0 0.0
      %3970 = vmatprep.subr.mxu0 0.0
      %3971 = vmatpush1.msra.mxu0 0.0
      %3972 = vmatprep.subr.mxu0 0.0
      %3973 = vmatpush1.msra.mxu0 %v3940
      %3974 = vmatprep.subr.mxu0 0.0
      %3975 = vmatpush2.msra.mxu0 0.0
      %3976 = vmatprep.subr.mxu0 0.0
      %3977 = vmatpush2.msra.mxu0 0.0
      %3978 = vmatprep.subr.mxu0 0.0
      %3979 = vmatpush2.msra.mxu0 0.0
      %3980 = vmatprep.subr.mxu0 0.0
      %3981 = vmatpush2.msra.mxu0 0.0
      %3982 = vmatprep.subr.mxu0 0.0
      %3983 = vmatpush2.msra.mxu0 0.0
      %3984 = vmatprep.subr.mxu0 0.0
      %3985 = vmatpush2.msra.mxu0 0.0
      %3986 = vmatprep.subr.mxu0 0.0
      %3987 = vmatpush2.msra.mxu0 0.0
      %3988 = vmatprep.subr.mxu0 0.0
      %3989 = vmatpush2.msra.mxu0 0.0
      %3990 = vmatprep.subr.mxu0 0.0
      %3991 = vmatpush2.msra.mxu0 0.0
      %3992 = vmatprep.subr.mxu0 0.0
      %3993 = vmatpush2.msra.mxu0 0.0
      %3994 = vmatprep.subr.mxu0 0.0
      %3995 = vmatpush2.msra.mxu0 0.0
      %3996 = vmatprep.subr.mxu0 0.0
      %3997 = vmatpush2.msra.mxu0 0.0
      %3998 = vmatprep.subr.mxu0 0.0
      %3999 = vmatpush2.msra.mxu0 0.0
      %4000 = vmatprep.subr.mxu0 0.0
      %4001 = vmatpush2.msra.mxu0 0.0
      %4002 = vmatprep.subr.mxu0 0.0
      %4003 = vmatpush2.msra.mxu0 0.0
      %4004 = vmatprep.subr.mxu0 0.0
      %4005 = vmatpush2.msra.mxu0 0.0
      %4006 = vmatprep.mubr.f32.mxu0 0.0
      %4007 = vmatmul.mubr.f32.gmra.mxu0 %v3844
      %v4008 = vpop.f32.mrf.mxu0
      %v4009 = vadd.f32 %v3685, %v4008
      %v4010 = vpop.f32.mrf.mxu0
      %4011 = vmatprep.mubr.f32.mxu0 0.0
      %4012 = vmatmul.mubr.f32.gmra.mxu0 %v3847
      %v4013 = vpop.f32.mrf.mxu0
      %v4014 = vadd.f32 %v3690, %v4013
      %v4015 = vpop.f32.mrf.mxu0
      %4016 = vmatprep.mubr.f32.mxu0 0.0
      %4017 = vmatmul.mubr.f32.gmra.mxu0 %v3850
      %v4018 = vpop.f32.mrf.mxu0
      %v4019 = vadd.f32 %v3695, %v4018
      %v4020 = vpop.f32.mrf.mxu0
      %4021 = vmatprep.mubr.f32.mxu0 0.0
      %4022 = vmatmul.mubr.f32.gmra.mxu0 %v3853
      %v4023 = vpop.f32.mrf.mxu0
      %v4024 = vadd.f32 %v3700, %v4023
      %v4025 = vpop.f32.mrf.mxu0
      %4026 = vmatprep.mubr.f32.mxu0 0.0
      %4027 = vmatmul.mubr.f32.gmra.mxu0 %v3856
      %v4028 = vpop.f32.mrf.mxu0
      %v4029 = vadd.f32 %v3705, %v4028
      %v4030 = vpop.f32.mrf.mxu0
      %4031 = vmatprep.mubr.f32.mxu0 0.0
      %4032 = vmatmul.mubr.f32.gmra.mxu0 %v3859
      %v4033 = vpop.f32.mrf.mxu0
      %v4034 = vadd.f32 %v3710, %v4033
      %v4035 = vpop.f32.mrf.mxu0
      %4036 = vmatprep.mubr.f32.mxu0 0.0
      %4037 = vmatmul.mubr.f32.gmra.mxu0 %v3862
      %v4038 = vpop.f32.mrf.mxu0
      %v4039 = vadd.f32 %v3715, %v4038
      %v4040 = vpop.f32.mrf.mxu0
      %4041 = vmatprep.mubr.f32.mxu0 0.0
      %4042 = vmatmul.mubr.f32.gmra.mxu0 %v3865
      %v4043 = vpop.f32.mrf.mxu0
      %v4044 = vadd.f32 %v3720, %v4043
      %v4045 = vpop.f32.mrf.mxu0
      %4046 = vmatprep.mubr.f32.mxu0 0.0
      %4047 = vmatmul.mubr.f32.gmra.mxu0 %v3868
      %v4048 = vpop.f32.mrf.mxu0
      %v4049 = vadd.f32 %v3725, %v4048
      %v4050 = vpop.f32.mrf.mxu0
      %4051 = vmatprep.mubr.f32.mxu0 0.0
      %4052 = vmatmul.mubr.f32.gmra.mxu0 %v3871
      %v4053 = vpop.f32.mrf.mxu0
      %v4054 = vadd.f32 %v3730, %v4053
      %v4055 = vpop.f32.mrf.mxu0
      %4056 = vmatprep.mubr.f32.mxu0 0.0
      %4057 = vmatmul.mubr.f32.gmra.mxu0 %v3874
      %v4058 = vpop.f32.mrf.mxu0
      %v4059 = vadd.f32 %v3735, %v4058
      %v4060 = vpop.f32.mrf.mxu0
      %4061 = vmatprep.mubr.f32.mxu0 0.0
      %4062 = vmatmul.mubr.f32.gmra.mxu0 %v3877
      %v4063 = vpop.f32.mrf.mxu0
      %v4064 = vadd.f32 %v3740, %v4063
      %v4065 = vpop.f32.mrf.mxu0
      %4066 = vmatprep.mubr.f32.mxu0 0.0
      %4067 = vmatmul.mubr.f32.gmra.mxu0 %v3880
      %v4068 = vpop.f32.mrf.mxu0
      %v4069 = vadd.f32 %v3745, %v4068
      %v4070 = vpop.f32.mrf.mxu0
      %4071 = vmatprep.mubr.f32.mxu0 0.0
      %4072 = vmatmul.mubr.f32.gmra.mxu0 %v3883
      %v4073 = vpop.f32.mrf.mxu0
      %v4074 = vadd.f32 %v3750, %v4073
      %v4075 = vpop.f32.mrf.mxu0
      %4076 = vmatprep.mubr.f32.mxu0 0.0
      %4077 = vmatmul.mubr.f32.gmra.mxu0 %v3886
      %v4078 = vpop.f32.mrf.mxu0
      %v4079 = vadd.f32 %v3755, %v4078
      %v4080 = vpop.f32.mrf.mxu0
      %4081 = vmatprep.mubr.f32.mxu0 0.0
      %4082 = vmatmul.mubr.f32.gmra.mxu0 %v3889
      %v4083 = vpop.f32.mrf.mxu0
      %v4084 = vadd.f32 %v3760, %v4083
      %v4085 = vpop.f32.mrf.mxu0
      %4086 = vmatprep.mubr.f32.mxu0 0.0
      %4087 = vmatmul.mubr.f32.gmra.mxu0 %v3892
      %v4088 = vpop.f32.mrf.mxu0
      %v4089 = vadd.f32 %v3765, %v4088
      %v4090 = vpop.f32.mrf.mxu0
      %4091 = vmatprep.mubr.f32.mxu0 0.0
      %4092 = vmatmul.mubr.f32.gmra.mxu0 %v3895
      %v4093 = vpop.f32.mrf.mxu0
      %v4094 = vadd.f32 %v3770, %v4093
      %v4095 = vpop.f32.mrf.mxu0
      %4096 = vmatprep.mubr.f32.mxu0 0.0
      %4097 = vmatmul.mubr.f32.gmra.mxu0 %v3898
      %v4098 = vpop.f32.mrf.mxu0
      %v4099 = vadd.f32 %v3775, %v4098
      %v4100 = vpop.f32.mrf.mxu0
      %4101 = vmatprep.mubr.f32.mxu0 0.0
      %4102 = vmatmul.mubr.f32.gmra.mxu0 %v3901
      %v4103 = vpop.f32.mrf.mxu0
      %v4104 = vadd.f32 %v3780, %v4103
      %v4105 = vpop.f32.mrf.mxu0
      %4106 = vmatprep.mubr.f32.mxu0 0.0
      %4107 = vmatmul.mubr.f32.gmra.mxu0 %v3904
      %v4108 = vpop.f32.mrf.mxu0
      %v4109 = vadd.f32 %v3785, %v4108
      %v4110 = vpop.f32.mrf.mxu0
      %4111 = vmatprep.mubr.f32.mxu0 0.0
      %4112 = vmatmul.mubr.f32.gmra.mxu0 %v3907
      %v4113 = vpop.f32.mrf.mxu0
      %v4114 = vadd.f32 %v3790, %v4113
      %v4115 = vpop.f32.mrf.mxu0
      %4116 = vmatprep.mubr.f32.mxu0 0.0
      %4117 = vmatmul.mubr.f32.gmra.mxu0 %v3910
      %v4118 = vpop.f32.mrf.mxu0
      %v4119 = vadd.f32 %v3795, %v4118
      %v4120 = vpop.f32.mrf.mxu0
      %4121 = vmatprep.mubr.f32.mxu0 0.0
      %4122 = vmatmul.mubr.f32.gmra.mxu0 %v3913
      %v4123 = vpop.f32.mrf.mxu0
      %v4124 = vadd.f32 %v3800, %v4123
      %v4125 = vpop.f32.mrf.mxu0
      %4126 = vmatprep.mubr.f32.mxu0 0.0
      %4127 = vmatmul.mubr.f32.gmra.mxu0 %v3916
      %v4128 = vpop.f32.mrf.mxu0
      %v4129 = vadd.f32 %v3805, %v4128
      %v4130 = vpop.f32.mrf.mxu0
      %4131 = vmatprep.mubr.f32.mxu0 0.0
      %4132 = vmatmul.mubr.f32.gmra.mxu0 %v3919
      %v4133 = vpop.f32.mrf.mxu0
      %v4134 = vadd.f32 %v3810, %v4133
      %v4135 = vpop.f32.mrf.mxu0
      %4136 = vmatprep.mubr.f32.mxu0 0.0
      %4137 = vmatmul.mubr.f32.gmra.mxu0 %v3922
      %v4138 = vpop.f32.mrf.mxu0
      %v4139 = vadd.f32 %v3815, %v4138
      %v4140 = vpop.f32.mrf.mxu0
      %4141 = vmatprep.mubr.f32.mxu0 0.0
      %4142 = vmatmul.mubr.f32.gmra.mxu0 %v3925
      %v4143 = vpop.f32.mrf.mxu0
      %v4144 = vadd.f32 %v3820, %v4143
      %v4145 = vpop.f32.mrf.mxu0
      %4146 = vmatprep.mubr.f32.mxu0 0.0
      %4147 = vmatmul.mubr.f32.gmra.mxu0 %v3928
      %v4148 = vpop.f32.mrf.mxu0
      %v4149 = vadd.f32 %v3825, %v4148
      %v4150 = vpop.f32.mrf.mxu0
      %4151 = vmatprep.mubr.f32.mxu0 0.0
      %4152 = vmatmul.mubr.f32.gmra.mxu0 %v3931
      %v4153 = vpop.f32.mrf.mxu0
      %v4154 = vadd.f32 %v3830, %v4153
      %v4155 = vpop.f32.mrf.mxu0
      %4156 = vmatprep.mubr.f32.mxu0 0.0
      %4157 = vmatmul.mubr.f32.gmra.mxu0 %v3934
      %v4158 = vpop.f32.mrf.mxu0
      %v4159 = vadd.f32 %v3835, %v4158
      %v4160 = vpop.f32.mrf.mxu0
      %4161 = vmatprep.mubr.f32.mxu0 0.0
      %4162 = vmatmul.mubr.f32.gmra.mxu0 %v3937
      %v4163 = vpop.f32.mrf.mxu0
      %v4164 = vadd.f32 %v3840, %v4163
      %v4165 = vpop.f32.mrf.mxu0
      %4166 = vdwg.mxu0
      %v4167 = vld [vmem:[%s1017] sm:$0xf]
      %s4168 = scalar_lea.vmem [#allocation2], 48
      %v4169 = vld [vmem:[%s4168] sm:$0xff]
      %v4170 = vld [vmem:[%s4168 + $0x8] sm:$0xff]
      %v4171 = vld [vmem:[%s4168 + $0x18] sm:$0xff]
      %v4172 = vld [vmem:[%s4168 + $0x20] sm:$0xff]
      %v4173 = vld [vmem:[%s4168 + $0x30] sm:$0xff]
      %v4174 = vld [vmem:[%s4168 + $0x38] sm:$0xff]
      %v4175 = vld [vmem:[%s4168 + $0x48] sm:$0xff]
      %v4176 = vld [vmem:[%s4168 + $0x50] sm:$0xff]
      %v4177 = vld [vmem:[%s4168 + $0x60] sm:$0xff]
      %v4178 = vld [vmem:[%s4168 + $0x68] sm:$0xff]
      %v4179 = vld [vmem:[%s4168 + $0x78] sm:$0xff]
      %v4180 = vld [vmem:[%s4168 + $0x80] sm:$0xff]
      %v4181 = vld [vmem:[%s4168 + $0x90] sm:$0xff]
      %v4182 = vld [vmem:[%s4168 + $0x98] sm:$0xff]
      %v4183 = vld [vmem:[%s4168 + $0xa8] sm:$0xff]
      %v4184 = vld [vmem:[%s4168 + $0xb0] sm:$0xff]
      %v4185 = vld [vmem:[%s4168 + $0xc0] sm:$0xff]
      %v4186 = vld [vmem:[%s4168 + $0xc8] sm:$0xff]
      %v4187 = vld [vmem:[%s4168 + $0xd8] sm:$0xff]
      %v4188 = vld [vmem:[%s4168 + $0xe0] sm:$0xff]
      %v4189 = vld [vmem:[%s4168 + $0xf0] sm:$0xff]
      %v4190 = vld [vmem:[%s4168 + $0xf8] sm:$0xff]
      %v4191 = vld [vmem:[%s4168 + $0x108] sm:$0xff]
      %v4192 = vld [vmem:[%s4168 + $0x110] sm:$0xff]
      %v4193 = vld [vmem:[%s4168 + $0x120] sm:$0xff]
      %v4194 = vld [vmem:[%s4168 + $0x128] sm:$0xff]
      %v4195 = vld [vmem:[%s4168 + $0x138] sm:$0xff]
      %v4196 = vld [vmem:[%s4168 + $0x140] sm:$0xff]
      %v4197 = vld [vmem:[%s4168 + $0x150] sm:$0xff]
      %v4198 = vld [vmem:[%s4168 + $0x158] sm:$0xff]
      %v4199 = vld [vmem:[%s4168 + $0x168] sm:$0xff]
      %v4200 = vld [vmem:[%s4168 + $0x170] sm:$0xff]
      %v4202 = vsel %vm174, %v4169, 0
      %v4205 = vsel %vm174, %v4170, 0
      %v4208 = vsel %vm174, %v4171, 0
      %v4211 = vsel %vm174, %v4172, 0
      %v4214 = vsel %vm174, %v4173, 0
      %v4217 = vsel %vm174, %v4174, 0
      %v4220 = vsel %vm174, %v4175, 0
      %v4223 = vsel %vm174, %v4176, 0
      %v4226 = vsel %vm174, %v4177, 0
      %v4229 = vsel %vm174, %v4178, 0
      %v4232 = vsel %vm174, %v4179, 0
      %v4235 = vsel %vm174, %v4180, 0
      %v4238 = vsel %vm174, %v4181, 0
      %v4241 = vsel %vm174, %v4182, 0
      %v4244 = vsel %vm174, %v4183, 0
      %v4247 = vsel %vm174, %v4184, 0
      %v4250 = vsel %vm174, %v4185, 0
      %v4253 = vsel %vm174, %v4186, 0
      %v4256 = vsel %vm174, %v4187, 0
      %v4259 = vsel %vm174, %v4188, 0
      %v4262 = vsel %vm174, %v4189, 0
      %v4265 = vsel %vm174, %v4190, 0
      %v4268 = vsel %vm174, %v4191, 0
      %v4271 = vsel %vm174, %v4192, 0
      %v4274 = vsel %vm174, %v4193, 0
      %v4277 = vsel %vm174, %v4194, 0
      %v4280 = vsel %vm174, %v4195, 0
      %v4283 = vsel %vm174, %v4196, 0
      %v4286 = vsel %vm174, %v4197, 0
      %v4289 = vsel %vm174, %v4198, 0
      %v4292 = vsel %vm174, %v4199, 0
      %v4295 = vsel %vm174, %v4200, 0
      %v4298 = vsel %vm462, %v4167, 0
      %4300 = vmatprep.subr.mxu0 0.0
      %4301 = vmatpush1.msra.mxu0 0.0
      %4302 = vmatprep.subr.mxu0 0.0
      %4303 = vmatpush1.msra.mxu0 0.0
      %4304 = vmatprep.subr.mxu0 0.0
      %4305 = vmatpush1.msra.mxu0 0.0
      %4306 = vmatprep.subr.mxu0 0.0
      %4307 = vmatpush1.msra.mxu0 0.0
      %4308 = vmatprep.subr.mxu0 0.0
      %4309 = vmatpush1.msra.mxu0 0.0
      %4310 = vmatprep.subr.mxu0 0.0
      %4311 = vmatpush1.msra.mxu0 0.0
      %4312 = vmatprep.subr.mxu0 0.0
      %4313 = vmatpush1.msra.mxu0 0.0
      %4314 = vmatprep.subr.mxu0 0.0
      %4315 = vmatpush1.msra.mxu0 0.0
      %4316 = vmatprep.subr.mxu0 0.0
      %4317 = vmatpush1.msra.mxu0 0.0
      %4318 = vmatprep.subr.mxu0 0.0
      %4319 = vmatpush1.msra.mxu0 0.0
      %4320 = vmatprep.subr.mxu0 0.0
      %4321 = vmatpush1.msra.mxu0 0.0
      %4322 = vmatprep.subr.mxu0 0.0
      %4323 = vmatpush1.msra.mxu0 0.0
      %4324 = vmatprep.subr.mxu0 0.0
      %4325 = vmatpush1.msra.mxu0 0.0
      %4326 = vmatprep.subr.mxu0 0.0
      %4327 = vmatpush1.msra.mxu0 0.0
      %4328 = vmatprep.subr.mxu0 0.0
      %4329 = vmatpush1.msra.mxu0 0.0
      %4330 = vmatprep.subr.mxu0 0.0
      %4331 = vmatpush1.msra.mxu0 %v4298
      %4332 = vmatprep.subr.mxu0 0.0
      %4333 = vmatpush2.msra.mxu0 0.0
      %4334 = vmatprep.subr.mxu0 0.0
      %4335 = vmatpush2.msra.mxu0 0.0
      %4336 = vmatprep.subr.mxu0 0.0
      %4337 = vmatpush2.msra.mxu0 0.0
      %4338 = vmatprep.subr.mxu0 0.0
      %4339 = vmatpush2.msra.mxu0 0.0
      %4340 = vmatprep.subr.mxu0 0.0
      %4341 = vmatpush2.msra.mxu0 0.0
      %4342 = vmatprep.subr.mxu0 0.0
      %4343 = vmatpush2.msra.mxu0 0.0
      %4344 = vmatprep.subr.mxu0 0.0
      %4345 = vmatpush2.msra.mxu0 0.0
      %4346 = vmatprep.subr.mxu0 0.0
      %4347 = vmatpush2.msra.mxu0 0.0
      %4348 = vmatprep.subr.mxu0 0.0
      %4349 = vmatpush2.msra.mxu0 0.0
      %4350 = vmatprep.subr.mxu0 0.0
      %4351 = vmatpush2.msra.mxu0 0.0
      %4352 = vmatprep.subr.mxu0 0.0
      %4353 = vmatpush2.msra.mxu0 0.0
      %4354 = vmatprep.subr.mxu0 0.0
      %4355 = vmatpush2.msra.mxu0 0.0
      %4356 = vmatprep.subr.mxu0 0.0
      %4357 = vmatpush2.msra.mxu0 0.0
      %4358 = vmatprep.subr.mxu0 0.0
      %4359 = vmatpush2.msra.mxu0 0.0
      %4360 = vmatprep.subr.mxu0 0.0
      %4361 = vmatpush2.msra.mxu0 0.0
      %4362 = vmatprep.subr.mxu0 0.0
      %4363 = vmatpush2.msra.mxu0 0.0
      %4364 = vmatprep.mubr.f32.mxu0 0.0
      %4365 = vmatmul.mubr.f32.gmra.mxu0 %v4202
      %v4366 = vpop.f32.mrf.mxu0
      %v4367 = vadd.f32 0.0, %v4366
      %v4368 = vpop.f32.mrf.mxu0
      %4369 = vmatprep.mubr.f32.mxu0 0.0
      %4370 = vmatmul.mubr.f32.gmra.mxu0 %v4205
      %v4371 = vpop.f32.mrf.mxu0
      %v4372 = vadd.f32 0.0, %v4371
      %v4373 = vpop.f32.mrf.mxu0
      %4374 = vmatprep.mubr.f32.mxu0 0.0
      %4375 = vmatmul.mubr.f32.gmra.mxu0 %v4208
      %v4376 = vpop.f32.mrf.mxu0
      %v4377 = vadd.f32 0.0, %v4376
      %v4378 = vpop.f32.mrf.mxu0
      %4379 = vmatprep.mubr.f32.mxu0 0.0
      %4380 = vmatmul.mubr.f32.gmra.mxu0 %v4211
      %v4381 = vpop.f32.mrf.mxu0
      %v4382 = vadd.f32 0.0, %v4381
      %v4383 = vpop.f32.mrf.mxu0
      %4384 = vmatprep.mubr.f32.mxu0 0.0
      %4385 = vmatmul.mubr.f32.gmra.mxu0 %v4214
      %v4386 = vpop.f32.mrf.mxu0
      %v4387 = vadd.f32 0.0, %v4386
      %v4388 = vpop.f32.mrf.mxu0
      %4389 = vmatprep.mubr.f32.mxu0 0.0
      %4390 = vmatmul.mubr.f32.gmra.mxu0 %v4217
      %v4391 = vpop.f32.mrf.mxu0
      %v4392 = vadd.f32 0.0, %v4391
      %v4393 = vpop.f32.mrf.mxu0
      %4394 = vmatprep.mubr.f32.mxu0 0.0
      %4395 = vmatmul.mubr.f32.gmra.mxu0 %v4220
      %v4396 = vpop.f32.mrf.mxu0
      %v4397 = vadd.f32 0.0, %v4396
      %v4398 = vpop.f32.mrf.mxu0
      %4399 = vmatprep.mubr.f32.mxu0 0.0
      %4400 = vmatmul.mubr.f32.gmra.mxu0 %v4223
      %v4401 = vpop.f32.mrf.mxu0
      %v4402 = vadd.f32 0.0, %v4401
      %v4403 = vpop.f32.mrf.mxu0
      %4404 = vmatprep.mubr.f32.mxu0 0.0
      %4405 = vmatmul.mubr.f32.gmra.mxu0 %v4226
      %v4406 = vpop.f32.mrf.mxu0
      %v4407 = vadd.f32 0.0, %v4406
      %v4408 = vpop.f32.mrf.mxu0
      %4409 = vmatprep.mubr.f32.mxu0 0.0
      %4410 = vmatmul.mubr.f32.gmra.mxu0 %v4229
      %v4411 = vpop.f32.mrf.mxu0
      %v4412 = vadd.f32 0.0, %v4411
      %v4413 = vpop.f32.mrf.mxu0
      %4414 = vmatprep.mubr.f32.mxu0 0.0
      %4415 = vmatmul.mubr.f32.gmra.mxu0 %v4232
      %v4416 = vpop.f32.mrf.mxu0
      %v4417 = vadd.f32 0.0, %v4416
      %v4418 = vpop.f32.mrf.mxu0
      %4419 = vmatprep.mubr.f32.mxu0 0.0
      %4420 = vmatmul.mubr.f32.gmra.mxu0 %v4235
      %v4421 = vpop.f32.mrf.mxu0
      %v4422 = vadd.f32 0.0, %v4421
      %v4423 = vpop.f32.mrf.mxu0
      %4424 = vmatprep.mubr.f32.mxu0 0.0
      %4425 = vmatmul.mubr.f32.gmra.mxu0 %v4238
      %v4426 = vpop.f32.mrf.mxu0
      %v4427 = vadd.f32 0.0, %v4426
      %v4428 = vpop.f32.mrf.mxu0
      %4429 = vmatprep.mubr.f32.mxu0 0.0
      %4430 = vmatmul.mubr.f32.gmra.mxu0 %v4241
      %v4431 = vpop.f32.mrf.mxu0
      %v4432 = vadd.f32 0.0, %v4431
      %v4433 = vpop.f32.mrf.mxu0
      %4434 = vmatprep.mubr.f32.mxu0 0.0
      %4435 = vmatmul.mubr.f32.gmra.mxu0 %v4244
      %v4436 = vpop.f32.mrf.mxu0
      %v4437 = vadd.f32 0.0, %v4436
      %v4438 = vpop.f32.mrf.mxu0
      %4439 = vmatprep.mubr.f32.mxu0 0.0
      %4440 = vmatmul.mubr.f32.gmra.mxu0 %v4247
      %v4441 = vpop.f32.mrf.mxu0
      %v4442 = vadd.f32 0.0, %v4441
      %v4443 = vpop.f32.mrf.mxu0
      %4444 = vmatprep.mubr.f32.mxu0 0.0
      %4445 = vmatmul.mubr.f32.gmra.mxu0 %v4250
      %v4446 = vpop.f32.mrf.mxu0
      %v4447 = vadd.f32 0.0, %v4446
      %v4448 = vpop.f32.mrf.mxu0
      %4449 = vmatprep.mubr.f32.mxu0 0.0
      %4450 = vmatmul.mubr.f32.gmra.mxu0 %v4253
      %v4451 = vpop.f32.mrf.mxu0
      %v4452 = vadd.f32 0.0, %v4451
      %v4453 = vpop.f32.mrf.mxu0
      %4454 = vmatprep.mubr.f32.mxu0 0.0
      %4455 = vmatmul.mubr.f32.gmra.mxu0 %v4256
      %v4456 = vpop.f32.mrf.mxu0
      %v4457 = vadd.f32 0.0, %v4456
      %v4458 = vpop.f32.mrf.mxu0
      %4459 = vmatprep.mubr.f32.mxu0 0.0
      %4460 = vmatmul.mubr.f32.gmra.mxu0 %v4259
      %v4461 = vpop.f32.mrf.mxu0
      %v4462 = vadd.f32 0.0, %v4461
      %v4463 = vpop.f32.mrf.mxu0
      %4464 = vmatprep.mubr.f32.mxu0 0.0
      %4465 = vmatmul.mubr.f32.gmra.mxu0 %v4262
      %v4466 = vpop.f32.mrf.mxu0
      %v4467 = vadd.f32 0.0, %v4466
      %v4468 = vpop.f32.mrf.mxu0
      %4469 = vmatprep.mubr.f32.mxu0 0.0
      %4470 = vmatmul.mubr.f32.gmra.mxu0 %v4265
      %v4471 = vpop.f32.mrf.mxu0
      %v4472 = vadd.f32 0.0, %v4471
      %v4473 = vpop.f32.mrf.mxu0
      %4474 = vmatprep.mubr.f32.mxu0 0.0
      %4475 = vmatmul.mubr.f32.gmra.mxu0 %v4268
      %v4476 = vpop.f32.mrf.mxu0
      %v4477 = vadd.f32 0.0, %v4476
      %v4478 = vpop.f32.mrf.mxu0
      %4479 = vmatprep.mubr.f32.mxu0 0.0
      %4480 = vmatmul.mubr.f32.gmra.mxu0 %v4271
      %v4481 = vpop.f32.mrf.mxu0
      %v4482 = vadd.f32 0.0, %v4481
      %v4483 = vpop.f32.mrf.mxu0
      %4484 = vmatprep.mubr.f32.mxu0 0.0
      %4485 = vmatmul.mubr.f32.gmra.mxu0 %v4274
      %v4486 = vpop.f32.mrf.mxu0
      %v4487 = vadd.f32 0.0, %v4486
      %v4488 = vpop.f32.mrf.mxu0
      %4489 = vmatprep.mubr.f32.mxu0 0.0
      %4490 = vmatmul.mubr.f32.gmra.mxu0 %v4277
      %v4491 = vpop.f32.mrf.mxu0
      %v4492 = vadd.f32 0.0, %v4491
      %v4493 = vpop.f32.mrf.mxu0
      %4494 = vmatprep.mubr.f32.mxu0 0.0
      %4495 = vmatmul.mubr.f32.gmra.mxu0 %v4280
      %v4496 = vpop.f32.mrf.mxu0
      %v4497 = vadd.f32 0.0, %v4496
      %v4498 = vpop.f32.mrf.mxu0
      %4499 = vmatprep.mubr.f32.mxu0 0.0
      %4500 = vmatmul.mubr.f32.gmra.mxu0 %v4283
      %v4501 = vpop.f32.mrf.mxu0
      %v4502 = vadd.f32 0.0, %v4501
      %v4503 = vpop.f32.mrf.mxu0
      %4504 = vmatprep.mubr.f32.mxu0 0.0
      %4505 = vmatmul.mubr.f32.gmra.mxu0 %v4286
      %v4506 = vpop.f32.mrf.mxu0
      %v4507 = vadd.f32 0.0, %v4506
      %v4508 = vpop.f32.mrf.mxu0
      %4509 = vmatprep.mubr.f32.mxu0 0.0
      %4510 = vmatmul.mubr.f32.gmra.mxu0 %v4289
      %v4511 = vpop.f32.mrf.mxu0
      %v4512 = vadd.f32 0.0, %v4511
      %v4513 = vpop.f32.mrf.mxu0
      %4514 = vmatprep.mubr.f32.mxu0 0.0
      %4515 = vmatmul.mubr.f32.gmra.mxu0 %v4292
      %v4516 = vpop.f32.mrf.mxu0
      %v4517 = vadd.f32 0.0, %v4516
      %v4518 = vpop.f32.mrf.mxu0
      %4519 = vmatprep.mubr.f32.mxu0 0.0
      %4520 = vmatmul.mubr.f32.gmra.mxu0 %v4295
      %v4521 = vpop.f32.mrf.mxu0
      %v4522 = vadd.f32 0.0, %v4521
      %v4523 = vpop.f32.mrf.mxu0
      %4524 = vdwg.mxu0
      %v4525 = vadd.f32 %v4009, %v4367
      %v4526 = vadd.f32 %v4014, %v4372
      %v4527 = vadd.f32 %v4019, %v4377
      %v4528 = vadd.f32 %v4024, %v4382
      %v4529 = vadd.f32 %v4029, %v4387
      %v4530 = vadd.f32 %v4034, %v4392
      %v4531 = vadd.f32 %v4039, %v4397
      %v4532 = vadd.f32 %v4044, %v4402
      %v4533 = vadd.f32 %v4049, %v4407
      %v4534 = vadd.f32 %v4054, %v4412
      %v4535 = vadd.f32 %v4059, %v4417
      %v4536 = vadd.f32 %v4064, %v4422
      %v4537 = vadd.f32 %v4069, %v4427
      %v4538 = vadd.f32 %v4074, %v4432
      %v4539 = vadd.f32 %v4079, %v4437
      %v4540 = vadd.f32 %v4084, %v4442
      %v4541 = vadd.f32 %v4089, %v4447
      %v4542 = vadd.f32 %v4094, %v4452
      %v4543 = vadd.f32 %v4099, %v4457
      %v4544 = vadd.f32 %v4104, %v4462
      %v4545 = vadd.f32 %v4109, %v4467
      %v4546 = vadd.f32 %v4114, %v4472
      %v4547 = vadd.f32 %v4119, %v4477
      %v4548 = vadd.f32 %v4124, %v4482
      %v4549 = vadd.f32 %v4129, %v4487
      %v4550 = vadd.f32 %v4134, %v4492
      %v4551 = vadd.f32 %v4139, %v4497
      %v4552 = vadd.f32 %v4144, %v4502
      %v4553 = vadd.f32 %v4149, %v4507
      %v4554 = vadd.f32 %v4154, %v4512
      %v4555 = vadd.f32 %v4159, %v4517
      %v4556 = vadd.f32 %v4164, %v4522
      %v4557 = vld [vmem:[%s1413] sm:$0xf]
      %v4558 = vld [vmem:[%s1416] sm:$0xf]
      %v4559 = vadd.f32 %v4557, %v4558
      %v4560 = vld [vmem:[%s4168 + $0x1] sm:$0xff]
      %v4561 = vld [vmem:[%s4168 + $0x9] sm:$0xff]
      %v4562 = vld [vmem:[%s4168 + $0x19] sm:$0xff]
      %v4563 = vld [vmem:[%s4168 + $0x21] sm:$0xff]
      %v4564 = vld [vmem:[%s4168 + $0x31] sm:$0xff]
      %v4565 = vld [vmem:[%s4168 + $0x39] sm:$0xff]
      %v4566 = vld [vmem:[%s4168 + $0x49] sm:$0xff]
      %v4567 = vld [vmem:[%s4168 + $0x51] sm:$0xff]
      %v4568 = vld [vmem:[%s4168 + $0x61] sm:$0xff]
      %v4569 = vld [vmem:[%s4168 + $0x69] sm:$0xff]
      %v4570 = vld [vmem:[%s4168 + $0x79] sm:$0xff]
      %v4571 = vld [vmem:[%s4168 + $0x81] sm:$0xff]
      %v4572 = vld [vmem:[%s4168 + $0x91] sm:$0xff]
      %v4573 = vld [vmem:[%s4168 + $0x99] sm:$0xff]
      %v4574 = vld [vmem:[%s4168 + $0xa9] sm:$0xff]
      %v4575 = vld [vmem:[%s4168 + $0xb1] sm:$0xff]
      %v4576 = vld [vmem:[%s4168 + $0xc1] sm:$0xff]
      %v4577 = vld [vmem:[%s4168 + $0xc9] sm:$0xff]
      %v4578 = vld [vmem:[%s4168 + $0xd9] sm:$0xff]
      %v4579 = vld [vmem:[%s4168 + $0xe1] sm:$0xff]
      %v4580 = vld [vmem:[%s4168 + $0xf1] sm:$0xff]
      %v4581 = vld [vmem:[%s4168 + $0xf9] sm:$0xff]
      %v4582 = vld [vmem:[%s4168 + $0x109] sm:$0xff]
      %v4583 = vld [vmem:[%s4168 + $0x111] sm:$0xff]
      %v4584 = vld [vmem:[%s4168 + $0x121] sm:$0xff]
      %v4585 = vld [vmem:[%s4168 + $0x129] sm:$0xff]
      %v4586 = vld [vmem:[%s4168 + $0x139] sm:$0xff]
      %v4587 = vld [vmem:[%s4168 + $0x141] sm:$0xff]
      %v4588 = vld [vmem:[%s4168 + $0x151] sm:$0xff]
      %v4589 = vld [vmem:[%s4168 + $0x159] sm:$0xff]
      %v4590 = vld [vmem:[%s4168 + $0x169] sm:$0xff]
      %v4591 = vld [vmem:[%s4168 + $0x171] sm:$0xff]
      %v4593 = vsel %vm174, %v4560, 0
      %v4596 = vsel %vm174, %v4561, 0
      %v4599 = vsel %vm174, %v4562, 0
      %v4602 = vsel %vm174, %v4563, 0
      %v4605 = vsel %vm174, %v4564, 0
      %v4608 = vsel %vm174, %v4565, 0
      %v4611 = vsel %vm174, %v4566, 0
      %v4614 = vsel %vm174, %v4567, 0
      %v4617 = vsel %vm174, %v4568, 0
      %v4620 = vsel %vm174, %v4569, 0
      %v4623 = vsel %vm174, %v4570, 0
      %v4626 = vsel %vm174, %v4571, 0
      %v4629 = vsel %vm174, %v4572, 0
      %v4632 = vsel %vm174, %v4573, 0
      %v4635 = vsel %vm174, %v4574, 0
      %v4638 = vsel %vm174, %v4575, 0
      %v4641 = vsel %vm174, %v4576, 0
      %v4644 = vsel %vm174, %v4577, 0
      %v4647 = vsel %vm174, %v4578, 0
      %v4650 = vsel %vm174, %v4579, 0
      %v4653 = vsel %vm174, %v4580, 0
      %v4656 = vsel %vm174, %v4581, 0
      %v4659 = vsel %vm174, %v4582, 0
      %v4662 = vsel %vm174, %v4583, 0
      %v4665 = vsel %vm174, %v4584, 0
      %v4668 = vsel %vm174, %v4585, 0
      %v4671 = vsel %vm174, %v4586, 0
      %v4674 = vsel %vm174, %v4587, 0
      %v4677 = vsel %vm174, %v4588, 0
      %v4680 = vsel %vm174, %v4589, 0
      %v4683 = vsel %vm174, %v4590, 0
      %v4686 = vsel %vm174, %v4591, 0
      %v4689 = vsel %vm462, %v4559, 0
      %4691 = vmatprep.subr.mxu0 0.0
      %4692 = vmatpush1.msra.mxu0 0.0
      %4693 = vmatprep.subr.mxu0 0.0
      %4694 = vmatpush1.msra.mxu0 0.0
      %4695 = vmatprep.subr.mxu0 0.0
      %4696 = vmatpush1.msra.mxu0 0.0
      %4697 = vmatprep.subr.mxu0 0.0
      %4698 = vmatpush1.msra.mxu0 0.0
      %4699 = vmatprep.subr.mxu0 0.0
      %4700 = vmatpush1.msra.mxu0 0.0
      %4701 = vmatprep.subr.mxu0 0.0
      %4702 = vmatpush1.msra.mxu0 0.0
      %4703 = vmatprep.subr.mxu0 0.0
      %4704 = vmatpush1.msra.mxu0 0.0
      %4705 = vmatprep.subr.mxu0 0.0
      %4706 = vmatpush1.msra.mxu0 0.0
      %4707 = vmatprep.subr.mxu0 0.0
      %4708 = vmatpush1.msra.mxu0 0.0
      %4709 = vmatprep.subr.mxu0 0.0
      %4710 = vmatpush1.msra.mxu0 0.0
      %4711 = vmatprep.subr.mxu0 0.0
      %4712 = vmatpush1.msra.mxu0 0.0
      %4713 = vmatprep.subr.mxu0 0.0
      %4714 = vmatpush1.msra.mxu0 0.0
      %4715 = vmatprep.subr.mxu0 0.0
      %4716 = vmatpush1.msra.mxu0 0.0
      %4717 = vmatprep.subr.mxu0 0.0
      %4718 = vmatpush1.msra.mxu0 0.0
      %4719 = vmatprep.subr.mxu0 0.0
      %4720 = vmatpush1.msra.mxu0 0.0
      %4721 = vmatprep.subr.mxu0 0.0
      %4722 = vmatpush1.msra.mxu0 %v4689
      %4723 = vmatprep.subr.mxu0 0.0
      %4724 = vmatpush2.msra.mxu0 0.0
      %4725 = vmatprep.subr.mxu0 0.0
      %4726 = vmatpush2.msra.mxu0 0.0
      %4727 = vmatprep.subr.mxu0 0.0
      %4728 = vmatpush2.msra.mxu0 0.0
      %4729 = vmatprep.subr.mxu0 0.0
      %4730 = vmatpush2.msra.mxu0 0.0
      %4731 = vmatprep.subr.mxu0 0.0
      %4732 = vmatpush2.msra.mxu0 0.0
      %4733 = vmatprep.subr.mxu0 0.0
      %4734 = vmatpush2.msra.mxu0 0.0
      %4735 = vmatprep.subr.mxu0 0.0
      %4736 = vmatpush2.msra.mxu0 0.0
      %4737 = vmatprep.subr.mxu0 0.0
      %4738 = vmatpush2.msra.mxu0 0.0
      %4739 = vmatprep.subr.mxu0 0.0
      %4740 = vmatpush2.msra.mxu0 0.0
      %4741 = vmatprep.subr.mxu0 0.0
      %4742 = vmatpush2.msra.mxu0 0.0
      %4743 = vmatprep.subr.mxu0 0.0
      %4744 = vmatpush2.msra.mxu0 0.0
      %4745 = vmatprep.subr.mxu0 0.0
      %4746 = vmatpush2.msra.mxu0 0.0
      %4747 = vmatprep.subr.mxu0 0.0
      %4748 = vmatpush2.msra.mxu0 0.0
      %4749 = vmatprep.subr.mxu0 0.0
      %4750 = vmatpush2.msra.mxu0 0.0
      %4751 = vmatprep.subr.mxu0 0.0
      %4752 = vmatpush2.msra.mxu0 0.0
      %4753 = vmatprep.subr.mxu0 0.0
      %4754 = vmatpush2.msra.mxu0 0.0
      %4755 = vmatprep.mubr.f32.mxu0 0.0
      %4756 = vmatmul.mubr.f32.gmra.mxu0 %v4593
      %v4757 = vpop.f32.mrf.mxu0
      %v4758 = vadd.f32 0.0, %v4757
      %v4759 = vpop.f32.mrf.mxu0
      %4760 = vmatprep.mubr.f32.mxu0 0.0
      %4761 = vmatmul.mubr.f32.gmra.mxu0 %v4596
      %v4762 = vpop.f32.mrf.mxu0
      %v4763 = vadd.f32 0.0, %v4762
      %v4764 = vpop.f32.mrf.mxu0
      %4765 = vmatprep.mubr.f32.mxu0 0.0
      %4766 = vmatmul.mubr.f32.gmra.mxu0 %v4599
      %v4767 = vpop.f32.mrf.mxu0
      %v4768 = vadd.f32 0.0, %v4767
      %v4769 = vpop.f32.mrf.mxu0
      %4770 = vmatprep.mubr.f32.mxu0 0.0
      %4771 = vmatmul.mubr.f32.gmra.mxu0 %v4602
      %v4772 = vpop.f32.mrf.mxu0
      %v4773 = vadd.f32 0.0, %v4772
      %v4774 = vpop.f32.mrf.mxu0
      %4775 = vmatprep.mubr.f32.mxu0 0.0
      %4776 = vmatmul.mubr.f32.gmra.mxu0 %v4605
      %v4777 = vpop.f32.mrf.mxu0
      %v4778 = vadd.f32 0.0, %v4777
      %v4779 = vpop.f32.mrf.mxu0
      %4780 = vmatprep.mubr.f32.mxu0 0.0
      %4781 = vmatmul.mubr.f32.gmra.mxu0 %v4608
      %v4782 = vpop.f32.mrf.mxu0
      %v4783 = vadd.f32 0.0, %v4782
      %v4784 = vpop.f32.mrf.mxu0
      %4785 = vmatprep.mubr.f32.mxu0 0.0
      %4786 = vmatmul.mubr.f32.gmra.mxu0 %v4611
      %v4787 = vpop.f32.mrf.mxu0
      %v4788 = vadd.f32 0.0, %v4787
      %v4789 = vpop.f32.mrf.mxu0
      %4790 = vmatprep.mubr.f32.mxu0 0.0
      %4791 = vmatmul.mubr.f32.gmra.mxu0 %v4614
      %v4792 = vpop.f32.mrf.mxu0
      %v4793 = vadd.f32 0.0, %v4792
      %v4794 = vpop.f32.mrf.mxu0
      %4795 = vmatprep.mubr.f32.mxu0 0.0
      %4796 = vmatmul.mubr.f32.gmra.mxu0 %v4617
      %v4797 = vpop.f32.mrf.mxu0
      %v4798 = vadd.f32 0.0, %v4797
      %v4799 = vpop.f32.mrf.mxu0
      %4800 = vmatprep.mubr.f32.mxu0 0.0
      %4801 = vmatmul.mubr.f32.gmra.mxu0 %v4620
      %v4802 = vpop.f32.mrf.mxu0
      %v4803 = vadd.f32 0.0, %v4802
      %v4804 = vpop.f32.mrf.mxu0
      %4805 = vmatprep.mubr.f32.mxu0 0.0
      %4806 = vmatmul.mubr.f32.gmra.mxu0 %v4623
      %v4807 = vpop.f32.mrf.mxu0
      %v4808 = vadd.f32 0.0, %v4807
      %v4809 = vpop.f32.mrf.mxu0
      %4810 = vmatprep.mubr.f32.mxu0 0.0
      %4811 = vmatmul.mubr.f32.gmra.mxu0 %v4626
      %v4812 = vpop.f32.mrf.mxu0
      %v4813 = vadd.f32 0.0, %v4812
      %v4814 = vpop.f32.mrf.mxu0
      %4815 = vmatprep.mubr.f32.mxu0 0.0
      %4816 = vmatmul.mubr.f32.gmra.mxu0 %v4629
      %v4817 = vpop.f32.mrf.mxu0
      %v4818 = vadd.f32 0.0, %v4817
      %v4819 = vpop.f32.mrf.mxu0
      %4820 = vmatprep.mubr.f32.mxu0 0.0
      %4821 = vmatmul.mubr.f32.gmra.mxu0 %v4632
      %v4822 = vpop.f32.mrf.mxu0
      %v4823 = vadd.f32 0.0, %v4822
      %v4824 = vpop.f32.mrf.mxu0
      %4825 = vmatprep.mubr.f32.mxu0 0.0
      %4826 = vmatmul.mubr.f32.gmra.mxu0 %v4635
      %v4827 = vpop.f32.mrf.mxu0
      %v4828 = vadd.f32 0.0, %v4827
      %v4829 = vpop.f32.mrf.mxu0
      %4830 = vmatprep.mubr.f32.mxu0 0.0
      %4831 = vmatmul.mubr.f32.gmra.mxu0 %v4638
      %v4832 = vpop.f32.mrf.mxu0
      %v4833 = vadd.f32 0.0, %v4832
      %v4834 = vpop.f32.mrf.mxu0
      %4835 = vmatprep.mubr.f32.mxu0 0.0
      %4836 = vmatmul.mubr.f32.gmra.mxu0 %v4641
      %v4837 = vpop.f32.mrf.mxu0
      %v4838 = vadd.f32 0.0, %v4837
      %v4839 = vpop.f32.mrf.mxu0
      %4840 = vmatprep.mubr.f32.mxu0 0.0
      %4841 = vmatmul.mubr.f32.gmra.mxu0 %v4644
      %v4842 = vpop.f32.mrf.mxu0
      %v4843 = vadd.f32 0.0, %v4842
      %v4844 = vpop.f32.mrf.mxu0
      %4845 = vmatprep.mubr.f32.mxu0 0.0
      %4846 = vmatmul.mubr.f32.gmra.mxu0 %v4647
      %v4847 = vpop.f32.mrf.mxu0
      %v4848 = vadd.f32 0.0, %v4847
      %v4849 = vpop.f32.mrf.mxu0
      %4850 = vmatprep.mubr.f32.mxu0 0.0
      %4851 = vmatmul.mubr.f32.gmra.mxu0 %v4650
      %v4852 = vpop.f32.mrf.mxu0
      %v4853 = vadd.f32 0.0, %v4852
      %v4854 = vpop.f32.mrf.mxu0
      %4855 = vmatprep.mubr.f32.mxu0 0.0
      %4856 = vmatmul.mubr.f32.gmra.mxu0 %v4653
      %v4857 = vpop.f32.mrf.mxu0
      %v4858 = vadd.f32 0.0, %v4857
      %v4859 = vpop.f32.mrf.mxu0
      %4860 = vmatprep.mubr.f32.mxu0 0.0
      %4861 = vmatmul.mubr.f32.gmra.mxu0 %v4656
      %v4862 = vpop.f32.mrf.mxu0
      %v4863 = vadd.f32 0.0, %v4862
      %v4864 = vpop.f32.mrf.mxu0
      %4865 = vmatprep.mubr.f32.mxu0 0.0
      %4866 = vmatmul.mubr.f32.gmra.mxu0 %v4659
      %v4867 = vpop.f32.mrf.mxu0
      %v4868 = vadd.f32 0.0, %v4867
      %v4869 = vpop.f32.mrf.mxu0
      %4870 = vmatprep.mubr.f32.mxu0 0.0
      %4871 = vmatmul.mubr.f32.gmra.mxu0 %v4662
      %v4872 = vpop.f32.mrf.mxu0
      %v4873 = vadd.f32 0.0, %v4872
      %v4874 = vpop.f32.mrf.mxu0
      %4875 = vmatprep.mubr.f32.mxu0 0.0
      %4876 = vmatmul.mubr.f32.gmra.mxu0 %v4665
      %v4877 = vpop.f32.mrf.mxu0
      %v4878 = vadd.f32 0.0, %v4877
      %v4879 = vpop.f32.mrf.mxu0
      %4880 = vmatprep.mubr.f32.mxu0 0.0
      %4881 = vmatmul.mubr.f32.gmra.mxu0 %v4668
      %v4882 = vpop.f32.mrf.mxu0
      %v4883 = vadd.f32 0.0, %v4882
      %v4884 = vpop.f32.mrf.mxu0
      %4885 = vmatprep.mubr.f32.mxu0 0.0
      %4886 = vmatmul.mubr.f32.gmra.mxu0 %v4671
      %v4887 = vpop.f32.mrf.mxu0
      %v4888 = vadd.f32 0.0, %v4887
      %v4889 = vpop.f32.mrf.mxu0
      %4890 = vmatprep.mubr.f32.mxu0 0.0
      %4891 = vmatmul.mubr.f32.gmra.mxu0 %v4674
      %v4892 = vpop.f32.mrf.mxu0
      %v4893 = vadd.f32 0.0, %v4892
      %v4894 = vpop.f32.mrf.mxu0
      %4895 = vmatprep.mubr.f32.mxu0 0.0
      %4896 = vmatmul.mubr.f32.gmra.mxu0 %v4677
      %v4897 = vpop.f32.mrf.mxu0
      %v4898 = vadd.f32 0.0, %v4897
      %v4899 = vpop.f32.mrf.mxu0
      %4900 = vmatprep.mubr.f32.mxu0 0.0
      %4901 = vmatmul.mubr.f32.gmra.mxu0 %v4680
      %v4902 = vpop.f32.mrf.mxu0
      %v4903 = vadd.f32 0.0, %v4902
      %v4904 = vpop.f32.mrf.mxu0
      %4905 = vmatprep.mubr.f32.mxu0 0.0
      %4906 = vmatmul.mubr.f32.gmra.mxu0 %v4683
      %v4907 = vpop.f32.mrf.mxu0
      %v4908 = vadd.f32 0.0, %v4907
      %v4909 = vpop.f32.mrf.mxu0
      %4910 = vmatprep.mubr.f32.mxu0 0.0
      %4911 = vmatmul.mubr.f32.gmra.mxu0 %v4686
      %v4912 = vpop.f32.mrf.mxu0
      %v4913 = vadd.f32 0.0, %v4912
      %v4914 = vpop.f32.mrf.mxu0
      %4915 = vdwg.mxu0
      %v4916 = vadd.f32 %v4525, %v4758
      %v4917 = vadd.f32 %v4526, %v4763
      %v4918 = vadd.f32 %v4527, %v4768
      %v4919 = vadd.f32 %v4528, %v4773
      %v4920 = vadd.f32 %v4529, %v4778
      %v4921 = vadd.f32 %v4530, %v4783
      %v4922 = vadd.f32 %v4531, %v4788
      %v4923 = vadd.f32 %v4532, %v4793
      %v4924 = vadd.f32 %v4533, %v4798
      %v4925 = vadd.f32 %v4534, %v4803
      %v4926 = vadd.f32 %v4535, %v4808
      %v4927 = vadd.f32 %v4536, %v4813
      %v4928 = vadd.f32 %v4537, %v4818
      %v4929 = vadd.f32 %v4538, %v4823
      %v4930 = vadd.f32 %v4539, %v4828
      %v4931 = vadd.f32 %v4540, %v4833
      %v4932 = vadd.f32 %v4541, %v4838
      %v4933 = vadd.f32 %v4542, %v4843
      %v4934 = vadd.f32 %v4543, %v4848
      %v4935 = vadd.f32 %v4544, %v4853
      %v4936 = vadd.f32 %v4545, %v4858
      %v4937 = vadd.f32 %v4546, %v4863
      %v4938 = vadd.f32 %v4547, %v4868
      %v4939 = vadd.f32 %v4548, %v4873
      %v4940 = vadd.f32 %v4549, %v4878
      %v4941 = vadd.f32 %v4550, %v4883
      %v4942 = vadd.f32 %v4551, %v4888
      %v4943 = vadd.f32 %v4552, %v4893
      %v4944 = vadd.f32 %v4553, %v4898
      %v4945 = vadd.f32 %v4554, %v4903
      %v4946 = vadd.f32 %v4555, %v4908
      %v4947 = vadd.f32 %v4556, %v4913
      %v4948 = vadd.f32 %v4916, %v1811
      %v4949 = vadd.f32 %v4917, %v1811
      %v4950 = vadd.f32 %v4918, %v1811
      %v4951 = vadd.f32 %v4919, %v1811
      %v4952 = vadd.f32 %v4920, %v1811
      %v4953 = vadd.f32 %v4921, %v1811
      %v4954 = vadd.f32 %v4922, %v1811
      %v4955 = vadd.f32 %v4923, %v1811
      %v4956 = vadd.f32 %v4924, %v1811
      %v4957 = vadd.f32 %v4925, %v1811
      %v4958 = vadd.f32 %v4926, %v1811
      %v4959 = vadd.f32 %v4927, %v1811
      %v4960 = vadd.f32 %v4928, %v1811
      %v4961 = vadd.f32 %v4929, %v1811
      %v4962 = vadd.f32 %v4930, %v1811
      %v4963 = vadd.f32 %v4931, %v1811
      %v4964 = vadd.f32 %v4932, %v1811
      %v4965 = vadd.f32 %v4933, %v1811
      %v4966 = vadd.f32 %v4934, %v1811
      %v4967 = vadd.f32 %v4935, %v1811
      %v4968 = vadd.f32 %v4936, %v1811
      %v4969 = vadd.f32 %v4937, %v1811
      %v4970 = vadd.f32 %v4938, %v1811
      %v4971 = vadd.f32 %v4939, %v1811
      %v4972 = vadd.f32 %v4940, %v1811
      %v4973 = vadd.f32 %v4941, %v1811
      %v4974 = vadd.f32 %v4942, %v1811
      %v4975 = vadd.f32 %v4943, %v1811
      %v4976 = vadd.f32 %v4944, %v1811
      %v4977 = vadd.f32 %v4945, %v1811
      %v4978 = vadd.f32 %v4946, %v1811
      %v4979 = vadd.f32 %v4947, %v1811
      %s4980 = scalar_lea.vmem %s172, 512
      %4981 = vst.msk [vmem:[%s4980] sm:$0xff] %vm1845, %v4948
      %4982 = vst.msk [vmem:[%s4980 + $0x8] sm:$0xff] %vm1845, %v4949
      %4983 = vst.msk [vmem:[%s4980 + $0x10] sm:$0xff] %vm1845, %v4950
      %4984 = vst.msk [vmem:[%s4980 + $0x18] sm:$0xff] %vm1845, %v4951
      %4985 = vst.msk [vmem:[%s4980 + $0x20] sm:$0xff] %vm1845, %v4952
      %4986 = vst.msk [vmem:[%s4980 + $0x28] sm:$0xff] %vm1845, %v4953
      %4987 = vst.msk [vmem:[%s4980 + $0x30] sm:$0xff] %vm1845, %v4954
      %4988 = vst.msk [vmem:[%s4980 + $0x38] sm:$0xff] %vm1845, %v4955
      %4989 = vst.msk [vmem:[%s4980 + $0x40] sm:$0xff] %vm1845, %v4956
      %4990 = vst.msk [vmem:[%s4980 + $0x48] sm:$0xff] %vm1845, %v4957
      %4991 = vst.msk [vmem:[%s4980 + $0x50] sm:$0xff] %vm1845, %v4958
      %4992 = vst.msk [vmem:[%s4980 + $0x58] sm:$0xff] %vm1845, %v4959
      %4993 = vst.msk [vmem:[%s4980 + $0x60] sm:$0xff] %vm1845, %v4960
      %4994 = vst.msk [vmem:[%s4980 + $0x68] sm:$0xff] %vm1845, %v4961
      %4995 = vst.msk [vmem:[%s4980 + $0x70] sm:$0xff] %vm1845, %v4962
      %4996 = vst.msk [vmem:[%s4980 + $0x78] sm:$0xff] %vm1845, %v4963
      %4997 = vst.msk [vmem:[%s4980 + $0x80] sm:$0xff] %vm1845, %v4964
      %4998 = vst.msk [vmem:[%s4980 + $0x88] sm:$0xff] %vm1845, %v4965
      %4999 = vst.msk [vmem:[%s4980 + $0x90] sm:$0xff] %vm1845, %v4966
      %5000 = vst.msk [vmem:[%s4980 + $0x98] sm:$0xff] %vm1845, %v4967
      %5001 = vst.msk [vmem:[%s4980 + $0xa0] sm:$0xff] %vm1845, %v4968
      %5002 = vst.msk [vmem:[%s4980 + $0xa8] sm:$0xff] %vm1845, %v4969
      %5003 = vst.msk [vmem:[%s4980 + $0xb0] sm:$0xff] %vm1845, %v4970
      %5004 = vst.msk [vmem:[%s4980 + $0xb8] sm:$0xff] %vm1845, %v4971
      %5005 = vst.msk [vmem:[%s4980 + $0xc0] sm:$0xff] %vm1845, %v4972
      %5006 = vst.msk [vmem:[%s4980 + $0xc8] sm:$0xff] %vm1845, %v4973
      %5007 = vst.msk [vmem:[%s4980 + $0xd0] sm:$0xff] %vm1845, %v4974
      %5008 = vst.msk [vmem:[%s4980 + $0xd8] sm:$0xff] %vm1845, %v4975
      %5009 = vst.msk [vmem:[%s4980 + $0xe0] sm:$0xff] %vm1845, %v4976
      %5010 = vst.msk [vmem:[%s4980 + $0xe8] sm:$0xff] %vm1845, %v4977
      %5011 = vst.msk [vmem:[%s4980 + $0xf0] sm:$0xff] %vm1845, %v4978
      %5012 = vst.msk [vmem:[%s4980 + $0xf8] sm:$0xff] %vm1845, %v4979
      %v5013 = vld [vmem:[%s1] sm:$0xf]
      %v5014 = vld [vmem:[%s329] sm:$0xf]
      %v5015 = vadd.f32 %v5013, %v5014
      %v5016 = vld [vmem:[%s1015] sm:$0xf]
      %v5017 = vadd.f32 %v5015, %v5016
      %v5018 = vld [vmem:[%s1408] sm:$0xf]
      %v5019 = vadd.f32 %v5017, %v5018
      %v5020 = vld [vmem:[%s262 + $0x1] sm:$0xff]
      %v5021 = vld [vmem:[%s262 + $0x9] sm:$0xff]
      %v5022 = vld [vmem:[%s262 + $0x19] sm:$0xff]
      %v5023 = vld [vmem:[%s262 + $0x21] sm:$0xff]
      %v5024 = vld [vmem:[%s262 + $0x31] sm:$0xff]
      %v5025 = vld [vmem:[%s262 + $0x39] sm:$0xff]
      %v5026 = vld [vmem:[%s262 + $0x49] sm:$0xff]
      %v5027 = vld [vmem:[%s262 + $0x51] sm:$0xff]
      %v5028 = vld [vmem:[%s262 + $0x61] sm:$0xff]
      %v5029 = vld [vmem:[%s262 + $0x69] sm:$0xff]
      %v5030 = vld [vmem:[%s262 + $0x79] sm:$0xff]
      %v5031 = vld [vmem:[%s262 + $0x81] sm:$0xff]
      %v5032 = vld [vmem:[%s262 + $0x91] sm:$0xff]
      %v5033 = vld [vmem:[%s262 + $0x99] sm:$0xff]
      %v5034 = vld [vmem:[%s262 + $0xa9] sm:$0xff]
      %v5035 = vld [vmem:[%s262 + $0xb1] sm:$0xff]
      %v5036 = vld [vmem:[%s262 + $0xc1] sm:$0xff]
      %v5037 = vld [vmem:[%s262 + $0xc9] sm:$0xff]
      %v5038 = vld [vmem:[%s262 + $0xd9] sm:$0xff]
      %v5039 = vld [vmem:[%s262 + $0xe1] sm:$0xff]
      %v5040 = vld [vmem:[%s262 + $0xf1] sm:$0xff]
      %v5041 = vld [vmem:[%s262 + $0xf9] sm:$0xff]
      %v5042 = vld [vmem:[%s262 + $0x109] sm:$0xff]
      %v5043 = vld [vmem:[%s262 + $0x111] sm:$0xff]
      %v5044 = vld [vmem:[%s262 + $0x121] sm:$0xff]
      %v5045 = vld [vmem:[%s262 + $0x129] sm:$0xff]
      %v5046 = vld [vmem:[%s262 + $0x139] sm:$0xff]
      %v5047 = vld [vmem:[%s262 + $0x141] sm:$0xff]
      %v5048 = vld [vmem:[%s262 + $0x151] sm:$0xff]
      %v5049 = vld [vmem:[%s262 + $0x159] sm:$0xff]
      %v5050 = vld [vmem:[%s262 + $0x169] sm:$0xff]
      %v5051 = vld [vmem:[%s262 + $0x171] sm:$0xff]
      %v5052 = vld [vmem:[%s331] sm:$0xf]
      %v5053 = vld [vmem:[%s1410] sm:$0xf]
      %v5054 = vadd.f32 %v5052, %v5053
      %v5055 = vld [vmem:[%s262 + $0x2] sm:$0xff]
      %v5056 = vld [vmem:[%s262 + $0xa] sm:$0xff]
      %v5057 = vld [vmem:[%s262 + $0x1a] sm:$0xff]
      %v5058 = vld [vmem:[%s262 + $0x22] sm:$0xff]
      %v5059 = vld [vmem:[%s262 + $0x32] sm:$0xff]
      %v5060 = vld [vmem:[%s262 + $0x3a] sm:$0xff]
      %v5061 = vld [vmem:[%s262 + $0x4a] sm:$0xff]
      %v5062 = vld [vmem:[%s262 + $0x52] sm:$0xff]
      %v5063 = vld [vmem:[%s262 + $0x62] sm:$0xff]
      %v5064 = vld [vmem:[%s262 + $0x6a] sm:$0xff]
      %v5065 = vld [vmem:[%s262 + $0x7a] sm:$0xff]
      %v5066 = vld [vmem:[%s262 + $0x82] sm:$0xff]
      %v5067 = vld [vmem:[%s262 + $0x92] sm:$0xff]
      %v5068 = vld [vmem:[%s262 + $0x9a] sm:$0xff]
      %v5069 = vld [vmem:[%s262 + $0xaa] sm:$0xff]
      %v5070 = vld [vmem:[%s262 + $0xb2] sm:$0xff]
      %v5071 = vld [vmem:[%s262 + $0xc2] sm:$0xff]
      %v5072 = vld [vmem:[%s262 + $0xca] sm:$0xff]
      %v5073 = vld [vmem:[%s262 + $0xda] sm:$0xff]
      %v5074 = vld [vmem:[%s262 + $0xe2] sm:$0xff]
      %v5075 = vld [vmem:[%s262 + $0xf2] sm:$0xff]
      %v5076 = vld [vmem:[%s262 + $0xfa] sm:$0xff]
      %v5077 = vld [vmem:[%s262 + $0x10a] sm:$0xff]
      %v5078 = vld [vmem:[%s262 + $0x112] sm:$0xff]
      %v5079 = vld [vmem:[%s262 + $0x122] sm:$0xff]
      %v5080 = vld [vmem:[%s262 + $0x12a] sm:$0xff]
      %v5081 = vld [vmem:[%s262 + $0x13a] sm:$0xff]
      %v5082 = vld [vmem:[%s262 + $0x142] sm:$0xff]
      %v5083 = vld [vmem:[%s262 + $0x152] sm:$0xff]
      %v5084 = vld [vmem:[%s262 + $0x15a] sm:$0xff]
      %v5085 = vld [vmem:[%s262 + $0x16a] sm:$0xff]
      %v5086 = vld [vmem:[%s262 + $0x172] sm:$0xff]
      %v5088 = vsel %vm174, %v5055, 0
      %v5091 = vsel %vm174, %v5056, 0
      %v5094 = vsel %vm174, %v5057, 0
      %v5097 = vsel %vm174, %v5058, 0
      %v5100 = vsel %vm174, %v5059, 0
      %v5103 = vsel %vm174, %v5060, 0
      %v5106 = vsel %vm174, %v5061, 0
      %v5109 = vsel %vm174, %v5062, 0
      %v5112 = vsel %vm174, %v5063, 0
      %v5115 = vsel %vm174, %v5064, 0
      %v5118 = vsel %vm174, %v5065, 0
      %v5121 = vsel %vm174, %v5066, 0
      %v5124 = vsel %vm174, %v5067, 0
      %v5127 = vsel %vm174, %v5068, 0
      %v5130 = vsel %vm174, %v5069, 0
      %v5133 = vsel %vm174, %v5070, 0
      %v5136 = vsel %vm174, %v5071, 0
      %v5139 = vsel %vm174, %v5072, 0
      %v5142 = vsel %vm174, %v5073, 0
      %v5145 = vsel %vm174, %v5074, 0
      %v5148 = vsel %vm174, %v5075, 0
      %v5151 = vsel %vm174, %v5076, 0
      %v5154 = vsel %vm174, %v5077, 0
      %v5157 = vsel %vm174, %v5078, 0
      %v5160 = vsel %vm174, %v5079, 0
      %v5163 = vsel %vm174, %v5080, 0
      %v5166 = vsel %vm174, %v5081, 0
      %v5169 = vsel %vm174, %v5082, 0
      %v5172 = vsel %vm174, %v5083, 0
      %v5175 = vsel %vm174, %v5084, 0
      %v5178 = vsel %vm174, %v5085, 0
      %v5181 = vsel %vm174, %v5086, 0
      %v5184 = vsel %vm462, %v5054, 0
      %5186 = vmatprep.subr.mxu0 0.0
      %5187 = vmatpush1.msra.mxu0 0.0
      %5188 = vmatprep.subr.mxu0 0.0
      %5189 = vmatpush1.msra.mxu0 0.0
      %5190 = vmatprep.subr.mxu0 0.0
      %5191 = vmatpush1.msra.mxu0 0.0
      %5192 = vmatprep.subr.mxu0 0.0
      %5193 = vmatpush1.msra.mxu0 0.0
      %5194 = vmatprep.subr.mxu0 0.0
      %5195 = vmatpush1.msra.mxu0 0.0
      %5196 = vmatprep.subr.mxu0 0.0
      %5197 = vmatpush1.msra.mxu0 0.0
      %5198 = vmatprep.subr.mxu0 0.0
      %5199 = vmatpush1.msra.mxu0 0.0
      %5200 = vmatprep.subr.mxu0 0.0
      %5201 = vmatpush1.msra.mxu0 0.0
      %5202 = vmatprep.subr.mxu0 0.0
      %5203 = vmatpush1.msra.mxu0 0.0
      %5204 = vmatprep.subr.mxu0 0.0
      %5205 = vmatpush1.msra.mxu0 0.0
      %5206 = vmatprep.subr.mxu0 0.0
      %5207 = vmatpush1.msra.mxu0 0.0
      %5208 = vmatprep.subr.mxu0 0.0
      %5209 = vmatpush1.msra.mxu0 0.0
      %5210 = vmatprep.subr.mxu0 0.0
      %5211 = vmatpush1.msra.mxu0 0.0
      %5212 = vmatprep.subr.mxu0 0.0
      %5213 = vmatpush1.msra.mxu0 0.0
      %5214 = vmatprep.subr.mxu0 0.0
      %5215 = vmatpush1.msra.mxu0 0.0
      %5216 = vmatprep.subr.mxu0 0.0
      %5217 = vmatpush1.msra.mxu0 %v5184
      %5218 = vmatprep.subr.mxu0 0.0
      %5219 = vmatpush2.msra.mxu0 0.0
      %5220 = vmatprep.subr.mxu0 0.0
      %5221 = vmatpush2.msra.mxu0 0.0
      %5222 = vmatprep.subr.mxu0 0.0
      %5223 = vmatpush2.msra.mxu0 0.0
      %5224 = vmatprep.subr.mxu0 0.0
      %5225 = vmatpush2.msra.mxu0 0.0
      %5226 = vmatprep.subr.mxu0 0.0
      %5227 = vmatpush2.msra.mxu0 0.0
      %5228 = vmatprep.subr.mxu0 0.0
      %5229 = vmatpush2.msra.mxu0 0.0
      %5230 = vmatprep.subr.mxu0 0.0
      %5231 = vmatpush2.msra.mxu0 0.0
      %5232 = vmatprep.subr.mxu0 0.0
      %5233 = vmatpush2.msra.mxu0 0.0
      %5234 = vmatprep.subr.mxu0 0.0
      %5235 = vmatpush2.msra.mxu0 0.0
      %5236 = vmatprep.subr.mxu0 0.0
      %5237 = vmatpush2.msra.mxu0 0.0
      %5238 = vmatprep.subr.mxu0 0.0
      %5239 = vmatpush2.msra.mxu0 0.0
      %5240 = vmatprep.subr.mxu0 0.0
      %5241 = vmatpush2.msra.mxu0 0.0
      %5242 = vmatprep.subr.mxu0 0.0
      %5243 = vmatpush2.msra.mxu0 0.0
      %5244 = vmatprep.subr.mxu0 0.0
      %5245 = vmatpush2.msra.mxu0 0.0
      %5246 = vmatprep.subr.mxu0 0.0
      %5247 = vmatpush2.msra.mxu0 0.0
      %5248 = vmatprep.subr.mxu0 0.0
      %5249 = vmatpush2.msra.mxu0 0.0
      %5250 = vmatprep.mubr.f32.mxu0 0.0
      %5251 = vmatmul.mubr.f32.gmra.mxu0 %v5088
      %v5252 = vpop.f32.mrf.mxu0
      %v5253 = vadd.f32 0.0, %v5252
      %v5254 = vpop.f32.mrf.mxu0
      %5255 = vmatprep.mubr.f32.mxu0 0.0
      %5256 = vmatmul.mubr.f32.gmra.mxu0 %v5091
      %v5257 = vpop.f32.mrf.mxu0
      %v5258 = vadd.f32 0.0, %v5257
      %v5259 = vpop.f32.mrf.mxu0
      %5260 = vmatprep.mubr.f32.mxu0 0.0
      %5261 = vmatmul.mubr.f32.gmra.mxu0 %v5094
      %v5262 = vpop.f32.mrf.mxu0
      %v5263 = vadd.f32 0.0, %v5262
      %v5264 = vpop.f32.mrf.mxu0
      %5265 = vmatprep.mubr.f32.mxu0 0.0
      %5266 = vmatmul.mubr.f32.gmra.mxu0 %v5097
      %v5267 = vpop.f32.mrf.mxu0
      %v5268 = vadd.f32 0.0, %v5267
      %v5269 = vpop.f32.mrf.mxu0
      %5270 = vmatprep.mubr.f32.mxu0 0.0
      %5271 = vmatmul.mubr.f32.gmra.mxu0 %v5100
      %v5272 = vpop.f32.mrf.mxu0
      %v5273 = vadd.f32 0.0, %v5272
      %v5274 = vpop.f32.mrf.mxu0
      %5275 = vmatprep.mubr.f32.mxu0 0.0
      %5276 = vmatmul.mubr.f32.gmra.mxu0 %v5103
      %v5277 = vpop.f32.mrf.mxu0
      %v5278 = vadd.f32 0.0, %v5277
      %v5279 = vpop.f32.mrf.mxu0
      %5280 = vmatprep.mubr.f32.mxu0 0.0
      %5281 = vmatmul.mubr.f32.gmra.mxu0 %v5106
      %v5282 = vpop.f32.mrf.mxu0
      %v5283 = vadd.f32 0.0, %v5282
      %v5284 = vpop.f32.mrf.mxu0
      %5285 = vmatprep.mubr.f32.mxu0 0.0
      %5286 = vmatmul.mubr.f32.gmra.mxu0 %v5109
      %v5287 = vpop.f32.mrf.mxu0
      %v5288 = vadd.f32 0.0, %v5287
      %v5289 = vpop.f32.mrf.mxu0
      %5290 = vmatprep.mubr.f32.mxu0 0.0
      %5291 = vmatmul.mubr.f32.gmra.mxu0 %v5112
      %v5292 = vpop.f32.mrf.mxu0
      %v5293 = vadd.f32 0.0, %v5292
      %v5294 = vpop.f32.mrf.mxu0
      %5295 = vmatprep.mubr.f32.mxu0 0.0
      %5296 = vmatmul.mubr.f32.gmra.mxu0 %v5115
      %v5297 = vpop.f32.mrf.mxu0
      %v5298 = vadd.f32 0.0, %v5297
      %v5299 = vpop.f32.mrf.mxu0
      %5300 = vmatprep.mubr.f32.mxu0 0.0
      %5301 = vmatmul.mubr.f32.gmra.mxu0 %v5118
      %v5302 = vpop.f32.mrf.mxu0
      %v5303 = vadd.f32 0.0, %v5302
      %v5304 = vpop.f32.mrf.mxu0
      %5305 = vmatprep.mubr.f32.mxu0 0.0
      %5306 = vmatmul.mubr.f32.gmra.mxu0 %v5121
      %v5307 = vpop.f32.mrf.mxu0
      %v5308 = vadd.f32 0.0, %v5307
      %v5309 = vpop.f32.mrf.mxu0
      %5310 = vmatprep.mubr.f32.mxu0 0.0
      %5311 = vmatmul.mubr.f32.gmra.mxu0 %v5124
      %v5312 = vpop.f32.mrf.mxu0
      %v5313 = vadd.f32 0.0, %v5312
      %v5314 = vpop.f32.mrf.mxu0
      %5315 = vmatprep.mubr.f32.mxu0 0.0
      %5316 = vmatmul.mubr.f32.gmra.mxu0 %v5127
      %v5317 = vpop.f32.mrf.mxu0
      %v5318 = vadd.f32 0.0, %v5317
      %v5319 = vpop.f32.mrf.mxu0
      %5320 = vmatprep.mubr.f32.mxu0 0.0
      %5321 = vmatmul.mubr.f32.gmra.mxu0 %v5130
      %v5322 = vpop.f32.mrf.mxu0
      %v5323 = vadd.f32 0.0, %v5322
      %v5324 = vpop.f32.mrf.mxu0
      %5325 = vmatprep.mubr.f32.mxu0 0.0
      %5326 = vmatmul.mubr.f32.gmra.mxu0 %v5133
      %v5327 = vpop.f32.mrf.mxu0
      %v5328 = vadd.f32 0.0, %v5327
      %v5329 = vpop.f32.mrf.mxu0
      %5330 = vmatprep.mubr.f32.mxu0 0.0
      %5331 = vmatmul.mubr.f32.gmra.mxu0 %v5136
      %v5332 = vpop.f32.mrf.mxu0
      %v5333 = vadd.f32 0.0, %v5332
      %v5334 = vpop.f32.mrf.mxu0
      %5335 = vmatprep.mubr.f32.mxu0 0.0
      %5336 = vmatmul.mubr.f32.gmra.mxu0 %v5139
      %v5337 = vpop.f32.mrf.mxu0
      %v5338 = vadd.f32 0.0, %v5337
      %v5339 = vpop.f32.mrf.mxu0
      %5340 = vmatprep.mubr.f32.mxu0 0.0
      %5341 = vmatmul.mubr.f32.gmra.mxu0 %v5142
      %v5342 = vpop.f32.mrf.mxu0
      %v5343 = vadd.f32 0.0, %v5342
      %v5344 = vpop.f32.mrf.mxu0
      %5345 = vmatprep.mubr.f32.mxu0 0.0
      %5346 = vmatmul.mubr.f32.gmra.mxu0 %v5145
      %v5347 = vpop.f32.mrf.mxu0
      %v5348 = vadd.f32 0.0, %v5347
      %v5349 = vpop.f32.mrf.mxu0
      %5350 = vmatprep.mubr.f32.mxu0 0.0
      %5351 = vmatmul.mubr.f32.gmra.mxu0 %v5148
      %v5352 = vpop.f32.mrf.mxu0
      %v5353 = vadd.f32 0.0, %v5352
      %v5354 = vpop.f32.mrf.mxu0
      %5355 = vmatprep.mubr.f32.mxu0 0.0
      %5356 = vmatmul.mubr.f32.gmra.mxu0 %v5151
      %v5357 = vpop.f32.mrf.mxu0
      %v5358 = vadd.f32 0.0, %v5357
      %v5359 = vpop.f32.mrf.mxu0
      %5360 = vmatprep.mubr.f32.mxu0 0.0
      %5361 = vmatmul.mubr.f32.gmra.mxu0 %v5154
      %v5362 = vpop.f32.mrf.mxu0
      %v5363 = vadd.f32 0.0, %v5362
      %v5364 = vpop.f32.mrf.mxu0
      %5365 = vmatprep.mubr.f32.mxu0 0.0
      %5366 = vmatmul.mubr.f32.gmra.mxu0 %v5157
      %v5367 = vpop.f32.mrf.mxu0
      %v5368 = vadd.f32 0.0, %v5367
      %v5369 = vpop.f32.mrf.mxu0
      %5370 = vmatprep.mubr.f32.mxu0 0.0
      %5371 = vmatmul.mubr.f32.gmra.mxu0 %v5160
      %v5372 = vpop.f32.mrf.mxu0
      %v5373 = vadd.f32 0.0, %v5372
      %v5374 = vpop.f32.mrf.mxu0
      %5375 = vmatprep.mubr.f32.mxu0 0.0
      %5376 = vmatmul.mubr.f32.gmra.mxu0 %v5163
      %v5377 = vpop.f32.mrf.mxu0
      %v5378 = vadd.f32 0.0, %v5377
      %v5379 = vpop.f32.mrf.mxu0
      %5380 = vmatprep.mubr.f32.mxu0 0.0
      %5381 = vmatmul.mubr.f32.gmra.mxu0 %v5166
      %v5382 = vpop.f32.mrf.mxu0
      %v5383 = vadd.f32 0.0, %v5382
      %v5384 = vpop.f32.mrf.mxu0
      %5385 = vmatprep.mubr.f32.mxu0 0.0
      %5386 = vmatmul.mubr.f32.gmra.mxu0 %v5169
      %v5387 = vpop.f32.mrf.mxu0
      %v5388 = vadd.f32 0.0, %v5387
      %v5389 = vpop.f32.mrf.mxu0
      %5390 = vmatprep.mubr.f32.mxu0 0.0
      %5391 = vmatmul.mubr.f32.gmra.mxu0 %v5172
      %v5392 = vpop.f32.mrf.mxu0
      %v5393 = vadd.f32 0.0, %v5392
      %v5394 = vpop.f32.mrf.mxu0
      %5395 = vmatprep.mubr.f32.mxu0 0.0
      %5396 = vmatmul.mubr.f32.gmra.mxu0 %v5175
      %v5397 = vpop.f32.mrf.mxu0
      %v5398 = vadd.f32 0.0, %v5397
      %v5399 = vpop.f32.mrf.mxu0
      %5400 = vmatprep.mubr.f32.mxu0 0.0
      %5401 = vmatmul.mubr.f32.gmra.mxu0 %v5178
      %v5402 = vpop.f32.mrf.mxu0
      %v5403 = vadd.f32 0.0, %v5402
      %v5404 = vpop.f32.mrf.mxu0
      %5405 = vmatprep.mubr.f32.mxu0 0.0
      %5406 = vmatmul.mubr.f32.gmra.mxu0 %v5181
      %v5407 = vpop.f32.mrf.mxu0
      %v5408 = vadd.f32 0.0, %v5407
      %v5409 = vpop.f32.mrf.mxu0
      %5410 = vdwg.mxu0
      %v5412 = vsel %vm174, %v5020, 0
      %v5415 = vsel %vm174, %v5021, 0
      %v5418 = vsel %vm174, %v5022, 0
      %v5421 = vsel %vm174, %v5023, 0
      %v5424 = vsel %vm174, %v5024, 0
      %v5427 = vsel %vm174, %v5025, 0
      %v5430 = vsel %vm174, %v5026, 0
      %v5433 = vsel %vm174, %v5027, 0
      %v5436 = vsel %vm174, %v5028, 0
      %v5439 = vsel %vm174, %v5029, 0
      %v5442 = vsel %vm174, %v5030, 0
      %v5445 = vsel %vm174, %v5031, 0
      %v5448 = vsel %vm174, %v5032, 0
      %v5451 = vsel %vm174, %v5033, 0
      %v5454 = vsel %vm174, %v5034, 0
      %v5457 = vsel %vm174, %v5035, 0
      %v5460 = vsel %vm174, %v5036, 0
      %v5463 = vsel %vm174, %v5037, 0
      %v5466 = vsel %vm174, %v5038, 0
      %v5469 = vsel %vm174, %v5039, 0
      %v5472 = vsel %vm174, %v5040, 0
      %v5475 = vsel %vm174, %v5041, 0
      %v5478 = vsel %vm174, %v5042, 0
      %v5481 = vsel %vm174, %v5043, 0
      %v5484 = vsel %vm174, %v5044, 0
      %v5487 = vsel %vm174, %v5045, 0
      %v5490 = vsel %vm174, %v5046, 0
      %v5493 = vsel %vm174, %v5047, 0
      %v5496 = vsel %vm174, %v5048, 0
      %v5499 = vsel %vm174, %v5049, 0
      %v5502 = vsel %vm174, %v5050, 0
      %v5505 = vsel %vm174, %v5051, 0
      %v5508 = vsel %vm462, %v5019, 0
      %5510 = vmatprep.subr.mxu0 0.0
      %5511 = vmatpush1.msra.mxu0 0.0
      %5512 = vmatprep.subr.mxu0 0.0
      %5513 = vmatpush1.msra.mxu0 0.0
      %5514 = vmatprep.subr.mxu0 0.0
      %5515 = vmatpush1.msra.mxu0 0.0
      %5516 = vmatprep.subr.mxu0 0.0
      %5517 = vmatpush1.msra.mxu0 0.0
      %5518 = vmatprep.subr.mxu0 0.0
      %5519 = vmatpush1.msra.mxu0 0.0
      %5520 = vmatprep.subr.mxu0 0.0
      %5521 = vmatpush1.msra.mxu0 0.0
      %5522 = vmatprep.subr.mxu0 0.0
      %5523 = vmatpush1.msra.mxu0 0.0
      %5524 = vmatprep.subr.mxu0 0.0
      %5525 = vmatpush1.msra.mxu0 0.0
      %5526 = vmatprep.subr.mxu0 0.0
      %5527 = vmatpush1.msra.mxu0 0.0
      %5528 = vmatprep.subr.mxu0 0.0
      %5529 = vmatpush1.msra.mxu0 0.0
      %5530 = vmatprep.subr.mxu0 0.0
      %5531 = vmatpush1.msra.mxu0 0.0
      %5532 = vmatprep.subr.mxu0 0.0
      %5533 = vmatpush1.msra.mxu0 0.0
      %5534 = vmatprep.subr.mxu0 0.0
      %5535 = vmatpush1.msra.mxu0 0.0
      %5536 = vmatprep.subr.mxu0 0.0
      %5537 = vmatpush1.msra.mxu0 0.0
      %5538 = vmatprep.subr.mxu0 0.0
      %5539 = vmatpush1.msra.mxu0 0.0
      %5540 = vmatprep.subr.mxu0 0.0
      %5541 = vmatpush1.msra.mxu0 %v5508
      %5542 = vmatprep.subr.mxu0 0.0
      %5543 = vmatpush2.msra.mxu0 0.0
      %5544 = vmatprep.subr.mxu0 0.0
      %5545 = vmatpush2.msra.mxu0 0.0
      %5546 = vmatprep.subr.mxu0 0.0
      %5547 = vmatpush2.msra.mxu0 0.0
      %5548 = vmatprep.subr.mxu0 0.0
      %5549 = vmatpush2.msra.mxu0 0.0
      %5550 = vmatprep.subr.mxu0 0.0
      %5551 = vmatpush2.msra.mxu0 0.0
      %5552 = vmatprep.subr.mxu0 0.0
      %5553 = vmatpush2.msra.mxu0 0.0
      %5554 = vmatprep.subr.mxu0 0.0
      %5555 = vmatpush2.msra.mxu0 0.0
      %5556 = vmatprep.subr.mxu0 0.0
      %5557 = vmatpush2.msra.mxu0 0.0
      %5558 = vmatprep.subr.mxu0 0.0
      %5559 = vmatpush2.msra.mxu0 0.0
      %5560 = vmatprep.subr.mxu0 0.0
      %5561 = vmatpush2.msra.mxu0 0.0
      %5562 = vmatprep.subr.mxu0 0.0
      %5563 = vmatpush2.msra.mxu0 0.0
      %5564 = vmatprep.subr.mxu0 0.0
      %5565 = vmatpush2.msra.mxu0 0.0
      %5566 = vmatprep.subr.mxu0 0.0
      %5567 = vmatpush2.msra.mxu0 0.0
      %5568 = vmatprep.subr.mxu0 0.0
      %5569 = vmatpush2.msra.mxu0 0.0
      %5570 = vmatprep.subr.mxu0 0.0
      %5571 = vmatpush2.msra.mxu0 0.0
      %5572 = vmatprep.subr.mxu0 0.0
      %5573 = vmatpush2.msra.mxu0 0.0
      %5574 = vmatprep.mubr.f32.mxu0 0.0
      %5575 = vmatmul.mubr.f32.gmra.mxu0 %v5412
      %v5576 = vpop.f32.mrf.mxu0
      %v5577 = vadd.f32 %v5253, %v5576
      %v5578 = vpop.f32.mrf.mxu0
      %5579 = vmatprep.mubr.f32.mxu0 0.0
      %5580 = vmatmul.mubr.f32.gmra.mxu0 %v5415
      %v5581 = vpop.f32.mrf.mxu0
      %v5582 = vadd.f32 %v5258, %v5581
      %v5583 = vpop.f32.mrf.mxu0
      %5584 = vmatprep.mubr.f32.mxu0 0.0
      %5585 = vmatmul.mubr.f32.gmra.mxu0 %v5418
      %v5586 = vpop.f32.mrf.mxu0
      %v5587 = vadd.f32 %v5263, %v5586
      %v5588 = vpop.f32.mrf.mxu0
      %5589 = vmatprep.mubr.f32.mxu0 0.0
      %5590 = vmatmul.mubr.f32.gmra.mxu0 %v5421
      %v5591 = vpop.f32.mrf.mxu0
      %v5592 = vadd.f32 %v5268, %v5591
      %v5593 = vpop.f32.mrf.mxu0
      %5594 = vmatprep.mubr.f32.mxu0 0.0
      %5595 = vmatmul.mubr.f32.gmra.mxu0 %v5424
      %v5596 = vpop.f32.mrf.mxu0
      %v5597 = vadd.f32 %v5273, %v5596
      %v5598 = vpop.f32.mrf.mxu0
      %5599 = vmatprep.mubr.f32.mxu0 0.0
      %5600 = vmatmul.mubr.f32.gmra.mxu0 %v5427
      %v5601 = vpop.f32.mrf.mxu0
      %v5602 = vadd.f32 %v5278, %v5601
      %v5603 = vpop.f32.mrf.mxu0
      %5604 = vmatprep.mubr.f32.mxu0 0.0
      %5605 = vmatmul.mubr.f32.gmra.mxu0 %v5430
      %v5606 = vpop.f32.mrf.mxu0
      %v5607 = vadd.f32 %v5283, %v5606
      %v5608 = vpop.f32.mrf.mxu0
      %5609 = vmatprep.mubr.f32.mxu0 0.0
      %5610 = vmatmul.mubr.f32.gmra.mxu0 %v5433
      %v5611 = vpop.f32.mrf.mxu0
      %v5612 = vadd.f32 %v5288, %v5611
      %v5613 = vpop.f32.mrf.mxu0
      %5614 = vmatprep.mubr.f32.mxu0 0.0
      %5615 = vmatmul.mubr.f32.gmra.mxu0 %v5436
      %v5616 = vpop.f32.mrf.mxu0
      %v5617 = vadd.f32 %v5293, %v5616
      %v5618 = vpop.f32.mrf.mxu0
      %5619 = vmatprep.mubr.f32.mxu0 0.0
      %5620 = vmatmul.mubr.f32.gmra.mxu0 %v5439
      %v5621 = vpop.f32.mrf.mxu0
      %v5622 = vadd.f32 %v5298, %v5621
      %v5623 = vpop.f32.mrf.mxu0
      %5624 = vmatprep.mubr.f32.mxu0 0.0
      %5625 = vmatmul.mubr.f32.gmra.mxu0 %v5442
      %v5626 = vpop.f32.mrf.mxu0
      %v5627 = vadd.f32 %v5303, %v5626
      %v5628 = vpop.f32.mrf.mxu0
      %5629 = vmatprep.mubr.f32.mxu0 0.0
      %5630 = vmatmul.mubr.f32.gmra.mxu0 %v5445
      %v5631 = vpop.f32.mrf.mxu0
      %v5632 = vadd.f32 %v5308, %v5631
      %v5633 = vpop.f32.mrf.mxu0
      %5634 = vmatprep.mubr.f32.mxu0 0.0
      %5635 = vmatmul.mubr.f32.gmra.mxu0 %v5448
      %v5636 = vpop.f32.mrf.mxu0
      %v5637 = vadd.f32 %v5313, %v5636
      %v5638 = vpop.f32.mrf.mxu0
      %5639 = vmatprep.mubr.f32.mxu0 0.0
      %5640 = vmatmul.mubr.f32.gmra.mxu0 %v5451
      %v5641 = vpop.f32.mrf.mxu0
      %v5642 = vadd.f32 %v5318, %v5641
      %v5643 = vpop.f32.mrf.mxu0
      %5644 = vmatprep.mubr.f32.mxu0 0.0
      %5645 = vmatmul.mubr.f32.gmra.mxu0 %v5454
      %v5646 = vpop.f32.mrf.mxu0
      %v5647 = vadd.f32 %v5323, %v5646
      %v5648 = vpop.f32.mrf.mxu0
      %5649 = vmatprep.mubr.f32.mxu0 0.0
      %5650 = vmatmul.mubr.f32.gmra.mxu0 %v5457
      %v5651 = vpop.f32.mrf.mxu0
      %v5652 = vadd.f32 %v5328, %v5651
      %v5653 = vpop.f32.mrf.mxu0
      %5654 = vmatprep.mubr.f32.mxu0 0.0
      %5655 = vmatmul.mubr.f32.gmra.mxu0 %v5460
      %v5656 = vpop.f32.mrf.mxu0
      %v5657 = vadd.f32 %v5333, %v5656
      %v5658 = vpop.f32.mrf.mxu0
      %5659 = vmatprep.mubr.f32.mxu0 0.0
      %5660 = vmatmul.mubr.f32.gmra.mxu0 %v5463
      %v5661 = vpop.f32.mrf.mxu0
      %v5662 = vadd.f32 %v5338, %v5661
      %v5663 = vpop.f32.mrf.mxu0
      %5664 = vmatprep.mubr.f32.mxu0 0.0
      %5665 = vmatmul.mubr.f32.gmra.mxu0 %v5466
      %v5666 = vpop.f32.mrf.mxu0
      %v5667 = vadd.f32 %v5343, %v5666
      %v5668 = vpop.f32.mrf.mxu0
      %5669 = vmatprep.mubr.f32.mxu0 0.0
      %5670 = vmatmul.mubr.f32.gmra.mxu0 %v5469
      %v5671 = vpop.f32.mrf.mxu0
      %v5672 = vadd.f32 %v5348, %v5671
      %v5673 = vpop.f32.mrf.mxu0
      %5674 = vmatprep.mubr.f32.mxu0 0.0
      %5675 = vmatmul.mubr.f32.gmra.mxu0 %v5472
      %v5676 = vpop.f32.mrf.mxu0
      %v5677 = vadd.f32 %v5353, %v5676
      %v5678 = vpop.f32.mrf.mxu0
      %5679 = vmatprep.mubr.f32.mxu0 0.0
      %5680 = vmatmul.mubr.f32.gmra.mxu0 %v5475
      %v5681 = vpop.f32.mrf.mxu0
      %v5682 = vadd.f32 %v5358, %v5681
      %v5683 = vpop.f32.mrf.mxu0
      %5684 = vmatprep.mubr.f32.mxu0 0.0
      %5685 = vmatmul.mubr.f32.gmra.mxu0 %v5478
      %v5686 = vpop.f32.mrf.mxu0
      %v5687 = vadd.f32 %v5363, %v5686
      %v5688 = vpop.f32.mrf.mxu0
      %5689 = vmatprep.mubr.f32.mxu0 0.0
      %5690 = vmatmul.mubr.f32.gmra.mxu0 %v5481
      %v5691 = vpop.f32.mrf.mxu0
      %v5692 = vadd.f32 %v5368, %v5691
      %v5693 = vpop.f32.mrf.mxu0
      %5694 = vmatprep.mubr.f32.mxu0 0.0
      %5695 = vmatmul.mubr.f32.gmra.mxu0 %v5484
      %v5696 = vpop.f32.mrf.mxu0
      %v5697 = vadd.f32 %v5373, %v5696
      %v5698 = vpop.f32.mrf.mxu0
      %5699 = vmatprep.mubr.f32.mxu0 0.0
      %5700 = vmatmul.mubr.f32.gmra.mxu0 %v5487
      %v5701 = vpop.f32.mrf.mxu0
      %v5702 = vadd.f32 %v5378, %v5701
      %v5703 = vpop.f32.mrf.mxu0
      %5704 = vmatprep.mubr.f32.mxu0 0.0
      %5705 = vmatmul.mubr.f32.gmra.mxu0 %v5490
      %v5706 = vpop.f32.mrf.mxu0
      %v5707 = vadd.f32 %v5383, %v5706
      %v5708 = vpop.f32.mrf.mxu0
      %5709 = vmatprep.mubr.f32.mxu0 0.0
      %5710 = vmatmul.mubr.f32.gmra.mxu0 %v5493
      %v5711 = vpop.f32.mrf.mxu0
      %v5712 = vadd.f32 %v5388, %v5711
      %v5713 = vpop.f32.mrf.mxu0
      %5714 = vmatprep.mubr.f32.mxu0 0.0
      %5715 = vmatmul.mubr.f32.gmra.mxu0 %v5496
      %v5716 = vpop.f32.mrf.mxu0
      %v5717 = vadd.f32 %v5393, %v5716
      %v5718 = vpop.f32.mrf.mxu0
      %5719 = vmatprep.mubr.f32.mxu0 0.0
      %5720 = vmatmul.mubr.f32.gmra.mxu0 %v5499
      %v5721 = vpop.f32.mrf.mxu0
      %v5722 = vadd.f32 %v5398, %v5721
      %v5723 = vpop.f32.mrf.mxu0
      %5724 = vmatprep.mubr.f32.mxu0 0.0
      %5725 = vmatmul.mubr.f32.gmra.mxu0 %v5502
      %v5726 = vpop.f32.mrf.mxu0
      %v5727 = vadd.f32 %v5403, %v5726
      %v5728 = vpop.f32.mrf.mxu0
      %5729 = vmatprep.mubr.f32.mxu0 0.0
      %5730 = vmatmul.mubr.f32.gmra.mxu0 %v5505
      %v5731 = vpop.f32.mrf.mxu0
      %v5732 = vadd.f32 %v5408, %v5731
      %v5733 = vpop.f32.mrf.mxu0
      %5734 = vdwg.mxu0
      %v5735 = vld [vmem:[%s1017] sm:$0xf]
      %v5736 = vld [vmem:[%s1413] sm:$0xf]
      %v5737 = vadd.f32 %v5735, %v5736
      %v5738 = vld [vmem:[%s4168 + $0x1] sm:$0xff]
      %v5739 = vld [vmem:[%s4168 + $0x9] sm:$0xff]
      %v5740 = vld [vmem:[%s4168 + $0x19] sm:$0xff]
      %v5741 = vld [vmem:[%s4168 + $0x21] sm:$0xff]
      %v5742 = vld [vmem:[%s4168 + $0x31] sm:$0xff]
      %v5743 = vld [vmem:[%s4168 + $0x39] sm:$0xff]
      %v5744 = vld [vmem:[%s4168 + $0x49] sm:$0xff]
      %v5745 = vld [vmem:[%s4168 + $0x51] sm:$0xff]
      %v5746 = vld [vmem:[%s4168 + $0x61] sm:$0xff]
      %v5747 = vld [vmem:[%s4168 + $0x69] sm:$0xff]
      %v5748 = vld [vmem:[%s4168 + $0x79] sm:$0xff]
      %v5749 = vld [vmem:[%s4168 + $0x81] sm:$0xff]
      %v5750 = vld [vmem:[%s4168 + $0x91] sm:$0xff]
      %v5751 = vld [vmem:[%s4168 + $0x99] sm:$0xff]
      %v5752 = vld [vmem:[%s4168 + $0xa9] sm:$0xff]
      %v5753 = vld [vmem:[%s4168 + $0xb1] sm:$0xff]
      %v5754 = vld [vmem:[%s4168 + $0xc1] sm:$0xff]
      %v5755 = vld [vmem:[%s4168 + $0xc9] sm:$0xff]
      %v5756 = vld [vmem:[%s4168 + $0xd9] sm:$0xff]
      %v5757 = vld [vmem:[%s4168 + $0xe1] sm:$0xff]
      %v5758 = vld [vmem:[%s4168 + $0xf1] sm:$0xff]
      %v5759 = vld [vmem:[%s4168 + $0xf9] sm:$0xff]
      %v5760 = vld [vmem:[%s4168 + $0x109] sm:$0xff]
      %v5761 = vld [vmem:[%s4168 + $0x111] sm:$0xff]
      %v5762 = vld [vmem:[%s4168 + $0x121] sm:$0xff]
      %v5763 = vld [vmem:[%s4168 + $0x129] sm:$0xff]
      %v5764 = vld [vmem:[%s4168 + $0x139] sm:$0xff]
      %v5765 = vld [vmem:[%s4168 + $0x141] sm:$0xff]
      %v5766 = vld [vmem:[%s4168 + $0x151] sm:$0xff]
      %v5767 = vld [vmem:[%s4168 + $0x159] sm:$0xff]
      %v5768 = vld [vmem:[%s4168 + $0x169] sm:$0xff]
      %v5769 = vld [vmem:[%s4168 + $0x171] sm:$0xff]
      %v5771 = vsel %vm174, %v5738, 0
      %v5774 = vsel %vm174, %v5739, 0
      %v5777 = vsel %vm174, %v5740, 0
      %v5780 = vsel %vm174, %v5741, 0
      %v5783 = vsel %vm174, %v5742, 0
      %v5786 = vsel %vm174, %v5743, 0
      %v5789 = vsel %vm174, %v5744, 0
      %v5792 = vsel %vm174, %v5745, 0
      %v5795 = vsel %vm174, %v5746, 0
      %v5798 = vsel %vm174, %v5747, 0
      %v5801 = vsel %vm174, %v5748, 0
      %v5804 = vsel %vm174, %v5749, 0
      %v5807 = vsel %vm174, %v5750, 0
      %v5810 = vsel %vm174, %v5751, 0
      %v5813 = vsel %vm174, %v5752, 0
      %v5816 = vsel %vm174, %v5753, 0
      %v5819 = vsel %vm174, %v5754, 0
      %v5822 = vsel %vm174, %v5755, 0
      %v5825 = vsel %vm174, %v5756, 0
      %v5828 = vsel %vm174, %v5757, 0
      %v5831 = vsel %vm174, %v5758, 0
      %v5834 = vsel %vm174, %v5759, 0
      %v5837 = vsel %vm174, %v5760, 0
      %v5840 = vsel %vm174, %v5761, 0
      %v5843 = vsel %vm174, %v5762, 0
      %v5846 = vsel %vm174, %v5763, 0
      %v5849 = vsel %vm174, %v5764, 0
      %v5852 = vsel %vm174, %v5765, 0
      %v5855 = vsel %vm174, %v5766, 0
      %v5858 = vsel %vm174, %v5767, 0
      %v5861 = vsel %vm174, %v5768, 0
      %v5864 = vsel %vm174, %v5769, 0
      %v5867 = vsel %vm462, %v5737, 0
      %5869 = vmatprep.subr.mxu0 0.0
      %5870 = vmatpush1.msra.mxu0 0.0
      %5871 = vmatprep.subr.mxu0 0.0
      %5872 = vmatpush1.msra.mxu0 0.0
      %5873 = vmatprep.subr.mxu0 0.0
      %5874 = vmatpush1.msra.mxu0 0.0
      %5875 = vmatprep.subr.mxu0 0.0
      %5876 = vmatpush1.msra.mxu0 0.0
      %5877 = vmatprep.subr.mxu0 0.0
      %5878 = vmatpush1.msra.mxu0 0.0
      %5879 = vmatprep.subr.mxu0 0.0
      %5880 = vmatpush1.msra.mxu0 0.0
      %5881 = vmatprep.subr.mxu0 0.0
      %5882 = vmatpush1.msra.mxu0 0.0
      %5883 = vmatprep.subr.mxu0 0.0
      %5884 = vmatpush1.msra.mxu0 0.0
      %5885 = vmatprep.subr.mxu0 0.0
      %5886 = vmatpush1.msra.mxu0 0.0
      %5887 = vmatprep.subr.mxu0 0.0
      %5888 = vmatpush1.msra.mxu0 0.0
      %5889 = vmatprep.subr.mxu0 0.0
      %5890 = vmatpush1.msra.mxu0 0.0
      %5891 = vmatprep.subr.mxu0 0.0
      %5892 = vmatpush1.msra.mxu0 0.0
      %5893 = vmatprep.subr.mxu0 0.0
      %5894 = vmatpush1.msra.mxu0 0.0
      %5895 = vmatprep.subr.mxu0 0.0
      %5896 = vmatpush1.msra.mxu0 0.0
      %5897 = vmatprep.subr.mxu0 0.0
      %5898 = vmatpush1.msra.mxu0 0.0
      %5899 = vmatprep.subr.mxu0 0.0
      %5900 = vmatpush1.msra.mxu0 %v5867
      %5901 = vmatprep.subr.mxu0 0.0
      %5902 = vmatpush2.msra.mxu0 0.0
      %5903 = vmatprep.subr.mxu0 0.0
      %5904 = vmatpush2.msra.mxu0 0.0
      %5905 = vmatprep.subr.mxu0 0.0
      %5906 = vmatpush2.msra.mxu0 0.0
      %5907 = vmatprep.subr.mxu0 0.0
      %5908 = vmatpush2.msra.mxu0 0.0
      %5909 = vmatprep.subr.mxu0 0.0
      %5910 = vmatpush2.msra.mxu0 0.0
      %5911 = vmatprep.subr.mxu0 0.0
      %5912 = vmatpush2.msra.mxu0 0.0
      %5913 = vmatprep.subr.mxu0 0.0
      %5914 = vmatpush2.msra.mxu0 0.0
      %5915 = vmatprep.subr.mxu0 0.0
      %5916 = vmatpush2.msra.mxu0 0.0
      %5917 = vmatprep.subr.mxu0 0.0
      %5918 = vmatpush2.msra.mxu0 0.0
      %5919 = vmatprep.subr.mxu0 0.0
      %5920 = vmatpush2.msra.mxu0 0.0
      %5921 = vmatprep.subr.mxu0 0.0
      %5922 = vmatpush2.msra.mxu0 0.0
      %5923 = vmatprep.subr.mxu0 0.0
      %5924 = vmatpush2.msra.mxu0 0.0
      %5925 = vmatprep.subr.mxu0 0.0
      %5926 = vmatpush2.msra.mxu0 0.0
      %5927 = vmatprep.subr.mxu0 0.0
      %5928 = vmatpush2.msra.mxu0 0.0
      %5929 = vmatprep.subr.mxu0 0.0
      %5930 = vmatpush2.msra.mxu0 0.0
      %5931 = vmatprep.subr.mxu0 0.0
      %5932 = vmatpush2.msra.mxu0 0.0
      %5933 = vmatprep.mubr.f32.mxu0 0.0
      %5934 = vmatmul.mubr.f32.gmra.mxu0 %v5771
      %v5935 = vpop.f32.mrf.mxu0
      %v5936 = vadd.f32 0.0, %v5935
      %v5937 = vpop.f32.mrf.mxu0
      %5938 = vmatprep.mubr.f32.mxu0 0.0
      %5939 = vmatmul.mubr.f32.gmra.mxu0 %v5774
      %v5940 = vpop.f32.mrf.mxu0
      %v5941 = vadd.f32 0.0, %v5940
      %v5942 = vpop.f32.mrf.mxu0
      %5943 = vmatprep.mubr.f32.mxu0 0.0
      %5944 = vmatmul.mubr.f32.gmra.mxu0 %v5777
      %v5945 = vpop.f32.mrf.mxu0
      %v5946 = vadd.f32 0.0, %v5945
      %v5947 = vpop.f32.mrf.mxu0
      %5948 = vmatprep.mubr.f32.mxu0 0.0
      %5949 = vmatmul.mubr.f32.gmra.mxu0 %v5780
      %v5950 = vpop.f32.mrf.mxu0
      %v5951 = vadd.f32 0.0, %v5950
      %v5952 = vpop.f32.mrf.mxu0
      %5953 = vmatprep.mubr.f32.mxu0 0.0
      %5954 = vmatmul.mubr.f32.gmra.mxu0 %v5783
      %v5955 = vpop.f32.mrf.mxu0
      %v5956 = vadd.f32 0.0, %v5955
      %v5957 = vpop.f32.mrf.mxu0
      %5958 = vmatprep.mubr.f32.mxu0 0.0
      %5959 = vmatmul.mubr.f32.gmra.mxu0 %v5786
      %v5960 = vpop.f32.mrf.mxu0
      %v5961 = vadd.f32 0.0, %v5960
      %v5962 = vpop.f32.mrf.mxu0
      %5963 = vmatprep.mubr.f32.mxu0 0.0
      %5964 = vmatmul.mubr.f32.gmra.mxu0 %v5789
      %v5965 = vpop.f32.mrf.mxu0
      %v5966 = vadd.f32 0.0, %v5965
      %v5967 = vpop.f32.mrf.mxu0
      %5968 = vmatprep.mubr.f32.mxu0 0.0
      %5969 = vmatmul.mubr.f32.gmra.mxu0 %v5792
      %v5970 = vpop.f32.mrf.mxu0
      %v5971 = vadd.f32 0.0, %v5970
      %v5972 = vpop.f32.mrf.mxu0
      %5973 = vmatprep.mubr.f32.mxu0 0.0
      %5974 = vmatmul.mubr.f32.gmra.mxu0 %v5795
      %v5975 = vpop.f32.mrf.mxu0
      %v5976 = vadd.f32 0.0, %v5975
      %v5977 = vpop.f32.mrf.mxu0
      %5978 = vmatprep.mubr.f32.mxu0 0.0
      %5979 = vmatmul.mubr.f32.gmra.mxu0 %v5798
      %v5980 = vpop.f32.mrf.mxu0
      %v5981 = vadd.f32 0.0, %v5980
      %v5982 = vpop.f32.mrf.mxu0
      %5983 = vmatprep.mubr.f32.mxu0 0.0
      %5984 = vmatmul.mubr.f32.gmra.mxu0 %v5801
      %v5985 = vpop.f32.mrf.mxu0
      %v5986 = vadd.f32 0.0, %v5985
      %v5987 = vpop.f32.mrf.mxu0
      %5988 = vmatprep.mubr.f32.mxu0 0.0
      %5989 = vmatmul.mubr.f32.gmra.mxu0 %v5804
      %v5990 = vpop.f32.mrf.mxu0
      %v5991 = vadd.f32 0.0, %v5990
      %v5992 = vpop.f32.mrf.mxu0
      %5993 = vmatprep.mubr.f32.mxu0 0.0
      %5994 = vmatmul.mubr.f32.gmra.mxu0 %v5807
      %v5995 = vpop.f32.mrf.mxu0
      %v5996 = vadd.f32 0.0, %v5995
      %v5997 = vpop.f32.mrf.mxu0
      %5998 = vmatprep.mubr.f32.mxu0 0.0
      %5999 = vmatmul.mubr.f32.gmra.mxu0 %v5810
      %v6000 = vpop.f32.mrf.mxu0
      %v6001 = vadd.f32 0.0, %v6000
      %v6002 = vpop.f32.mrf.mxu0
      %6003 = vmatprep.mubr.f32.mxu0 0.0
      %6004 = vmatmul.mubr.f32.gmra.mxu0 %v5813
      %v6005 = vpop.f32.mrf.mxu0
      %v6006 = vadd.f32 0.0, %v6005
      %v6007 = vpop.f32.mrf.mxu0
      %6008 = vmatprep.mubr.f32.mxu0 0.0
      %6009 = vmatmul.mubr.f32.gmra.mxu0 %v5816
      %v6010 = vpop.f32.mrf.mxu0
      %v6011 = vadd.f32 0.0, %v6010
      %v6012 = vpop.f32.mrf.mxu0
      %6013 = vmatprep.mubr.f32.mxu0 0.0
      %6014 = vmatmul.mubr.f32.gmra.mxu0 %v5819
      %v6015 = vpop.f32.mrf.mxu0
      %v6016 = vadd.f32 0.0, %v6015
      %v6017 = vpop.f32.mrf.mxu0
      %6018 = vmatprep.mubr.f32.mxu0 0.0
      %6019 = vmatmul.mubr.f32.gmra.mxu0 %v5822
      %v6020 = vpop.f32.mrf.mxu0
      %v6021 = vadd.f32 0.0, %v6020
      %v6022 = vpop.f32.mrf.mxu0
      %6023 = vmatprep.mubr.f32.mxu0 0.0
      %6024 = vmatmul.mubr.f32.gmra.mxu0 %v5825
      %v6025 = vpop.f32.mrf.mxu0
      %v6026 = vadd.f32 0.0, %v6025
      %v6027 = vpop.f32.mrf.mxu0
      %6028 = vmatprep.mubr.f32.mxu0 0.0
      %6029 = vmatmul.mubr.f32.gmra.mxu0 %v5828
      %v6030 = vpop.f32.mrf.mxu0
      %v6031 = vadd.f32 0.0, %v6030
      %v6032 = vpop.f32.mrf.mxu0
      %6033 = vmatprep.mubr.f32.mxu0 0.0
      %6034 = vmatmul.mubr.f32.gmra.mxu0 %v5831
      %v6035 = vpop.f32.mrf.mxu0
      %v6036 = vadd.f32 0.0, %v6035
      %v6037 = vpop.f32.mrf.mxu0
      %6038 = vmatprep.mubr.f32.mxu0 0.0
      %6039 = vmatmul.mubr.f32.gmra.mxu0 %v5834
      %v6040 = vpop.f32.mrf.mxu0
      %v6041 = vadd.f32 0.0, %v6040
      %v6042 = vpop.f32.mrf.mxu0
      %6043 = vmatprep.mubr.f32.mxu0 0.0
      %6044 = vmatmul.mubr.f32.gmra.mxu0 %v5837
      %v6045 = vpop.f32.mrf.mxu0
      %v6046 = vadd.f32 0.0, %v6045
      %v6047 = vpop.f32.mrf.mxu0
      %6048 = vmatprep.mubr.f32.mxu0 0.0
      %6049 = vmatmul.mubr.f32.gmra.mxu0 %v5840
      %v6050 = vpop.f32.mrf.mxu0
      %v6051 = vadd.f32 0.0, %v6050
      %v6052 = vpop.f32.mrf.mxu0
      %6053 = vmatprep.mubr.f32.mxu0 0.0
      %6054 = vmatmul.mubr.f32.gmra.mxu0 %v5843
      %v6055 = vpop.f32.mrf.mxu0
      %v6056 = vadd.f32 0.0, %v6055
      %v6057 = vpop.f32.mrf.mxu0
      %6058 = vmatprep.mubr.f32.mxu0 0.0
      %6059 = vmatmul.mubr.f32.gmra.mxu0 %v5846
      %v6060 = vpop.f32.mrf.mxu0
      %v6061 = vadd.f32 0.0, %v6060
      %v6062 = vpop.f32.mrf.mxu0
      %6063 = vmatprep.mubr.f32.mxu0 0.0
      %6064 = vmatmul.mubr.f32.gmra.mxu0 %v5849
      %v6065 = vpop.f32.mrf.mxu0
      %v6066 = vadd.f32 0.0, %v6065
      %v6067 = vpop.f32.mrf.mxu0
      %6068 = vmatprep.mubr.f32.mxu0 0.0
      %6069 = vmatmul.mubr.f32.gmra.mxu0 %v5852
      %v6070 = vpop.f32.mrf.mxu0
      %v6071 = vadd.f32 0.0, %v6070
      %v6072 = vpop.f32.mrf.mxu0
      %6073 = vmatprep.mubr.f32.mxu0 0.0
      %6074 = vmatmul.mubr.f32.gmra.mxu0 %v5855
      %v6075 = vpop.f32.mrf.mxu0
      %v6076 = vadd.f32 0.0, %v6075
      %v6077 = vpop.f32.mrf.mxu0
      %6078 = vmatprep.mubr.f32.mxu0 0.0
      %6079 = vmatmul.mubr.f32.gmra.mxu0 %v5858
      %v6080 = vpop.f32.mrf.mxu0
      %v6081 = vadd.f32 0.0, %v6080
      %v6082 = vpop.f32.mrf.mxu0
      %6083 = vmatprep.mubr.f32.mxu0 0.0
      %6084 = vmatmul.mubr.f32.gmra.mxu0 %v5861
      %v6085 = vpop.f32.mrf.mxu0
      %v6086 = vadd.f32 0.0, %v6085
      %v6087 = vpop.f32.mrf.mxu0
      %6088 = vmatprep.mubr.f32.mxu0 0.0
      %6089 = vmatmul.mubr.f32.gmra.mxu0 %v5864
      %v6090 = vpop.f32.mrf.mxu0
      %v6091 = vadd.f32 0.0, %v6090
      %v6092 = vpop.f32.mrf.mxu0
      %6093 = vdwg.mxu0
      %v6094 = vadd.f32 %v5577, %v5936
      %v6095 = vadd.f32 %v5582, %v5941
      %v6096 = vadd.f32 %v5587, %v5946
      %v6097 = vadd.f32 %v5592, %v5951
      %v6098 = vadd.f32 %v5597, %v5956
      %v6099 = vadd.f32 %v5602, %v5961
      %v6100 = vadd.f32 %v5607, %v5966
      %v6101 = vadd.f32 %v5612, %v5971
      %v6102 = vadd.f32 %v5617, %v5976
      %v6103 = vadd.f32 %v5622, %v5981
      %v6104 = vadd.f32 %v5627, %v5986
      %v6105 = vadd.f32 %v5632, %v5991
      %v6106 = vadd.f32 %v5637, %v5996
      %v6107 = vadd.f32 %v5642, %v6001
      %v6108 = vadd.f32 %v5647, %v6006
      %v6109 = vadd.f32 %v5652, %v6011
      %v6110 = vadd.f32 %v5657, %v6016
      %v6111 = vadd.f32 %v5662, %v6021
      %v6112 = vadd.f32 %v5667, %v6026
      %v6113 = vadd.f32 %v5672, %v6031
      %v6114 = vadd.f32 %v5677, %v6036
      %v6115 = vadd.f32 %v5682, %v6041
      %v6116 = vadd.f32 %v5687, %v6046
      %v6117 = vadd.f32 %v5692, %v6051
      %v6118 = vadd.f32 %v5697, %v6056
      %v6119 = vadd.f32 %v5702, %v6061
      %v6120 = vadd.f32 %v5707, %v6066
      %v6121 = vadd.f32 %v5712, %v6071
      %v6122 = vadd.f32 %v5717, %v6076
      %v6123 = vadd.f32 %v5722, %v6081
      %v6124 = vadd.f32 %v5727, %v6086
      %v6125 = vadd.f32 %v5732, %v6091
      %v6126 = vld [vmem:[%s1416] sm:$0xf]
      %v6127 = vld [vmem:[%s4168 + $0x2] sm:$0xff]
      %v6128 = vld [vmem:[%s4168 + $0xa] sm:$0xff]
      %v6129 = vld [vmem:[%s4168 + $0x1a] sm:$0xff]
      %v6130 = vld [vmem:[%s4168 + $0x22] sm:$0xff]
      %v6131 = vld [vmem:[%s4168 + $0x32] sm:$0xff]
      %v6132 = vld [vmem:[%s4168 + $0x3a] sm:$0xff]
      %v6133 = vld [vmem:[%s4168 + $0x4a] sm:$0xff]
      %v6134 = vld [vmem:[%s4168 + $0x52] sm:$0xff]
      %v6135 = vld [vmem:[%s4168 + $0x62] sm:$0xff]
      %v6136 = vld [vmem:[%s4168 + $0x6a] sm:$0xff]
      %v6137 = vld [vmem:[%s4168 + $0x7a] sm:$0xff]
      %v6138 = vld [vmem:[%s4168 + $0x82] sm:$0xff]
      %v6139 = vld [vmem:[%s4168 + $0x92] sm:$0xff]
      %v6140 = vld [vmem:[%s4168 + $0x9a] sm:$0xff]
      %v6141 = vld [vmem:[%s4168 + $0xaa] sm:$0xff]
      %v6142 = vld [vmem:[%s4168 + $0xb2] sm:$0xff]
      %v6143 = vld [vmem:[%s4168 + $0xc2] sm:$0xff]
      %v6144 = vld [vmem:[%s4168 + $0xca] sm:$0xff]
      %v6145 = vld [vmem:[%s4168 + $0xda] sm:$0xff]
      %v6146 = vld [vmem:[%s4168 + $0xe2] sm:$0xff]
      %v6147 = vld [vmem:[%s4168 + $0xf2] sm:$0xff]
      %v6148 = vld [vmem:[%s4168 + $0xfa] sm:$0xff]
      %v6149 = vld [vmem:[%s4168 + $0x10a] sm:$0xff]
      %v6150 = vld [vmem:[%s4168 + $0x112] sm:$0xff]
      %v6151 = vld [vmem:[%s4168 + $0x122] sm:$0xff]
      %v6152 = vld [vmem:[%s4168 + $0x12a] sm:$0xff]
      %v6153 = vld [vmem:[%s4168 + $0x13a] sm:$0xff]
      %v6154 = vld [vmem:[%s4168 + $0x142] sm:$0xff]
      %v6155 = vld [vmem:[%s4168 + $0x152] sm:$0xff]
      %v6156 = vld [vmem:[%s4168 + $0x15a] sm:$0xff]
      %v6157 = vld [vmem:[%s4168 + $0x16a] sm:$0xff]
      %v6158 = vld [vmem:[%s4168 + $0x172] sm:$0xff]
      %v6160 = vsel %vm174, %v6127, 0
      %v6163 = vsel %vm174, %v6128, 0
      %v6166 = vsel %vm174, %v6129, 0
      %v6169 = vsel %vm174, %v6130, 0
      %v6172 = vsel %vm174, %v6131, 0
      %v6175 = vsel %vm174, %v6132, 0
      %v6178 = vsel %vm174, %v6133, 0
      %v6181 = vsel %vm174, %v6134, 0
      %v6184 = vsel %vm174, %v6135, 0
      %v6187 = vsel %vm174, %v6136, 0
      %v6190 = vsel %vm174, %v6137, 0
      %v6193 = vsel %vm174, %v6138, 0
      %v6196 = vsel %vm174, %v6139, 0
      %v6199 = vsel %vm174, %v6140, 0
      %v6202 = vsel %vm174, %v6141, 0
      %v6205 = vsel %vm174, %v6142, 0
      %v6208 = vsel %vm174, %v6143, 0
      %v6211 = vsel %vm174, %v6144, 0
      %v6214 = vsel %vm174, %v6145, 0
      %v6217 = vsel %vm174, %v6146, 0
      %v6220 = vsel %vm174, %v6147, 0
      %v6223 = vsel %vm174, %v6148, 0
      %v6226 = vsel %vm174, %v6149, 0
      %v6229 = vsel %vm174, %v6150, 0
      %v6232 = vsel %vm174, %v6151, 0
      %v6235 = vsel %vm174, %v6152, 0
      %v6238 = vsel %vm174, %v6153, 0
      %v6241 = vsel %vm174, %v6154, 0
      %v6244 = vsel %vm174, %v6155, 0
      %v6247 = vsel %vm174, %v6156, 0
      %v6250 = vsel %vm174, %v6157, 0
      %v6253 = vsel %vm174, %v6158, 0
      %v6256 = vsel %vm462, %v6126, 0
      %6258 = vmatprep.subr.mxu0 0.0
      %6259 = vmatpush1.msra.mxu0 0.0
      %6260 = vmatprep.subr.mxu0 0.0
      %6261 = vmatpush1.msra.mxu0 0.0
      %6262 = vmatprep.subr.mxu0 0.0
      %6263 = vmatpush1.msra.mxu0 0.0
      %6264 = vmatprep.subr.mxu0 0.0
      %6265 = vmatpush1.msra.mxu0 0.0
      %6266 = vmatprep.subr.mxu0 0.0
      %6267 = vmatpush1.msra.mxu0 0.0
      %6268 = vmatprep.subr.mxu0 0.0
      %6269 = vmatpush1.msra.mxu0 0.0
      %6270 = vmatprep.subr.mxu0 0.0
      %6271 = vmatpush1.msra.mxu0 0.0
      %6272 = vmatprep.subr.mxu0 0.0
      %6273 = vmatpush1.msra.mxu0 0.0
      %6274 = vmatprep.subr.mxu0 0.0
      %6275 = vmatpush1.msra.mxu0 0.0
      %6276 = vmatprep.subr.mxu0 0.0
      %6277 = vmatpush1.msra.mxu0 0.0
      %6278 = vmatprep.subr.mxu0 0.0
      %6279 = vmatpush1.msra.mxu0 0.0
      %6280 = vmatprep.subr.mxu0 0.0
      %6281 = vmatpush1.msra.mxu0 0.0
      %6282 = vmatprep.subr.mxu0 0.0
      %6283 = vmatpush1.msra.mxu0 0.0
      %6284 = vmatprep.subr.mxu0 0.0
      %6285 = vmatpush1.msra.mxu0 0.0
      %6286 = vmatprep.subr.mxu0 0.0
      %6287 = vmatpush1.msra.mxu0 0.0
      %6288 = vmatprep.subr.mxu0 0.0
      %6289 = vmatpush1.msra.mxu0 %v6256
      %6290 = vmatprep.subr.mxu0 0.0
      %6291 = vmatpush2.msra.mxu0 0.0
      %6292 = vmatprep.subr.mxu0 0.0
      %6293 = vmatpush2.msra.mxu0 0.0
      %6294 = vmatprep.subr.mxu0 0.0
      %6295 = vmatpush2.msra.mxu0 0.0
      %6296 = vmatprep.subr.mxu0 0.0
      %6297 = vmatpush2.msra.mxu0 0.0
      %6298 = vmatprep.subr.mxu0 0.0
      %6299 = vmatpush2.msra.mxu0 0.0
      %6300 = vmatprep.subr.mxu0 0.0
      %6301 = vmatpush2.msra.mxu0 0.0
      %6302 = vmatprep.subr.mxu0 0.0
      %6303 = vmatpush2.msra.mxu0 0.0
      %6304 = vmatprep.subr.mxu0 0.0
      %6305 = vmatpush2.msra.mxu0 0.0
      %6306 = vmatprep.subr.mxu0 0.0
      %6307 = vmatpush2.msra.mxu0 0.0
      %6308 = vmatprep.subr.mxu0 0.0
      %6309 = vmatpush2.msra.mxu0 0.0
      %6310 = vmatprep.subr.mxu0 0.0
      %6311 = vmatpush2.msra.mxu0 0.0
      %6312 = vmatprep.subr.mxu0 0.0
      %6313 = vmatpush2.msra.mxu0 0.0
      %6314 = vmatprep.subr.mxu0 0.0
      %6315 = vmatpush2.msra.mxu0 0.0
      %6316 = vmatprep.subr.mxu0 0.0
      %6317 = vmatpush2.msra.mxu0 0.0
      %6318 = vmatprep.subr.mxu0 0.0
      %6319 = vmatpush2.msra.mxu0 0.0
      %6320 = vmatprep.subr.mxu0 0.0
      %6321 = vmatpush2.msra.mxu0 0.0
      %6322 = vmatprep.mubr.f32.mxu0 0.0
      %6323 = vmatmul.mubr.f32.gmra.mxu0 %v6160
      %v6324 = vpop.f32.mrf.mxu0
      %v6325 = vadd.f32 0.0, %v6324
      %v6326 = vpop.f32.mrf.mxu0
      %6327 = vmatprep.mubr.f32.mxu0 0.0
      %6328 = vmatmul.mubr.f32.gmra.mxu0 %v6163
      %v6329 = vpop.f32.mrf.mxu0
      %v6330 = vadd.f32 0.0, %v6329
      %v6331 = vpop.f32.mrf.mxu0
      %6332 = vmatprep.mubr.f32.mxu0 0.0
      %6333 = vmatmul.mubr.f32.gmra.mxu0 %v6166
      %v6334 = vpop.f32.mrf.mxu0
      %v6335 = vadd.f32 0.0, %v6334
      %v6336 = vpop.f32.mrf.mxu0
      %6337 = vmatprep.mubr.f32.mxu0 0.0
      %6338 = vmatmul.mubr.f32.gmra.mxu0 %v6169
      %v6339 = vpop.f32.mrf.mxu0
      %v6340 = vadd.f32 0.0, %v6339
      %v6341 = vpop.f32.mrf.mxu0
      %6342 = vmatprep.mubr.f32.mxu0 0.0
      %6343 = vmatmul.mubr.f32.gmra.mxu0 %v6172
      %v6344 = vpop.f32.mrf.mxu0
      %v6345 = vadd.f32 0.0, %v6344
      %v6346 = vpop.f32.mrf.mxu0
      %6347 = vmatprep.mubr.f32.mxu0 0.0
      %6348 = vmatmul.mubr.f32.gmra.mxu0 %v6175
      %v6349 = vpop.f32.mrf.mxu0
      %v6350 = vadd.f32 0.0, %v6349
      %v6351 = vpop.f32.mrf.mxu0
      %6352 = vmatprep.mubr.f32.mxu0 0.0
      %6353 = vmatmul.mubr.f32.gmra.mxu0 %v6178
      %v6354 = vpop.f32.mrf.mxu0
      %v6355 = vadd.f32 0.0, %v6354
      %v6356 = vpop.f32.mrf.mxu0
      %6357 = vmatprep.mubr.f32.mxu0 0.0
      %6358 = vmatmul.mubr.f32.gmra.mxu0 %v6181
      %v6359 = vpop.f32.mrf.mxu0
      %v6360 = vadd.f32 0.0, %v6359
      %v6361 = vpop.f32.mrf.mxu0
      %6362 = vmatprep.mubr.f32.mxu0 0.0
      %6363 = vmatmul.mubr.f32.gmra.mxu0 %v6184
      %v6364 = vpop.f32.mrf.mxu0
      %v6365 = vadd.f32 0.0, %v6364
      %v6366 = vpop.f32.mrf.mxu0
      %6367 = vmatprep.mubr.f32.mxu0 0.0
      %6368 = vmatmul.mubr.f32.gmra.mxu0 %v6187
      %v6369 = vpop.f32.mrf.mxu0
      %v6370 = vadd.f32 0.0, %v6369
      %v6371 = vpop.f32.mrf.mxu0
      %6372 = vmatprep.mubr.f32.mxu0 0.0
      %6373 = vmatmul.mubr.f32.gmra.mxu0 %v6190
      %v6374 = vpop.f32.mrf.mxu0
      %v6375 = vadd.f32 0.0, %v6374
      %v6376 = vpop.f32.mrf.mxu0
      %6377 = vmatprep.mubr.f32.mxu0 0.0
      %6378 = vmatmul.mubr.f32.gmra.mxu0 %v6193
      %v6379 = vpop.f32.mrf.mxu0
      %v6380 = vadd.f32 0.0, %v6379
      %v6381 = vpop.f32.mrf.mxu0
      %6382 = vmatprep.mubr.f32.mxu0 0.0
      %6383 = vmatmul.mubr.f32.gmra.mxu0 %v6196
      %v6384 = vpop.f32.mrf.mxu0
      %v6385 = vadd.f32 0.0, %v6384
      %v6386 = vpop.f32.mrf.mxu0
      %6387 = vmatprep.mubr.f32.mxu0 0.0
      %6388 = vmatmul.mubr.f32.gmra.mxu0 %v6199
      %v6389 = vpop.f32.mrf.mxu0
      %v6390 = vadd.f32 0.0, %v6389
      %v6391 = vpop.f32.mrf.mxu0
      %6392 = vmatprep.mubr.f32.mxu0 0.0
      %6393 = vmatmul.mubr.f32.gmra.mxu0 %v6202
      %v6394 = vpop.f32.mrf.mxu0
      %v6395 = vadd.f32 0.0, %v6394
      %v6396 = vpop.f32.mrf.mxu0
      %6397 = vmatprep.mubr.f32.mxu0 0.0
      %6398 = vmatmul.mubr.f32.gmra.mxu0 %v6205
      %v6399 = vpop.f32.mrf.mxu0
      %v6400 = vadd.f32 0.0, %v6399
      %v6401 = vpop.f32.mrf.mxu0
      %6402 = vmatprep.mubr.f32.mxu0 0.0
      %6403 = vmatmul.mubr.f32.gmra.mxu0 %v6208
      %v6404 = vpop.f32.mrf.mxu0
      %v6405 = vadd.f32 0.0, %v6404
      %v6406 = vpop.f32.mrf.mxu0
      %6407 = vmatprep.mubr.f32.mxu0 0.0
      %6408 = vmatmul.mubr.f32.gmra.mxu0 %v6211
      %v6409 = vpop.f32.mrf.mxu0
      %v6410 = vadd.f32 0.0, %v6409
      %v6411 = vpop.f32.mrf.mxu0
      %6412 = vmatprep.mubr.f32.mxu0 0.0
      %6413 = vmatmul.mubr.f32.gmra.mxu0 %v6214
      %v6414 = vpop.f32.mrf.mxu0
      %v6415 = vadd.f32 0.0, %v6414
      %v6416 = vpop.f32.mrf.mxu0
      %6417 = vmatprep.mubr.f32.mxu0 0.0
      %6418 = vmatmul.mubr.f32.gmra.mxu0 %v6217
      %v6419 = vpop.f32.mrf.mxu0
      %v6420 = vadd.f32 0.0, %v6419
      %v6421 = vpop.f32.mrf.mxu0
      %6422 = vmatprep.mubr.f32.mxu0 0.0
      %6423 = vmatmul.mubr.f32.gmra.mxu0 %v6220
      %v6424 = vpop.f32.mrf.mxu0
      %v6425 = vadd.f32 0.0, %v6424
      %v6426 = vpop.f32.mrf.mxu0
      %6427 = vmatprep.mubr.f32.mxu0 0.0
      %6428 = vmatmul.mubr.f32.gmra.mxu0 %v6223
      %v6429 = vpop.f32.mrf.mxu0
      %v6430 = vadd.f32 0.0, %v6429
      %v6431 = vpop.f32.mrf.mxu0
      %6432 = vmatprep.mubr.f32.mxu0 0.0
      %6433 = vmatmul.mubr.f32.gmra.mxu0 %v6226
      %v6434 = vpop.f32.mrf.mxu0
      %v6435 = vadd.f32 0.0, %v6434
      %v6436 = vpop.f32.mrf.mxu0
      %6437 = vmatprep.mubr.f32.mxu0 0.0
      %6438 = vmatmul.mubr.f32.gmra.mxu0 %v6229
      %v6439 = vpop.f32.mrf.mxu0
      %v6440 = vadd.f32 0.0, %v6439
      %v6441 = vpop.f32.mrf.mxu0
      %6442 = vmatprep.mubr.f32.mxu0 0.0
      %6443 = vmatmul.mubr.f32.gmra.mxu0 %v6232
      %v6444 = vpop.f32.mrf.mxu0
      %v6445 = vadd.f32 0.0, %v6444
      %v6446 = vpop.f32.mrf.mxu0
      %6447 = vmatprep.mubr.f32.mxu0 0.0
      %6448 = vmatmul.mubr.f32.gmra.mxu0 %v6235
      %v6449 = vpop.f32.mrf.mxu0
      %v6450 = vadd.f32 0.0, %v6449
      %v6451 = vpop.f32.mrf.mxu0
      %6452 = vmatprep.mubr.f32.mxu0 0.0
      %6453 = vmatmul.mubr.f32.gmra.mxu0 %v6238
      %v6454 = vpop.f32.mrf.mxu0
      %v6455 = vadd.f32 0.0, %v6454
      %v6456 = vpop.f32.mrf.mxu0
      %6457 = vmatprep.mubr.f32.mxu0 0.0
      %6458 = vmatmul.mubr.f32.gmra.mxu0 %v6241
      %v6459 = vpop.f32.mrf.mxu0
      %v6460 = vadd.f32 0.0, %v6459
      %v6461 = vpop.f32.mrf.mxu0
      %6462 = vmatprep.mubr.f32.mxu0 0.0
      %6463 = vmatmul.mubr.f32.gmra.mxu0 %v6244
      %v6464 = vpop.f32.mrf.mxu0
      %v6465 = vadd.f32 0.0, %v6464
      %v6466 = vpop.f32.mrf.mxu0
      %6467 = vmatprep.mubr.f32.mxu0 0.0
      %6468 = vmatmul.mubr.f32.gmra.mxu0 %v6247
      %v6469 = vpop.f32.mrf.mxu0
      %v6470 = vadd.f32 0.0, %v6469
      %v6471 = vpop.f32.mrf.mxu0
      %6472 = vmatprep.mubr.f32.mxu0 0.0
      %6473 = vmatmul.mubr.f32.gmra.mxu0 %v6250
      %v6474 = vpop.f32.mrf.mxu0
      %v6475 = vadd.f32 0.0, %v6474
      %v6476 = vpop.f32.mrf.mxu0
      %6477 = vmatprep.mubr.f32.mxu0 0.0
      %6478 = vmatmul.mubr.f32.gmra.mxu0 %v6253
      %v6479 = vpop.f32.mrf.mxu0
      %v6480 = vadd.f32 0.0, %v6479
      %v6481 = vpop.f32.mrf.mxu0
      %6482 = vdwg.mxu0
      %v6483 = vadd.f32 %v6094, %v6325
      %v6484 = vadd.f32 %v6095, %v6330
      %v6485 = vadd.f32 %v6096, %v6335
      %v6486 = vadd.f32 %v6097, %v6340
      %v6487 = vadd.f32 %v6098, %v6345
      %v6488 = vadd.f32 %v6099, %v6350
      %v6489 = vadd.f32 %v6100, %v6355
      %v6490 = vadd.f32 %v6101, %v6360
      %v6491 = vadd.f32 %v6102, %v6365
      %v6492 = vadd.f32 %v6103, %v6370
      %v6493 = vadd.f32 %v6104, %v6375
      %v6494 = vadd.f32 %v6105, %v6380
      %v6495 = vadd.f32 %v6106, %v6385
      %v6496 = vadd.f32 %v6107, %v6390
      %v6497 = vadd.f32 %v6108, %v6395
      %v6498 = vadd.f32 %v6109, %v6400
      %v6499 = vadd.f32 %v6110, %v6405
      %v6500 = vadd.f32 %v6111, %v6410
      %v6501 = vadd.f32 %v6112, %v6415
      %v6502 = vadd.f32 %v6113, %v6420
      %v6503 = vadd.f32 %v6114, %v6425
      %v6504 = vadd.f32 %v6115, %v6430
      %v6505 = vadd.f32 %v6116, %v6435
      %v6506 = vadd.f32 %v6117, %v6440
      %v6507 = vadd.f32 %v6118, %v6445
      %v6508 = vadd.f32 %v6119, %v6450
      %v6509 = vadd.f32 %v6120, %v6455
      %v6510 = vadd.f32 %v6121, %v6460
      %v6511 = vadd.f32 %v6122, %v6465
      %v6512 = vadd.f32 %v6123, %v6470
      %v6513 = vadd.f32 %v6124, %v6475
      %v6514 = vadd.f32 %v6125, %v6480
      %v6515 = vadd.f32 %v6483, %v1811
      %v6516 = vadd.f32 %v6484, %v1811
      %v6517 = vadd.f32 %v6485, %v1811
      %v6518 = vadd.f32 %v6486, %v1811
      %v6519 = vadd.f32 %v6487, %v1811
      %v6520 = vadd.f32 %v6488, %v1811
      %v6521 = vadd.f32 %v6489, %v1811
      %v6522 = vadd.f32 %v6490, %v1811
      %v6523 = vadd.f32 %v6491, %v1811
      %v6524 = vadd.f32 %v6492, %v1811
      %v6525 = vadd.f32 %v6493, %v1811
      %v6526 = vadd.f32 %v6494, %v1811
      %v6527 = vadd.f32 %v6495, %v1811
      %v6528 = vadd.f32 %v6496, %v1811
      %v6529 = vadd.f32 %v6497, %v1811
      %v6530 = vadd.f32 %v6498, %v1811
      %v6531 = vadd.f32 %v6499, %v1811
      %v6532 = vadd.f32 %v6500, %v1811
      %v6533 = vadd.f32 %v6501, %v1811
      %v6534 = vadd.f32 %v6502, %v1811
      %v6535 = vadd.f32 %v6503, %v1811
      %v6536 = vadd.f32 %v6504, %v1811
      %v6537 = vadd.f32 %v6505, %v1811
      %v6538 = vadd.f32 %v6506, %v1811
      %v6539 = vadd.f32 %v6507, %v1811
      %v6540 = vadd.f32 %v6508, %v1811
      %v6541 = vadd.f32 %v6509, %v1811
      %v6542 = vadd.f32 %v6510, %v1811
      %v6543 = vadd.f32 %v6511, %v1811
      %v6544 = vadd.f32 %v6512, %v1811
      %v6545 = vadd.f32 %v6513, %v1811
      %v6546 = vadd.f32 %v6514, %v1811
      %s6547 = scalar_lea.vmem %s172, 768
      %6548 = vst.msk [vmem:[%s6547] sm:$0xff] %vm1845, %v6515
      %6549 = vst.msk [vmem:[%s6547 + $0x8] sm:$0xff] %vm1845, %v6516
      %6550 = vst.msk [vmem:[%s6547 + $0x10] sm:$0xff] %vm1845, %v6517
      %6551 = vst.msk [vmem:[%s6547 + $0x18] sm:$0xff] %vm1845, %v6518
      %6552 = vst.msk [vmem:[%s6547 + $0x20] sm:$0xff] %vm1845, %v6519
      %6553 = vst.msk [vmem:[%s6547 + $0x28] sm:$0xff] %vm1845, %v6520
      %6554 = vst.msk [vmem:[%s6547 + $0x30] sm:$0xff] %vm1845, %v6521
      %6555 = vst.msk [vmem:[%s6547 + $0x38] sm:$0xff] %vm1845, %v6522
      %6556 = vst.msk [vmem:[%s6547 + $0x40] sm:$0xff] %vm1845, %v6523
      %6557 = vst.msk [vmem:[%s6547 + $0x48] sm:$0xff] %vm1845, %v6524
      %6558 = vst.msk [vmem:[%s6547 + $0x50] sm:$0xff] %vm1845, %v6525
      %6559 = vst.msk [vmem:[%s6547 + $0x58] sm:$0xff] %vm1845, %v6526
      %6560 = vst.msk [vmem:[%s6547 + $0x60] sm:$0xff] %vm1845, %v6527
      %6561 = vst.msk [vmem:[%s6547 + $0x68] sm:$0xff] %vm1845, %v6528
      %6562 = vst.msk [vmem:[%s6547 + $0x70] sm:$0xff] %vm1845, %v6529
      %6563 = vst.msk [vmem:[%s6547 + $0x78] sm:$0xff] %vm1845, %v6530
      %6564 = vst.msk [vmem:[%s6547 + $0x80] sm:$0xff] %vm1845, %v6531
      %6565 = vst.msk [vmem:[%s6547 + $0x88] sm:$0xff] %vm1845, %v6532
      %6566 = vst.msk [vmem:[%s6547 + $0x90] sm:$0xff] %vm1845, %v6533
      %6567 = vst.msk [vmem:[%s6547 + $0x98] sm:$0xff] %vm1845, %v6534
      %6568 = vst.msk [vmem:[%s6547 + $0xa0] sm:$0xff] %vm1845, %v6535
      %6569 = vst.msk [vmem:[%s6547 + $0xa8] sm:$0xff] %vm1845, %v6536
      %6570 = vst.msk [vmem:[%s6547 + $0xb0] sm:$0xff] %vm1845, %v6537
      %6571 = vst.msk [vmem:[%s6547 + $0xb8] sm:$0xff] %vm1845, %v6538
      %6572 = vst.msk [vmem:[%s6547 + $0xc0] sm:$0xff] %vm1845, %v6539
      %6573 = vst.msk [vmem:[%s6547 + $0xc8] sm:$0xff] %vm1845, %v6540
      %6574 = vst.msk [vmem:[%s6547 + $0xd0] sm:$0xff] %vm1845, %v6541
      %6575 = vst.msk [vmem:[%s6547 + $0xd8] sm:$0xff] %vm1845, %v6542
      %6576 = vst.msk [vmem:[%s6547 + $0xe0] sm:$0xff] %vm1845, %v6543
      %6577 = vst.msk [vmem:[%s6547 + $0xe8] sm:$0xff] %vm1845, %v6544
      %6578 = vst.msk [vmem:[%s6547 + $0xf0] sm:$0xff] %vm1845, %v6545
      %6579 = vst.msk [vmem:[%s6547 + $0xf8] sm:$0xff] %vm1845, %v6546
      %s6580 = smul.u32 4, %s14
      %p6581 = scmp.lt.s32.totalorder %s6580, 7
      %s6582 = scalar_select %p6581, %s6580, 7
      %s6583 = smul.addr %s6582, 32
      %s6584 = smul.addr %s6583, 8
      %s6585 = scalar_lea.vmem %s3, %s6584
      // Predicated region
      $region33: #{tpu_custom_call.1} parent=31 // pred_check
        %p6586 = pneg %p100
      $region34: #{tpu_custom_call.1} parent=31 // pred_check_branch
        %6588 = sbr.rel (%p6586) target = $region36
      $region35: #{tpu_custom_call.1} parent=31 // pred_region
        %s6589 = smul.u32 4, %s14
      $region36: #{tpu_custom_call.1} parent=31 // pred_fallthru
        _
    $region32: #{tpu_custom_call.1} parent=5 // pred_fallthru
      _
    %p6590 = scmp.le.s32.totalorder 2, %s9
    // Predicated region
    $region37: #{tpu_custom_call.1} parent=5 // pred_check
      %p6591 = pneg %p6590
    $region38: #{tpu_custom_call.1} parent=5 // pred_check_branch
      %6593 = sbr.rel (%p6591) target = $region40
    $region39: #{tpu_custom_call.1} parent=5 // pred_region
      %s6594 = ssub.s32 %s9, 2
      // Predicated region
      $region41: #{tpu_custom_call.1} parent=39 // pred_check
        %p6595 = pneg %p106
      $region42: #{tpu_custom_call.1} parent=39 // pred_check_branch
        %6597 = sbr.rel (%p6595) target = $region44
      $region43: #{tpu_custom_call.1} parent=39 // pred_region
        %s6598 = smul.u32 4, %s15
        %p6599 = scmp.lt.s32.totalorder %s6598, 7
        %s6600 = scalar_select %p6599, %s6598, 7
        %s6601 = smul.addr %s6600, 32
        %s6602 = smul.addr %s6601, 8
        %s6603 = scalar_lea.vmem %s3, %s6602
      $region44: #{tpu_custom_call.1} parent=39 // pred_fallthru
        _
    $region40: #{tpu_custom_call.1} parent=5 // pred_fallthru
      _
  $region6: #{tpu_custom_call.1} parent=0 // loop_footer
    %s13 = sadd.s32 1, %s9
  $region7: #{tpu_custom_call.1} parent=0 // loop_footer_branch
    %8 = sbr.rel target = $region3
  $region8: #{tpu_custom_call.1} parent=0 // loop_exit
    _

</llo_original>
